<compile_context>
chip_gen: v7x
topology: tpu7x:2x2x1
jax: 0.10.0
libtpu: 0.0.40
codegen_flags: <defaults>
</compile_context>

<pallas_src>
import functools

import jax
import jax.numpy as jnp
from jax.experimental import pallas as pl
from jax.experimental.pallas import tpu as pltpu


HIDDEN = 256
LSTM_IN = 512
GATES = 4 * HIDDEN          # 1024
POS_DIM = 8
POS_FEAT = 64
ACTION_DIM = 8
ACTION_PAD = 128            # lane-dense output slab; sliced to ACTION_DIM outside


def _time_chunk(T):
    """Largest divisor of T that is <= 8 (caps the unrolled in-kernel loop)."""
    for tc in range(min(8, T), 0, -1):
        if T % tc == 0:
            return tc
    return 1


# ----------------------------------------------------------------------------
# Fused kernel: vision encoder + hoisted LSTM input projection (preamble),
# LSTM recurrence with h/c in VMEM scratch, batched imi head (epilogue).
# Grid: (batch groups [parallel], time chunks [arbitrary, innermost]).
# ----------------------------------------------------------------------------
def _actor_fused_kernel(x_ref, vw_ref, vb_ref, wih_ref, blstm_ref, whh_ref,
                        imiw_ref, imib_ref, h0_ref, c0_ref,
                        logit_ref, hn_ref, cn_ref,
                        h_sc, c_sc, hseq_sc, *, hidden, tc, bpg):
    ci = pl.program_id(1)                       # chunk index (innermost)
    chw = x_ref.shape[2]

    @pl.when(ci == 0)
    def _():                                    # per-group h/c init
        h_sc[...] = h0_ref[...]
        c_sc[...] = c0_ref[...]

    # --- Preamble: fused vision encoder + hoisted LSTM input projection -----
    #   gates_x = relu(x @ W_vis + b_vis) @ W_ih^T + (b_ih + b_hh)
    # computed for the whole chunk in two batched MXU matmuls; never hits HBM.
    x2d = x_ref[...].reshape(tc * bpg, chw)                      # bf16, t-major
    feats = jnp.dot(x2d, vw_ref[...], preferred_element_type=jnp.float32)
    feats = jnp.maximum(feats + vb_ref[...], 0.0)                # (tc*bpg, 512)
    gx = jnp.dot(feats.astype(wih_ref.dtype), wih_ref[...],
                 preferred_element_type=jnp.float32) + blstm_ref[...]
    gx = gx.reshape(tc, bpg, 4 * hidden)                         # t-major slabs

    # --- Serial recurrence over the chunk (tc <= 8, static unroll) ----------
    h = h_sc[...]
    c = c_sc[...]
    for t in range(tc):
        gates = gx[t] + jnp.dot(h.astype(whh_ref.dtype), whh_ref[...],
                                preferred_element_type=jnp.float32)
        i_g = jax.nn.sigmoid(gates[:, 0 * hidden:1 * hidden])
        f_g = jax.nn.sigmoid(gates[:, 1 * hidden:2 * hidden])
        g_g = jnp.tanh(gates[:, 2 * hidden:3 * hidden])
        o_g = jax.nn.sigmoid(gates[:, 3 * hidden:4 * hidden])
        c = f_g * c + i_g * g_g
        h = o_g * jnp.tanh(c)
        hseq_sc[t] = h        # off the h/c critical path; consumed in epilogue

    h_sc[...] = h
    c_sc[...] = c
    hn_ref[...] = h.astype(hn_ref.dtype)        # resident block; last write wins
    cn_ref[...] = c.astype(cn_ref.dtype)

    # --- Epilogue: ONE batched imi matmul for the whole chunk ---------------
    hs = hseq_sc[...].reshape(tc * bpg, hidden)
    logits = jnp.dot(hs.astype(imiw_ref.dtype), imiw_ref[...],
                     preferred_element_type=jnp.float32) + imib_ref[...]
    logit_ref[...] = logits.reshape(tc, bpg, ACTION_PAD).astype(logit_ref.dtype)


def fused_actor(x_pad, vis_w, vis_b, w_ih_t, b_lstm, w_hh_t,
                imi_w_pad, imi_b_pad, h0_pad, c0_pad, *, num_batch_groups):
    """x_pad: (T, B_tot, CHW) bf16 time-major, B_tot = groups * bpg (bpg % 8 == 0)."""
    T, B_TOT, CHW = x_pad.shape
    G = num_batch_groups
    bpg = B_TOT // G
    tc = _time_chunk(T)

    kernel = functools.partial(_actor_fused_kernel,
                               hidden=HIDDEN, tc=tc, bpg=bpg)
    return pl.pallas_call(
        kernel,
        out_shape=(
            jax.ShapeDtypeStruct((T, B_TOT, ACTION_PAD), jnp.float32),
            jax.ShapeDtypeStruct((B_TOT, HIDDEN), jnp.float32),
            jax.ShapeDtypeStruct((B_TOT, HIDDEN), jnp.float32),
        ),
        grid_spec=pltpu.PrefetchScalarGridSpec(
            num_scalar_prefetch=0,
            grid=(G, T // tc),
            in_specs=[
                pl.BlockSpec((tc, bpg, CHW), lambda g, c: (c, g, 0)),
                pl.BlockSpec((CHW, LSTM_IN), lambda g, c: (0, 0)),
                pl.BlockSpec((1, LSTM_IN), lambda g, c: (0, 0)),
                pl.BlockSpec((LSTM_IN, GATES), lambda g, c: (0, 0)),
                pl.BlockSpec((1, GATES), lambda g, c: (0, 0)),
                pl.BlockSpec((HIDDEN, GATES), lambda g, c: (0, 0)),
                pl.BlockSpec((HIDDEN, ACTION_PAD), lambda g, c: (0, 0)),
                pl.BlockSpec((1, ACTION_PAD), lambda g, c: (0, 0)),
                pl.BlockSpec((bpg, HIDDEN), lambda g, c: (g, 0)),
                pl.BlockSpec((bpg, HIDDEN), lambda g, c: (g, 0)),
            ],
            out_specs=(
                pl.BlockSpec((tc, bpg, ACTION_PAD), lambda g, c: (c, g, 0)),
                pl.BlockSpec((bpg, HIDDEN), lambda g, c: (g, 0)),
                pl.BlockSpec((bpg, HIDDEN), lambda g, c: (g, 0)),
            ),
            scratch_shapes=[
                pltpu.VMEM((bpg, HIDDEN), jnp.float32),          # h carry
                pltpu.VMEM((bpg, HIDDEN), jnp.float32),          # c carry
                pltpu.VMEM((tc, bpg, HIDDEN), jnp.float32),      # h per step
            ],
        ),
        compiler_params=pltpu.CompilerParams(
            dimension_semantics=("parallel", "arbitrary"),
            vmem_limit_bytes=32 * 1024 * 1024,
        ),
    )(x_pad, vis_w, vis_b.reshape(1, LSTM_IN), w_ih_t,
      b_lstm.reshape(1, GATES), w_hh_t, imi_w_pad,
      imi_b_pad.reshape(1, ACTION_PAD), h0_pad, c0_pad)


# ----------------------------------------------------------------------------
# Small generic Linear (+ReLU) kernel — only used for the (unused) pos_encoder.
# ----------------------------------------------------------------------------
def _linear_kernel(x_ref, w_ref, b_ref, o_ref, *, relu):
    y = jnp.dot(x_ref[...], w_ref[...], preferred_element_type=jnp.float32)
    y = y + b_ref[...]
    if relu:
        y = jnp.maximum(y, 0.0)
    o_ref[...] = y.astype(o_ref.dtype)


def pallas_linear(x, w, b, relu=False):
    N, K = x.shape
    _, M = w.shape
    return pl.pallas_call(
        functools.partial(_linear_kernel, relu=relu),
        out_shape=jax.ShapeDtypeStruct((N, M), jnp.float32),
        grid_spec=pltpu.PrefetchScalarGridSpec(
            num_scalar_prefetch=0,
            grid=(1,),
            in_specs=[
                pl.BlockSpec((N, K), lambda i: (0, 0)),
                pl.BlockSpec((K, M), lambda i: (0, 0)),
                pl.BlockSpec((1, M), lambda i: (0, 0)),
            ],
            out_specs=pl.BlockSpec((N, M), lambda i: (0, 0)),
        ),
        compiler_params=pltpu.CompilerParams(
            dimension_semantics=("arbitrary",)),
    )(x, w, b.reshape(1, M))


# ----------------------------------------------------------------------------
# Parameters (deterministic).  Matmul weights stored in bf16 (f32 accumulation
# inside the kernel); biases / elementwise math stay f32.
# ----------------------------------------------------------------------------
def init_params(key, c, h, w):
    ks = jax.random.split(key, 9)
    s = 0.02
    vis_in = c * h * w
    imi_w = jax.random.normal(ks[7], (HIDDEN, ACTION_DIM), jnp.float32) * s
    imi_b = jax.random.normal(ks[8], (ACTION_DIM,), jnp.float32) * s
    imi_w_pad = jnp.zeros((HIDDEN, ACTION_PAD), jnp.float32).at[:, :ACTION_DIM].set(imi_w)
    imi_b_pad = jnp.zeros((ACTION_PAD,), jnp.float32).at[:ACTION_DIM].set(imi_b)
    params = {
        # vision_encoder: Linear(C*H*W -> 512) + ReLU
        "vis_w": (jax.random.normal(ks[0], (vis_in, LSTM_IN), jnp.float32) * s
                  ).astype(jnp.bfloat16),
        "vis_b": jnp.zeros((LSTM_IN,), jnp.float32),
        # pos_encoder: Linear(8 -> 64) + ReLU (output unused downstream)
        "pos_w": jax.random.normal(ks[1], (POS_DIM, POS_FEAT), jnp.float32) * s,
        "pos_b": jnp.zeros((POS_FEAT,), jnp.float32),
        # bottleneck Linear(3072 -> 512): defined but NOT used in forward()
        "bott_w": jax.random.normal(ks[2], (3072, 512), jnp.float32) * s,
        "bott_b": jnp.zeros((512,), jnp.float32),
        # LSTM (PyTorch layout weight_ih (4H,I), weight_hh (4H,H)); stored
        # pre-transposed for the x @ W^T formulation, bf16.
        "w_ih_t": (jax.random.normal(ks[3], (LSTM_IN, GATES), jnp.float32) * s
                   ).astype(jnp.bfloat16),
        "w_hh_t": (jax.random.normal(ks[4], (HIDDEN, GATES), jnp.float32) * s
                   ).astype(jnp.bfloat16),
        "b_lstm": (jax.random.normal(ks[5], (GATES,), jnp.float32) * s
                   + jax.random.normal(ks[6], (GATES,), jnp.float32) * s),
        # imi_models: Linear(256 -> 8), lane-padded to 128 columns
        "imi_w_pad": imi_w_pad.astype(jnp.bfloat16),
        "imi_b_pad": imi_b_pad,
    }
    return params


# ----------------------------------------------------------------------------
# LSTMRobotActor.forward
# ----------------------------------------------------------------------------
def lstm_robot_actor_forward(params, visual_input, pos_input, freeze=True,
                             prev_hidden=None, num_batch_groups=1,
                             compute_pos_feats=False):
    # `freeze` only toggles torch.no_grad() in the reference -> forward values
    # are identical either way.
    del freeze
    B, T, C, H, W = visual_input.shape
    CHW = C * H * W
    G = num_batch_groups

    # Batch padding: each group holds ceil(B/G) real sequences, padded up to a
    # multiple of 8 rows (sublane-dense blocks).  num_batch_groups=2 on v7x
    # puts one sequence per TensorCore; default 1 is best on v5e/v6e.
    per_group = -(-B // G)
    bpg = max(8, ((per_group + 7) // 8) * 8)
    B_TOT = G * bpg
    row_idx = jnp.asarray(
        [(b // per_group) * bpg + (b % per_group) for b in range(B)],
        dtype=jnp.int32)

    # Time-major layout: per-step gate slices / h stores are contiguous slabs.
    x = visual_input.reshape(B, T, CHW).astype(jnp.bfloat16)
    x = jnp.transpose(x, (1, 0, 2))                              # (T, B, CHW)
    vis_w = params["vis_w"]
    if CHW % 128 != 0:                                           # lane padding
        pad = 128 - CHW % 128
        x = jnp.pad(x, ((0, 0), (0, 0), (0, pad)))
        vis_w = jnp.pad(vis_w, ((0, pad), (0, 0)))
        CHW += pad
    x_pad = jnp.zeros((T, B_TOT, CHW), jnp.bfloat16).at[:, row_idx, :].set(x)

    if prev_hidden is None:
        h0 = jnp.zeros((B, HIDDEN), jnp.float32)
        c0 = jnp.zeros((B, HIDDEN), jnp.float32)
    else:
        h0 = prev_hidden[0].reshape(B, HIDDEN).astype(jnp.float32)
        c0 = prev_hidden[1].reshape(B, HIDDEN).astype(jnp.float32)
    h0_pad = jnp.zeros((B_TOT, HIDDEN), jnp.float32).at[row_idx].set(h0)
    c0_pad = jnp.zeros((B_TOT, HIDDEN), jnp.float32).at[row_idx].set(c0)

    if compute_pos_feats:
        # pos_feats is computed but unused by the reference forward(); off by
        # default so it costs nothing.
        _pos_feats = pallas_linear(pos_input, params["pos_w"], params["pos_b"],
                                   relu=True)

    logits_pad, hn_pad, cn_pad = fused_actor(
        x_pad, vis_w, params["vis_b"], params["w_ih_t"], params["b_lstm"],
        params["w_hh_t"], params["imi_w_pad"], params["imi_b_pad"],
        h0_pad, c0_pad, num_batch_groups=G)

    action_logits = jnp.transpose(logits_pad[:, row_idx, :ACTION_DIM], (1, 0, 2))
    # PyTorch returns (h_n, c_n) each shaped (num_layers=1, B, hidden).
    next_hidden = (hn_pad[row_idx][None, :, :], cn_pad[row_idx][None, :, :])
    return action_logits, next_hidden


# ----------------------------------------------------------------------------
# Pure-JAX f32 reference (bf16 weight/operand rounding mirrored) for validation.
# ----------------------------------------------------------------------------
def _forward_reference(params, visual_input, prev_hidden=None):
    B, T, C, H, W = visual_input.shape
    f32 = jnp.float32
    hp = jax.lax.Precision.HIGHEST
    x = visual_input.reshape(B * T, C * H * W).astype(jnp.bfloat16).astype(f32)
    feats = jnp.maximum(
        jnp.dot(x, params["vis_w"].astype(f32), precision=hp) + params["vis_b"], 0.0)
    feats = feats.astype(jnp.bfloat16).astype(f32)
    gx = jnp.dot(feats, params["w_ih_t"].astype(f32), precision=hp) + params["b_lstm"]
    gx = gx.reshape(B, T, GATES)
    if prev_hidden is None:
        h = jnp.zeros((B, HIDDEN), f32)
        c = jnp.zeros((B, HIDDEN), f32)
    else:
        h = prev_hidden[0].reshape(B, HIDDEN).astype(f32)
        c = prev_hidden[1].reshape(B, HIDDEN).astype(f32)
    whh = params["w_hh_t"].astype(f32)
    imiw = params["imi_w_pad"].astype(f32)[:, :ACTION_DIM]
    imib = params["imi_b_pad"][:ACTION_DIM]
    outs = []
    for t in range(T):
        g = gx[:, t] + jnp.dot(h.astype(jnp.bfloat16).astype(f32), whh, precision=hp)
        i_g = jax.nn.sigmoid(g[:, 0 * HIDDEN:1 * HIDDEN])
        f_g = jax.nn.sigmoid(g[:, 1 * HIDDEN:2 * HIDDEN])
        g_g = jnp.tanh(g[:, 2 * HIDDEN:3 * HIDDEN])
        o_g = jax.nn.sigmoid(g[:, 3 * HIDDEN:4 * HIDDEN])
        c = f_g * c + i_g * g_g
        h = o_g * jnp.tanh(c)
        outs.append(jnp.dot(h.astype(jnp.bfloat16).astype(f32), imiw,
                            precision=hp) + imib)
    return jnp.stack(outs, axis=1), (h[None], c[None])


if __name__ == "__main__":
    key = jax.random.PRNGKey(0)
    B, T, C, H, W = 2, 8, 3, 16, 16

    k1, k2, kp = jax.random.split(key, 3)
    visual_input = jax.random.normal(k1, (B, T, C, H, W), jnp.float32)
    pos_input = jax.random.normal(k2, (B, POS_DIM), jnp.float32)
    params = init_params(kp, C, H, W)

    fwd = jax.jit(lstm_robot_actor_forward,
                  static_argnames=("freeze", "num_batch_groups",
                                   "compute_pos_feats"))

    action_logits, (h_n, c_n) = fwd(params, visual_input, pos_input,
                                    freeze=True, prev_hidden=None)
    jax.block_until_ready((action_logits, h_n, c_n))
    assert action_logits.shape == (B, T, ACTION_DIM)
    assert h_n.shape == (1, B, HIDDEN) and c_n.shape == (1, B, HIDDEN)

    # Correctness vs. pure-JAX f32 reference (tolerance covers bf16 matmuls).
    ref_logits, (ref_h, ref_c) = _forward_reference(params, visual_input)
    assert jnp.allclose(action_logits, ref_logits, atol=1e-3, rtol=1e-2)
    assert jnp.allclose(h_n, ref_h, atol=1e-3, rtol=1e-2)
    assert jnp.allclose(c_n, ref_c, atol=1e-3, rtol=1e-2)

    # v7x megacore path (one batch group per TensorCore) must match exactly.
    logits_g2, (h_g2, c_g2) = fwd(params, visual_input, pos_input,
                                  freeze=True, prev_hidden=None,
                                  num_batch_groups=2)
    jax.block_until_ready((logits_g2, h_g2, c_g2))
    assert jnp.allclose(action_logits, logits_g2, atol=1e-5)
    assert jnp.allclose(h_n, h_g2, atol=1e-5)
    assert jnp.allclose(c_n, c_g2, atol=1e-5)

    print("KERNEL_OK")
</pallas_src>

<mosaic_0001>
module attributes {stable_mosaic.version = 11 : i64} {
  func.func @_actor_fused_kernel(%arg0: i32, %arg1: i32, %arg2: memref<8x8x768xbf16, #tpu.memory_space<vmem>>, %arg3: memref<768x512xbf16, #tpu.memory_space<vmem>>, %arg4: memref<1x512xf32, #tpu.memory_space<vmem>>, %arg5: memref<512x1024xbf16, #tpu.memory_space<vmem>>, %arg6: memref<1x1024xf32, #tpu.memory_space<vmem>>, %arg7: memref<256x1024xbf16, #tpu.memory_space<vmem>>, %arg8: memref<256x128xbf16, #tpu.memory_space<vmem>>, %arg9: memref<1x128xf32, #tpu.memory_space<vmem>>, %arg10: memref<8x256xf32, #tpu.memory_space<vmem>>, %arg11: memref<8x256xf32, #tpu.memory_space<vmem>>, %arg12: memref<8x8x128xf32, #tpu.memory_space<vmem>>, %arg13: memref<8x256xf32, #tpu.memory_space<vmem>>, %arg14: memref<8x256xf32, #tpu.memory_space<vmem>>, %arg15: memref<8x256xf32, #tpu.memory_space<vmem>>, %arg16: memref<8x256xf32, #tpu.memory_space<vmem>>, %arg17: memref<8x8x256xf32, #tpu.memory_space<vmem>>) attributes {dimension_semantics = [#tpu.dimension_semantics<parallel>, #tpu.dimension_semantics<arbitrary>], iteration_bounds = array<i64: 1, 1>, scalar_prefetch = 0 : i64, scratch_operands = 3 : i64, tpu.core_type = #tpu.core_type<tc>, window_params = [{transform_indices = @transform_0, window_bounds = array<i64: 8, 8, 768>}, {pipeline_mode = #tpu.pipeline_mode<synchronous>, transform_indices = @transform_1, window_bounds = array<i64: 768, 512>}, {pipeline_mode = #tpu.pipeline_mode<synchronous>, transform_indices = @transform_2, window_bounds = array<i64: 1, 512>}, {pipeline_mode = #tpu.pipeline_mode<synchronous>, transform_indices = @transform_3, window_bounds = array<i64: 512, 1024>}, {pipeline_mode = #tpu.pipeline_mode<synchronous>, transform_indices = @transform_4, window_bounds = array<i64: 1, 1024>}, {pipeline_mode = #tpu.pipeline_mode<synchronous>, transform_indices = @transform_5, window_bounds = array<i64: 256, 1024>}, {pipeline_mode = #tpu.pipeline_mode<synchronous>, transform_indices = @transform_6, window_bounds = array<i64: 256, 128>}, {pipeline_mode = #tpu.pipeline_mode<synchronous>, transform_indices = @transform_7, window_bounds = array<i64: 1, 128>}, {transform_indices = @transform_8, window_bounds = array<i64: 8, 256>}, {transform_indices = @transform_9, window_bounds = array<i64: 8, 256>}, {transform_indices = @transform_10, window_bounds = array<i64: 8, 8, 128>}, {transform_indices = @transform_11, window_bounds = array<i64: 8, 256>}, {transform_indices = @transform_12, window_bounds = array<i64: 8, 256>}]} {
    %c0_i32 = arith.constant 0 : i32
    %0 = arith.cmpi eq, %arg1, %c0_i32 : i32
    %1 = arith.extui %0 : i1 to i32
    %c0_i32_0 = arith.constant 0 : i32
    %2 = arith.cmpi ne, %1, %c0_i32_0 : i32
    scf.if %2 {
      %c0_101 = arith.constant 0 : index
      %c0_102 = arith.constant 0 : index
      %307 = vector.load %arg10[%c0_101, %c0_102] : memref<8x256xf32, #tpu.memory_space<vmem>>, vector<8x256xf32>
      %c0_103 = arith.constant 0 : index
      %c0_104 = arith.constant 0 : index
      %308 = vector.load %arg15[%c0_103, %c0_104] : memref<8x256xf32, #tpu.memory_space<vmem>>, vector<8x256xf32>
      tpu.vector_store %arg15[%c0_103, %c0_104], %307 {strides = array<i32>} : memref<8x256xf32, #tpu.memory_space<vmem>>, vector<8x256xf32>,
      %c0_105 = arith.constant 0 : index
      %c0_106 = arith.constant 0 : index
      %309 = vector.load %arg11[%c0_105, %c0_106] : memref<8x256xf32, #tpu.memory_space<vmem>>, vector<8x256xf32>
      %c0_107 = arith.constant 0 : index
      %c0_108 = arith.constant 0 : index
      %310 = vector.load %arg16[%c0_107, %c0_108] : memref<8x256xf32, #tpu.memory_space<vmem>>, vector<8x256xf32>
      tpu.vector_store %arg16[%c0_107, %c0_108], %309 {strides = array<i32>} : memref<8x256xf32, #tpu.memory_space<vmem>>, vector<8x256xf32>,
    } else {
    }
    %c0 = arith.constant 0 : index
    %c0_1 = arith.constant 0 : index
    %c0_2 = arith.constant 0 : index
    %3 = vector.load %arg2[%c0, %c0_1, %c0_2] : memref<8x8x768xbf16, #tpu.memory_space<vmem>>, vector<8x8x768xbf16>
    %4 = vector.shape_cast %3 : vector<8x8x768xbf16> to vector<64x768xbf16>
    %c0_3 = arith.constant 0 : index
    %c0_4 = arith.constant 0 : index
    %5 = vector.load %arg3[%c0_3, %c0_4] : memref<768x512xbf16, #tpu.memory_space<vmem>>, vector<768x512xbf16>
    %cst = arith.constant dense<0.000000e+00> : vector<64x512xf32>
    %6 = tpu.matmul %4, %5, %cst {dimension_numbers = #tpu.dot_dimension_numbers<[1], [0], [0], [1], [0, 0, 1, 1], [], []>} : vector<64x768xbf16>, vector<768x512xbf16>, vector<64x512xf32> -> vector<64x512xf32>
    %c0_5 = arith.constant 0 : index
    %c0_6 = arith.constant 0 : index
    %7 = vector.load %arg4[%c0_5, %c0_6] : memref<1x512xf32, #tpu.memory_space<vmem>>, vector<1x512xf32>
    %8 = vector.broadcast %7 : vector<1x512xf32> to vector<64x512xf32>
    %9 = arith.addf %6, %8 : vector<64x512xf32>
    %cst_7 = arith.constant 0.000000e+00 : f32
    %10 = vector.broadcast %cst_7 : f32 to vector<64x512xf32>
    %11 = arith.maximumf %9, %10 : vector<64x512xf32>
    %12 = arith.truncf %11 : vector<64x512xf32> to vector<64x512xbf16>
    %c0_8 = arith.constant 0 : index
    %c0_9 = arith.constant 0 : index
    %13 = vector.load %arg5[%c0_8, %c0_9] : memref<512x1024xbf16, #tpu.memory_space<vmem>>, vector<512x1024xbf16>
    %cst_10 = arith.constant dense<0.000000e+00> : vector<64x1024xf32>
    %14 = tpu.matmul %12, %13, %cst_10 {dimension_numbers = #tpu.dot_dimension_numbers<[1], [0], [0], [1], [0, 0, 1, 1], [], []>} : vector<64x512xbf16>, vector<512x1024xbf16>, vector<64x1024xf32> -> vector<64x1024xf32>
    %c0_11 = arith.constant 0 : index
    %c0_12 = arith.constant 0 : index
    %15 = vector.load %arg6[%c0_11, %c0_12] : memref<1x1024xf32, #tpu.memory_space<vmem>>, vector<1x1024xf32>
    %16 = vector.broadcast %15 : vector<1x1024xf32> to vector<64x1024xf32>
    %17 = arith.addf %14, %16 : vector<64x1024xf32>
    %18 = vector.shape_cast %17 : vector<64x1024xf32> to vector<8x8x1024xf32>
    %c0_13 = arith.constant 0 : index
    %c0_14 = arith.constant 0 : index
    %19 = vector.load %arg15[%c0_13, %c0_14] : memref<8x256xf32, #tpu.memory_space<vmem>>, vector<8x256xf32>
    %c0_15 = arith.constant 0 : index
    %c0_16 = arith.constant 0 : index
    %20 = vector.load %arg16[%c0_15, %c0_16] : memref<8x256xf32, #tpu.memory_space<vmem>>, vector<8x256xf32>
    %21 = vector.extract_strided_slice %18 {offsets = [0, 0, 0], sizes = [1, 8, 1024], strides = [1, 1, 1]} : vector<8x8x1024xf32> to vector<1x8x1024xf32>
    %22 = vector.shape_cast %21 : vector<1x8x1024xf32> to vector<8x1024xf32>
    %23 = arith.truncf %19 : vector<8x256xf32> to vector<8x256xbf16>
    %c0_17 = arith.constant 0 : index
    %c0_18 = arith.constant 0 : index
    %24 = vector.load %arg7[%c0_17, %c0_18] : memref<256x1024xbf16, #tpu.memory_space<vmem>>, vector<256x1024xbf16>
    %cst_19 = arith.constant dense<0.000000e+00> : vector<8x1024xf32>
    %25 = tpu.matmul %23, %24, %cst_19 {dimension_numbers = #tpu.dot_dimension_numbers<[1], [0], [0], [1], [0, 0, 1, 1], [], []>} : vector<8x256xbf16>, vector<256x1024xbf16>, vector<8x1024xf32> -> vector<8x1024xf32>
    %26 = arith.addf %22, %25 : vector<8x1024xf32>
    %27 = vector.extract_strided_slice %26 {offsets = [0, 0], sizes = [8, 256], strides = [1, 1]} : vector<8x1024xf32> to vector<8x256xf32>
    %28 = arith.negf %27 : vector<8x256xf32>
    %29 = math.exp %28 : vector<8x256xf32>
    %cst_20 = arith.constant 1.000000e+00 : f32
    %30 = vector.broadcast %cst_20 : f32 to vector<8x256xf32>
    %31 = arith.addf %30, %29 : vector<8x256xf32>
    %32 = arith.divf %30, %31 : vector<8x256xf32>
    %33 = vector.extract_strided_slice %26 {offsets = [0, 256], sizes = [8, 256], strides = [1, 1]} : vector<8x1024xf32> to vector<8x256xf32>
    %34 = arith.negf %33 : vector<8x256xf32>
    %35 = math.exp %34 : vector<8x256xf32>
    %cst_21 = arith.constant 1.000000e+00 : f32
    %36 = vector.broadcast %cst_21 : f32 to vector<8x256xf32>
    %37 = arith.addf %36, %35 : vector<8x256xf32>
    %38 = arith.divf %36, %37 : vector<8x256xf32>
    %39 = vector.extract_strided_slice %26 {offsets = [0, 512], sizes = [8, 256], strides = [1, 1]} : vector<8x1024xf32> to vector<8x256xf32>
    %40 = math.tanh %39 : vector<8x256xf32>
    %41 = vector.extract_strided_slice %26 {offsets = [0, 768], sizes = [8, 256], strides = [1, 1]} : vector<8x1024xf32> to vector<8x256xf32>
    %42 = arith.negf %41 : vector<8x256xf32>
    %43 = math.exp %42 : vector<8x256xf32>
    %cst_22 = arith.constant 1.000000e+00 : f32
    %44 = vector.broadcast %cst_22 : f32 to vector<8x256xf32>
    %45 = arith.addf %44, %43 : vector<8x256xf32>
    %46 = arith.divf %44, %45 : vector<8x256xf32>
    %47 = arith.mulf %38, %20 : vector<8x256xf32>
    %48 = arith.mulf %32, %40 : vector<8x256xf32>
    %49 = arith.addf %47, %48 : vector<8x256xf32>
    %50 = math.tanh %49 : vector<8x256xf32>
    %51 = arith.mulf %46, %50 : vector<8x256xf32>
    %c0_23 = arith.constant 0 : index
    %c0_24 = arith.constant 0 : index
    %c0_25 = arith.constant 0 : index
    %52 = vector.load %arg17[%c0_23, %c0_24, %c0_25] : memref<8x8x256xf32, #tpu.memory_space<vmem>>, vector<1x8x256xf32>
    %53 = vector.shape_cast %52 : vector<1x8x256xf32> to vector<8x256xf32>
    %54 = vector.shape_cast %51 : vector<8x256xf32> to vector<1x8x256xf32>
    tpu.vector_store %arg17[%c0_23, %c0_24, %c0_25], %54 {strides = array<i32>} : memref<8x8x256xf32, #tpu.memory_space<vmem>>, vector<1x8x256xf32>,
    %55 = vector.extract_strided_slice %18 {offsets = [1, 0, 0], sizes = [1, 8, 1024], strides = [1, 1, 1]} : vector<8x8x1024xf32> to vector<1x8x1024xf32>
    %56 = vector.shape_cast %55 : vector<1x8x1024xf32> to vector<8x1024xf32>
    %57 = arith.truncf %51 : vector<8x256xf32> to vector<8x256xbf16>
    %c0_26 = arith.constant 0 : index
    %c0_27 = arith.constant 0 : index
    %58 = vector.load %arg7[%c0_26, %c0_27] : memref<256x1024xbf16, #tpu.memory_space<vmem>>, vector<256x1024xbf16>
    %cst_28 = arith.constant dense<0.000000e+00> : vector<8x1024xf32>
    %59 = tpu.matmul %57, %58, %cst_28 {dimension_numbers = #tpu.dot_dimension_numbers<[1], [0], [0], [1], [0, 0, 1, 1], [], []>} : vector<8x256xbf16>, vector<256x1024xbf16>, vector<8x1024xf32> -> vector<8x1024xf32>
    %60 = arith.addf %56, %59 : vector<8x1024xf32>
    %61 = vector.extract_strided_slice %60 {offsets = [0, 0], sizes = [8, 256], strides = [1, 1]} : vector<8x1024xf32> to vector<8x256xf32>
    %62 = arith.negf %61 : vector<8x256xf32>
    %63 = math.exp %62 : vector<8x256xf32>
    %cst_29 = arith.constant 1.000000e+00 : f32
    %64 = vector.broadcast %cst_29 : f32 to vector<8x256xf32>
    %65 = arith.addf %64, %63 : vector<8x256xf32>
    %66 = arith.divf %64, %65 : vector<8x256xf32>
    %67 = vector.extract_strided_slice %60 {offsets = [0, 256], sizes = [8, 256], strides = [1, 1]} : vector<8x1024xf32> to vector<8x256xf32>
    %68 = arith.negf %67 : vector<8x256xf32>
    %69 = math.exp %68 : vector<8x256xf32>
    %cst_30 = arith.constant 1.000000e+00 : f32
    %70 = vector.broadcast %cst_30 : f32 to vector<8x256xf32>
    %71 = arith.addf %70, %69 : vector<8x256xf32>
    %72 = arith.divf %70, %71 : vector<8x256xf32>
    %73 = vector.extract_strided_slice %60 {offsets = [0, 512], sizes = [8, 256], strides = [1, 1]} : vector<8x1024xf32> to vector<8x256xf32>
    %74 = math.tanh %73 : vector<8x256xf32>
    %75 = vector.extract_strided_slice %60 {offsets = [0, 768], sizes = [8, 256], strides = [1, 1]} : vector<8x1024xf32> to vector<8x256xf32>
    %76 = arith.negf %75 : vector<8x256xf32>
    %77 = math.exp %76 : vector<8x256xf32>
    %cst_31 = arith.constant 1.000000e+00 : f32
    %78 = vector.broadcast %cst_31 : f32 to vector<8x256xf32>
    %79 = arith.addf %78, %77 : vector<8x256xf32>
    %80 = arith.divf %78, %79 : vector<8x256xf32>
    %81 = arith.mulf %72, %49 : vector<8x256xf32>
    %82 = arith.mulf %66, %74 : vector<8x256xf32>
    %83 = arith.addf %81, %82 : vector<8x256xf32>
    %84 = math.tanh %83 : vector<8x256xf32>
    %85 = arith.mulf %80, %84 : vector<8x256xf32>
    %c1 = arith.constant 1 : index
    %c0_32 = arith.constant 0 : index
    %c0_33 = arith.constant 0 : index
    %86 = vector.load %arg17[%c1, %c0_32, %c0_33] : memref<8x8x256xf32, #tpu.memory_space<vmem>>, vector<1x8x256xf32>
    %87 = vector.shape_cast %86 : vector<1x8x256xf32> to vector<8x256xf32>
    %88 = vector.shape_cast %85 : vector<8x256xf32> to vector<1x8x256xf32>
    tpu.vector_store %arg17[%c1, %c0_32, %c0_33], %88 {strides = array<i32>} : memref<8x8x256xf32, #tpu.memory_space<vmem>>, vector<1x8x256xf32>,
    %89 = vector.extract_strided_slice %18 {offsets = [2, 0, 0], sizes = [1, 8, 1024], strides = [1, 1, 1]} : vector<8x8x1024xf32> to vector<1x8x1024xf32>
    %90 = vector.shape_cast %89 : vector<1x8x1024xf32> to vector<8x1024xf32>
    %91 = arith.truncf %85 : vector<8x256xf32> to vector<8x256xbf16>
    %c0_34 = arith.constant 0 : index
    %c0_35 = arith.constant 0 : index
    %92 = vector.load %arg7[%c0_34, %c0_35] : memref<256x1024xbf16, #tpu.memory_space<vmem>>, vector<256x1024xbf16>
    %cst_36 = arith.constant dense<0.000000e+00> : vector<8x1024xf32>
    %93 = tpu.matmul %91, %92, %cst_36 {dimension_numbers = #tpu.dot_dimension_numbers<[1], [0], [0], [1], [0, 0, 1, 1], [], []>} : vector<8x256xbf16>, vector<256x1024xbf16>, vector<8x1024xf32> -> vector<8x1024xf32>
    %94 = arith.addf %90, %93 : vector<8x1024xf32>
    %95 = vector.extract_strided_slice %94 {offsets = [0, 0], sizes = [8, 256], strides = [1, 1]} : vector<8x1024xf32> to vector<8x256xf32>
    %96 = arith.negf %95 : vector<8x256xf32>
    %97 = math.exp %96 : vector<8x256xf32>
    %cst_37 = arith.constant 1.000000e+00 : f32
    %98 = vector.broadcast %cst_37 : f32 to vector<8x256xf32>
    %99 = arith.addf %98, %97 : vector<8x256xf32>
    %100 = arith.divf %98, %99 : vector<8x256xf32>
    %101 = vector.extract_strided_slice %94 {offsets = [0, 256], sizes = [8, 256], strides = [1, 1]} : vector<8x1024xf32> to vector<8x256xf32>
    %102 = arith.negf %101 : vector<8x256xf32>
    %103 = math.exp %102 : vector<8x256xf32>
    %cst_38 = arith.constant 1.000000e+00 : f32
    %104 = vector.broadcast %cst_38 : f32 to vector<8x256xf32>
    %105 = arith.addf %104, %103 : vector<8x256xf32>
    %106 = arith.divf %104, %105 : vector<8x256xf32>
    %107 = vector.extract_strided_slice %94 {offsets = [0, 512], sizes = [8, 256], strides = [1, 1]} : vector<8x1024xf32> to vector<8x256xf32>
    %108 = math.tanh %107 : vector<8x256xf32>
    %109 = vector.extract_strided_slice %94 {offsets = [0, 768], sizes = [8, 256], strides = [1, 1]} : vector<8x1024xf32> to vector<8x256xf32>
    %110 = arith.negf %109 : vector<8x256xf32>
    %111 = math.exp %110 : vector<8x256xf32>
    %cst_39 = arith.constant 1.000000e+00 : f32
    %112 = vector.broadcast %cst_39 : f32 to vector<8x256xf32>
    %113 = arith.addf %112, %111 : vector<8x256xf32>
    %114 = arith.divf %112, %113 : vector<8x256xf32>
    %115 = arith.mulf %106, %83 : vector<8x256xf32>
    %116 = arith.mulf %100, %108 : vector<8x256xf32>
    %117 = arith.addf %115, %116 : vector<8x256xf32>
    %118 = math.tanh %117 : vector<8x256xf32>
    %119 = arith.mulf %114, %118 : vector<8x256xf32>
    %c2 = arith.constant 2 : index
    %c0_40 = arith.constant 0 : index
    %c0_41 = arith.constant 0 : index
    %120 = vector.load %arg17[%c2, %c0_40, %c0_41] : memref<8x8x256xf32, #tpu.memory_space<vmem>>, vector<1x8x256xf32>
    %121 = vector.shape_cast %120 : vector<1x8x256xf32> to vector<8x256xf32>
    %122 = vector.shape_cast %119 : vector<8x256xf32> to vector<1x8x256xf32>
    tpu.vector_store %arg17[%c2, %c0_40, %c0_41], %122 {strides = array<i32>} : memref<8x8x256xf32, #tpu.memory_space<vmem>>, vector<1x8x256xf32>,
    %123 = vector.extract_strided_slice %18 {offsets = [3, 0, 0], sizes = [1, 8, 1024], strides = [1, 1, 1]} : vector<8x8x1024xf32> to vector<1x8x1024xf32>
    %124 = vector.shape_cast %123 : vector<1x8x1024xf32> to vector<8x1024xf32>
    %125 = arith.truncf %119 : vector<8x256xf32> to vector<8x256xbf16>
    %c0_42 = arith.constant 0 : index
    %c0_43 = arith.constant 0 : index
    %126 = vector.load %arg7[%c0_42, %c0_43] : memref<256x1024xbf16, #tpu.memory_space<vmem>>, vector<256x1024xbf16>
    %cst_44 = arith.constant dense<0.000000e+00> : vector<8x1024xf32>
    %127 = tpu.matmul %125, %126, %cst_44 {dimension_numbers = #tpu.dot_dimension_numbers<[1], [0], [0], [1], [0, 0, 1, 1], [], []>} : vector<8x256xbf16>, vector<256x1024xbf16>, vector<8x1024xf32> -> vector<8x1024xf32>
    %128 = arith.addf %124, %127 : vector<8x1024xf32>
    %129 = vector.extract_strided_slice %128 {offsets = [0, 0], sizes = [8, 256], strides = [1, 1]} : vector<8x1024xf32> to vector<8x256xf32>
    %130 = arith.negf %129 : vector<8x256xf32>
    %131 = math.exp %130 : vector<8x256xf32>
    %cst_45 = arith.constant 1.000000e+00 : f32
    %132 = vector.broadcast %cst_45 : f32 to vector<8x256xf32>
    %133 = arith.addf %132, %131 : vector<8x256xf32>
    %134 = arith.divf %132, %133 : vector<8x256xf32>
    %135 = vector.extract_strided_slice %128 {offsets = [0, 256], sizes = [8, 256], strides = [1, 1]} : vector<8x1024xf32> to vector<8x256xf32>
    %136 = arith.negf %135 : vector<8x256xf32>
    %137 = math.exp %136 : vector<8x256xf32>
    %cst_46 = arith.constant 1.000000e+00 : f32
    %138 = vector.broadcast %cst_46 : f32 to vector<8x256xf32>
    %139 = arith.addf %138, %137 : vector<8x256xf32>
    %140 = arith.divf %138, %139 : vector<8x256xf32>
    %141 = vector.extract_strided_slice %128 {offsets = [0, 512], sizes = [8, 256], strides = [1, 1]} : vector<8x1024xf32> to vector<8x256xf32>
    %142 = math.tanh %141 : vector<8x256xf32>
    %143 = vector.extract_strided_slice %128 {offsets = [0, 768], sizes = [8, 256], strides = [1, 1]} : vector<8x1024xf32> to vector<8x256xf32>
    %144 = arith.negf %143 : vector<8x256xf32>
    %145 = math.exp %144 : vector<8x256xf32>
    %cst_47 = arith.constant 1.000000e+00 : f32
    %146 = vector.broadcast %cst_47 : f32 to vector<8x256xf32>
    %147 = arith.addf %146, %145 : vector<8x256xf32>
    %148 = arith.divf %146, %147 : vector<8x256xf32>
    %149 = arith.mulf %140, %117 : vector<8x256xf32>
    %150 = arith.mulf %134, %142 : vector<8x256xf32>
    %151 = arith.addf %149, %150 : vector<8x256xf32>
    %152 = math.tanh %151 : vector<8x256xf32>
    %153 = arith.mulf %148, %152 : vector<8x256xf32>
    %c3 = arith.constant 3 : index
    %c0_48 = arith.constant 0 : index
    %c0_49 = arith.constant 0 : index
    %154 = vector.load %arg17[%c3, %c0_48, %c0_49] : memref<8x8x256xf32, #tpu.memory_space<vmem>>, vector<1x8x256xf32>
    %155 = vector.shape_cast %154 : vector<1x8x256xf32> to vector<8x256xf32>
    %156 = vector.shape_cast %153 : vector<8x256xf32> to vector<1x8x256xf32>
    tpu.vector_store %arg17[%c3, %c0_48, %c0_49], %156 {strides = array<i32>} : memref<8x8x256xf32, #tpu.memory_space<vmem>>, vector<1x8x256xf32>,
    %157 = vector.extract_strided_slice %18 {offsets = [4, 0, 0], sizes = [1, 8, 1024], strides = [1, 1, 1]} : vector<8x8x1024xf32> to vector<1x8x1024xf32>
    %158 = vector.shape_cast %157 : vector<1x8x1024xf32> to vector<8x1024xf32>
    %159 = arith.truncf %153 : vector<8x256xf32> to vector<8x256xbf16>
    %c0_50 = arith.constant 0 : index
    %c0_51 = arith.constant 0 : index
    %160 = vector.load %arg7[%c0_50, %c0_51] : memref<256x1024xbf16, #tpu.memory_space<vmem>>, vector<256x1024xbf16>
    %cst_52 = arith.constant dense<0.000000e+00> : vector<8x1024xf32>
    %161 = tpu.matmul %159, %160, %cst_52 {dimension_numbers = #tpu.dot_dimension_numbers<[1], [0], [0], [1], [0, 0, 1, 1], [], []>} : vector<8x256xbf16>, vector<256x1024xbf16>, vector<8x1024xf32> -> vector<8x1024xf32>
    %162 = arith.addf %158, %161 : vector<8x1024xf32>
    %163 = vector.extract_strided_slice %162 {offsets = [0, 0], sizes = [8, 256], strides = [1, 1]} : vector<8x1024xf32> to vector<8x256xf32>
    %164 = arith.negf %163 : vector<8x256xf32>
    %165 = math.exp %164 : vector<8x256xf32>
    %cst_53 = arith.constant 1.000000e+00 : f32
    %166 = vector.broadcast %cst_53 : f32 to vector<8x256xf32>
    %167 = arith.addf %166, %165 : vector<8x256xf32>
    %168 = arith.divf %166, %167 : vector<8x256xf32>
    %169 = vector.extract_strided_slice %162 {offsets = [0, 256], sizes = [8, 256], strides = [1, 1]} : vector<8x1024xf32> to vector<8x256xf32>
    %170 = arith.negf %169 : vector<8x256xf32>
    %171 = math.exp %170 : vector<8x256xf32>
    %cst_54 = arith.constant 1.000000e+00 : f32
    %172 = vector.broadcast %cst_54 : f32 to vector<8x256xf32>
    %173 = arith.addf %172, %171 : vector<8x256xf32>
    %174 = arith.divf %172, %173 : vector<8x256xf32>
    %175 = vector.extract_strided_slice %162 {offsets = [0, 512], sizes = [8, 256], strides = [1, 1]} : vector<8x1024xf32> to vector<8x256xf32>
    %176 = math.tanh %175 : vector<8x256xf32>
    %177 = vector.extract_strided_slice %162 {offsets = [0, 768], sizes = [8, 256], strides = [1, 1]} : vector<8x1024xf32> to vector<8x256xf32>
    %178 = arith.negf %177 : vector<8x256xf32>
    %179 = math.exp %178 : vector<8x256xf32>
    %cst_55 = arith.constant 1.000000e+00 : f32
    %180 = vector.broadcast %cst_55 : f32 to vector<8x256xf32>
    %181 = arith.addf %180, %179 : vector<8x256xf32>
    %182 = arith.divf %180, %181 : vector<8x256xf32>
    %183 = arith.mulf %174, %151 : vector<8x256xf32>
    %184 = arith.mulf %168, %176 : vector<8x256xf32>
    %185 = arith.addf %183, %184 : vector<8x256xf32>
    %186 = math.tanh %185 : vector<8x256xf32>
    %187 = arith.mulf %182, %186 : vector<8x256xf32>
    %c4 = arith.constant 4 : index
    %c0_56 = arith.constant 0 : index
    %c0_57 = arith.constant 0 : index
    %188 = vector.load %arg17[%c4, %c0_56, %c0_57] : memref<8x8x256xf32, #tpu.memory_space<vmem>>, vector<1x8x256xf32>
    %189 = vector.shape_cast %188 : vector<1x8x256xf32> to vector<8x256xf32>
    %190 = vector.shape_cast %187 : vector<8x256xf32> to vector<1x8x256xf32>
    tpu.vector_store %arg17[%c4, %c0_56, %c0_57], %190 {strides = array<i32>} : memref<8x8x256xf32, #tpu.memory_space<vmem>>, vector<1x8x256xf32>,
    %191 = vector.extract_strided_slice %18 {offsets = [5, 0, 0], sizes = [1, 8, 1024], strides = [1, 1, 1]} : vector<8x8x1024xf32> to vector<1x8x1024xf32>
    %192 = vector.shape_cast %191 : vector<1x8x1024xf32> to vector<8x1024xf32>
    %193 = arith.truncf %187 : vector<8x256xf32> to vector<8x256xbf16>
    %c0_58 = arith.constant 0 : index
    %c0_59 = arith.constant 0 : index
    %194 = vector.load %arg7[%c0_58, %c0_59] : memref<256x1024xbf16, #tpu.memory_space<vmem>>, vector<256x1024xbf16>
    %cst_60 = arith.constant dense<0.000000e+00> : vector<8x1024xf32>
    %195 = tpu.matmul %193, %194, %cst_60 {dimension_numbers = #tpu.dot_dimension_numbers<[1], [0], [0], [1], [0, 0, 1, 1], [], []>} : vector<8x256xbf16>, vector<256x1024xbf16>, vector<8x1024xf32> -> vector<8x1024xf32>
    %196 = arith.addf %192, %195 : vector<8x1024xf32>
    %197 = vector.extract_strided_slice %196 {offsets = [0, 0], sizes = [8, 256], strides = [1, 1]} : vector<8x1024xf32> to vector<8x256xf32>
    %198 = arith.negf %197 : vector<8x256xf32>
    %199 = math.exp %198 : vector<8x256xf32>
    %cst_61 = arith.constant 1.000000e+00 : f32
    %200 = vector.broadcast %cst_61 : f32 to vector<8x256xf32>
    %201 = arith.addf %200, %199 : vector<8x256xf32>
    %202 = arith.divf %200, %201 : vector<8x256xf32>
    %203 = vector.extract_strided_slice %196 {offsets = [0, 256], sizes = [8, 256], strides = [1, 1]} : vector<8x1024xf32> to vector<8x256xf32>
    %204 = arith.negf %203 : vector<8x256xf32>
    %205 = math.exp %204 : vector<8x256xf32>
    %cst_62 = arith.constant 1.000000e+00 : f32
    %206 = vector.broadcast %cst_62 : f32 to vector<8x256xf32>
    %207 = arith.addf %206, %205 : vector<8x256xf32>
    %208 = arith.divf %206, %207 : vector<8x256xf32>
    %209 = vector.extract_strided_slice %196 {offsets = [0, 512], sizes = [8, 256], strides = [1, 1]} : vector<8x1024xf32> to vector<8x256xf32>
    %210 = math.tanh %209 : vector<8x256xf32>
    %211 = vector.extract_strided_slice %196 {offsets = [0, 768], sizes = [8, 256], strides = [1, 1]} : vector<8x1024xf32> to vector<8x256xf32>
    %212 = arith.negf %211 : vector<8x256xf32>
    %213 = math.exp %212 : vector<8x256xf32>
    %cst_63 = arith.constant 1.000000e+00 : f32
    %214 = vector.broadcast %cst_63 : f32 to vector<8x256xf32>
    %215 = arith.addf %214, %213 : vector<8x256xf32>
    %216 = arith.divf %214, %215 : vector<8x256xf32>
    %217 = arith.mulf %208, %185 : vector<8x256xf32>
    %218 = arith.mulf %202, %210 : vector<8x256xf32>
    %219 = arith.addf %217, %218 : vector<8x256xf32>
    %220 = math.tanh %219 : vector<8x256xf32>
    %221 = arith.mulf %216, %220 : vector<8x256xf32>
    %c5 = arith.constant 5 : index
    %c0_64 = arith.constant 0 : index
    %c0_65 = arith.constant 0 : index
    %222 = vector.load %arg17[%c5, %c0_64, %c0_65] : memref<8x8x256xf32, #tpu.memory_space<vmem>>, vector<1x8x256xf32>
    %223 = vector.shape_cast %222 : vector<1x8x256xf32> to vector<8x256xf32>
    %224 = vector.shape_cast %221 : vector<8x256xf32> to vector<1x8x256xf32>
    tpu.vector_store %arg17[%c5, %c0_64, %c0_65], %224 {strides = array<i32>} : memref<8x8x256xf32, #tpu.memory_space<vmem>>, vector<1x8x256xf32>,
    %225 = vector.extract_strided_slice %18 {offsets = [6, 0, 0], sizes = [1, 8, 1024], strides = [1, 1, 1]} : vector<8x8x1024xf32> to vector<1x8x1024xf32>
    %226 = vector.shape_cast %225 : vector<1x8x1024xf32> to vector<8x1024xf32>
    %227 = arith.truncf %221 : vector<8x256xf32> to vector<8x256xbf16>
    %c0_66 = arith.constant 0 : index
    %c0_67 = arith.constant 0 : index
    %228 = vector.load %arg7[%c0_66, %c0_67] : memref<256x1024xbf16, #tpu.memory_space<vmem>>, vector<256x1024xbf16>
    %cst_68 = arith.constant dense<0.000000e+00> : vector<8x1024xf32>
    %229 = tpu.matmul %227, %228, %cst_68 {dimension_numbers = #tpu.dot_dimension_numbers<[1], [0], [0], [1], [0, 0, 1, 1], [], []>} : vector<8x256xbf16>, vector<256x1024xbf16>, vector<8x1024xf32> -> vector<8x1024xf32>
    %230 = arith.addf %226, %229 : vector<8x1024xf32>
    %231 = vector.extract_strided_slice %230 {offsets = [0, 0], sizes = [8, 256], strides = [1, 1]} : vector<8x1024xf32> to vector<8x256xf32>
    %232 = arith.negf %231 : vector<8x256xf32>
    %233 = math.exp %232 : vector<8x256xf32>
    %cst_69 = arith.constant 1.000000e+00 : f32
    %234 = vector.broadcast %cst_69 : f32 to vector<8x256xf32>
    %235 = arith.addf %234, %233 : vector<8x256xf32>
    %236 = arith.divf %234, %235 : vector<8x256xf32>
    %237 = vector.extract_strided_slice %230 {offsets = [0, 256], sizes = [8, 256], strides = [1, 1]} : vector<8x1024xf32> to vector<8x256xf32>
    %238 = arith.negf %237 : vector<8x256xf32>
    %239 = math.exp %238 : vector<8x256xf32>
    %cst_70 = arith.constant 1.000000e+00 : f32
    %240 = vector.broadcast %cst_70 : f32 to vector<8x256xf32>
    %241 = arith.addf %240, %239 : vector<8x256xf32>
    %242 = arith.divf %240, %241 : vector<8x256xf32>
    %243 = vector.extract_strided_slice %230 {offsets = [0, 512], sizes = [8, 256], strides = [1, 1]} : vector<8x1024xf32> to vector<8x256xf32>
    %244 = math.tanh %243 : vector<8x256xf32>
    %245 = vector.extract_strided_slice %230 {offsets = [0, 768], sizes = [8, 256], strides = [1, 1]} : vector<8x1024xf32> to vector<8x256xf32>
    %246 = arith.negf %245 : vector<8x256xf32>
    %247 = math.exp %246 : vector<8x256xf32>
    %cst_71 = arith.constant 1.000000e+00 : f32
    %248 = vector.broadcast %cst_71 : f32 to vector<8x256xf32>
    %249 = arith.addf %248, %247 : vector<8x256xf32>
    %250 = arith.divf %248, %249 : vector<8x256xf32>
    %251 = arith.mulf %242, %219 : vector<8x256xf32>
    %252 = arith.mulf %236, %244 : vector<8x256xf32>
    %253 = arith.addf %251, %252 : vector<8x256xf32>
    %254 = math.tanh %253 : vector<8x256xf32>
    %255 = arith.mulf %250, %254 : vector<8x256xf32>
    %c6 = arith.constant 6 : index
    %c0_72 = arith.constant 0 : index
    %c0_73 = arith.constant 0 : index
    %256 = vector.load %arg17[%c6, %c0_72, %c0_73] : memref<8x8x256xf32, #tpu.memory_space<vmem>>, vector<1x8x256xf32>
    %257 = vector.shape_cast %256 : vector<1x8x256xf32> to vector<8x256xf32>
    %258 = vector.shape_cast %255 : vector<8x256xf32> to vector<1x8x256xf32>
    tpu.vector_store %arg17[%c6, %c0_72, %c0_73], %258 {strides = array<i32>} : memref<8x8x256xf32, #tpu.memory_space<vmem>>, vector<1x8x256xf32>,
    %259 = vector.extract_strided_slice %18 {offsets = [7, 0, 0], sizes = [1, 8, 1024], strides = [1, 1, 1]} : vector<8x8x1024xf32> to vector<1x8x1024xf32>
    %260 = vector.shape_cast %259 : vector<1x8x1024xf32> to vector<8x1024xf32>
    %261 = arith.truncf %255 : vector<8x256xf32> to vector<8x256xbf16>
    %c0_74 = arith.constant 0 : index
    %c0_75 = arith.constant 0 : index
    %262 = vector.load %arg7[%c0_74, %c0_75] : memref<256x1024xbf16, #tpu.memory_space<vmem>>, vector<256x1024xbf16>
    %cst_76 = arith.constant dense<0.000000e+00> : vector<8x1024xf32>
    %263 = tpu.matmul %261, %262, %cst_76 {dimension_numbers = #tpu.dot_dimension_numbers<[1], [0], [0], [1], [0, 0, 1, 1], [], []>} : vector<8x256xbf16>, vector<256x1024xbf16>, vector<8x1024xf32> -> vector<8x1024xf32>
    %264 = arith.addf %260, %263 : vector<8x1024xf32>
    %265 = vector.extract_strided_slice %264 {offsets = [0, 0], sizes = [8, 256], strides = [1, 1]} : vector<8x1024xf32> to vector<8x256xf32>
    %266 = arith.negf %265 : vector<8x256xf32>
    %267 = math.exp %266 : vector<8x256xf32>
    %cst_77 = arith.constant 1.000000e+00 : f32
    %268 = vector.broadcast %cst_77 : f32 to vector<8x256xf32>
    %269 = arith.addf %268, %267 : vector<8x256xf32>
    %270 = arith.divf %268, %269 : vector<8x256xf32>
    %271 = vector.extract_strided_slice %264 {offsets = [0, 256], sizes = [8, 256], strides = [1, 1]} : vector<8x1024xf32> to vector<8x256xf32>
    %272 = arith.negf %271 : vector<8x256xf32>
    %273 = math.exp %272 : vector<8x256xf32>
    %cst_78 = arith.constant 1.000000e+00 : f32
    %274 = vector.broadcast %cst_78 : f32 to vector<8x256xf32>
    %275 = arith.addf %274, %273 : vector<8x256xf32>
    %276 = arith.divf %274, %275 : vector<8x256xf32>
    %277 = vector.extract_strided_slice %264 {offsets = [0, 512], sizes = [8, 256], strides = [1, 1]} : vector<8x1024xf32> to vector<8x256xf32>
    %278 = math.tanh %277 : vector<8x256xf32>
    %279 = vector.extract_strided_slice %264 {offsets = [0, 768], sizes = [8, 256], strides = [1, 1]} : vector<8x1024xf32> to vector<8x256xf32>
    %280 = arith.negf %279 : vector<8x256xf32>
    %281 = math.exp %280 : vector<8x256xf32>
    %cst_79 = arith.constant 1.000000e+00 : f32
    %282 = vector.broadcast %cst_79 : f32 to vector<8x256xf32>
    %283 = arith.addf %282, %281 : vector<8x256xf32>
    %284 = arith.divf %282, %283 : vector<8x256xf32>
    %285 = arith.mulf %276, %253 : vector<8x256xf32>
    %286 = arith.mulf %270, %278 : vector<8x256xf32>
    %287 = arith.addf %285, %286 : vector<8x256xf32>
    %288 = math.tanh %287 : vector<8x256xf32>
    %289 = arith.mulf %284, %288 : vector<8x256xf32>
    %c7 = arith.constant 7 : index
    %c0_80 = arith.constant 0 : index
    %c0_81 = arith.constant 0 : index
    %290 = vector.load %arg17[%c7, %c0_80, %c0_81] : memref<8x8x256xf32, #tpu.memory_space<vmem>>, vector<1x8x256xf32>
    %291 = vector.shape_cast %290 : vector<1x8x256xf32> to vector<8x256xf32>
    %292 = vector.shape_cast %289 : vector<8x256xf32> to vector<1x8x256xf32>
    tpu.vector_store %arg17[%c7, %c0_80, %c0_81], %292 {strides = array<i32>} : memref<8x8x256xf32, #tpu.memory_space<vmem>>, vector<1x8x256xf32>,
    %c0_82 = arith.constant 0 : index
    %c0_83 = arith.constant 0 : index
    %293 = vector.load %arg15[%c0_82, %c0_83] : memref<8x256xf32, #tpu.memory_space<vmem>>, vector<8x256xf32>
    tpu.vector_store %arg15[%c0_82, %c0_83], %289 {strides = array<i32>} : memref<8x256xf32, #tpu.memory_space<vmem>>, vector<8x256xf32>,
    %c0_84 = arith.constant 0 : index
    %c0_85 = arith.constant 0 : index
    %294 = vector.load %arg16[%c0_84, %c0_85] : memref<8x256xf32, #tpu.memory_space<vmem>>, vector<8x256xf32>
    tpu.vector_store %arg16[%c0_84, %c0_85], %287 {strides = array<i32>} : memref<8x256xf32, #tpu.memory_space<vmem>>, vector<8x256xf32>,
    %c0_86 = arith.constant 0 : index
    %c0_87 = arith.constant 0 : index
    %295 = vector.load %arg13[%c0_86, %c0_87] : memref<8x256xf32, #tpu.memory_space<vmem>>, vector<8x256xf32>
    tpu.vector_store %arg13[%c0_86, %c0_87], %289 {strides = array<i32>} : memref<8x256xf32, #tpu.memory_space<vmem>>, vector<8x256xf32>,
    %c0_88 = arith.constant 0 : index
    %c0_89 = arith.constant 0 : index
    %296 = vector.load %arg14[%c0_88, %c0_89] : memref<8x256xf32, #tpu.memory_space<vmem>>, vector<8x256xf32>
    tpu.vector_store %arg14[%c0_88, %c0_89], %287 {strides = array<i32>} : memref<8x256xf32, #tpu.memory_space<vmem>>, vector<8x256xf32>,
    %c0_90 = arith.constant 0 : index
    %c0_91 = arith.constant 0 : index
    %c0_92 = arith.constant 0 : index
    %297 = vector.load %arg17[%c0_90, %c0_91, %c0_92] : memref<8x8x256xf32, #tpu.memory_space<vmem>>, vector<8x8x256xf32>
    %298 = vector.shape_cast %297 : vector<8x8x256xf32> to vector<64x256xf32>
    %299 = arith.truncf %298 : vector<64x256xf32> to vector<64x256xbf16>
    %c0_93 = arith.constant 0 : index
    %c0_94 = arith.constant 0 : index
    %300 = vector.load %arg8[%c0_93, %c0_94] : memref<256x128xbf16, #tpu.memory_space<vmem>>, vector<256x128xbf16>
    %cst_95 = arith.constant dense<0.000000e+00> : vector<64x128xf32>
    %301 = tpu.matmul %299, %300, %cst_95 {dimension_numbers = #tpu.dot_dimension_numbers<[1], [0], [0], [1], [0, 0, 1, 1], [], []>} : vector<64x256xbf16>, vector<256x128xbf16>, vector<64x128xf32> -> vector<64x128xf32>
    %c0_96 = arith.constant 0 : index
    %c0_97 = arith.constant 0 : index
    %302 = vector.load %arg9[%c0_96, %c0_97] : memref<1x128xf32, #tpu.memory_space<vmem>>, vector<1x128xf32>
    %303 = vector.broadcast %302 : vector<1x128xf32> to vector<64x128xf32>
    %304 = arith.addf %301, %303 : vector<64x128xf32>
    %305 = vector.shape_cast %304 : vector<64x128xf32> to vector<8x8x128xf32>
    %c0_98 = arith.constant 0 : index
    %c0_99 = arith.constant 0 : index
    %c0_100 = arith.constant 0 : index
    %306 = vector.load %arg12[%c0_98, %c0_99, %c0_100] : memref<8x8x128xf32, #tpu.memory_space<vmem>>, vector<8x8x128xf32>
    tpu.vector_store %arg12[%c0_98, %c0_99, %c0_100], %305 {strides = array<i32>} : memref<8x8x128xf32, #tpu.memory_space<vmem>>, vector<8x8x128xf32>,
    return
  }
  func.func @transform_0(%arg0: i32, %arg1: i32) -> (i32, i32, i32) {
    %c0_i32 = arith.constant 0 : i32
    %c0_i32_0 = arith.constant 0 : i32
    return %arg1, %arg0, %c0_i32 : i32, i32, i32
  }
  func.func @transform_1(%arg0: i32, %arg1: i32) -> (i32, i32) {
    %c0_i32 = arith.constant 0 : i32
    %c0_i32_0 = arith.constant 0 : i32
    %c0_i32_1 = arith.constant 0 : i32
    return %c0_i32, %c0_i32_0 : i32, i32
  }
  func.func @transform_2(%arg0: i32, %arg1: i32) -> (i32, i32) {
    %c0_i32 = arith.constant 0 : i32
    %c0_i32_0 = arith.constant 0 : i32
    %c0_i32_1 = arith.constant 0 : i32
    return %c0_i32, %c0_i32_0 : i32, i32
  }
  func.func @transform_3(%arg0: i32, %arg1: i32) -> (i32, i32) {
    %c0_i32 = arith.constant 0 : i32
    %c0_i32_0 = arith.constant 0 : i32
    %c0_i32_1 = arith.constant 0 : i32
    return %c0_i32, %c0_i32_0 : i32, i32
  }
  func.func @transform_4(%arg0: i32, %arg1: i32) -> (i32, i32) {
    %c0_i32 = arith.constant 0 : i32
    %c0_i32_0 = arith.constant 0 : i32
    %c0_i32_1 = arith.constant 0 : i32
    return %c0_i32, %c0_i32_0 : i32, i32
  }
  func.func @transform_5(%arg0: i32, %arg1: i32) -> (i32, i32) {
    %c0_i32 = arith.constant 0 : i32
    %c0_i32_0 = arith.constant 0 : i32
    %c0_i32_1 = arith.constant 0 : i32
    return %c0_i32, %c0_i32_0 : i32, i32
  }
  func.func @transform_6(%arg0: i32, %arg1: i32) -> (i32, i32) {
    %c0_i32 = arith.constant 0 : i32
    %c0_i32_0 = arith.constant 0 : i32
    %c0_i32_1 = arith.constant 0 : i32
    return %c0_i32, %c0_i32_0 : i32, i32
  }
  func.func @transform_7(%arg0: i32, %arg1: i32) -> (i32, i32) {
    %c0_i32 = arith.constant 0 : i32
    %c0_i32_0 = arith.constant 0 : i32
    %c0_i32_1 = arith.constant 0 : i32
    return %c0_i32, %c0_i32_0 : i32, i32
  }
  func.func @transform_8(%arg0: i32, %arg1: i32) -> (i32, i32) {
    %c0_i32 = arith.constant 0 : i32
    %c0_i32_0 = arith.constant 0 : i32
    return %arg0, %c0_i32 : i32, i32
  }
  func.func @transform_9(%arg0: i32, %arg1: i32) -> (i32, i32) {
    %c0_i32 = arith.constant 0 : i32
    %c0_i32_0 = arith.constant 0 : i32
    return %arg0, %c0_i32 : i32, i32
  }
  func.func @transform_10(%arg0: i32, %arg1: i32) -> (i32, i32, i32) {
    %c0_i32 = arith.constant 0 : i32
    %c0_i32_0 = arith.constant 0 : i32
    return %arg1, %arg0, %c0_i32 : i32, i32, i32
  }
  func.func @transform_11(%arg0: i32, %arg1: i32) -> (i32, i32) {
    %c0_i32 = arith.constant 0 : i32
    %c0_i32_0 = arith.constant 0 : i32
    return %arg0, %c0_i32 : i32, i32
  }
  func.func @transform_12(%arg0: i32, %arg1: i32) -> (i32, i32) {
    %c0_i32 = arith.constant 0 : i32
    %c0_i32_0 = arith.constant 0 : i32
    return %arg0, %c0_i32 : i32, i32
  }
}

</mosaic_0001>

<llo_original>
// kernel: lstm_robot_actor_forward.1
$region0: #{lstm_robot_actor_forward.1}
  #allocation0 [shape = 'u32[]', space=smem, size = 0x4, offset = 0x4, fixed_abs, tag = 'smem constant byte address 0x4 - core index']
  #allocation1 [shape = 'u32[144,128]{1,0:T(1,128)}', space=vmem, size = 0x12000, scoped, tag = 'internal scratch']
  #allocation2 [shape = 'f32[8,256]{1,0:T(8,128)}', space=vmem, size = 0x2000, scoped, tag = 'scratch operand']
  #allocation3 [shape = 'f32[8,256]{1,0:T(8,128)}', space=vmem, size = 0x2000, scoped, tag = 'scratch operand']
  #allocation4 [shape = 'f32[8,8,256]{2,1,0:T(8,128)}', space=vmem, size = 0x10000, scoped, tag = 'scratch operand']
  %s0 = inlined_call_operand.vmem [shape: bf16[8,8,768], index: 0, kind: input, shape index: {}]
  %s1 = inlined_call_operand.hbm [shape: bf16[768,512], index: 1, kind: input, shape index: {}]
  %s2 = inlined_call_operand.vmem [shape: f32[1,512], index: 2, kind: input, shape index: {}]
  %s3 = inlined_call_operand.vmem [shape: bf16[512,1024], index: 3, kind: input, shape index: {}]
  %s4 = inlined_call_operand.vmem [shape: f32[1,1024], index: 4, kind: input, shape index: {}]
  %s5 = inlined_call_operand.hbm [shape: bf16[256,1024], index: 5, kind: input, shape index: {}]
  %s6 = inlined_call_operand.vmem [shape: bf16[256,128], index: 6, kind: input, shape index: {}]
  %s7 = inlined_call_operand.vmem [shape: f32[1,128], index: 7, kind: input, shape index: {}]
  %s8 = inlined_call_operand.vmem [shape: f32[8,256], index: 8, kind: input, shape index: {}, may-alias: {8,9}]
  %s9 = inlined_call_operand.vmem [shape: f32[8,256], index: 9, kind: input, shape index: {}, may-alias: {8,9}]
  %s10 = inlined_call_operand.vmem [shape: f32[8,8,128], index: 10, kind: output, shape index: {0}]
  %s11 = inlined_call_operand.vmem [shape: f32[8,256], index: 11, kind: output, shape index: {1}]
  %s12 = inlined_call_operand.vmem [shape: f32[8,256], index: 12, kind: output, shape index: {2}]
  %13 = xla_tuple %s10, %s11, %s12
  %s14 = sld [smem:[#allocation0]]
  $region78: #{lstm_robot_actor_forward.1} parent=0
    _
  %s16 = ssub.s32 1, %s14
  %s17 = scalar_select 0, %s16, %s14
  $region1: #{lstm_robot_actor_forward.1} parent=0
    #allocation5 [shape = 'u8[786432]{0}', space=vmem, size = 0xc0000, scoped, tag = 'input window, operand 1, single buffered']
    #allocation6 [shape = 's32[1]{0}', space=sflag, size = 0x4, scoped, tag = 'scoped memory for lstm_robot_actor_forward.1']
    #allocation7 [shape = 'u8[524288]{0}', space=vmem, size = 0x80000, scoped, tag = 'input window, operand 5, single buffered']
    #allocation8 [shape = 's32[1]{0}', space=sflag, size = 0x4, scoped, tag = 'scoped memory for lstm_robot_actor_forward.1']
    %18 = vsyncpa [#allocation6], 0
    %19 = vsyncpa [#allocation8], 0
    // Predicated region
    $region2: #{lstm_robot_actor_forward.1} parent=1 // pred_check
      _
    $region3: #{lstm_robot_actor_forward.1} parent=1 // pred_check_branch
      %21 = sbr.rel (0) target = $region5
    $region4: #{lstm_robot_actor_forward.1} parent=1 // pred_region
      _
    $region5: #{lstm_robot_actor_forward.1} parent=1 // pred_fallthru
      _
    // Predicated region
    $region6: #{lstm_robot_actor_forward.1} parent=1 // pred_check
      _
    $region7: #{lstm_robot_actor_forward.1} parent=1 // pred_check_branch
      %23 = sbr.rel (0) target = $region9
    $region8: #{lstm_robot_actor_forward.1} parent=1 // pred_region
      %s25 = ssub.s32 24576, 24576
      %26 = vsyncadd [#allocation6], %s25
      %s27 = sshll.u32 [#allocation5], 4
      %s28 = int_to_ptr.vmem [resolvable:$true] %s27
      %33 = dma.hbm_to_vmem [thread:$0]  %s1, 24576, %s28, [#allocation6], 256, 256, 16
    $region9: #{lstm_robot_actor_forward.1} parent=1 // pred_fallthru
      _
    // Predicated region
    $region10: #{lstm_robot_actor_forward.1} parent=1 // pred_check
      _
    $region11: #{lstm_robot_actor_forward.1} parent=1 // pred_check_branch
      %35 = sbr.rel (0) target = $region13
    $region12: #{lstm_robot_actor_forward.1} parent=1 // pred_region
      _
    $region13: #{lstm_robot_actor_forward.1} parent=1 // pred_fallthru
      _
    // Predicated region
    $region14: #{lstm_robot_actor_forward.1} parent=1 // pred_check
      _
    $region15: #{lstm_robot_actor_forward.1} parent=1 // pred_check_branch
      %37 = sbr.rel (0) target = $region17
    $region16: #{lstm_robot_actor_forward.1} parent=1 // pred_region
      _
    $region17: #{lstm_robot_actor_forward.1} parent=1 // pred_fallthru
      _
    // Predicated region
    $region18: #{lstm_robot_actor_forward.1} parent=1 // pred_check
      _
    $region19: #{lstm_robot_actor_forward.1} parent=1 // pred_check_branch
      %39 = sbr.rel (0) target = $region21
    $region20: #{lstm_robot_actor_forward.1} parent=1 // pred_region
      _
    $region21: #{lstm_robot_actor_forward.1} parent=1 // pred_fallthru
      _
    // Predicated region
    $region22: #{lstm_robot_actor_forward.1} parent=1 // pred_check
      _
    $region23: #{lstm_robot_actor_forward.1} parent=1 // pred_check_branch
      %41 = sbr.rel (0) target = $region25
    $region24: #{lstm_robot_actor_forward.1} parent=1 // pred_region
      %s43 = ssub.s32 16384, 16384
      %44 = vsyncadd [#allocation8], %s43
      %s45 = sshll.u32 [#allocation7], 4
      %s46 = int_to_ptr.vmem [resolvable:$true] %s45
      %51 = dma.hbm_to_vmem [thread:$0]  %s5, 16384, %s46, [#allocation8], 512, 512, 32
    $region25: #{lstm_robot_actor_forward.1} parent=1 // pred_fallthru
      _
    // Predicated region
    $region26: #{lstm_robot_actor_forward.1} parent=1 // pred_check
      _
    $region27: #{lstm_robot_actor_forward.1} parent=1 // pred_check_branch
      %53 = sbr.rel (0) target = $region29
    $region28: #{lstm_robot_actor_forward.1} parent=1 // pred_region
      _
    $region29: #{lstm_robot_actor_forward.1} parent=1 // pred_fallthru
      _
    // Predicated region
    $region30: #{lstm_robot_actor_forward.1} parent=1 // pred_check
      _
    $region31: #{lstm_robot_actor_forward.1} parent=1 // pred_check_branch
      %55 = sbr.rel (0) target = $region33
    $region32: #{lstm_robot_actor_forward.1} parent=1 // pred_region
      _
    $region33: #{lstm_robot_actor_forward.1} parent=1 // pred_fallthru
      _
    // Predicated region
    $region34: #{lstm_robot_actor_forward.1} parent=1 // pred_check
      _
    $region35: #{lstm_robot_actor_forward.1} parent=1 // pred_check_branch
      %57 = sbr.rel (0) target = $region37
    $region36: #{lstm_robot_actor_forward.1} parent=1 // pred_region
      _
    $region37: #{lstm_robot_actor_forward.1} parent=1 // pred_fallthru
      _
    // Predicated region
    $region38: #{lstm_robot_actor_forward.1} parent=1 // pred_check
      _
    $region39: #{lstm_robot_actor_forward.1} parent=1 // pred_check_branch
      %59 = sbr.rel (0) target = $region41
    $region40: #{lstm_robot_actor_forward.1} parent=1 // pred_region
      _
    $region41: #{lstm_robot_actor_forward.1} parent=1 // pred_fallthru
      _
    // Predicated region
    $region42: #{lstm_robot_actor_forward.1} parent=1 // pred_check
      _
    $region43: #{lstm_robot_actor_forward.1} parent=1 // pred_check_branch
      %61 = sbr.rel (0) target = $region45
    $region44: #{lstm_robot_actor_forward.1} parent=1 // pred_region
      %62 = dma.done [#allocation6], 24576
    $region45: #{lstm_robot_actor_forward.1} parent=1 // pred_fallthru
      _
    // Predicated region
    $region46: #{lstm_robot_actor_forward.1} parent=1 // pred_check
      _
    $region47: #{lstm_robot_actor_forward.1} parent=1 // pred_check_branch
      %64 = sbr.rel (0) target = $region49
    $region48: #{lstm_robot_actor_forward.1} parent=1 // pred_region
      %65 = dma.done [#allocation8], 16384
    $region49: #{lstm_robot_actor_forward.1} parent=1 // pred_fallthru
      _
    %p67 = scmp.eq.s32.totalorder 0, 0
    // Predicated region
    $region50: #{lstm_robot_actor_forward.1} parent=1 // pred_check
      %p68 = pneg %p67
    $region51: #{lstm_robot_actor_forward.1} parent=1 // pred_check_branch
      %70 = sbr.rel (%p68) target = $region53
    $region52: #{lstm_robot_actor_forward.1} parent=1 // pred_region
      %v71 = vld [vmem:[%s8] sm:$0xff]
      %v72 = vld [vmem:[%s8 + $0x8] sm:$0xff]
      %73 = vst [vmem:[#allocation2] sm:$0xff] %v71
      %74 = vst [vmem:[#allocation2 + $0x8] sm:$0xff] %v72
      %v75 = vld [vmem:[%s9] sm:$0xff]
      %v76 = vld [vmem:[%s9 + $0x8] sm:$0xff]
      %77 = vst [vmem:[#allocation3] sm:$0xff] %v75
      %78 = vst [vmem:[#allocation3 + $0x8] sm:$0xff] %v76
    $region53: #{lstm_robot_actor_forward.1} parent=1 // pred_fallthru
      _
    %v79 = vld [vmem:[%s0] sm:$0xff]
    %v80 = vld [vmem:[%s0 + $0x8] sm:$0xff]
    %v81 = vld [vmem:[%s0 + $0x10] sm:$0xff]
    %v82 = vld [vmem:[%s0 + $0x18] sm:$0xff]
    %v83 = vld [vmem:[%s0 + $0x20] sm:$0xff]
    %v84 = vld [vmem:[%s0 + $0x28] sm:$0xff]
    %v85 = vld [vmem:[%s0 + $0x30] sm:$0xff]
    %v86 = vld [vmem:[%s0 + $0x38] sm:$0xff]
    %v87 = vld [vmem:[%s0 + $0x40] sm:$0xff]
    %v88 = vld [vmem:[%s0 + $0x48] sm:$0xff]
    %v89 = vld [vmem:[%s0 + $0x50] sm:$0xff]
    %v90 = vld [vmem:[%s0 + $0x58] sm:$0xff]
    %v91 = vld [vmem:[%s0 + $0x60] sm:$0xff]
    %v92 = vld [vmem:[%s0 + $0x68] sm:$0xff]
    %v93 = vld [vmem:[%s0 + $0x70] sm:$0xff]
    %v94 = vld [vmem:[%s0 + $0x78] sm:$0xff]
    %v95 = vld [vmem:[%s0 + $0x80] sm:$0xff]
    %v96 = vld [vmem:[%s0 + $0x88] sm:$0xff]
    %v97 = vld [vmem:[%s0 + $0x90] sm:$0xff]
    %v98 = vld [vmem:[%s0 + $0x98] sm:$0xff]
    %v99 = vld [vmem:[%s0 + $0xa0] sm:$0xff]
    %v100 = vld [vmem:[%s0 + $0xa8] sm:$0xff]
    %v101 = vld [vmem:[%s0 + $0xb0] sm:$0xff]
    %v102 = vld [vmem:[%s0 + $0xb8] sm:$0xff]
    %v103 = vld [vmem:[#allocation5] sm:$0xff]
    %v104 = vld [vmem:[#allocation5 + $0x8] sm:$0xff]
    %v105 = vld [vmem:[#allocation5 + $0x10] sm:$0xff]
    %v106 = vld [vmem:[#allocation5 + $0x18] sm:$0xff]
    %v107 = vld [vmem:[#allocation5 + $0x20] sm:$0xff]
    %v108 = vld [vmem:[#allocation5 + $0x28] sm:$0xff]
    %v109 = vld [vmem:[#allocation5 + $0x30] sm:$0xff]
    %v110 = vld [vmem:[#allocation5 + $0x38] sm:$0xff]
    %v111 = vld [vmem:[#allocation5 + $0x40] sm:$0xff]
    %v112 = vld [vmem:[#allocation5 + $0x48] sm:$0xff]
    %v113 = vld [vmem:[#allocation5 + $0x50] sm:$0xff]
    %v114 = vld [vmem:[#allocation5 + $0x58] sm:$0xff]
    %v115 = vld [vmem:[#allocation5 + $0x60] sm:$0xff]
    %v116 = vld [vmem:[#allocation5 + $0x68] sm:$0xff]
    %v117 = vld [vmem:[#allocation5 + $0x70] sm:$0xff]
    %v118 = vld [vmem:[#allocation5 + $0x78] sm:$0xff]
    %v119 = vld [vmem:[#allocation5 + $0x80] sm:$0xff]
    %v120 = vld [vmem:[#allocation5 + $0x88] sm:$0xff]
    %v121 = vld [vmem:[#allocation5 + $0x90] sm:$0xff]
    %v122 = vld [vmem:[#allocation5 + $0x98] sm:$0xff]
    %v123 = vld [vmem:[#allocation5 + $0xa0] sm:$0xff]
    %v124 = vld [vmem:[#allocation5 + $0xa8] sm:$0xff]
    %v125 = vld [vmem:[#allocation5 + $0xb0] sm:$0xff]
    %v126 = vld [vmem:[#allocation5 + $0xb8] sm:$0xff]
    %v127 = vld [vmem:[#allocation5 + $0xc0] sm:$0xff]
    %v128 = vld [vmem:[#allocation5 + $0xc8] sm:$0xff]
    %v129 = vld [vmem:[#allocation5 + $0xd0] sm:$0xff]
    %v130 = vld [vmem:[#allocation5 + $0xd8] sm:$0xff]
    %v131 = vld [vmem:[#allocation5 + $0xe0] sm:$0xff]
    %v132 = vld [vmem:[#allocation5 + $0xe8] sm:$0xff]
    %v133 = vld [vmem:[#allocation5 + $0xf0] sm:$0xff]
    %v134 = vld [vmem:[#allocation5 + $0xf8] sm:$0xff]
    %v135 = vld [vmem:[#allocation5 + $0x100] sm:$0xff]
    %v136 = vld [vmem:[#allocation5 + $0x108] sm:$0xff]
    %v137 = vld [vmem:[#allocation5 + $0x110] sm:$0xff]
    %v138 = vld [vmem:[#allocation5 + $0x118] sm:$0xff]
    %v139 = vld [vmem:[#allocation5 + $0x120] sm:$0xff]
    %v140 = vld [vmem:[#allocation5 + $0x128] sm:$0xff]
    %v141 = vld [vmem:[#allocation5 + $0x130] sm:$0xff]
    %v142 = vld [vmem:[#allocation5 + $0x138] sm:$0xff]
    %v143 = vld [vmem:[#allocation5 + $0x140] sm:$0xff]
    %v144 = vld [vmem:[#allocation5 + $0x148] sm:$0xff]
    %v145 = vld [vmem:[#allocation5 + $0x150] sm:$0xff]
    %v146 = vld [vmem:[#allocation5 + $0x158] sm:$0xff]
    %v147 = vld [vmem:[#allocation5 + $0x160] sm:$0xff]
    %v148 = vld [vmem:[#allocation5 + $0x168] sm:$0xff]
    %v149 = vld [vmem:[#allocation5 + $0x170] sm:$0xff]
    %v150 = vld [vmem:[#allocation5 + $0x178] sm:$0xff]
    %v151 = vld [vmem:[#allocation5 + $0x180] sm:$0xff]
    %v152 = vld [vmem:[#allocation5 + $0x188] sm:$0xff]
    %v153 = vld [vmem:[#allocation5 + $0x190] sm:$0xff]
    %v154 = vld [vmem:[#allocation5 + $0x198] sm:$0xff]
    %v155 = vld [vmem:[#allocation5 + $0x1a0] sm:$0xff]
    %v156 = vld [vmem:[#allocation5 + $0x1a8] sm:$0xff]
    %v157 = vld [vmem:[#allocation5 + $0x1b0] sm:$0xff]
    %v158 = vld [vmem:[#allocation5 + $0x1b8] sm:$0xff]
    %v159 = vld [vmem:[#allocation5 + $0x1c0] sm:$0xff]
    %v160 = vld [vmem:[#allocation5 + $0x1c8] sm:$0xff]
    %v161 = vld [vmem:[#allocation5 + $0x1d0] sm:$0xff]
    %v162 = vld [vmem:[#allocation5 + $0x1d8] sm:$0xff]
    %v163 = vld [vmem:[#allocation5 + $0x1e0] sm:$0xff]
    %v164 = vld [vmem:[#allocation5 + $0x1e8] sm:$0xff]
    %v165 = vld [vmem:[#allocation5 + $0x1f0] sm:$0xff]
    %v166 = vld [vmem:[#allocation5 + $0x1f8] sm:$0xff]
    %v167 = vld [vmem:[#allocation5 + $0x200] sm:$0xff]
    %v168 = vld [vmem:[#allocation5 + $0x208] sm:$0xff]
    %v169 = vld [vmem:[#allocation5 + $0x210] sm:$0xff]
    %v170 = vld [vmem:[#allocation5 + $0x218] sm:$0xff]
    %v171 = vld [vmem:[#allocation5 + $0x220] sm:$0xff]
    %v172 = vld [vmem:[#allocation5 + $0x228] sm:$0xff]
    %v173 = vld [vmem:[#allocation5 + $0x230] sm:$0xff]
    %v174 = vld [vmem:[#allocation5 + $0x238] sm:$0xff]
    %v175 = vld [vmem:[#allocation5 + $0x240] sm:$0xff]
    %v176 = vld [vmem:[#allocation5 + $0x248] sm:$0xff]
    %v177 = vld [vmem:[#allocation5 + $0x250] sm:$0xff]
    %v178 = vld [vmem:[#allocation5 + $0x258] sm:$0xff]
    %v179 = vld [vmem:[#allocation5 + $0x260] sm:$0xff]
    %v180 = vld [vmem:[#allocation5 + $0x268] sm:$0xff]
    %v181 = vld [vmem:[#allocation5 + $0x270] sm:$0xff]
    %v182 = vld [vmem:[#allocation5 + $0x278] sm:$0xff]
    %v183 = vld [vmem:[#allocation5 + $0x280] sm:$0xff]
    %v184 = vld [vmem:[#allocation5 + $0x288] sm:$0xff]
    %v185 = vld [vmem:[#allocation5 + $0x290] sm:$0xff]
    %v186 = vld [vmem:[#allocation5 + $0x298] sm:$0xff]
    %v187 = vld [vmem:[#allocation5 + $0x2a0] sm:$0xff]
    %v188 = vld [vmem:[#allocation5 + $0x2a8] sm:$0xff]
    %v189 = vld [vmem:[#allocation5 + $0x2b0] sm:$0xff]
    %v190 = vld [vmem:[#allocation5 + $0x2b8] sm:$0xff]
    %v191 = vld [vmem:[#allocation5 + $0x2c0] sm:$0xff]
    %v192 = vld [vmem:[#allocation5 + $0x2c8] sm:$0xff]
    %v193 = vld [vmem:[#allocation5 + $0x2d0] sm:$0xff]
    %v194 = vld [vmem:[#allocation5 + $0x2d8] sm:$0xff]
    %v195 = vld [vmem:[#allocation5 + $0x2e0] sm:$0xff]
    %v196 = vld [vmem:[#allocation5 + $0x2e8] sm:$0xff]
    %v197 = vld [vmem:[#allocation5 + $0x2f0] sm:$0xff]
    %v198 = vld [vmem:[#allocation5 + $0x2f8] sm:$0xff]
    %v199 = vld [vmem:[#allocation5 + $0x300] sm:$0xff]
    %v200 = vld [vmem:[#allocation5 + $0x308] sm:$0xff]
    %v201 = vld [vmem:[#allocation5 + $0x310] sm:$0xff]
    %v202 = vld [vmem:[#allocation5 + $0x318] sm:$0xff]
    %v203 = vld [vmem:[#allocation5 + $0x320] sm:$0xff]
    %v204 = vld [vmem:[#allocation5 + $0x328] sm:$0xff]
    %v205 = vld [vmem:[#allocation5 + $0x330] sm:$0xff]
    %v206 = vld [vmem:[#allocation5 + $0x338] sm:$0xff]
    %v207 = vld [vmem:[#allocation5 + $0x340] sm:$0xff]
    %v208 = vld [vmem:[#allocation5 + $0x348] sm:$0xff]
    %v209 = vld [vmem:[#allocation5 + $0x350] sm:$0xff]
    %v210 = vld [vmem:[#allocation5 + $0x358] sm:$0xff]
    %v211 = vld [vmem:[#allocation5 + $0x360] sm:$0xff]
    %v212 = vld [vmem:[#allocation5 + $0x368] sm:$0xff]
    %v213 = vld [vmem:[#allocation5 + $0x370] sm:$0xff]
    %v214 = vld [vmem:[#allocation5 + $0x378] sm:$0xff]
    %v215 = vld [vmem:[#allocation5 + $0x380] sm:$0xff]
    %v216 = vld [vmem:[#allocation5 + $0x388] sm:$0xff]
    %v217 = vld [vmem:[#allocation5 + $0x390] sm:$0xff]
    %v218 = vld [vmem:[#allocation5 + $0x398] sm:$0xff]
    %v219 = vld [vmem:[#allocation5 + $0x3a0] sm:$0xff]
    %v220 = vld [vmem:[#allocation5 + $0x3a8] sm:$0xff]
    %v221 = vld [vmem:[#allocation5 + $0x3b0] sm:$0xff]
    %v222 = vld [vmem:[#allocation5 + $0x3b8] sm:$0xff]
    %v223 = vld [vmem:[#allocation5 + $0x3c0] sm:$0xff]
    %v224 = vld [vmem:[#allocation5 + $0x3c8] sm:$0xff]
    %v225 = vld [vmem:[#allocation5 + $0x3d0] sm:$0xff]
    %v226 = vld [vmem:[#allocation5 + $0x3d8] sm:$0xff]
    %v227 = vld [vmem:[#allocation5 + $0x3e0] sm:$0xff]
    %v228 = vld [vmem:[#allocation5 + $0x3e8] sm:$0xff]
    %v229 = vld [vmem:[#allocation5 + $0x3f0] sm:$0xff]
    %v230 = vld [vmem:[#allocation5 + $0x3f8] sm:$0xff]
    %v231 = vld [vmem:[#allocation5 + $0x400] sm:$0xff]
    %v232 = vld [vmem:[#allocation5 + $0x408] sm:$0xff]
    %v233 = vld [vmem:[#allocation5 + $0x410] sm:$0xff]
    %v234 = vld [vmem:[#allocation5 + $0x418] sm:$0xff]
    %v235 = vld [vmem:[#allocation5 + $0x420] sm:$0xff]
    %v236 = vld [vmem:[#allocation5 + $0x428] sm:$0xff]
    %v237 = vld [vmem:[#allocation5 + $0x430] sm:$0xff]
    %v238 = vld [vmem:[#allocation5 + $0x438] sm:$0xff]
    %v239 = vld [vmem:[#allocation5 + $0x440] sm:$0xff]
    %v240 = vld [vmem:[#allocation5 + $0x448] sm:$0xff]
    %v241 = vld [vmem:[#allocation5 + $0x450] sm:$0xff]
    %v242 = vld [vmem:[#allocation5 + $0x458] sm:$0xff]
    %v243 = vld [vmem:[#allocation5 + $0x460] sm:$0xff]
    %v244 = vld [vmem:[#allocation5 + $0x468] sm:$0xff]
    %v245 = vld [vmem:[#allocation5 + $0x470] sm:$0xff]
    %v246 = vld [vmem:[#allocation5 + $0x478] sm:$0xff]
    %v247 = vld [vmem:[#allocation5 + $0x480] sm:$0xff]
    %v248 = vld [vmem:[#allocation5 + $0x488] sm:$0xff]
    %v249 = vld [vmem:[#allocation5 + $0x490] sm:$0xff]
    %v250 = vld [vmem:[#allocation5 + $0x498] sm:$0xff]
    %v251 = vld [vmem:[#allocation5 + $0x4a0] sm:$0xff]
    %v252 = vld [vmem:[#allocation5 + $0x4a8] sm:$0xff]
    %v253 = vld [vmem:[#allocation5 + $0x4b0] sm:$0xff]
    %v254 = vld [vmem:[#allocation5 + $0x4b8] sm:$0xff]
    %v255 = vld [vmem:[#allocation5 + $0x4c0] sm:$0xff]
    %v256 = vld [vmem:[#allocation5 + $0x4c8] sm:$0xff]
    %v257 = vld [vmem:[#allocation5 + $0x4d0] sm:$0xff]
    %v258 = vld [vmem:[#allocation5 + $0x4d8] sm:$0xff]
    %v259 = vld [vmem:[#allocation5 + $0x4e0] sm:$0xff]
    %v260 = vld [vmem:[#allocation5 + $0x4e8] sm:$0xff]
    %v261 = vld [vmem:[#allocation5 + $0x4f0] sm:$0xff]
    %v262 = vld [vmem:[#allocation5 + $0x4f8] sm:$0xff]
    %v263 = vld [vmem:[#allocation5 + $0x500] sm:$0xff]
    %v264 = vld [vmem:[#allocation5 + $0x508] sm:$0xff]
    %v265 = vld [vmem:[#allocation5 + $0x510] sm:$0xff]
    %v266 = vld [vmem:[#allocation5 + $0x518] sm:$0xff]
    %v267 = vld [vmem:[#allocation5 + $0x520] sm:$0xff]
    %v268 = vld [vmem:[#allocation5 + $0x528] sm:$0xff]
    %v269 = vld [vmem:[#allocation5 + $0x530] sm:$0xff]
    %v270 = vld [vmem:[#allocation5 + $0x538] sm:$0xff]
    %v271 = vld [vmem:[#allocation5 + $0x540] sm:$0xff]
    %v272 = vld [vmem:[#allocation5 + $0x548] sm:$0xff]
    %v273 = vld [vmem:[#allocation5 + $0x550] sm:$0xff]
    %v274 = vld [vmem:[#allocation5 + $0x558] sm:$0xff]
    %v275 = vld [vmem:[#allocation5 + $0x560] sm:$0xff]
    %v276 = vld [vmem:[#allocation5 + $0x568] sm:$0xff]
    %v277 = vld [vmem:[#allocation5 + $0x570] sm:$0xff]
    %v278 = vld [vmem:[#allocation5 + $0x578] sm:$0xff]
    %v279 = vld [vmem:[#allocation5 + $0x580] sm:$0xff]
    %v280 = vld [vmem:[#allocation5 + $0x588] sm:$0xff]
    %v281 = vld [vmem:[#allocation5 + $0x590] sm:$0xff]
    %v282 = vld [vmem:[#allocation5 + $0x598] sm:$0xff]
    %v283 = vld [vmem:[#allocation5 + $0x5a0] sm:$0xff]
    %v284 = vld [vmem:[#allocation5 + $0x5a8] sm:$0xff]
    %v285 = vld [vmem:[#allocation5 + $0x5b0] sm:$0xff]
    %v286 = vld [vmem:[#allocation5 + $0x5b8] sm:$0xff]
    %v287 = vld [vmem:[#allocation5 + $0x5c0] sm:$0xff]
    %v288 = vld [vmem:[#allocation5 + $0x5c8] sm:$0xff]
    %v289 = vld [vmem:[#allocation5 + $0x5d0] sm:$0xff]
    %v290 = vld [vmem:[#allocation5 + $0x5d8] sm:$0xff]
    %v291 = vld [vmem:[#allocation5 + $0x5e0] sm:$0xff]
    %v292 = vld [vmem:[#allocation5 + $0x5e8] sm:$0xff]
    %v293 = vld [vmem:[#allocation5 + $0x5f0] sm:$0xff]
    %v294 = vld [vmem:[#allocation5 + $0x5f8] sm:$0xff]
    %v295 = vld [vmem:[%s2] sm:$0xf]
    %v297 = vlaneseq
    %v298 = vshrl.u32 %v297, 7
    %v299 = vsub.s32 0, %v298
    %v300 = vrot.slane %v295, %v299
    %v301 = vlaneseq
    %v302 = vshrl.u32 %v301, 7
    %v303 = vsub.s32 1, %v302
    %v304 = vrot.slane %v295, %v303
    %v305 = vlaneseq
    %v306 = vshrl.u32 %v305, 7
    %v307 = vsub.s32 2, %v306
    %v308 = vrot.slane %v295, %v307
    %v309 = vlaneseq
    %v310 = vshrl.u32 %v309, 7
    %v311 = vsub.s32 3, %v310
    %v312 = vrot.slane %v295, %v311
    %v341 = vunpack.c.l.b16 %v79
    %v342 = vunpack.c.h.b16 %v79
    %v343 = vunpack.c.l.b16 %v80
    %v344 = vunpack.c.h.b16 %v80
    %v345 = vunpack.c.l.b16 %v81
    %v346 = vunpack.c.h.b16 %v81
    %v347 = vunpack.c.l.b16 %v82
    %v348 = vunpack.c.h.b16 %v82
    %v349 = vunpack.c.l.b16 %v83
    %v350 = vunpack.c.h.b16 %v83
    %v351 = vunpack.c.l.b16 %v84
    %v352 = vunpack.c.h.b16 %v84
    %v353 = vunpack.c.l.b16 %v85
    %v354 = vunpack.c.h.b16 %v85
    %v355 = vunpack.c.l.b16 %v86
    %v356 = vunpack.c.h.b16 %v86
    %v357 = vunpack.c.l.b16 %v87
    %v358 = vunpack.c.h.b16 %v87
    %v359 = vunpack.c.l.b16 %v88
    %v360 = vunpack.c.h.b16 %v88
    %v361 = vunpack.c.l.b16 %v89
    %v362 = vunpack.c.h.b16 %v89
    %v363 = vunpack.c.l.b16 %v90
    %v364 = vunpack.c.h.b16 %v90
    %v365 = vunpack.c.l.b16 %v91
    %v366 = vunpack.c.h.b16 %v91
    %v367 = vunpack.c.l.b16 %v92
    %v368 = vunpack.c.h.b16 %v92
    %v369 = vunpack.c.l.b16 %v93
    %v370 = vunpack.c.h.b16 %v93
    %v371 = vunpack.c.l.b16 %v94
    %v372 = vunpack.c.h.b16 %v94
    %v373 = vunpack.c.l.b16 %v95
    %v374 = vunpack.c.h.b16 %v95
    %v375 = vunpack.c.l.b16 %v96
    %v376 = vunpack.c.h.b16 %v96
    %v377 = vunpack.c.l.b16 %v97
    %v378 = vunpack.c.h.b16 %v97
    %v379 = vunpack.c.l.b16 %v98
    %v380 = vunpack.c.h.b16 %v98
    %v381 = vunpack.c.l.b16 %v99
    %v382 = vunpack.c.h.b16 %v99
    %v383 = vunpack.c.l.b16 %v100
    %v384 = vunpack.c.h.b16 %v100
    %v385 = vunpack.c.l.b16 %v101
    %v386 = vunpack.c.h.b16 %v101
    %v387 = vunpack.c.l.b16 %v102
    %v388 = vunpack.c.h.b16 %v102
    %v389 = vpack.c.b16 %v347, %v341
    %v390 = vpack.c.b16 %v348, %v342
    %v391 = vpack.c.b16 %v349, %v343
    %v392 = vpack.c.b16 %v350, %v344
    %v393 = vpack.c.b16 %v351, %v345
    %v394 = vpack.c.b16 %v352, %v346
    %v395 = vpack.c.b16 %v359, %v353
    %v396 = vpack.c.b16 %v360, %v354
    %v397 = vpack.c.b16 %v361, %v355
    %v398 = vpack.c.b16 %v362, %v356
    %v399 = vpack.c.b16 %v363, %v357
    %v400 = vpack.c.b16 %v364, %v358
    %v401 = vpack.c.b16 %v371, %v365
    %v402 = vpack.c.b16 %v372, %v366
    %v403 = vpack.c.b16 %v373, %v367
    %v404 = vpack.c.b16 %v374, %v368
    %v405 = vpack.c.b16 %v375, %v369
    %v406 = vpack.c.b16 %v376, %v370
    %v407 = vpack.c.b16 %v383, %v377
    %v408 = vpack.c.b16 %v384, %v378
    %v409 = vpack.c.b16 %v385, %v379
    %v410 = vpack.c.b16 %v386, %v380
    %v411 = vpack.c.b16 %v387, %v381
    %v412 = vpack.c.b16 %v388, %v382
    %v629 = vunpack.c.l.b16 %v103
    %v630 = vunpack.c.h.b16 %v103
    %v631 = vunpack.c.l.b16 %v104
    %v632 = vunpack.c.h.b16 %v104
    %v633 = vunpack.c.l.b16 %v105
    %v634 = vunpack.c.h.b16 %v105
    %v635 = vunpack.c.l.b16 %v106
    %v636 = vunpack.c.h.b16 %v106
    %v637 = vunpack.c.l.b16 %v107
    %v638 = vunpack.c.h.b16 %v107
    %v639 = vunpack.c.l.b16 %v108
    %v640 = vunpack.c.h.b16 %v108
    %v641 = vunpack.c.l.b16 %v109
    %v642 = vunpack.c.h.b16 %v109
    %v643 = vunpack.c.l.b16 %v110
    %v644 = vunpack.c.h.b16 %v110
    %v645 = vunpack.c.l.b16 %v111
    %v646 = vunpack.c.h.b16 %v111
    %v647 = vunpack.c.l.b16 %v112
    %v648 = vunpack.c.h.b16 %v112
    %v649 = vunpack.c.l.b16 %v113
    %v650 = vunpack.c.h.b16 %v113
    %v651 = vunpack.c.l.b16 %v114
    %v652 = vunpack.c.h.b16 %v114
    %v653 = vunpack.c.l.b16 %v115
    %v654 = vunpack.c.h.b16 %v115
    %v655 = vunpack.c.l.b16 %v116
    %v656 = vunpack.c.h.b16 %v116
    %v657 = vunpack.c.l.b16 %v117
    %v658 = vunpack.c.h.b16 %v117
    %v659 = vunpack.c.l.b16 %v118
    %v660 = vunpack.c.h.b16 %v118
    %v661 = vunpack.c.l.b16 %v119
    %v662 = vunpack.c.h.b16 %v119
    %v663 = vunpack.c.l.b16 %v120
    %v664 = vunpack.c.h.b16 %v120
    %v665 = vunpack.c.l.b16 %v121
    %v666 = vunpack.c.h.b16 %v121
    %v667 = vunpack.c.l.b16 %v122
    %v668 = vunpack.c.h.b16 %v122
    %v669 = vunpack.c.l.b16 %v123
    %v670 = vunpack.c.h.b16 %v123
    %v671 = vunpack.c.l.b16 %v124
    %v672 = vunpack.c.h.b16 %v124
    %v673 = vunpack.c.l.b16 %v125
    %v674 = vunpack.c.h.b16 %v125
    %v675 = vunpack.c.l.b16 %v126
    %v676 = vunpack.c.h.b16 %v126
    %v677 = vunpack.c.l.b16 %v127
    %v678 = vunpack.c.h.b16 %v127
    %v679 = vunpack.c.l.b16 %v128
    %v680 = vunpack.c.h.b16 %v128
    %v681 = vunpack.c.l.b16 %v129
    %v682 = vunpack.c.h.b16 %v129
    %v683 = vunpack.c.l.b16 %v130
    %v684 = vunpack.c.h.b16 %v130
    %v685 = vunpack.c.l.b16 %v131
    %v686 = vunpack.c.h.b16 %v131
    %v687 = vunpack.c.l.b16 %v132
    %v688 = vunpack.c.h.b16 %v132
    %v689 = vunpack.c.l.b16 %v133
    %v690 = vunpack.c.h.b16 %v133
    %v691 = vunpack.c.l.b16 %v134
    %v692 = vunpack.c.h.b16 %v134
    %v693 = vunpack.c.l.b16 %v135
    %v694 = vunpack.c.h.b16 %v135
    %v695 = vunpack.c.l.b16 %v136
    %v696 = vunpack.c.h.b16 %v136
    %v697 = vunpack.c.l.b16 %v137
    %v698 = vunpack.c.h.b16 %v137
    %v699 = vunpack.c.l.b16 %v138
    %v700 = vunpack.c.h.b16 %v138
    %v701 = vunpack.c.l.b16 %v139
    %v702 = vunpack.c.h.b16 %v139
    %v703 = vunpack.c.l.b16 %v140
    %v704 = vunpack.c.h.b16 %v140
    %v705 = vunpack.c.l.b16 %v141
    %v706 = vunpack.c.h.b16 %v141
    %v707 = vunpack.c.l.b16 %v142
    %v708 = vunpack.c.h.b16 %v142
    %v709 = vunpack.c.l.b16 %v143
    %v710 = vunpack.c.h.b16 %v143
    %v711 = vunpack.c.l.b16 %v144
    %v712 = vunpack.c.h.b16 %v144
    %v713 = vunpack.c.l.b16 %v145
    %v714 = vunpack.c.h.b16 %v145
    %v715 = vunpack.c.l.b16 %v146
    %v716 = vunpack.c.h.b16 %v146
    %v717 = vunpack.c.l.b16 %v147
    %v718 = vunpack.c.h.b16 %v147
    %v719 = vunpack.c.l.b16 %v148
    %v720 = vunpack.c.h.b16 %v148
    %v721 = vunpack.c.l.b16 %v149
    %v722 = vunpack.c.h.b16 %v149
    %v723 = vunpack.c.l.b16 %v150
    %v724 = vunpack.c.h.b16 %v150
    %v725 = vunpack.c.l.b16 %v151
    %v726 = vunpack.c.h.b16 %v151
    %v727 = vunpack.c.l.b16 %v152
    %v728 = vunpack.c.h.b16 %v152
    %v729 = vunpack.c.l.b16 %v153
    %v730 = vunpack.c.h.b16 %v153
    %v731 = vunpack.c.l.b16 %v154
    %v732 = vunpack.c.h.b16 %v154
    %v733 = vunpack.c.l.b16 %v155
    %v734 = vunpack.c.h.b16 %v155
    %v735 = vunpack.c.l.b16 %v156
    %v736 = vunpack.c.h.b16 %v156
    %v737 = vunpack.c.l.b16 %v157
    %v738 = vunpack.c.h.b16 %v157
    %v739 = vunpack.c.l.b16 %v158
    %v740 = vunpack.c.h.b16 %v158
    %v741 = vunpack.c.l.b16 %v159
    %v742 = vunpack.c.h.b16 %v159
    %v743 = vunpack.c.l.b16 %v160
    %v744 = vunpack.c.h.b16 %v160
    %v745 = vunpack.c.l.b16 %v161
    %v746 = vunpack.c.h.b16 %v161
    %v747 = vunpack.c.l.b16 %v162
    %v748 = vunpack.c.h.b16 %v162
    %v749 = vunpack.c.l.b16 %v163
    %v750 = vunpack.c.h.b16 %v163
    %v751 = vunpack.c.l.b16 %v164
    %v752 = vunpack.c.h.b16 %v164
    %v753 = vunpack.c.l.b16 %v165
    %v754 = vunpack.c.h.b16 %v165
    %v755 = vunpack.c.l.b16 %v166
    %v756 = vunpack.c.h.b16 %v166
    %v757 = vunpack.c.l.b16 %v167
    %v758 = vunpack.c.h.b16 %v167
    %v759 = vunpack.c.l.b16 %v168
    %v760 = vunpack.c.h.b16 %v168
    %v761 = vunpack.c.l.b16 %v169
    %v762 = vunpack.c.h.b16 %v169
    %v763 = vunpack.c.l.b16 %v170
    %v764 = vunpack.c.h.b16 %v170
    %v765 = vunpack.c.l.b16 %v171
    %v766 = vunpack.c.h.b16 %v171
    %v767 = vunpack.c.l.b16 %v172
    %v768 = vunpack.c.h.b16 %v172
    %v769 = vunpack.c.l.b16 %v173
    %v770 = vunpack.c.h.b16 %v173
    %v771 = vunpack.c.l.b16 %v174
    %v772 = vunpack.c.h.b16 %v174
    %v773 = vunpack.c.l.b16 %v175
    %v774 = vunpack.c.h.b16 %v175
    %v775 = vunpack.c.l.b16 %v176
    %v776 = vunpack.c.h.b16 %v176
    %v777 = vunpack.c.l.b16 %v177
    %v778 = vunpack.c.h.b16 %v177
    %v779 = vunpack.c.l.b16 %v178
    %v780 = vunpack.c.h.b16 %v178
    %v781 = vunpack.c.l.b16 %v179
    %v782 = vunpack.c.h.b16 %v179
    %v783 = vunpack.c.l.b16 %v180
    %v784 = vunpack.c.h.b16 %v180
    %v785 = vunpack.c.l.b16 %v181
    %v786 = vunpack.c.h.b16 %v181
    %v787 = vunpack.c.l.b16 %v182
    %v788 = vunpack.c.h.b16 %v182
    %v789 = vunpack.c.l.b16 %v183
    %v790 = vunpack.c.h.b16 %v183
    %v791 = vunpack.c.l.b16 %v184
    %v792 = vunpack.c.h.b16 %v184
    %v793 = vunpack.c.l.b16 %v185
    %v794 = vunpack.c.h.b16 %v185
    %v795 = vunpack.c.l.b16 %v186
    %v796 = vunpack.c.h.b16 %v186
    %v797 = vunpack.c.l.b16 %v187
    %v798 = vunpack.c.h.b16 %v187
    %v799 = vunpack.c.l.b16 %v188
    %v800 = vunpack.c.h.b16 %v188
    %v801 = vunpack.c.l.b16 %v189
    %v802 = vunpack.c.h.b16 %v189
    %v803 = vunpack.c.l.b16 %v190
    %v804 = vunpack.c.h.b16 %v190
    %v805 = vunpack.c.l.b16 %v191
    %v806 = vunpack.c.h.b16 %v191
    %v807 = vunpack.c.l.b16 %v192
    %v808 = vunpack.c.h.b16 %v192
    %v809 = vunpack.c.l.b16 %v193
    %v810 = vunpack.c.h.b16 %v193
    %v811 = vunpack.c.l.b16 %v194
    %v812 = vunpack.c.h.b16 %v194
    %v813 = vunpack.c.l.b16 %v195
    %v814 = vunpack.c.h.b16 %v195
    %v815 = vunpack.c.l.b16 %v196
    %v816 = vunpack.c.h.b16 %v196
    %v817 = vunpack.c.l.b16 %v197
    %v818 = vunpack.c.h.b16 %v197
    %v819 = vunpack.c.l.b16 %v198
    %v820 = vunpack.c.h.b16 %v198
    %v821 = vunpack.c.l.b16 %v199
    %v822 = vunpack.c.h.b16 %v199
    %v823 = vunpack.c.l.b16 %v200
    %v824 = vunpack.c.h.b16 %v200
    %v825 = vunpack.c.l.b16 %v201
    %v826 = vunpack.c.h.b16 %v201
    %v827 = vunpack.c.l.b16 %v202
    %v828 = vunpack.c.h.b16 %v202
    %v829 = vunpack.c.l.b16 %v203
    %v830 = vunpack.c.h.b16 %v203
    %v831 = vunpack.c.l.b16 %v204
    %v832 = vunpack.c.h.b16 %v204
    %v833 = vunpack.c.l.b16 %v205
    %v834 = vunpack.c.h.b16 %v205
    %v835 = vunpack.c.l.b16 %v206
    %v836 = vunpack.c.h.b16 %v206
    %v837 = vunpack.c.l.b16 %v207
    %v838 = vunpack.c.h.b16 %v207
    %v839 = vunpack.c.l.b16 %v208
    %v840 = vunpack.c.h.b16 %v208
    %v841 = vunpack.c.l.b16 %v209
    %v842 = vunpack.c.h.b16 %v209
    %v843 = vunpack.c.l.b16 %v210
    %v844 = vunpack.c.h.b16 %v210
    %v845 = vunpack.c.l.b16 %v211
    %v846 = vunpack.c.h.b16 %v211
    %v847 = vunpack.c.l.b16 %v212
    %v848 = vunpack.c.h.b16 %v212
    %v849 = vunpack.c.l.b16 %v213
    %v850 = vunpack.c.h.b16 %v213
    %v851 = vunpack.c.l.b16 %v214
    %v852 = vunpack.c.h.b16 %v214
    %v853 = vunpack.c.l.b16 %v215
    %v854 = vunpack.c.h.b16 %v215
    %v855 = vunpack.c.l.b16 %v216
    %v856 = vunpack.c.h.b16 %v216
    %v857 = vunpack.c.l.b16 %v217
    %v858 = vunpack.c.h.b16 %v217
    %v859 = vunpack.c.l.b16 %v218
    %v860 = vunpack.c.h.b16 %v218
    %v861 = vunpack.c.l.b16 %v219
    %v862 = vunpack.c.h.b16 %v219
    %v863 = vunpack.c.l.b16 %v220
    %v864 = vunpack.c.h.b16 %v220
    %v865 = vunpack.c.l.b16 %v221
    %v866 = vunpack.c.h.b16 %v221
    %v867 = vunpack.c.l.b16 %v222
    %v868 = vunpack.c.h.b16 %v222
    %v869 = vunpack.c.l.b16 %v223
    %v870 = vunpack.c.h.b16 %v223
    %v871 = vunpack.c.l.b16 %v224
    %v872 = vunpack.c.h.b16 %v224
    %v873 = vunpack.c.l.b16 %v225
    %v874 = vunpack.c.h.b16 %v225
    %v875 = vunpack.c.l.b16 %v226
    %v876 = vunpack.c.h.b16 %v226
    %v877 = vunpack.c.l.b16 %v227
    %v878 = vunpack.c.h.b16 %v227
    %v879 = vunpack.c.l.b16 %v228
    %v880 = vunpack.c.h.b16 %v228
    %v881 = vunpack.c.l.b16 %v229
    %v882 = vunpack.c.h.b16 %v229
    %v883 = vunpack.c.l.b16 %v230
    %v884 = vunpack.c.h.b16 %v230
    %v885 = vunpack.c.l.b16 %v231
    %v886 = vunpack.c.h.b16 %v231
    %v887 = vunpack.c.l.b16 %v232
    %v888 = vunpack.c.h.b16 %v232
    %v889 = vunpack.c.l.b16 %v233
    %v890 = vunpack.c.h.b16 %v233
    %v891 = vunpack.c.l.b16 %v234
    %v892 = vunpack.c.h.b16 %v234
    %v893 = vunpack.c.l.b16 %v235
    %v894 = vunpack.c.h.b16 %v235
    %v895 = vunpack.c.l.b16 %v236
    %v896 = vunpack.c.h.b16 %v236
    %v897 = vunpack.c.l.b16 %v237
    %v898 = vunpack.c.h.b16 %v237
    %v899 = vunpack.c.l.b16 %v238
    %v900 = vunpack.c.h.b16 %v238
    %v901 = vunpack.c.l.b16 %v239
    %v902 = vunpack.c.h.b16 %v239
    %v903 = vunpack.c.l.b16 %v240
    %v904 = vunpack.c.h.b16 %v240
    %v905 = vunpack.c.l.b16 %v241
    %v906 = vunpack.c.h.b16 %v241
    %v907 = vunpack.c.l.b16 %v242
    %v908 = vunpack.c.h.b16 %v242
    %v909 = vunpack.c.l.b16 %v243
    %v910 = vunpack.c.h.b16 %v243
    %v911 = vunpack.c.l.b16 %v244
    %v912 = vunpack.c.h.b16 %v244
    %v913 = vunpack.c.l.b16 %v245
    %v914 = vunpack.c.h.b16 %v245
    %v915 = vunpack.c.l.b16 %v246
    %v916 = vunpack.c.h.b16 %v246
    %v917 = vunpack.c.l.b16 %v247
    %v918 = vunpack.c.h.b16 %v247
    %v919 = vunpack.c.l.b16 %v248
    %v920 = vunpack.c.h.b16 %v248
    %v921 = vunpack.c.l.b16 %v249
    %v922 = vunpack.c.h.b16 %v249
    %v923 = vunpack.c.l.b16 %v250
    %v924 = vunpack.c.h.b16 %v250
    %v925 = vunpack.c.l.b16 %v251
    %v926 = vunpack.c.h.b16 %v251
    %v927 = vunpack.c.l.b16 %v252
    %v928 = vunpack.c.h.b16 %v252
    %v929 = vunpack.c.l.b16 %v253
    %v930 = vunpack.c.h.b16 %v253
    %v931 = vunpack.c.l.b16 %v254
    %v932 = vunpack.c.h.b16 %v254
    %v933 = vunpack.c.l.b16 %v255
    %v934 = vunpack.c.h.b16 %v255
    %v935 = vunpack.c.l.b16 %v256
    %v936 = vunpack.c.h.b16 %v256
    %v937 = vunpack.c.l.b16 %v257
    %v938 = vunpack.c.h.b16 %v257
    %v939 = vunpack.c.l.b16 %v258
    %v940 = vunpack.c.h.b16 %v258
    %v941 = vunpack.c.l.b16 %v259
    %v942 = vunpack.c.h.b16 %v259
    %v943 = vunpack.c.l.b16 %v260
    %v944 = vunpack.c.h.b16 %v260
    %v945 = vunpack.c.l.b16 %v261
    %v946 = vunpack.c.h.b16 %v261
    %v947 = vunpack.c.l.b16 %v262
    %v948 = vunpack.c.h.b16 %v262
    %v949 = vunpack.c.l.b16 %v263
    %v950 = vunpack.c.h.b16 %v263
    %v951 = vunpack.c.l.b16 %v264
    %v952 = vunpack.c.h.b16 %v264
    %v953 = vunpack.c.l.b16 %v265
    %v954 = vunpack.c.h.b16 %v265
    %v955 = vunpack.c.l.b16 %v266
    %v956 = vunpack.c.h.b16 %v266
    %v957 = vunpack.c.l.b16 %v267
    %v958 = vunpack.c.h.b16 %v267
    %v959 = vunpack.c.l.b16 %v268
    %v960 = vunpack.c.h.b16 %v268
    %v961 = vunpack.c.l.b16 %v269
    %v962 = vunpack.c.h.b16 %v269
    %v963 = vunpack.c.l.b16 %v270
    %v964 = vunpack.c.h.b16 %v270
    %v965 = vunpack.c.l.b16 %v271
    %v966 = vunpack.c.h.b16 %v271
    %v967 = vunpack.c.l.b16 %v272
    %v968 = vunpack.c.h.b16 %v272
    %v969 = vunpack.c.l.b16 %v273
    %v970 = vunpack.c.h.b16 %v273
    %v971 = vunpack.c.l.b16 %v274
    %v972 = vunpack.c.h.b16 %v274
    %v973 = vunpack.c.l.b16 %v275
    %v974 = vunpack.c.h.b16 %v275
    %v975 = vunpack.c.l.b16 %v276
    %v976 = vunpack.c.h.b16 %v276
    %v977 = vunpack.c.l.b16 %v277
    %v978 = vunpack.c.h.b16 %v277
    %v979 = vunpack.c.l.b16 %v278
    %v980 = vunpack.c.h.b16 %v278
    %v981 = vunpack.c.l.b16 %v279
    %v982 = vunpack.c.h.b16 %v279
    %v983 = vunpack.c.l.b16 %v280
    %v984 = vunpack.c.h.b16 %v280
    %v985 = vunpack.c.l.b16 %v281
    %v986 = vunpack.c.h.b16 %v281
    %v987 = vunpack.c.l.b16 %v282
    %v988 = vunpack.c.h.b16 %v282
    %v989 = vunpack.c.l.b16 %v283
    %v990 = vunpack.c.h.b16 %v283
    %v991 = vunpack.c.l.b16 %v284
    %v992 = vunpack.c.h.b16 %v284
    %v993 = vunpack.c.l.b16 %v285
    %v994 = vunpack.c.h.b16 %v285
    %v995 = vunpack.c.l.b16 %v286
    %v996 = vunpack.c.h.b16 %v286
    %v997 = vunpack.c.l.b16 %v287
    %v998 = vunpack.c.h.b16 %v287
    %v999 = vunpack.c.l.b16 %v288
    %v1000 = vunpack.c.h.b16 %v288
    %v1001 = vunpack.c.l.b16 %v289
    %v1002 = vunpack.c.h.b16 %v289
    %v1003 = vunpack.c.l.b16 %v290
    %v1004 = vunpack.c.h.b16 %v290
    %v1005 = vunpack.c.l.b16 %v291
    %v1006 = vunpack.c.h.b16 %v291
    %v1007 = vunpack.c.l.b16 %v292
    %v1008 = vunpack.c.h.b16 %v292
    %v1009 = vunpack.c.l.b16 %v293
    %v1010 = vunpack.c.h.b16 %v293
    %v1011 = vunpack.c.l.b16 %v294
    %v1012 = vunpack.c.h.b16 %v294
    %v1013 = vpack.c.b16 %v633, %v629
    %v1014 = vpack.c.b16 %v634, %v630
    %v1015 = vpack.c.b16 %v635, %v631
    %v1016 = vpack.c.b16 %v636, %v632
    %v1017 = vpack.c.b16 %v641, %v637
    %v1018 = vpack.c.b16 %v642, %v638
    %v1019 = vpack.c.b16 %v643, %v639
    %v1020 = vpack.c.b16 %v644, %v640
    %v1021 = vpack.c.b16 %v649, %v645
    %v1022 = vpack.c.b16 %v650, %v646
    %v1023 = vpack.c.b16 %v651, %v647
    %v1024 = vpack.c.b16 %v652, %v648
    %v1025 = vpack.c.b16 %v657, %v653
    %v1026 = vpack.c.b16 %v658, %v654
    %v1027 = vpack.c.b16 %v659, %v655
    %v1028 = vpack.c.b16 %v660, %v656
    %v1029 = vpack.c.b16 %v665, %v661
    %v1030 = vpack.c.b16 %v666, %v662
    %v1031 = vpack.c.b16 %v667, %v663
    %v1032 = vpack.c.b16 %v668, %v664
    %v1033 = vpack.c.b16 %v673, %v669
    %v1034 = vpack.c.b16 %v674, %v670
    %v1035 = vpack.c.b16 %v675, %v671
    %v1036 = vpack.c.b16 %v676, %v672
    %v1037 = vpack.c.b16 %v681, %v677
    %v1038 = vpack.c.b16 %v682, %v678
    %v1039 = vpack.c.b16 %v683, %v679
    %v1040 = vpack.c.b16 %v684, %v680
    %v1041 = vpack.c.b16 %v689, %v685
    %v1042 = vpack.c.b16 %v690, %v686
    %v1043 = vpack.c.b16 %v691, %v687
    %v1044 = vpack.c.b16 %v692, %v688
    %v1045 = vpack.c.b16 %v697, %v693
    %v1046 = vpack.c.b16 %v698, %v694
    %v1047 = vpack.c.b16 %v699, %v695
    %v1048 = vpack.c.b16 %v700, %v696
    %v1049 = vpack.c.b16 %v705, %v701
    %v1050 = vpack.c.b16 %v706, %v702
    %v1051 = vpack.c.b16 %v707, %v703
    %v1052 = vpack.c.b16 %v708, %v704
    %v1053 = vpack.c.b16 %v713, %v709
    %v1054 = vpack.c.b16 %v714, %v710
    %v1055 = vpack.c.b16 %v715, %v711
    %v1056 = vpack.c.b16 %v716, %v712
    %v1057 = vpack.c.b16 %v721, %v717
    %v1058 = vpack.c.b16 %v722, %v718
    %v1059 = vpack.c.b16 %v723, %v719
    %v1060 = vpack.c.b16 %v724, %v720
    %v1061 = vpack.c.b16 %v729, %v725
    %v1062 = vpack.c.b16 %v730, %v726
    %v1063 = vpack.c.b16 %v731, %v727
    %v1064 = vpack.c.b16 %v732, %v728
    %v1065 = vpack.c.b16 %v737, %v733
    %v1066 = vpack.c.b16 %v738, %v734
    %v1067 = vpack.c.b16 %v739, %v735
    %v1068 = vpack.c.b16 %v740, %v736
    %v1069 = vpack.c.b16 %v745, %v741
    %v1070 = vpack.c.b16 %v746, %v742
    %v1071 = vpack.c.b16 %v747, %v743
    %v1072 = vpack.c.b16 %v748, %v744
    %v1073 = vpack.c.b16 %v753, %v749
    %v1074 = vpack.c.b16 %v754, %v750
    %v1075 = vpack.c.b16 %v755, %v751
    %v1076 = vpack.c.b16 %v756, %v752
    %v1077 = vpack.c.b16 %v761, %v757
    %v1078 = vpack.c.b16 %v762, %v758
    %v1079 = vpack.c.b16 %v763, %v759
    %v1080 = vpack.c.b16 %v764, %v760
    %v1081 = vpack.c.b16 %v769, %v765
    %v1082 = vpack.c.b16 %v770, %v766
    %v1083 = vpack.c.b16 %v771, %v767
    %v1084 = vpack.c.b16 %v772, %v768
    %v1085 = vpack.c.b16 %v777, %v773
    %v1086 = vpack.c.b16 %v778, %v774
    %v1087 = vpack.c.b16 %v779, %v775
    %v1088 = vpack.c.b16 %v780, %v776
    %v1089 = vpack.c.b16 %v785, %v781
    %v1090 = vpack.c.b16 %v786, %v782
    %v1091 = vpack.c.b16 %v787, %v783
    %v1092 = vpack.c.b16 %v788, %v784
    %v1093 = vpack.c.b16 %v793, %v789
    %v1094 = vpack.c.b16 %v794, %v790
    %v1095 = vpack.c.b16 %v795, %v791
    %v1096 = vpack.c.b16 %v796, %v792
    %v1097 = vpack.c.b16 %v801, %v797
    %v1098 = vpack.c.b16 %v802, %v798
    %v1099 = vpack.c.b16 %v803, %v799
    %v1100 = vpack.c.b16 %v804, %v800
    %v1101 = vpack.c.b16 %v809, %v805
    %v1102 = vpack.c.b16 %v810, %v806
    %v1103 = vpack.c.b16 %v811, %v807
    %v1104 = vpack.c.b16 %v812, %v808
    %v1105 = vpack.c.b16 %v817, %v813
    %v1106 = vpack.c.b16 %v818, %v814
    %v1107 = vpack.c.b16 %v819, %v815
    %v1108 = vpack.c.b16 %v820, %v816
    %v1109 = vpack.c.b16 %v825, %v821
    %v1110 = vpack.c.b16 %v826, %v822
    %v1111 = vpack.c.b16 %v827, %v823
    %v1112 = vpack.c.b16 %v828, %v824
    %v1113 = vpack.c.b16 %v833, %v829
    %v1114 = vpack.c.b16 %v834, %v830
    %v1115 = vpack.c.b16 %v835, %v831
    %v1116 = vpack.c.b16 %v836, %v832
    %v1117 = vpack.c.b16 %v841, %v837
    %v1118 = vpack.c.b16 %v842, %v838
    %v1119 = vpack.c.b16 %v843, %v839
    %v1120 = vpack.c.b16 %v844, %v840
    %v1121 = vpack.c.b16 %v849, %v845
    %v1122 = vpack.c.b16 %v850, %v846
    %v1123 = vpack.c.b16 %v851, %v847
    %v1124 = vpack.c.b16 %v852, %v848
    %v1125 = vpack.c.b16 %v857, %v853
    %v1126 = vpack.c.b16 %v858, %v854
    %v1127 = vpack.c.b16 %v859, %v855
    %v1128 = vpack.c.b16 %v860, %v856
    %v1129 = vpack.c.b16 %v865, %v861
    %v1130 = vpack.c.b16 %v866, %v862
    %v1131 = vpack.c.b16 %v867, %v863
    %v1132 = vpack.c.b16 %v868, %v864
    %v1133 = vpack.c.b16 %v873, %v869
    %v1134 = vpack.c.b16 %v874, %v870
    %v1135 = vpack.c.b16 %v875, %v871
    %v1136 = vpack.c.b16 %v876, %v872
    %v1137 = vpack.c.b16 %v881, %v877
    %v1138 = vpack.c.b16 %v882, %v878
    %v1139 = vpack.c.b16 %v883, %v879
    %v1140 = vpack.c.b16 %v884, %v880
    %v1141 = vpack.c.b16 %v889, %v885
    %v1142 = vpack.c.b16 %v890, %v886
    %v1143 = vpack.c.b16 %v891, %v887
    %v1144 = vpack.c.b16 %v892, %v888
    %v1145 = vpack.c.b16 %v897, %v893
    %v1146 = vpack.c.b16 %v898, %v894
    %v1147 = vpack.c.b16 %v899, %v895
    %v1148 = vpack.c.b16 %v900, %v896
    %v1149 = vpack.c.b16 %v905, %v901
    %v1150 = vpack.c.b16 %v906, %v902
    %v1151 = vpack.c.b16 %v907, %v903
    %v1152 = vpack.c.b16 %v908, %v904
    %v1153 = vpack.c.b16 %v913, %v909
    %v1154 = vpack.c.b16 %v914, %v910
    %v1155 = vpack.c.b16 %v915, %v911
    %v1156 = vpack.c.b16 %v916, %v912
    %v1157 = vpack.c.b16 %v921, %v917
    %v1158 = vpack.c.b16 %v922, %v918
    %v1159 = vpack.c.b16 %v923, %v919
    %v1160 = vpack.c.b16 %v924, %v920
    %v1161 = vpack.c.b16 %v929, %v925
    %v1162 = vpack.c.b16 %v930, %v926
    %v1163 = vpack.c.b16 %v931, %v927
    %v1164 = vpack.c.b16 %v932, %v928
    %v1165 = vpack.c.b16 %v937, %v933
    %v1166 = vpack.c.b16 %v938, %v934
    %v1167 = vpack.c.b16 %v939, %v935
    %v1168 = vpack.c.b16 %v940, %v936
    %v1169 = vpack.c.b16 %v945, %v941
    %v1170 = vpack.c.b16 %v946, %v942
    %v1171 = vpack.c.b16 %v947, %v943
    %v1172 = vpack.c.b16 %v948, %v944
    %v1173 = vpack.c.b16 %v953, %v949
    %v1174 = vpack.c.b16 %v954, %v950
    %v1175 = vpack.c.b16 %v955, %v951
    %v1176 = vpack.c.b16 %v956, %v952
    %v1177 = vpack.c.b16 %v961, %v957
    %v1178 = vpack.c.b16 %v962, %v958
    %v1179 = vpack.c.b16 %v963, %v959
    %v1180 = vpack.c.b16 %v964, %v960
    %v1181 = vpack.c.b16 %v969, %v965
    %v1182 = vpack.c.b16 %v970, %v966
    %v1183 = vpack.c.b16 %v971, %v967
    %v1184 = vpack.c.b16 %v972, %v968
    %v1185 = vpack.c.b16 %v977, %v973
    %v1186 = vpack.c.b16 %v978, %v974
    %v1187 = vpack.c.b16 %v979, %v975
    %v1188 = vpack.c.b16 %v980, %v976
    %v1189 = vpack.c.b16 %v985, %v981
    %v1190 = vpack.c.b16 %v986, %v982
    %v1191 = vpack.c.b16 %v987, %v983
    %v1192 = vpack.c.b16 %v988, %v984
    %v1193 = vpack.c.b16 %v993, %v989
    %v1194 = vpack.c.b16 %v994, %v990
    %v1195 = vpack.c.b16 %v995, %v991
    %v1196 = vpack.c.b16 %v996, %v992
    %v1197 = vpack.c.b16 %v1001, %v997
    %v1198 = vpack.c.b16 %v1002, %v998
    %v1199 = vpack.c.b16 %v1003, %v999
    %v1200 = vpack.c.b16 %v1004, %v1000
    %v1201 = vpack.c.b16 %v1009, %v1005
    %v1202 = vpack.c.b16 %v1010, %v1006
    %v1203 = vpack.c.b16 %v1011, %v1007
    %v1204 = vpack.c.b16 %v1012, %v1008
    %1397 = vmatprep.subr.bf16.mxu0 %v1014
    %1398 = vmatpush1.bf16.msra.mxu0 %v1013
    %1399 = vmatprep.subr.bf16.mxu0 %v1018
    %1400 = vmatpush1.bf16.msra.mxu0 %v1017
    %1401 = vmatprep.subr.bf16.mxu0 %v1022
    %1402 = vmatpush1.bf16.msra.mxu0 %v1021
    %1403 = vmatprep.subr.bf16.mxu0 %v1026
    %1404 = vmatpush1.bf16.msra.mxu0 %v1025
    %1405 = vmatprep.subr.bf16.mxu0 %v1030
    %1406 = vmatpush1.bf16.msra.mxu0 %v1029
    %1407 = vmatprep.subr.bf16.mxu0 %v1034
    %1408 = vmatpush1.bf16.msra.mxu0 %v1033
    %1409 = vmatprep.subr.bf16.mxu0 %v1038
    %1410 = vmatpush1.bf16.msra.mxu0 %v1037
    %1411 = vmatprep.subr.bf16.mxu0 %v1042
    %1412 = vmatpush1.bf16.msra.mxu0 %v1041
    %1413 = vmatprep.subr.bf16.mxu0 %v1046
    %1414 = vmatpush1.bf16.msra.mxu0 %v1045
    %1415 = vmatprep.subr.bf16.mxu0 %v1050
    %1416 = vmatpush1.bf16.msra.mxu0 %v1049
    %1417 = vmatprep.subr.bf16.mxu0 %v1054
    %1418 = vmatpush1.bf16.msra.mxu0 %v1053
    %1419 = vmatprep.subr.bf16.mxu0 %v1058
    %1420 = vmatpush1.bf16.msra.mxu0 %v1057
    %1421 = vmatprep.subr.bf16.mxu0 %v1062
    %1422 = vmatpush1.bf16.msra.mxu0 %v1061
    %1423 = vmatprep.subr.bf16.mxu0 %v1066
    %1424 = vmatpush1.bf16.msra.mxu0 %v1065
    %1425 = vmatprep.subr.bf16.mxu0 %v1070
    %1426 = vmatpush1.bf16.msra.mxu0 %v1069
    %1427 = vmatprep.subr.bf16.mxu0 %v1074
    %1428 = vmatpush1.bf16.msra.mxu0 %v1073
    %1429 = vmatprep.mubr.bf16.mxu0 %v390
    %1430 = vmatmul.mubr.bf16.gmra.mrb[0].mxu0 %v389
    %v1431 = vpop.f32.mrb[0].mxu0
    %v1432 = vadd.f32 %v300, %v1431
    %v1433 = vpop.f32.mrb[0].mxu0
    %v1434 = vadd.f32 %v304, %v1433
    %v1435 = vpop.f32.mrb[0].mxu0
    %v1436 = vadd.f32 %v300, %v1435
    %v1437 = vpop.f32.mrb[0].mxu0
    %v1438 = vadd.f32 %v304, %v1437
    %1439 = vmatprep.mubr.bf16.mxu0 %v396
    %1440 = vmatmul.mubr.bf16.gmra.mrb[0].mxu0 %v395
    %v1441 = vpop.f32.mrb[0].mxu0
    %v1442 = vadd.f32 %v300, %v1441
    %v1443 = vpop.f32.mrb[0].mxu0
    %v1444 = vadd.f32 %v304, %v1443
    %v1445 = vpop.f32.mrb[0].mxu0
    %v1446 = vadd.f32 %v300, %v1445
    %v1447 = vpop.f32.mrb[0].mxu0
    %v1448 = vadd.f32 %v304, %v1447
    %1449 = vmatprep.mubr.bf16.mxu0 %v402
    %1450 = vmatmul.mubr.bf16.gmra.mrb[0].mxu0 %v401
    %v1451 = vpop.f32.mrb[0].mxu0
    %v1452 = vadd.f32 %v300, %v1451
    %v1453 = vpop.f32.mrb[0].mxu0
    %v1454 = vadd.f32 %v304, %v1453
    %v1455 = vpop.f32.mrb[0].mxu0
    %v1456 = vadd.f32 %v300, %v1455
    %v1457 = vpop.f32.mrb[0].mxu0
    %v1458 = vadd.f32 %v304, %v1457
    %1459 = vmatprep.mubr.bf16.mxu0 %v408
    %1460 = vmatmul.mubr.bf16.gmra.mrb[0].mxu0 %v407
    %v1461 = vpop.f32.mrb[0].mxu0
    %v1462 = vadd.f32 %v300, %v1461
    %v1463 = vpop.f32.mrb[0].mxu0
    %v1464 = vadd.f32 %v304, %v1463
    %v1465 = vpop.f32.mrb[0].mxu0
    %v1466 = vadd.f32 %v300, %v1465
    %v1467 = vpop.f32.mrb[0].mxu0
    %v1468 = vadd.f32 %v304, %v1467
    %1469 = vdwg.mxu0
    %1470 = vmatprep.subr.bf16.mxu0 %v1078
    %1471 = vmatpush1.bf16.msra.mxu0 %v1077
    %1472 = vmatprep.subr.bf16.mxu0 %v1082
    %1473 = vmatpush1.bf16.msra.mxu0 %v1081
    %1474 = vmatprep.subr.bf16.mxu0 %v1086
    %1475 = vmatpush1.bf16.msra.mxu0 %v1085
    %1476 = vmatprep.subr.bf16.mxu0 %v1090
    %1477 = vmatpush1.bf16.msra.mxu0 %v1089
    %1478 = vmatprep.subr.bf16.mxu0 %v1094
    %1479 = vmatpush1.bf16.msra.mxu0 %v1093
    %1480 = vmatprep.subr.bf16.mxu0 %v1098
    %1481 = vmatpush1.bf16.msra.mxu0 %v1097
    %1482 = vmatprep.subr.bf16.mxu0 %v1102
    %1483 = vmatpush1.bf16.msra.mxu0 %v1101
    %1484 = vmatprep.subr.bf16.mxu0 %v1106
    %1485 = vmatpush1.bf16.msra.mxu0 %v1105
    %1486 = vmatprep.subr.bf16.mxu0 %v1110
    %1487 = vmatpush1.bf16.msra.mxu0 %v1109
    %1488 = vmatprep.subr.bf16.mxu0 %v1114
    %1489 = vmatpush1.bf16.msra.mxu0 %v1113
    %1490 = vmatprep.subr.bf16.mxu0 %v1118
    %1491 = vmatpush1.bf16.msra.mxu0 %v1117
    %1492 = vmatprep.subr.bf16.mxu0 %v1122
    %1493 = vmatpush1.bf16.msra.mxu0 %v1121
    %1494 = vmatprep.subr.bf16.mxu0 %v1126
    %1495 = vmatpush1.bf16.msra.mxu0 %v1125
    %1496 = vmatprep.subr.bf16.mxu0 %v1130
    %1497 = vmatpush1.bf16.msra.mxu0 %v1129
    %1498 = vmatprep.subr.bf16.mxu0 %v1134
    %1499 = vmatpush1.bf16.msra.mxu0 %v1133
    %1500 = vmatprep.subr.bf16.mxu0 %v1138
    %1501 = vmatpush1.bf16.msra.mxu0 %v1137
    %1502 = vmatprep.mubr.bf16.mxu0 %v392
    %1503 = vmatmul.mubr.bf16.gmra.mrb[0].mxu0 %v391
    %v1504 = vpop.f32.mrb[0].mxu0
    %v1505 = vadd.f32 %v1432, %v1504
    %v1506 = vpop.f32.mrb[0].mxu0
    %v1507 = vadd.f32 %v1434, %v1506
    %v1508 = vpop.f32.mrb[0].mxu0
    %v1509 = vadd.f32 %v1436, %v1508
    %v1510 = vpop.f32.mrb[0].mxu0
    %v1511 = vadd.f32 %v1438, %v1510
    %1512 = vmatprep.mubr.bf16.mxu0 %v398
    %1513 = vmatmul.mubr.bf16.gmra.mrb[0].mxu0 %v397
    %v1514 = vpop.f32.mrb[0].mxu0
    %v1515 = vadd.f32 %v1442, %v1514
    %v1516 = vpop.f32.mrb[0].mxu0
    %v1517 = vadd.f32 %v1444, %v1516
    %v1518 = vpop.f32.mrb[0].mxu0
    %v1519 = vadd.f32 %v1446, %v1518
    %v1520 = vpop.f32.mrb[0].mxu0
    %v1521 = vadd.f32 %v1448, %v1520
    %1522 = vmatprep.mubr.bf16.mxu0 %v404
    %1523 = vmatmul.mubr.bf16.gmra.mrb[0].mxu0 %v403
    %v1524 = vpop.f32.mrb[0].mxu0
    %v1525 = vadd.f32 %v1452, %v1524
    %v1526 = vpop.f32.mrb[0].mxu0
    %v1527 = vadd.f32 %v1454, %v1526
    %v1528 = vpop.f32.mrb[0].mxu0
    %v1529 = vadd.f32 %v1456, %v1528
    %v1530 = vpop.f32.mrb[0].mxu0
    %v1531 = vadd.f32 %v1458, %v1530
    %1532 = vmatprep.mubr.bf16.mxu0 %v410
    %1533 = vmatmul.mubr.bf16.gmra.mrb[0].mxu0 %v409
    %v1534 = vpop.f32.mrb[0].mxu0
    %v1535 = vadd.f32 %v1462, %v1534
    %v1536 = vpop.f32.mrb[0].mxu0
    %v1537 = vadd.f32 %v1464, %v1536
    %v1538 = vpop.f32.mrb[0].mxu0
    %v1539 = vadd.f32 %v1466, %v1538
    %v1540 = vpop.f32.mrb[0].mxu0
    %v1541 = vadd.f32 %v1468, %v1540
    %1542 = vdwg.mxu0
    %1543 = vmatprep.subr.bf16.mxu0 %v1142
    %1544 = vmatpush1.bf16.msra.mxu0 %v1141
    %1545 = vmatprep.subr.bf16.mxu0 %v1146
    %1546 = vmatpush1.bf16.msra.mxu0 %v1145
    %1547 = vmatprep.subr.bf16.mxu0 %v1150
    %1548 = vmatpush1.bf16.msra.mxu0 %v1149
    %1549 = vmatprep.subr.bf16.mxu0 %v1154
    %1550 = vmatpush1.bf16.msra.mxu0 %v1153
    %1551 = vmatprep.subr.bf16.mxu0 %v1158
    %1552 = vmatpush1.bf16.msra.mxu0 %v1157
    %1553 = vmatprep.subr.bf16.mxu0 %v1162
    %1554 = vmatpush1.bf16.msra.mxu0 %v1161
    %1555 = vmatprep.subr.bf16.mxu0 %v1166
    %1556 = vmatpush1.bf16.msra.mxu0 %v1165
    %1557 = vmatprep.subr.bf16.mxu0 %v1170
    %1558 = vmatpush1.bf16.msra.mxu0 %v1169
    %1559 = vmatprep.subr.bf16.mxu0 %v1174
    %1560 = vmatpush1.bf16.msra.mxu0 %v1173
    %1561 = vmatprep.subr.bf16.mxu0 %v1178
    %1562 = vmatpush1.bf16.msra.mxu0 %v1177
    %1563 = vmatprep.subr.bf16.mxu0 %v1182
    %1564 = vmatpush1.bf16.msra.mxu0 %v1181
    %1565 = vmatprep.subr.bf16.mxu0 %v1186
    %1566 = vmatpush1.bf16.msra.mxu0 %v1185
    %1567 = vmatprep.subr.bf16.mxu0 %v1190
    %1568 = vmatpush1.bf16.msra.mxu0 %v1189
    %1569 = vmatprep.subr.bf16.mxu0 %v1194
    %1570 = vmatpush1.bf16.msra.mxu0 %v1193
    %1571 = vmatprep.subr.bf16.mxu0 %v1198
    %1572 = vmatpush1.bf16.msra.mxu0 %v1197
    %1573 = vmatprep.subr.bf16.mxu0 %v1202
    %1574 = vmatpush1.bf16.msra.mxu0 %v1201
    %1575 = vmatprep.mubr.bf16.mxu0 %v394
    %1576 = vmatmul.mubr.bf16.gmra.mrb[0].mxu0 %v393
    %v1577 = vpop.f32.mrb[0].mxu0
    %v1578 = vadd.f32 %v1505, %v1577
    %v1579 = vpop.f32.mrb[0].mxu0
    %v1580 = vadd.f32 %v1507, %v1579
    %v1581 = vpop.f32.mrb[0].mxu0
    %v1582 = vadd.f32 %v1509, %v1581
    %v1583 = vpop.f32.mrb[0].mxu0
    %v1584 = vadd.f32 %v1511, %v1583
    %1585 = vmatprep.mubr.bf16.mxu0 %v400
    %1586 = vmatmul.mubr.bf16.gmra.mrb[0].mxu0 %v399
    %v1587 = vpop.f32.mrb[0].mxu0
    %v1588 = vadd.f32 %v1515, %v1587
    %v1589 = vpop.f32.mrb[0].mxu0
    %v1590 = vadd.f32 %v1517, %v1589
    %v1591 = vpop.f32.mrb[0].mxu0
    %v1592 = vadd.f32 %v1519, %v1591
    %v1593 = vpop.f32.mrb[0].mxu0
    %v1594 = vadd.f32 %v1521, %v1593
    %1595 = vmatprep.mubr.bf16.mxu0 %v406
    %1596 = vmatmul.mubr.bf16.gmra.mrb[0].mxu0 %v405
    %v1597 = vpop.f32.mrb[0].mxu0
    %v1598 = vadd.f32 %v1525, %v1597
    %v1599 = vpop.f32.mrb[0].mxu0
    %v1600 = vadd.f32 %v1527, %v1599
    %v1601 = vpop.f32.mrb[0].mxu0
    %v1602 = vadd.f32 %v1529, %v1601
    %v1603 = vpop.f32.mrb[0].mxu0
    %v1604 = vadd.f32 %v1531, %v1603
    %1605 = vmatprep.mubr.bf16.mxu0 %v412
    %1606 = vmatmul.mubr.bf16.gmra.mrb[0].mxu0 %v411
    %v1607 = vpop.f32.mrb[0].mxu0
    %v1608 = vadd.f32 %v1535, %v1607
    %v1609 = vpop.f32.mrb[0].mxu0
    %v1610 = vadd.f32 %v1537, %v1609
    %v1611 = vpop.f32.mrb[0].mxu0
    %v1612 = vadd.f32 %v1539, %v1611
    %v1613 = vpop.f32.mrb[0].mxu0
    %v1614 = vadd.f32 %v1541, %v1613
    %1615 = vdwg.mxu0
    %1616 = vmatprep.subr.bf16.mxu0 %v1016
    %1617 = vmatpush1.bf16.msra.mxu0 %v1015
    %1618 = vmatprep.subr.bf16.mxu0 %v1020
    %1619 = vmatpush1.bf16.msra.mxu0 %v1019
    %1620 = vmatprep.subr.bf16.mxu0 %v1024
    %1621 = vmatpush1.bf16.msra.mxu0 %v1023
    %1622 = vmatprep.subr.bf16.mxu0 %v1028
    %1623 = vmatpush1.bf16.msra.mxu0 %v1027
    %1624 = vmatprep.subr.bf16.mxu0 %v1032
    %1625 = vmatpush1.bf16.msra.mxu0 %v1031
    %1626 = vmatprep.subr.bf16.mxu0 %v1036
    %1627 = vmatpush1.bf16.msra.mxu0 %v1035
    %1628 = vmatprep.subr.bf16.mxu0 %v1040
    %1629 = vmatpush1.bf16.msra.mxu0 %v1039
    %1630 = vmatprep.subr.bf16.mxu0 %v1044
    %1631 = vmatpush1.bf16.msra.mxu0 %v1043
    %1632 = vmatprep.subr.bf16.mxu0 %v1048
    %1633 = vmatpush1.bf16.msra.mxu0 %v1047
    %1634 = vmatprep.subr.bf16.mxu0 %v1052
    %1635 = vmatpush1.bf16.msra.mxu0 %v1051
    %1636 = vmatprep.subr.bf16.mxu0 %v1056
    %1637 = vmatpush1.bf16.msra.mxu0 %v1055
    %1638 = vmatprep.subr.bf16.mxu0 %v1060
    %1639 = vmatpush1.bf16.msra.mxu0 %v1059
    %1640 = vmatprep.subr.bf16.mxu0 %v1064
    %1641 = vmatpush1.bf16.msra.mxu0 %v1063
    %1642 = vmatprep.subr.bf16.mxu0 %v1068
    %1643 = vmatpush1.bf16.msra.mxu0 %v1067
    %1644 = vmatprep.subr.bf16.mxu0 %v1072
    %1645 = vmatpush1.bf16.msra.mxu0 %v1071
    %1646 = vmatprep.subr.bf16.mxu0 %v1076
    %1647 = vmatpush1.bf16.msra.mxu0 %v1075
    %1648 = vmatprep.mubr.bf16.mxu0 %v390
    %1649 = vmatmul.mubr.bf16.gmra.mrb[0].mxu0 %v389
    %v1650 = vpop.f32.mrb[0].mxu0
    %v1651 = vadd.f32 %v308, %v1650
    %v1652 = vpop.f32.mrb[0].mxu0
    %v1653 = vadd.f32 %v312, %v1652
    %v1654 = vpop.f32.mrb[0].mxu0
    %v1655 = vadd.f32 %v308, %v1654
    %v1656 = vpop.f32.mrb[0].mxu0
    %v1657 = vadd.f32 %v312, %v1656
    %1658 = vmatprep.mubr.bf16.mxu0 %v396
    %1659 = vmatmul.mubr.bf16.gmra.mrb[0].mxu0 %v395
    %v1660 = vpop.f32.mrb[0].mxu0
    %v1661 = vadd.f32 %v308, %v1660
    %v1662 = vpop.f32.mrb[0].mxu0
    %v1663 = vadd.f32 %v312, %v1662
    %v1664 = vpop.f32.mrb[0].mxu0
    %v1665 = vadd.f32 %v308, %v1664
    %v1666 = vpop.f32.mrb[0].mxu0
    %v1667 = vadd.f32 %v312, %v1666
    %1668 = vmatprep.mubr.bf16.mxu0 %v402
    %1669 = vmatmul.mubr.bf16.gmra.mrb[0].mxu0 %v401
    %v1670 = vpop.f32.mrb[0].mxu0
    %v1671 = vadd.f32 %v308, %v1670
    %v1672 = vpop.f32.mrb[0].mxu0
    %v1673 = vadd.f32 %v312, %v1672
    %v1674 = vpop.f32.mrb[0].mxu0
    %v1675 = vadd.f32 %v308, %v1674
    %v1676 = vpop.f32.mrb[0].mxu0
    %v1677 = vadd.f32 %v312, %v1676
    %1678 = vmatprep.mubr.bf16.mxu0 %v408
    %1679 = vmatmul.mubr.bf16.gmra.mrb[0].mxu0 %v407
    %v1680 = vpop.f32.mrb[0].mxu0
    %v1681 = vadd.f32 %v308, %v1680
    %v1682 = vpop.f32.mrb[0].mxu0
    %v1683 = vadd.f32 %v312, %v1682
    %v1684 = vpop.f32.mrb[0].mxu0
    %v1685 = vadd.f32 %v308, %v1684
    %v1686 = vpop.f32.mrb[0].mxu0
    %v1687 = vadd.f32 %v312, %v1686
    %1688 = vdwg.mxu0
    %1689 = vmatprep.subr.bf16.mxu0 %v1080
    %1690 = vmatpush1.bf16.msra.mxu0 %v1079
    %1691 = vmatprep.subr.bf16.mxu0 %v1084
    %1692 = vmatpush1.bf16.msra.mxu0 %v1083
    %1693 = vmatprep.subr.bf16.mxu0 %v1088
    %1694 = vmatpush1.bf16.msra.mxu0 %v1087
    %1695 = vmatprep.subr.bf16.mxu0 %v1092
    %1696 = vmatpush1.bf16.msra.mxu0 %v1091
    %1697 = vmatprep.subr.bf16.mxu0 %v1096
    %1698 = vmatpush1.bf16.msra.mxu0 %v1095
    %1699 = vmatprep.subr.bf16.mxu0 %v1100
    %1700 = vmatpush1.bf16.msra.mxu0 %v1099
    %1701 = vmatprep.subr.bf16.mxu0 %v1104
    %1702 = vmatpush1.bf16.msra.mxu0 %v1103
    %1703 = vmatprep.subr.bf16.mxu0 %v1108
    %1704 = vmatpush1.bf16.msra.mxu0 %v1107
    %1705 = vmatprep.subr.bf16.mxu0 %v1112
    %1706 = vmatpush1.bf16.msra.mxu0 %v1111
    %1707 = vmatprep.subr.bf16.mxu0 %v1116
    %1708 = vmatpush1.bf16.msra.mxu0 %v1115
    %1709 = vmatprep.subr.bf16.mxu0 %v1120
    %1710 = vmatpush1.bf16.msra.mxu0 %v1119
    %1711 = vmatprep.subr.bf16.mxu0 %v1124
    %1712 = vmatpush1.bf16.msra.mxu0 %v1123
    %1713 = vmatprep.subr.bf16.mxu0 %v1128
    %1714 = vmatpush1.bf16.msra.mxu0 %v1127
    %1715 = vmatprep.subr.bf16.mxu0 %v1132
    %1716 = vmatpush1.bf16.msra.mxu0 %v1131
    %1717 = vmatprep.subr.bf16.mxu0 %v1136
    %1718 = vmatpush1.bf16.msra.mxu0 %v1135
    %1719 = vmatprep.subr.bf16.mxu0 %v1140
    %1720 = vmatpush1.bf16.msra.mxu0 %v1139
    %1721 = vmatprep.mubr.bf16.mxu0 %v392
    %1722 = vmatmul.mubr.bf16.gmra.mrb[0].mxu0 %v391
    %v1723 = vpop.f32.mrb[0].mxu0
    %v1724 = vadd.f32 %v1651, %v1723
    %v1725 = vpop.f32.mrb[0].mxu0
    %v1726 = vadd.f32 %v1653, %v1725
    %v1727 = vpop.f32.mrb[0].mxu0
    %v1728 = vadd.f32 %v1655, %v1727
    %v1729 = vpop.f32.mrb[0].mxu0
    %v1730 = vadd.f32 %v1657, %v1729
    %1731 = vmatprep.mubr.bf16.mxu0 %v398
    %1732 = vmatmul.mubr.bf16.gmra.mrb[0].mxu0 %v397
    %v1733 = vpop.f32.mrb[0].mxu0
    %v1734 = vadd.f32 %v1661, %v1733
    %v1735 = vpop.f32.mrb[0].mxu0
    %v1736 = vadd.f32 %v1663, %v1735
    %v1737 = vpop.f32.mrb[0].mxu0
    %v1738 = vadd.f32 %v1665, %v1737
    %v1739 = vpop.f32.mrb[0].mxu0
    %v1740 = vadd.f32 %v1667, %v1739
    %1741 = vmatprep.mubr.bf16.mxu0 %v404
    %1742 = vmatmul.mubr.bf16.gmra.mrb[0].mxu0 %v403
    %v1743 = vpop.f32.mrb[0].mxu0
    %v1744 = vadd.f32 %v1671, %v1743
    %v1745 = vpop.f32.mrb[0].mxu0
    %v1746 = vadd.f32 %v1673, %v1745
    %v1747 = vpop.f32.mrb[0].mxu0
    %v1748 = vadd.f32 %v1675, %v1747
    %v1749 = vpop.f32.mrb[0].mxu0
    %v1750 = vadd.f32 %v1677, %v1749
    %1751 = vmatprep.mubr.bf16.mxu0 %v410
    %1752 = vmatmul.mubr.bf16.gmra.mrb[0].mxu0 %v409
    %v1753 = vpop.f32.mrb[0].mxu0
    %v1754 = vadd.f32 %v1681, %v1753
    %v1755 = vpop.f32.mrb[0].mxu0
    %v1756 = vadd.f32 %v1683, %v1755
    %v1757 = vpop.f32.mrb[0].mxu0
    %v1758 = vadd.f32 %v1685, %v1757
    %v1759 = vpop.f32.mrb[0].mxu0
    %v1760 = vadd.f32 %v1687, %v1759
    %1761 = vdwg.mxu0
    %1762 = vmatprep.subr.bf16.mxu0 %v1144
    %1763 = vmatpush1.bf16.msra.mxu0 %v1143
    %1764 = vmatprep.subr.bf16.mxu0 %v1148
    %1765 = vmatpush1.bf16.msra.mxu0 %v1147
    %1766 = vmatprep.subr.bf16.mxu0 %v1152
    %1767 = vmatpush1.bf16.msra.mxu0 %v1151
    %1768 = vmatprep.subr.bf16.mxu0 %v1156
    %1769 = vmatpush1.bf16.msra.mxu0 %v1155
    %1770 = vmatprep.subr.bf16.mxu0 %v1160
    %1771 = vmatpush1.bf16.msra.mxu0 %v1159
    %1772 = vmatprep.subr.bf16.mxu0 %v1164
    %1773 = vmatpush1.bf16.msra.mxu0 %v1163
    %1774 = vmatprep.subr.bf16.mxu0 %v1168
    %1775 = vmatpush1.bf16.msra.mxu0 %v1167
    %1776 = vmatprep.subr.bf16.mxu0 %v1172
    %1777 = vmatpush1.bf16.msra.mxu0 %v1171
    %1778 = vmatprep.subr.bf16.mxu0 %v1176
    %1779 = vmatpush1.bf16.msra.mxu0 %v1175
    %1780 = vmatprep.subr.bf16.mxu0 %v1180
    %1781 = vmatpush1.bf16.msra.mxu0 %v1179
    %1782 = vmatprep.subr.bf16.mxu0 %v1184
    %1783 = vmatpush1.bf16.msra.mxu0 %v1183
    %1784 = vmatprep.subr.bf16.mxu0 %v1188
    %1785 = vmatpush1.bf16.msra.mxu0 %v1187
    %1786 = vmatprep.subr.bf16.mxu0 %v1192
    %1787 = vmatpush1.bf16.msra.mxu0 %v1191
    %1788 = vmatprep.subr.bf16.mxu0 %v1196
    %1789 = vmatpush1.bf16.msra.mxu0 %v1195
    %1790 = vmatprep.subr.bf16.mxu0 %v1200
    %1791 = vmatpush1.bf16.msra.mxu0 %v1199
    %1792 = vmatprep.subr.bf16.mxu0 %v1204
    %1793 = vmatpush1.bf16.msra.mxu0 %v1203
    %1794 = vmatprep.mubr.bf16.mxu0 %v394
    %1795 = vmatmul.mubr.bf16.gmra.mrb[0].mxu0 %v393
    %v1796 = vpop.f32.mrb[0].mxu0
    %v1797 = vadd.f32 %v1724, %v1796
    %v1798 = vpop.f32.mrb[0].mxu0
    %v1799 = vadd.f32 %v1726, %v1798
    %v1800 = vpop.f32.mrb[0].mxu0
    %v1801 = vadd.f32 %v1728, %v1800
    %v1802 = vpop.f32.mrb[0].mxu0
    %v1803 = vadd.f32 %v1730, %v1802
    %1804 = vmatprep.mubr.bf16.mxu0 %v400
    %1805 = vmatmul.mubr.bf16.gmra.mrb[0].mxu0 %v399
    %v1806 = vpop.f32.mrb[0].mxu0
    %v1807 = vadd.f32 %v1734, %v1806
    %v1808 = vpop.f32.mrb[0].mxu0
    %v1809 = vadd.f32 %v1736, %v1808
    %v1810 = vpop.f32.mrb[0].mxu0
    %v1811 = vadd.f32 %v1738, %v1810
    %v1812 = vpop.f32.mrb[0].mxu0
    %v1813 = vadd.f32 %v1740, %v1812
    %1814 = vmatprep.mubr.bf16.mxu0 %v406
    %1815 = vmatmul.mubr.bf16.gmra.mrb[0].mxu0 %v405
    %v1816 = vpop.f32.mrb[0].mxu0
    %v1817 = vadd.f32 %v1744, %v1816
    %v1818 = vpop.f32.mrb[0].mxu0
    %v1819 = vadd.f32 %v1746, %v1818
    %v1820 = vpop.f32.mrb[0].mxu0
    %v1821 = vadd.f32 %v1748, %v1820
    %v1822 = vpop.f32.mrb[0].mxu0
    %v1823 = vadd.f32 %v1750, %v1822
    %1824 = vmatprep.mubr.bf16.mxu0 %v412
    %1825 = vmatmul.mubr.bf16.gmra.mrb[0].mxu0 %v411
    %v1826 = vpop.f32.mrb[0].mxu0
    %v1827 = vadd.f32 %v1754, %v1826
    %v1828 = vpop.f32.mrb[0].mxu0
    %v1829 = vadd.f32 %v1756, %v1828
    %v1830 = vpop.f32.mrb[0].mxu0
    %v1831 = vadd.f32 %v1758, %v1830
    %v1832 = vpop.f32.mrb[0].mxu0
    %v1833 = vadd.f32 %v1760, %v1832
    %1834 = vdwg.mxu0
    %v1835 = vmax.f32 %v1578, 0.0
    %v1836 = vmax.f32 %v1580, 0.0
    %v1837 = vmax.f32 %v1797, 0.0
    %v1838 = vmax.f32 %v1799, 0.0
    %v1839 = vmax.f32 %v1582, 0.0
    %v1840 = vmax.f32 %v1584, 0.0
    %v1841 = vmax.f32 %v1801, 0.0
    %v1842 = vmax.f32 %v1803, 0.0
    %v1843 = vmax.f32 %v1588, 0.0
    %v1844 = vmax.f32 %v1590, 0.0
    %v1845 = vmax.f32 %v1807, 0.0
    %v1846 = vmax.f32 %v1809, 0.0
    %v1847 = vmax.f32 %v1592, 0.0
    %v1848 = vmax.f32 %v1594, 0.0
    %v1849 = vmax.f32 %v1811, 0.0
    %v1850 = vmax.f32 %v1813, 0.0
    %v1851 = vmax.f32 %v1598, 0.0
    %v1852 = vmax.f32 %v1600, 0.0
    %v1853 = vmax.f32 %v1817, 0.0
    %v1854 = vmax.f32 %v1819, 0.0
    %v1855 = vmax.f32 %v1602, 0.0
    %v1856 = vmax.f32 %v1604, 0.0
    %v1857 = vmax.f32 %v1821, 0.0
    %v1858 = vmax.f32 %v1823, 0.0
    %v1859 = vmax.f32 %v1608, 0.0
    %v1860 = vmax.f32 %v1610, 0.0
    %v1861 = vmax.f32 %v1827, 0.0
    %v1862 = vmax.f32 %v1829, 0.0
    %v1863 = vmax.f32 %v1612, 0.0
    %v1864 = vmax.f32 %v1614, 0.0
    %v1865 = vmax.f32 %v1831, 0.0
    %v1866 = vmax.f32 %v1833, 0.0
    %v1867 = vpack.c.bf16 %v1839, %v1835
    %v1868 = vpack.c.bf16 %v1840, %v1836
    %v1869 = vpack.c.bf16 %v1841, %v1837
    %v1870 = vpack.c.bf16 %v1842, %v1838
    %v1871 = vpack.c.bf16 %v1847, %v1843
    %v1872 = vpack.c.bf16 %v1848, %v1844
    %v1873 = vpack.c.bf16 %v1849, %v1845
    %v1874 = vpack.c.bf16 %v1850, %v1846
    %v1875 = vpack.c.bf16 %v1855, %v1851
    %v1876 = vpack.c.bf16 %v1856, %v1852
    %v1877 = vpack.c.bf16 %v1857, %v1853
    %v1878 = vpack.c.bf16 %v1858, %v1854
    %v1879 = vpack.c.bf16 %v1863, %v1859
    %v1880 = vpack.c.bf16 %v1864, %v1860
    %v1881 = vpack.c.bf16 %v1865, %v1861
    %v1882 = vpack.c.bf16 %v1866, %v1862
    %v1883 = vld [vmem:[%s3] sm:$0xff]
    %v1884 = vld [vmem:[%s3 + $0x8] sm:$0xff]
    %v1885 = vld [vmem:[%s3 + $0x10] sm:$0xff]
    %v1886 = vld [vmem:[%s3 + $0x18] sm:$0xff]
    %v1887 = vld [vmem:[%s3 + $0x20] sm:$0xff]
    %v1888 = vld [vmem:[%s3 + $0x28] sm:$0xff]
    %v1889 = vld [vmem:[%s3 + $0x30] sm:$0xff]
    %v1890 = vld [vmem:[%s3 + $0x38] sm:$0xff]
    %v1891 = vld [vmem:[%s3 + $0x40] sm:$0xff]
    %v1892 = vld [vmem:[%s3 + $0x48] sm:$0xff]
    %v1893 = vld [vmem:[%s3 + $0x50] sm:$0xff]
    %v1894 = vld [vmem:[%s3 + $0x58] sm:$0xff]
    %v1895 = vld [vmem:[%s3 + $0x60] sm:$0xff]
    %v1896 = vld [vmem:[%s3 + $0x68] sm:$0xff]
    %v1897 = vld [vmem:[%s3 + $0x70] sm:$0xff]
    %v1898 = vld [vmem:[%s3 + $0x78] sm:$0xff]
    %v1899 = vld [vmem:[%s3 + $0x80] sm:$0xff]
    %v1900 = vld [vmem:[%s3 + $0x88] sm:$0xff]
    %v1901 = vld [vmem:[%s3 + $0x90] sm:$0xff]
    %v1902 = vld [vmem:[%s3 + $0x98] sm:$0xff]
    %v1903 = vld [vmem:[%s3 + $0xa0] sm:$0xff]
    %v1904 = vld [vmem:[%s3 + $0xa8] sm:$0xff]
    %v1905 = vld [vmem:[%s3 + $0xb0] sm:$0xff]
    %v1906 = vld [vmem:[%s3 + $0xb8] sm:$0xff]
    %v1907 = vld [vmem:[%s3 + $0xc0] sm:$0xff]
    %v1908 = vld [vmem:[%s3 + $0xc8] sm:$0xff]
    %v1909 = vld [vmem:[%s3 + $0xd0] sm:$0xff]
    %v1910 = vld [vmem:[%s3 + $0xd8] sm:$0xff]
    %v1911 = vld [vmem:[%s3 + $0xe0] sm:$0xff]
    %v1912 = vld [vmem:[%s3 + $0xe8] sm:$0xff]
    %v1913 = vld [vmem:[%s3 + $0xf0] sm:$0xff]
    %v1914 = vld [vmem:[%s3 + $0xf8] sm:$0xff]
    %v1915 = vld [vmem:[%s3 + $0x100] sm:$0xff]
    %v1916 = vld [vmem:[%s3 + $0x108] sm:$0xff]
    %v1917 = vld [vmem:[%s3 + $0x110] sm:$0xff]
    %v1918 = vld [vmem:[%s3 + $0x118] sm:$0xff]
    %v1919 = vld [vmem:[%s3 + $0x120] sm:$0xff]
    %v1920 = vld [vmem:[%s3 + $0x128] sm:$0xff]
    %v1921 = vld [vmem:[%s3 + $0x130] sm:$0xff]
    %v1922 = vld [vmem:[%s3 + $0x138] sm:$0xff]
    %v1923 = vld [vmem:[%s3 + $0x140] sm:$0xff]
    %v1924 = vld [vmem:[%s3 + $0x148] sm:$0xff]
    %v1925 = vld [vmem:[%s3 + $0x150] sm:$0xff]
    %v1926 = vld [vmem:[%s3 + $0x158] sm:$0xff]
    %v1927 = vld [vmem:[%s3 + $0x160] sm:$0xff]
    %v1928 = vld [vmem:[%s3 + $0x168] sm:$0xff]
    %v1929 = vld [vmem:[%s3 + $0x170] sm:$0xff]
    %v1930 = vld [vmem:[%s3 + $0x178] sm:$0xff]
    %v1931 = vld [vmem:[%s3 + $0x180] sm:$0xff]
    %v1932 = vld [vmem:[%s3 + $0x188] sm:$0xff]
    %v1933 = vld [vmem:[%s3 + $0x190] sm:$0xff]
    %v1934 = vld [vmem:[%s3 + $0x198] sm:$0xff]
    %v1935 = vld [vmem:[%s3 + $0x1a0] sm:$0xff]
    %v1936 = vld [vmem:[%s3 + $0x1a8] sm:$0xff]
    %v1937 = vld [vmem:[%s3 + $0x1b0] sm:$0xff]
    %v1938 = vld [vmem:[%s3 + $0x1b8] sm:$0xff]
    %v1939 = vld [vmem:[%s3 + $0x1c0] sm:$0xff]
    %v1940 = vld [vmem:[%s3 + $0x1c8] sm:$0xff]
    %v1941 = vld [vmem:[%s3 + $0x1d0] sm:$0xff]
    %v1942 = vld [vmem:[%s3 + $0x1d8] sm:$0xff]
    %v1943 = vld [vmem:[%s3 + $0x1e0] sm:$0xff]
    %v1944 = vld [vmem:[%s3 + $0x1e8] sm:$0xff]
    %v1945 = vld [vmem:[%s3 + $0x1f0] sm:$0xff]
    %v1946 = vld [vmem:[%s3 + $0x1f8] sm:$0xff]
    %v1947 = vld [vmem:[%s3 + $0x200] sm:$0xff]
    %v1948 = vld [vmem:[%s3 + $0x208] sm:$0xff]
    %v1949 = vld [vmem:[%s3 + $0x210] sm:$0xff]
    %v1950 = vld [vmem:[%s3 + $0x218] sm:$0xff]
    %v1951 = vld [vmem:[%s3 + $0x220] sm:$0xff]
    %v1952 = vld [vmem:[%s3 + $0x228] sm:$0xff]
    %v1953 = vld [vmem:[%s3 + $0x230] sm:$0xff]
    %v1954 = vld [vmem:[%s3 + $0x238] sm:$0xff]
    %v1955 = vld [vmem:[%s3 + $0x240] sm:$0xff]
    %v1956 = vld [vmem:[%s3 + $0x248] sm:$0xff]
    %v1957 = vld [vmem:[%s3 + $0x250] sm:$0xff]
    %v1958 = vld [vmem:[%s3 + $0x258] sm:$0xff]
    %v1959 = vld [vmem:[%s3 + $0x260] sm:$0xff]
    %v1960 = vld [vmem:[%s3 + $0x268] sm:$0xff]
    %v1961 = vld [vmem:[%s3 + $0x270] sm:$0xff]
    %v1962 = vld [vmem:[%s3 + $0x278] sm:$0xff]
    %v1963 = vld [vmem:[%s3 + $0x280] sm:$0xff]
    %v1964 = vld [vmem:[%s3 + $0x288] sm:$0xff]
    %v1965 = vld [vmem:[%s3 + $0x290] sm:$0xff]
    %v1966 = vld [vmem:[%s3 + $0x298] sm:$0xff]
    %v1967 = vld [vmem:[%s3 + $0x2a0] sm:$0xff]
    %v1968 = vld [vmem:[%s3 + $0x2a8] sm:$0xff]
    %v1969 = vld [vmem:[%s3 + $0x2b0] sm:$0xff]
    %v1970 = vld [vmem:[%s3 + $0x2b8] sm:$0xff]
    %v1971 = vld [vmem:[%s3 + $0x2c0] sm:$0xff]
    %v1972 = vld [vmem:[%s3 + $0x2c8] sm:$0xff]
    %v1973 = vld [vmem:[%s3 + $0x2d0] sm:$0xff]
    %v1974 = vld [vmem:[%s3 + $0x2d8] sm:$0xff]
    %v1975 = vld [vmem:[%s3 + $0x2e0] sm:$0xff]
    %v1976 = vld [vmem:[%s3 + $0x2e8] sm:$0xff]
    %v1977 = vld [vmem:[%s3 + $0x2f0] sm:$0xff]
    %v1978 = vld [vmem:[%s3 + $0x2f8] sm:$0xff]
    %v1979 = vld [vmem:[%s3 + $0x300] sm:$0xff]
    %v1980 = vld [vmem:[%s3 + $0x308] sm:$0xff]
    %v1981 = vld [vmem:[%s3 + $0x310] sm:$0xff]
    %v1982 = vld [vmem:[%s3 + $0x318] sm:$0xff]
    %v1983 = vld [vmem:[%s3 + $0x320] sm:$0xff]
    %v1984 = vld [vmem:[%s3 + $0x328] sm:$0xff]
    %v1985 = vld [vmem:[%s3 + $0x330] sm:$0xff]
    %v1986 = vld [vmem:[%s3 + $0x338] sm:$0xff]
    %v1987 = vld [vmem:[%s3 + $0x340] sm:$0xff]
    %v1988 = vld [vmem:[%s3 + $0x348] sm:$0xff]
    %v1989 = vld [vmem:[%s3 + $0x350] sm:$0xff]
    %v1990 = vld [vmem:[%s3 + $0x358] sm:$0xff]
    %v1991 = vld [vmem:[%s3 + $0x360] sm:$0xff]
    %v1992 = vld [vmem:[%s3 + $0x368] sm:$0xff]
    %v1993 = vld [vmem:[%s3 + $0x370] sm:$0xff]
    %v1994 = vld [vmem:[%s3 + $0x378] sm:$0xff]
    %v1995 = vld [vmem:[%s3 + $0x380] sm:$0xff]
    %v1996 = vld [vmem:[%s3 + $0x388] sm:$0xff]
    %v1997 = vld [vmem:[%s3 + $0x390] sm:$0xff]
    %v1998 = vld [vmem:[%s3 + $0x398] sm:$0xff]
    %v1999 = vld [vmem:[%s3 + $0x3a0] sm:$0xff]
    %v2000 = vld [vmem:[%s3 + $0x3a8] sm:$0xff]
    %v2001 = vld [vmem:[%s3 + $0x3b0] sm:$0xff]
    %v2002 = vld [vmem:[%s3 + $0x3b8] sm:$0xff]
    %v2003 = vld [vmem:[%s3 + $0x3c0] sm:$0xff]
    %v2004 = vld [vmem:[%s3 + $0x3c8] sm:$0xff]
    %v2005 = vld [vmem:[%s3 + $0x3d0] sm:$0xff]
    %v2006 = vld [vmem:[%s3 + $0x3d8] sm:$0xff]
    %v2007 = vld [vmem:[%s3 + $0x3e0] sm:$0xff]
    %v2008 = vld [vmem:[%s3 + $0x3e8] sm:$0xff]
    %v2009 = vld [vmem:[%s3 + $0x3f0] sm:$0xff]
    %v2010 = vld [vmem:[%s3 + $0x3f8] sm:$0xff]
    %v2011 = vld [vmem:[%s3 + $0x400] sm:$0xff]
    %v2012 = vld [vmem:[%s3 + $0x408] sm:$0xff]
    %v2013 = vld [vmem:[%s3 + $0x410] sm:$0xff]
    %v2014 = vld [vmem:[%s3 + $0x418] sm:$0xff]
    %v2015 = vld [vmem:[%s3 + $0x420] sm:$0xff]
    %v2016 = vld [vmem:[%s3 + $0x428] sm:$0xff]
    %v2017 = vld [vmem:[%s3 + $0x430] sm:$0xff]
    %v2018 = vld [vmem:[%s3 + $0x438] sm:$0xff]
    %v2019 = vld [vmem:[%s3 + $0x440] sm:$0xff]
    %v2020 = vld [vmem:[%s3 + $0x448] sm:$0xff]
    %v2021 = vld [vmem:[%s3 + $0x450] sm:$0xff]
    %v2022 = vld [vmem:[%s3 + $0x458] sm:$0xff]
    %v2023 = vld [vmem:[%s3 + $0x460] sm:$0xff]
    %v2024 = vld [vmem:[%s3 + $0x468] sm:$0xff]
    %v2025 = vld [vmem:[%s3 + $0x470] sm:$0xff]
    %v2026 = vld [vmem:[%s3 + $0x478] sm:$0xff]
    %v2027 = vld [vmem:[%s3 + $0x480] sm:$0xff]
    %v2028 = vld [vmem:[%s3 + $0x488] sm:$0xff]
    %v2029 = vld [vmem:[%s3 + $0x490] sm:$0xff]
    %v2030 = vld [vmem:[%s3 + $0x498] sm:$0xff]
    %v2031 = vld [vmem:[%s3 + $0x4a0] sm:$0xff]
    %v2032 = vld [vmem:[%s3 + $0x4a8] sm:$0xff]
    %v2033 = vld [vmem:[%s3 + $0x4b0] sm:$0xff]
    %v2034 = vld [vmem:[%s3 + $0x4b8] sm:$0xff]
    %v2035 = vld [vmem:[%s3 + $0x4c0] sm:$0xff]
    %v2036 = vld [vmem:[%s3 + $0x4c8] sm:$0xff]
    %v2037 = vld [vmem:[%s3 + $0x4d0] sm:$0xff]
    %v2038 = vld [vmem:[%s3 + $0x4d8] sm:$0xff]
    %v2039 = vld [vmem:[%s3 + $0x4e0] sm:$0xff]
    %v2040 = vld [vmem:[%s3 + $0x4e8] sm:$0xff]
    %v2041 = vld [vmem:[%s3 + $0x4f0] sm:$0xff]
    %v2042 = vld [vmem:[%s3 + $0x4f8] sm:$0xff]
    %v2043 = vld [vmem:[%s3 + $0x500] sm:$0xff]
    %v2044 = vld [vmem:[%s3 + $0x508] sm:$0xff]
    %v2045 = vld [vmem:[%s3 + $0x510] sm:$0xff]
    %v2046 = vld [vmem:[%s3 + $0x518] sm:$0xff]
    %v2047 = vld [vmem:[%s3 + $0x520] sm:$0xff]
    %v2048 = vld [vmem:[%s3 + $0x528] sm:$0xff]
    %v2049 = vld [vmem:[%s3 + $0x530] sm:$0xff]
    %v2050 = vld [vmem:[%s3 + $0x538] sm:$0xff]
    %v2051 = vld [vmem:[%s3 + $0x540] sm:$0xff]
    %v2052 = vld [vmem:[%s3 + $0x548] sm:$0xff]
    %v2053 = vld [vmem:[%s3 + $0x550] sm:$0xff]
    %v2054 = vld [vmem:[%s3 + $0x558] sm:$0xff]
    %v2055 = vld [vmem:[%s3 + $0x560] sm:$0xff]
    %v2056 = vld [vmem:[%s3 + $0x568] sm:$0xff]
    %v2057 = vld [vmem:[%s3 + $0x570] sm:$0xff]
    %v2058 = vld [vmem:[%s3 + $0x578] sm:$0xff]
    %v2059 = vld [vmem:[%s3 + $0x580] sm:$0xff]
    %v2060 = vld [vmem:[%s3 + $0x588] sm:$0xff]
    %v2061 = vld [vmem:[%s3 + $0x590] sm:$0xff]
    %v2062 = vld [vmem:[%s3 + $0x598] sm:$0xff]
    %v2063 = vld [vmem:[%s3 + $0x5a0] sm:$0xff]
    %v2064 = vld [vmem:[%s3 + $0x5a8] sm:$0xff]
    %v2065 = vld [vmem:[%s3 + $0x5b0] sm:$0xff]
    %v2066 = vld [vmem:[%s3 + $0x5b8] sm:$0xff]
    %v2067 = vld [vmem:[%s3 + $0x5c0] sm:$0xff]
    %v2068 = vld [vmem:[%s3 + $0x5c8] sm:$0xff]
    %v2069 = vld [vmem:[%s3 + $0x5d0] sm:$0xff]
    %v2070 = vld [vmem:[%s3 + $0x5d8] sm:$0xff]
    %v2071 = vld [vmem:[%s3 + $0x5e0] sm:$0xff]
    %v2072 = vld [vmem:[%s3 + $0x5e8] sm:$0xff]
    %v2073 = vld [vmem:[%s3 + $0x5f0] sm:$0xff]
    %v2074 = vld [vmem:[%s3 + $0x5f8] sm:$0xff]
    %v2075 = vld [vmem:[%s3 + $0x600] sm:$0xff]
    %v2076 = vld [vmem:[%s3 + $0x608] sm:$0xff]
    %v2077 = vld [vmem:[%s3 + $0x610] sm:$0xff]
    %v2078 = vld [vmem:[%s3 + $0x618] sm:$0xff]
    %v2079 = vld [vmem:[%s3 + $0x620] sm:$0xff]
    %v2080 = vld [vmem:[%s3 + $0x628] sm:$0xff]
    %v2081 = vld [vmem:[%s3 + $0x630] sm:$0xff]
    %v2082 = vld [vmem:[%s3 + $0x638] sm:$0xff]
    %v2083 = vld [vmem:[%s3 + $0x640] sm:$0xff]
    %v2084 = vld [vmem:[%s3 + $0x648] sm:$0xff]
    %v2085 = vld [vmem:[%s3 + $0x650] sm:$0xff]
    %v2086 = vld [vmem:[%s3 + $0x658] sm:$0xff]
    %v2087 = vld [vmem:[%s3 + $0x660] sm:$0xff]
    %v2088 = vld [vmem:[%s3 + $0x668] sm:$0xff]
    %v2089 = vld [vmem:[%s3 + $0x670] sm:$0xff]
    %v2090 = vld [vmem:[%s3 + $0x678] sm:$0xff]
    %v2091 = vld [vmem:[%s3 + $0x680] sm:$0xff]
    %v2092 = vld [vmem:[%s3 + $0x688] sm:$0xff]
    %v2093 = vld [vmem:[%s3 + $0x690] sm:$0xff]
    %v2094 = vld [vmem:[%s3 + $0x698] sm:$0xff]
    %v2095 = vld [vmem:[%s3 + $0x6a0] sm:$0xff]
    %v2096 = vld [vmem:[%s3 + $0x6a8] sm:$0xff]
    %v2097 = vld [vmem:[%s3 + $0x6b0] sm:$0xff]
    %v2098 = vld [vmem:[%s3 + $0x6b8] sm:$0xff]
    %v2099 = vld [vmem:[%s3 + $0x6c0] sm:$0xff]
    %v2100 = vld [vmem:[%s3 + $0x6c8] sm:$0xff]
    %v2101 = vld [vmem:[%s3 + $0x6d0] sm:$0xff]
    %v2102 = vld [vmem:[%s3 + $0x6d8] sm:$0xff]
    %v2103 = vld [vmem:[%s3 + $0x6e0] sm:$0xff]
    %v2104 = vld [vmem:[%s3 + $0x6e8] sm:$0xff]
    %v2105 = vld [vmem:[%s3 + $0x6f0] sm:$0xff]
    %v2106 = vld [vmem:[%s3 + $0x6f8] sm:$0xff]
    %v2107 = vld [vmem:[%s3 + $0x700] sm:$0xff]
    %v2108 = vld [vmem:[%s3 + $0x708] sm:$0xff]
    %v2109 = vld [vmem:[%s3 + $0x710] sm:$0xff]
    %v2110 = vld [vmem:[%s3 + $0x718] sm:$0xff]
    %v2111 = vld [vmem:[%s3 + $0x720] sm:$0xff]
    %v2112 = vld [vmem:[%s3 + $0x728] sm:$0xff]
    %v2113 = vld [vmem:[%s3 + $0x730] sm:$0xff]
    %v2114 = vld [vmem:[%s3 + $0x738] sm:$0xff]
    %v2115 = vld [vmem:[%s3 + $0x740] sm:$0xff]
    %v2116 = vld [vmem:[%s3 + $0x748] sm:$0xff]
    %v2117 = vld [vmem:[%s3 + $0x750] sm:$0xff]
    %v2118 = vld [vmem:[%s3 + $0x758] sm:$0xff]
    %v2119 = vld [vmem:[%s3 + $0x760] sm:$0xff]
    %v2120 = vld [vmem:[%s3 + $0x768] sm:$0xff]
    %v2121 = vld [vmem:[%s3 + $0x770] sm:$0xff]
    %v2122 = vld [vmem:[%s3 + $0x778] sm:$0xff]
    %v2123 = vld [vmem:[%s3 + $0x780] sm:$0xff]
    %v2124 = vld [vmem:[%s3 + $0x788] sm:$0xff]
    %v2125 = vld [vmem:[%s3 + $0x790] sm:$0xff]
    %v2126 = vld [vmem:[%s3 + $0x798] sm:$0xff]
    %v2127 = vld [vmem:[%s3 + $0x7a0] sm:$0xff]
    %v2128 = vld [vmem:[%s3 + $0x7a8] sm:$0xff]
    %v2129 = vld [vmem:[%s3 + $0x7b0] sm:$0xff]
    %v2130 = vld [vmem:[%s3 + $0x7b8] sm:$0xff]
    %v2131 = vld [vmem:[%s3 + $0x7c0] sm:$0xff]
    %v2132 = vld [vmem:[%s3 + $0x7c8] sm:$0xff]
    %v2133 = vld [vmem:[%s3 + $0x7d0] sm:$0xff]
    %v2134 = vld [vmem:[%s3 + $0x7d8] sm:$0xff]
    %v2135 = vld [vmem:[%s3 + $0x7e0] sm:$0xff]
    %v2136 = vld [vmem:[%s3 + $0x7e8] sm:$0xff]
    %v2137 = vld [vmem:[%s3 + $0x7f0] sm:$0xff]
    %v2138 = vld [vmem:[%s3 + $0x7f8] sm:$0xff]
    %v2139 = vld [vmem:[%s4] sm:$0xff]
    %v2141 = vlaneseq
    %v2142 = vshrl.u32 %v2141, 7
    %v2143 = vsub.s32 0, %v2142
    %v2144 = vrot.slane %v2139, %v2143
    %v2145 = vlaneseq
    %v2146 = vshrl.u32 %v2145, 7
    %v2147 = vsub.s32 1, %v2146
    %v2148 = vrot.slane %v2139, %v2147
    %v2149 = vlaneseq
    %v2150 = vshrl.u32 %v2149, 7
    %v2151 = vsub.s32 2, %v2150
    %v2152 = vrot.slane %v2139, %v2151
    %v2153 = vlaneseq
    %v2154 = vshrl.u32 %v2153, 7
    %v2155 = vsub.s32 3, %v2154
    %v2156 = vrot.slane %v2139, %v2155
    %v2157 = vlaneseq
    %v2158 = vshrl.u32 %v2157, 7
    %v2159 = vsub.s32 4, %v2158
    %v2160 = vrot.slane %v2139, %v2159
    %v2161 = vlaneseq
    %v2162 = vshrl.u32 %v2161, 7
    %v2163 = vsub.s32 5, %v2162
    %v2164 = vrot.slane %v2139, %v2163
    %v2165 = vlaneseq
    %v2166 = vshrl.u32 %v2165, 7
    %v2167 = vsub.s32 6, %v2166
    %v2168 = vrot.slane %v2139, %v2167
    %v2169 = vlaneseq
    %v2170 = vshrl.u32 %v2169, 7
    %v2171 = vsub.s32 7, %v2170
    %v2172 = vrot.slane %v2139, %v2171
    %v2437 = vunpack.c.l.b16 %v1883
    %v2438 = vunpack.c.h.b16 %v1883
    %v2439 = vunpack.c.l.b16 %v1884
    %v2440 = vunpack.c.h.b16 %v1884
    %v2441 = vunpack.c.l.b16 %v1885
    %v2442 = vunpack.c.h.b16 %v1885
    %v2443 = vunpack.c.l.b16 %v1886
    %v2444 = vunpack.c.h.b16 %v1886
    %v2445 = vunpack.c.l.b16 %v1887
    %v2446 = vunpack.c.h.b16 %v1887
    %v2447 = vunpack.c.l.b16 %v1888
    %v2448 = vunpack.c.h.b16 %v1888
    %v2449 = vunpack.c.l.b16 %v1889
    %v2450 = vunpack.c.h.b16 %v1889
    %v2451 = vunpack.c.l.b16 %v1890
    %v2452 = vunpack.c.h.b16 %v1890
    %v2453 = vunpack.c.l.b16 %v1891
    %v2454 = vunpack.c.h.b16 %v1891
    %v2455 = vunpack.c.l.b16 %v1892
    %v2456 = vunpack.c.h.b16 %v1892
    %v2457 = vunpack.c.l.b16 %v1893
    %v2458 = vunpack.c.h.b16 %v1893
    %v2459 = vunpack.c.l.b16 %v1894
    %v2460 = vunpack.c.h.b16 %v1894
    %v2461 = vunpack.c.l.b16 %v1895
    %v2462 = vunpack.c.h.b16 %v1895
    %v2463 = vunpack.c.l.b16 %v1896
    %v2464 = vunpack.c.h.b16 %v1896
    %v2465 = vunpack.c.l.b16 %v1897
    %v2466 = vunpack.c.h.b16 %v1897
    %v2467 = vunpack.c.l.b16 %v1898
    %v2468 = vunpack.c.h.b16 %v1898
    %v2469 = vunpack.c.l.b16 %v1899
    %v2470 = vunpack.c.h.b16 %v1899
    %v2471 = vunpack.c.l.b16 %v1900
    %v2472 = vunpack.c.h.b16 %v1900
    %v2473 = vunpack.c.l.b16 %v1901
    %v2474 = vunpack.c.h.b16 %v1901
    %v2475 = vunpack.c.l.b16 %v1902
    %v2476 = vunpack.c.h.b16 %v1902
    %v2477 = vunpack.c.l.b16 %v1903
    %v2478 = vunpack.c.h.b16 %v1903
    %v2479 = vunpack.c.l.b16 %v1904
    %v2480 = vunpack.c.h.b16 %v1904
    %v2481 = vunpack.c.l.b16 %v1905
    %v2482 = vunpack.c.h.b16 %v1905
    %v2483 = vunpack.c.l.b16 %v1906
    %v2484 = vunpack.c.h.b16 %v1906
    %v2485 = vunpack.c.l.b16 %v1907
    %v2486 = vunpack.c.h.b16 %v1907
    %v2487 = vunpack.c.l.b16 %v1908
    %v2488 = vunpack.c.h.b16 %v1908
    %v2489 = vunpack.c.l.b16 %v1909
    %v2490 = vunpack.c.h.b16 %v1909
    %v2491 = vunpack.c.l.b16 %v1910
    %v2492 = vunpack.c.h.b16 %v1910
    %v2493 = vunpack.c.l.b16 %v1911
    %v2494 = vunpack.c.h.b16 %v1911
    %v2495 = vunpack.c.l.b16 %v1912
    %v2496 = vunpack.c.h.b16 %v1912
    %v2497 = vunpack.c.l.b16 %v1913
    %v2498 = vunpack.c.h.b16 %v1913
    %v2499 = vunpack.c.l.b16 %v1914
    %v2500 = vunpack.c.h.b16 %v1914
    %v2501 = vunpack.c.l.b16 %v1915
    %v2502 = vunpack.c.h.b16 %v1915
    %v2503 = vunpack.c.l.b16 %v1916
    %v2504 = vunpack.c.h.b16 %v1916
    %v2505 = vunpack.c.l.b16 %v1917
    %v2506 = vunpack.c.h.b16 %v1917
    %v2507 = vunpack.c.l.b16 %v1918
    %v2508 = vunpack.c.h.b16 %v1918
    %v2509 = vunpack.c.l.b16 %v1919
    %v2510 = vunpack.c.h.b16 %v1919
    %v2511 = vunpack.c.l.b16 %v1920
    %v2512 = vunpack.c.h.b16 %v1920
    %v2513 = vunpack.c.l.b16 %v1921
    %v2514 = vunpack.c.h.b16 %v1921
    %v2515 = vunpack.c.l.b16 %v1922
    %v2516 = vunpack.c.h.b16 %v1922
    %v2517 = vunpack.c.l.b16 %v1923
    %v2518 = vunpack.c.h.b16 %v1923
    %v2519 = vunpack.c.l.b16 %v1924
    %v2520 = vunpack.c.h.b16 %v1924
    %v2521 = vunpack.c.l.b16 %v1925
    %v2522 = vunpack.c.h.b16 %v1925
    %v2523 = vunpack.c.l.b16 %v1926
    %v2524 = vunpack.c.h.b16 %v1926
    %v2525 = vunpack.c.l.b16 %v1927
    %v2526 = vunpack.c.h.b16 %v1927
    %v2527 = vunpack.c.l.b16 %v1928
    %v2528 = vunpack.c.h.b16 %v1928
    %v2529 = vunpack.c.l.b16 %v1929
    %v2530 = vunpack.c.h.b16 %v1929
    %v2531 = vunpack.c.l.b16 %v1930
    %v2532 = vunpack.c.h.b16 %v1930
    %v2533 = vunpack.c.l.b16 %v1931
    %v2534 = vunpack.c.h.b16 %v1931
    %v2535 = vunpack.c.l.b16 %v1932
    %v2536 = vunpack.c.h.b16 %v1932
    %v2537 = vunpack.c.l.b16 %v1933
    %v2538 = vunpack.c.h.b16 %v1933
    %v2539 = vunpack.c.l.b16 %v1934
    %v2540 = vunpack.c.h.b16 %v1934
    %v2541 = vunpack.c.l.b16 %v1935
    %v2542 = vunpack.c.h.b16 %v1935
    %v2543 = vunpack.c.l.b16 %v1936
    %v2544 = vunpack.c.h.b16 %v1936
    %v2545 = vunpack.c.l.b16 %v1937
    %v2546 = vunpack.c.h.b16 %v1937
    %v2547 = vunpack.c.l.b16 %v1938
    %v2548 = vunpack.c.h.b16 %v1938
    %v2549 = vunpack.c.l.b16 %v1939
    %v2550 = vunpack.c.h.b16 %v1939
    %v2551 = vunpack.c.l.b16 %v1940
    %v2552 = vunpack.c.h.b16 %v1940
    %v2553 = vunpack.c.l.b16 %v1941
    %v2554 = vunpack.c.h.b16 %v1941
    %v2555 = vunpack.c.l.b16 %v1942
    %v2556 = vunpack.c.h.b16 %v1942
    %v2557 = vunpack.c.l.b16 %v1943
    %v2558 = vunpack.c.h.b16 %v1943
    %v2559 = vunpack.c.l.b16 %v1944
    %v2560 = vunpack.c.h.b16 %v1944
    %v2561 = vunpack.c.l.b16 %v1945
    %v2562 = vunpack.c.h.b16 %v1945
    %v2563 = vunpack.c.l.b16 %v1946
    %v2564 = vunpack.c.h.b16 %v1946
    %v2565 = vunpack.c.l.b16 %v1947
    %v2566 = vunpack.c.h.b16 %v1947
    %v2567 = vunpack.c.l.b16 %v1948
    %v2568 = vunpack.c.h.b16 %v1948
    %v2569 = vunpack.c.l.b16 %v1949
    %v2570 = vunpack.c.h.b16 %v1949
    %v2571 = vunpack.c.l.b16 %v1950
    %v2572 = vunpack.c.h.b16 %v1950
    %v2573 = vunpack.c.l.b16 %v1951
    %v2574 = vunpack.c.h.b16 %v1951
    %v2575 = vunpack.c.l.b16 %v1952
    %v2576 = vunpack.c.h.b16 %v1952
    %v2577 = vunpack.c.l.b16 %v1953
    %v2578 = vunpack.c.h.b16 %v1953
    %v2579 = vunpack.c.l.b16 %v1954
    %v2580 = vunpack.c.h.b16 %v1954
    %v2581 = vunpack.c.l.b16 %v1955
    %v2582 = vunpack.c.h.b16 %v1955
    %v2583 = vunpack.c.l.b16 %v1956
    %v2584 = vunpack.c.h.b16 %v1956
    %v2585 = vunpack.c.l.b16 %v1957
    %v2586 = vunpack.c.h.b16 %v1957
    %v2587 = vunpack.c.l.b16 %v1958
    %v2588 = vunpack.c.h.b16 %v1958
    %v2589 = vunpack.c.l.b16 %v1959
    %v2590 = vunpack.c.h.b16 %v1959
    %v2591 = vunpack.c.l.b16 %v1960
    %v2592 = vunpack.c.h.b16 %v1960
    %v2593 = vunpack.c.l.b16 %v1961
    %v2594 = vunpack.c.h.b16 %v1961
    %v2595 = vunpack.c.l.b16 %v1962
    %v2596 = vunpack.c.h.b16 %v1962
    %v2597 = vunpack.c.l.b16 %v1963
    %v2598 = vunpack.c.h.b16 %v1963
    %v2599 = vunpack.c.l.b16 %v1964
    %v2600 = vunpack.c.h.b16 %v1964
    %v2601 = vunpack.c.l.b16 %v1965
    %v2602 = vunpack.c.h.b16 %v1965
    %v2603 = vunpack.c.l.b16 %v1966
    %v2604 = vunpack.c.h.b16 %v1966
    %v2605 = vunpack.c.l.b16 %v1967
    %v2606 = vunpack.c.h.b16 %v1967
    %v2607 = vunpack.c.l.b16 %v1968
    %v2608 = vunpack.c.h.b16 %v1968
    %v2609 = vunpack.c.l.b16 %v1969
    %v2610 = vunpack.c.h.b16 %v1969
    %v2611 = vunpack.c.l.b16 %v1970
    %v2612 = vunpack.c.h.b16 %v1970
    %v2613 = vunpack.c.l.b16 %v1971
    %v2614 = vunpack.c.h.b16 %v1971
    %v2615 = vunpack.c.l.b16 %v1972
    %v2616 = vunpack.c.h.b16 %v1972
    %v2617 = vunpack.c.l.b16 %v1973
    %v2618 = vunpack.c.h.b16 %v1973
    %v2619 = vunpack.c.l.b16 %v1974
    %v2620 = vunpack.c.h.b16 %v1974
    %v2621 = vunpack.c.l.b16 %v1975
    %v2622 = vunpack.c.h.b16 %v1975
    %v2623 = vunpack.c.l.b16 %v1976
    %v2624 = vunpack.c.h.b16 %v1976
    %v2625 = vunpack.c.l.b16 %v1977
    %v2626 = vunpack.c.h.b16 %v1977
    %v2627 = vunpack.c.l.b16 %v1978
    %v2628 = vunpack.c.h.b16 %v1978
    %v2629 = vunpack.c.l.b16 %v1979
    %v2630 = vunpack.c.h.b16 %v1979
    %v2631 = vunpack.c.l.b16 %v1980
    %v2632 = vunpack.c.h.b16 %v1980
    %v2633 = vunpack.c.l.b16 %v1981
    %v2634 = vunpack.c.h.b16 %v1981
    %v2635 = vunpack.c.l.b16 %v1982
    %v2636 = vunpack.c.h.b16 %v1982
    %v2637 = vunpack.c.l.b16 %v1983
    %v2638 = vunpack.c.h.b16 %v1983
    %v2639 = vunpack.c.l.b16 %v1984
    %v2640 = vunpack.c.h.b16 %v1984
    %v2641 = vunpack.c.l.b16 %v1985
    %v2642 = vunpack.c.h.b16 %v1985
    %v2643 = vunpack.c.l.b16 %v1986
    %v2644 = vunpack.c.h.b16 %v1986
    %v2645 = vunpack.c.l.b16 %v1987
    %v2646 = vunpack.c.h.b16 %v1987
    %v2647 = vunpack.c.l.b16 %v1988
    %v2648 = vunpack.c.h.b16 %v1988
    %v2649 = vunpack.c.l.b16 %v1989
    %v2650 = vunpack.c.h.b16 %v1989
    %v2651 = vunpack.c.l.b16 %v1990
    %v2652 = vunpack.c.h.b16 %v1990
    %v2653 = vunpack.c.l.b16 %v1991
    %v2654 = vunpack.c.h.b16 %v1991
    %v2655 = vunpack.c.l.b16 %v1992
    %v2656 = vunpack.c.h.b16 %v1992
    %v2657 = vunpack.c.l.b16 %v1993
    %v2658 = vunpack.c.h.b16 %v1993
    %v2659 = vunpack.c.l.b16 %v1994
    %v2660 = vunpack.c.h.b16 %v1994
    %v2661 = vunpack.c.l.b16 %v1995
    %v2662 = vunpack.c.h.b16 %v1995
    %v2663 = vunpack.c.l.b16 %v1996
    %v2664 = vunpack.c.h.b16 %v1996
    %v2665 = vunpack.c.l.b16 %v1997
    %v2666 = vunpack.c.h.b16 %v1997
    %v2667 = vunpack.c.l.b16 %v1998
    %v2668 = vunpack.c.h.b16 %v1998
    %v2669 = vunpack.c.l.b16 %v1999
    %v2670 = vunpack.c.h.b16 %v1999
    %v2671 = vunpack.c.l.b16 %v2000
    %v2672 = vunpack.c.h.b16 %v2000
    %v2673 = vunpack.c.l.b16 %v2001
    %v2674 = vunpack.c.h.b16 %v2001
    %v2675 = vunpack.c.l.b16 %v2002
    %v2676 = vunpack.c.h.b16 %v2002
    %v2677 = vunpack.c.l.b16 %v2003
    %v2678 = vunpack.c.h.b16 %v2003
    %v2679 = vunpack.c.l.b16 %v2004
    %v2680 = vunpack.c.h.b16 %v2004
    %v2681 = vunpack.c.l.b16 %v2005
    %v2682 = vunpack.c.h.b16 %v2005
    %v2683 = vunpack.c.l.b16 %v2006
    %v2684 = vunpack.c.h.b16 %v2006
    %v2685 = vunpack.c.l.b16 %v2007
    %v2686 = vunpack.c.h.b16 %v2007
    %v2687 = vunpack.c.l.b16 %v2008
    %v2688 = vunpack.c.h.b16 %v2008
    %v2689 = vunpack.c.l.b16 %v2009
    %v2690 = vunpack.c.h.b16 %v2009
    %v2691 = vunpack.c.l.b16 %v2010
    %v2692 = vunpack.c.h.b16 %v2010
    %v2693 = vunpack.c.l.b16 %v2011
    %v2694 = vunpack.c.h.b16 %v2011
    %v2695 = vunpack.c.l.b16 %v2012
    %v2696 = vunpack.c.h.b16 %v2012
    %v2697 = vunpack.c.l.b16 %v2013
    %v2698 = vunpack.c.h.b16 %v2013
    %v2699 = vunpack.c.l.b16 %v2014
    %v2700 = vunpack.c.h.b16 %v2014
    %v2701 = vunpack.c.l.b16 %v2015
    %v2702 = vunpack.c.h.b16 %v2015
    %v2703 = vunpack.c.l.b16 %v2016
    %v2704 = vunpack.c.h.b16 %v2016
    %v2705 = vunpack.c.l.b16 %v2017
    %v2706 = vunpack.c.h.b16 %v2017
    %v2707 = vunpack.c.l.b16 %v2018
    %v2708 = vunpack.c.h.b16 %v2018
    %v2709 = vunpack.c.l.b16 %v2019
    %v2710 = vunpack.c.h.b16 %v2019
    %v2711 = vunpack.c.l.b16 %v2020
    %v2712 = vunpack.c.h.b16 %v2020
    %v2713 = vunpack.c.l.b16 %v2021
    %v2714 = vunpack.c.h.b16 %v2021
    %v2715 = vunpack.c.l.b16 %v2022
    %v2716 = vunpack.c.h.b16 %v2022
    %v2717 = vunpack.c.l.b16 %v2023
    %v2718 = vunpack.c.h.b16 %v2023
    %v2719 = vunpack.c.l.b16 %v2024
    %v2720 = vunpack.c.h.b16 %v2024
    %v2721 = vunpack.c.l.b16 %v2025
    %v2722 = vunpack.c.h.b16 %v2025
    %v2723 = vunpack.c.l.b16 %v2026
    %v2724 = vunpack.c.h.b16 %v2026
    %v2725 = vunpack.c.l.b16 %v2027
    %v2726 = vunpack.c.h.b16 %v2027
    %v2727 = vunpack.c.l.b16 %v2028
    %v2728 = vunpack.c.h.b16 %v2028
    %v2729 = vunpack.c.l.b16 %v2029
    %v2730 = vunpack.c.h.b16 %v2029
    %v2731 = vunpack.c.l.b16 %v2030
    %v2732 = vunpack.c.h.b16 %v2030
    %v2733 = vunpack.c.l.b16 %v2031
    %v2734 = vunpack.c.h.b16 %v2031
    %v2735 = vunpack.c.l.b16 %v2032
    %v2736 = vunpack.c.h.b16 %v2032
    %v2737 = vunpack.c.l.b16 %v2033
    %v2738 = vunpack.c.h.b16 %v2033
    %v2739 = vunpack.c.l.b16 %v2034
    %v2740 = vunpack.c.h.b16 %v2034
    %v2741 = vunpack.c.l.b16 %v2035
    %v2742 = vunpack.c.h.b16 %v2035
    %v2743 = vunpack.c.l.b16 %v2036
    %v2744 = vunpack.c.h.b16 %v2036
    %v2745 = vunpack.c.l.b16 %v2037
    %v2746 = vunpack.c.h.b16 %v2037
    %v2747 = vunpack.c.l.b16 %v2038
    %v2748 = vunpack.c.h.b16 %v2038
    %v2749 = vunpack.c.l.b16 %v2039
    %v2750 = vunpack.c.h.b16 %v2039
    %v2751 = vunpack.c.l.b16 %v2040
    %v2752 = vunpack.c.h.b16 %v2040
    %v2753 = vunpack.c.l.b16 %v2041
    %v2754 = vunpack.c.h.b16 %v2041
    %v2755 = vunpack.c.l.b16 %v2042
    %v2756 = vunpack.c.h.b16 %v2042
    %v2757 = vunpack.c.l.b16 %v2043
    %v2758 = vunpack.c.h.b16 %v2043
    %v2759 = vunpack.c.l.b16 %v2044
    %v2760 = vunpack.c.h.b16 %v2044
    %v2761 = vunpack.c.l.b16 %v2045
    %v2762 = vunpack.c.h.b16 %v2045
    %v2763 = vunpack.c.l.b16 %v2046
    %v2764 = vunpack.c.h.b16 %v2046
    %v2765 = vunpack.c.l.b16 %v2047
    %v2766 = vunpack.c.h.b16 %v2047
    %v2767 = vunpack.c.l.b16 %v2048
    %v2768 = vunpack.c.h.b16 %v2048
    %v2769 = vunpack.c.l.b16 %v2049
    %v2770 = vunpack.c.h.b16 %v2049
    %v2771 = vunpack.c.l.b16 %v2050
    %v2772 = vunpack.c.h.b16 %v2050
    %v2773 = vunpack.c.l.b16 %v2051
    %v2774 = vunpack.c.h.b16 %v2051
    %v2775 = vunpack.c.l.b16 %v2052
    %v2776 = vunpack.c.h.b16 %v2052
    %v2777 = vunpack.c.l.b16 %v2053
    %v2778 = vunpack.c.h.b16 %v2053
    %v2779 = vunpack.c.l.b16 %v2054
    %v2780 = vunpack.c.h.b16 %v2054
    %v2781 = vunpack.c.l.b16 %v2055
    %v2782 = vunpack.c.h.b16 %v2055
    %v2783 = vunpack.c.l.b16 %v2056
    %v2784 = vunpack.c.h.b16 %v2056
    %v2785 = vunpack.c.l.b16 %v2057
    %v2786 = vunpack.c.h.b16 %v2057
    %v2787 = vunpack.c.l.b16 %v2058
    %v2788 = vunpack.c.h.b16 %v2058
    %v2789 = vunpack.c.l.b16 %v2059
    %v2790 = vunpack.c.h.b16 %v2059
    %v2791 = vunpack.c.l.b16 %v2060
    %v2792 = vunpack.c.h.b16 %v2060
    %v2793 = vunpack.c.l.b16 %v2061
    %v2794 = vunpack.c.h.b16 %v2061
    %v2795 = vunpack.c.l.b16 %v2062
    %v2796 = vunpack.c.h.b16 %v2062
    %v2797 = vunpack.c.l.b16 %v2063
    %v2798 = vunpack.c.h.b16 %v2063
    %v2799 = vunpack.c.l.b16 %v2064
    %v2800 = vunpack.c.h.b16 %v2064
    %v2801 = vunpack.c.l.b16 %v2065
    %v2802 = vunpack.c.h.b16 %v2065
    %v2803 = vunpack.c.l.b16 %v2066
    %v2804 = vunpack.c.h.b16 %v2066
    %v2805 = vunpack.c.l.b16 %v2067
    %v2806 = vunpack.c.h.b16 %v2067
    %v2807 = vunpack.c.l.b16 %v2068
    %v2808 = vunpack.c.h.b16 %v2068
    %v2809 = vunpack.c.l.b16 %v2069
    %v2810 = vunpack.c.h.b16 %v2069
    %v2811 = vunpack.c.l.b16 %v2070
    %v2812 = vunpack.c.h.b16 %v2070
    %v2813 = vunpack.c.l.b16 %v2071
    %v2814 = vunpack.c.h.b16 %v2071
    %v2815 = vunpack.c.l.b16 %v2072
    %v2816 = vunpack.c.h.b16 %v2072
    %v2817 = vunpack.c.l.b16 %v2073
    %v2818 = vunpack.c.h.b16 %v2073
    %v2819 = vunpack.c.l.b16 %v2074
    %v2820 = vunpack.c.h.b16 %v2074
    %v2821 = vunpack.c.l.b16 %v2075
    %v2822 = vunpack.c.h.b16 %v2075
    %v2823 = vunpack.c.l.b16 %v2076
    %v2824 = vunpack.c.h.b16 %v2076
    %v2825 = vunpack.c.l.b16 %v2077
    %v2826 = vunpack.c.h.b16 %v2077
    %v2827 = vunpack.c.l.b16 %v2078
    %v2828 = vunpack.c.h.b16 %v2078
    %v2829 = vunpack.c.l.b16 %v2079
    %v2830 = vunpack.c.h.b16 %v2079
    %v2831 = vunpack.c.l.b16 %v2080
    %v2832 = vunpack.c.h.b16 %v2080
    %v2833 = vunpack.c.l.b16 %v2081
    %v2834 = vunpack.c.h.b16 %v2081
    %v2835 = vunpack.c.l.b16 %v2082
    %v2836 = vunpack.c.h.b16 %v2082
    %v2837 = vunpack.c.l.b16 %v2083
    %v2838 = vunpack.c.h.b16 %v2083
    %v2839 = vunpack.c.l.b16 %v2084
    %v2840 = vunpack.c.h.b16 %v2084
    %v2841 = vunpack.c.l.b16 %v2085
    %v2842 = vunpack.c.h.b16 %v2085
    %v2843 = vunpack.c.l.b16 %v2086
    %v2844 = vunpack.c.h.b16 %v2086
    %v2845 = vunpack.c.l.b16 %v2087
    %v2846 = vunpack.c.h.b16 %v2087
    %v2847 = vunpack.c.l.b16 %v2088
    %v2848 = vunpack.c.h.b16 %v2088
    %v2849 = vunpack.c.l.b16 %v2089
    %v2850 = vunpack.c.h.b16 %v2089
    %v2851 = vunpack.c.l.b16 %v2090
    %v2852 = vunpack.c.h.b16 %v2090
    %v2853 = vunpack.c.l.b16 %v2091
    %v2854 = vunpack.c.h.b16 %v2091
    %v2855 = vunpack.c.l.b16 %v2092
    %v2856 = vunpack.c.h.b16 %v2092
    %v2857 = vunpack.c.l.b16 %v2093
    %v2858 = vunpack.c.h.b16 %v2093
    %v2859 = vunpack.c.l.b16 %v2094
    %v2860 = vunpack.c.h.b16 %v2094
    %v2861 = vunpack.c.l.b16 %v2095
    %v2862 = vunpack.c.h.b16 %v2095
    %v2863 = vunpack.c.l.b16 %v2096
    %v2864 = vunpack.c.h.b16 %v2096
    %v2865 = vunpack.c.l.b16 %v2097
    %v2866 = vunpack.c.h.b16 %v2097
    %v2867 = vunpack.c.l.b16 %v2098
    %v2868 = vunpack.c.h.b16 %v2098
    %v2869 = vunpack.c.l.b16 %v2099
    %v2870 = vunpack.c.h.b16 %v2099
    %v2871 = vunpack.c.l.b16 %v2100
    %v2872 = vunpack.c.h.b16 %v2100
    %v2873 = vunpack.c.l.b16 %v2101
    %v2874 = vunpack.c.h.b16 %v2101
    %v2875 = vunpack.c.l.b16 %v2102
    %v2876 = vunpack.c.h.b16 %v2102
    %v2877 = vunpack.c.l.b16 %v2103
    %v2878 = vunpack.c.h.b16 %v2103
    %v2879 = vunpack.c.l.b16 %v2104
    %v2880 = vunpack.c.h.b16 %v2104
    %v2881 = vunpack.c.l.b16 %v2105
    %v2882 = vunpack.c.h.b16 %v2105
    %v2883 = vunpack.c.l.b16 %v2106
    %v2884 = vunpack.c.h.b16 %v2106
    %v2885 = vunpack.c.l.b16 %v2107
    %v2886 = vunpack.c.h.b16 %v2107
    %v2887 = vunpack.c.l.b16 %v2108
    %v2888 = vunpack.c.h.b16 %v2108
    %v2889 = vunpack.c.l.b16 %v2109
    %v2890 = vunpack.c.h.b16 %v2109
    %v2891 = vunpack.c.l.b16 %v2110
    %v2892 = vunpack.c.h.b16 %v2110
    %v2893 = vunpack.c.l.b16 %v2111
    %v2894 = vunpack.c.h.b16 %v2111
    %v2895 = vunpack.c.l.b16 %v2112
    %v2896 = vunpack.c.h.b16 %v2112
    %v2897 = vunpack.c.l.b16 %v2113
    %v2898 = vunpack.c.h.b16 %v2113
    %v2899 = vunpack.c.l.b16 %v2114
    %v2900 = vunpack.c.h.b16 %v2114
    %v2901 = vunpack.c.l.b16 %v2115
    %v2902 = vunpack.c.h.b16 %v2115
    %v2903 = vunpack.c.l.b16 %v2116
    %v2904 = vunpack.c.h.b16 %v2116
    %v2905 = vunpack.c.l.b16 %v2117
    %v2906 = vunpack.c.h.b16 %v2117
    %v2907 = vunpack.c.l.b16 %v2118
    %v2908 = vunpack.c.h.b16 %v2118
    %v2909 = vunpack.c.l.b16 %v2119
    %v2910 = vunpack.c.h.b16 %v2119
    %v2911 = vunpack.c.l.b16 %v2120
    %v2912 = vunpack.c.h.b16 %v2120
    %v2913 = vunpack.c.l.b16 %v2121
    %v2914 = vunpack.c.h.b16 %v2121
    %v2915 = vunpack.c.l.b16 %v2122
    %v2916 = vunpack.c.h.b16 %v2122
    %v2917 = vunpack.c.l.b16 %v2123
    %v2918 = vunpack.c.h.b16 %v2123
    %v2919 = vunpack.c.l.b16 %v2124
    %v2920 = vunpack.c.h.b16 %v2124
    %v2921 = vunpack.c.l.b16 %v2125
    %v2922 = vunpack.c.h.b16 %v2125
    %v2923 = vunpack.c.l.b16 %v2126
    %v2924 = vunpack.c.h.b16 %v2126
    %v2925 = vunpack.c.l.b16 %v2127
    %v2926 = vunpack.c.h.b16 %v2127
    %v2927 = vunpack.c.l.b16 %v2128
    %v2928 = vunpack.c.h.b16 %v2128
    %v2929 = vunpack.c.l.b16 %v2129
    %v2930 = vunpack.c.h.b16 %v2129
    %v2931 = vunpack.c.l.b16 %v2130
    %v2932 = vunpack.c.h.b16 %v2130
    %v2933 = vunpack.c.l.b16 %v2131
    %v2934 = vunpack.c.h.b16 %v2131
    %v2935 = vunpack.c.l.b16 %v2132
    %v2936 = vunpack.c.h.b16 %v2132
    %v2937 = vunpack.c.l.b16 %v2133
    %v2938 = vunpack.c.h.b16 %v2133
    %v2939 = vunpack.c.l.b16 %v2134
    %v2940 = vunpack.c.h.b16 %v2134
    %v2941 = vunpack.c.l.b16 %v2135
    %v2942 = vunpack.c.h.b16 %v2135
    %v2943 = vunpack.c.l.b16 %v2136
    %v2944 = vunpack.c.h.b16 %v2136
    %v2945 = vunpack.c.l.b16 %v2137
    %v2946 = vunpack.c.h.b16 %v2137
    %v2947 = vunpack.c.l.b16 %v2138
    %v2948 = vunpack.c.h.b16 %v2138
    %v2949 = vpack.c.b16 %v2445, %v2437
    %v2950 = vpack.c.b16 %v2446, %v2438
    %v2951 = vpack.c.b16 %v2447, %v2439
    %v2952 = vpack.c.b16 %v2448, %v2440
    %v2953 = vpack.c.b16 %v2449, %v2441
    %v2954 = vpack.c.b16 %v2450, %v2442
    %v2955 = vpack.c.b16 %v2451, %v2443
    %v2956 = vpack.c.b16 %v2452, %v2444
    %v2957 = vpack.c.b16 %v2461, %v2453
    %v2958 = vpack.c.b16 %v2462, %v2454
    %v2959 = vpack.c.b16 %v2463, %v2455
    %v2960 = vpack.c.b16 %v2464, %v2456
    %v2961 = vpack.c.b16 %v2465, %v2457
    %v2962 = vpack.c.b16 %v2466, %v2458
    %v2963 = vpack.c.b16 %v2467, %v2459
    %v2964 = vpack.c.b16 %v2468, %v2460
    %v2965 = vpack.c.b16 %v2477, %v2469
    %v2966 = vpack.c.b16 %v2478, %v2470
    %v2967 = vpack.c.b16 %v2479, %v2471
    %v2968 = vpack.c.b16 %v2480, %v2472
    %v2969 = vpack.c.b16 %v2481, %v2473
    %v2970 = vpack.c.b16 %v2482, %v2474
    %v2971 = vpack.c.b16 %v2483, %v2475
    %v2972 = vpack.c.b16 %v2484, %v2476
    %v2973 = vpack.c.b16 %v2493, %v2485
    %v2974 = vpack.c.b16 %v2494, %v2486
    %v2975 = vpack.c.b16 %v2495, %v2487
    %v2976 = vpack.c.b16 %v2496, %v2488
    %v2977 = vpack.c.b16 %v2497, %v2489
    %v2978 = vpack.c.b16 %v2498, %v2490
    %v2979 = vpack.c.b16 %v2499, %v2491
    %v2980 = vpack.c.b16 %v2500, %v2492
    %v2981 = vpack.c.b16 %v2509, %v2501
    %v2982 = vpack.c.b16 %v2510, %v2502
    %v2983 = vpack.c.b16 %v2511, %v2503
    %v2984 = vpack.c.b16 %v2512, %v2504
    %v2985 = vpack.c.b16 %v2513, %v2505
    %v2986 = vpack.c.b16 %v2514, %v2506
    %v2987 = vpack.c.b16 %v2515, %v2507
    %v2988 = vpack.c.b16 %v2516, %v2508
    %v2989 = vpack.c.b16 %v2525, %v2517
    %v2990 = vpack.c.b16 %v2526, %v2518
    %v2991 = vpack.c.b16 %v2527, %v2519
    %v2992 = vpack.c.b16 %v2528, %v2520
    %v2993 = vpack.c.b16 %v2529, %v2521
    %v2994 = vpack.c.b16 %v2530, %v2522
    %v2995 = vpack.c.b16 %v2531, %v2523
    %v2996 = vpack.c.b16 %v2532, %v2524
    %v2997 = vpack.c.b16 %v2541, %v2533
    %v2998 = vpack.c.b16 %v2542, %v2534
    %v2999 = vpack.c.b16 %v2543, %v2535
    %v3000 = vpack.c.b16 %v2544, %v2536
    %v3001 = vpack.c.b16 %v2545, %v2537
    %v3002 = vpack.c.b16 %v2546, %v2538
    %v3003 = vpack.c.b16 %v2547, %v2539
    %v3004 = vpack.c.b16 %v2548, %v2540
    %v3005 = vpack.c.b16 %v2557, %v2549
    %v3006 = vpack.c.b16 %v2558, %v2550
    %v3007 = vpack.c.b16 %v2559, %v2551
    %v3008 = vpack.c.b16 %v2560, %v2552
    %v3009 = vpack.c.b16 %v2561, %v2553
    %v3010 = vpack.c.b16 %v2562, %v2554
    %v3011 = vpack.c.b16 %v2563, %v2555
    %v3012 = vpack.c.b16 %v2564, %v2556
    %v3013 = vpack.c.b16 %v2573, %v2565
    %v3014 = vpack.c.b16 %v2574, %v2566
    %v3015 = vpack.c.b16 %v2575, %v2567
    %v3016 = vpack.c.b16 %v2576, %v2568
    %v3017 = vpack.c.b16 %v2577, %v2569
    %v3018 = vpack.c.b16 %v2578, %v2570
    %v3019 = vpack.c.b16 %v2579, %v2571
    %v3020 = vpack.c.b16 %v2580, %v2572
    %v3021 = vpack.c.b16 %v2589, %v2581
    %v3022 = vpack.c.b16 %v2590, %v2582
    %v3023 = vpack.c.b16 %v2591, %v2583
    %v3024 = vpack.c.b16 %v2592, %v2584
    %v3025 = vpack.c.b16 %v2593, %v2585
    %v3026 = vpack.c.b16 %v2594, %v2586
    %v3027 = vpack.c.b16 %v2595, %v2587
    %v3028 = vpack.c.b16 %v2596, %v2588
    %v3029 = vpack.c.b16 %v2605, %v2597
    %v3030 = vpack.c.b16 %v2606, %v2598
    %v3031 = vpack.c.b16 %v2607, %v2599
    %v3032 = vpack.c.b16 %v2608, %v2600
    %v3033 = vpack.c.b16 %v2609, %v2601
    %v3034 = vpack.c.b16 %v2610, %v2602
    %v3035 = vpack.c.b16 %v2611, %v2603
    %v3036 = vpack.c.b16 %v2612, %v2604
    %v3037 = vpack.c.b16 %v2621, %v2613
    %v3038 = vpack.c.b16 %v2622, %v2614
    %v3039 = vpack.c.b16 %v2623, %v2615
    %v3040 = vpack.c.b16 %v2624, %v2616
    %v3041 = vpack.c.b16 %v2625, %v2617
    %v3042 = vpack.c.b16 %v2626, %v2618
    %v3043 = vpack.c.b16 %v2627, %v2619
    %v3044 = vpack.c.b16 %v2628, %v2620
    %v3045 = vpack.c.b16 %v2637, %v2629
    %v3046 = vpack.c.b16 %v2638, %v2630
    %v3047 = vpack.c.b16 %v2639, %v2631
    %v3048 = vpack.c.b16 %v2640, %v2632
    %v3049 = vpack.c.b16 %v2641, %v2633
    %v3050 = vpack.c.b16 %v2642, %v2634
    %v3051 = vpack.c.b16 %v2643, %v2635
    %v3052 = vpack.c.b16 %v2644, %v2636
    %v3053 = vpack.c.b16 %v2653, %v2645
    %v3054 = vpack.c.b16 %v2654, %v2646
    %v3055 = vpack.c.b16 %v2655, %v2647
    %v3056 = vpack.c.b16 %v2656, %v2648
    %v3057 = vpack.c.b16 %v2657, %v2649
    %v3058 = vpack.c.b16 %v2658, %v2650
    %v3059 = vpack.c.b16 %v2659, %v2651
    %v3060 = vpack.c.b16 %v2660, %v2652
    %v3061 = vpack.c.b16 %v2669, %v2661
    %v3062 = vpack.c.b16 %v2670, %v2662
    %v3063 = vpack.c.b16 %v2671, %v2663
    %v3064 = vpack.c.b16 %v2672, %v2664
    %v3065 = vpack.c.b16 %v2673, %v2665
    %v3066 = vpack.c.b16 %v2674, %v2666
    %v3067 = vpack.c.b16 %v2675, %v2667
    %v3068 = vpack.c.b16 %v2676, %v2668
    %v3069 = vpack.c.b16 %v2685, %v2677
    %v3070 = vpack.c.b16 %v2686, %v2678
    %v3071 = vpack.c.b16 %v2687, %v2679
    %v3072 = vpack.c.b16 %v2688, %v2680
    %v3073 = vpack.c.b16 %v2689, %v2681
    %v3074 = vpack.c.b16 %v2690, %v2682
    %v3075 = vpack.c.b16 %v2691, %v2683
    %v3076 = vpack.c.b16 %v2692, %v2684
    %v3077 = vpack.c.b16 %v2701, %v2693
    %v3078 = vpack.c.b16 %v2702, %v2694
    %v3079 = vpack.c.b16 %v2703, %v2695
    %v3080 = vpack.c.b16 %v2704, %v2696
    %v3081 = vpack.c.b16 %v2705, %v2697
    %v3082 = vpack.c.b16 %v2706, %v2698
    %v3083 = vpack.c.b16 %v2707, %v2699
    %v3084 = vpack.c.b16 %v2708, %v2700
    %v3085 = vpack.c.b16 %v2717, %v2709
    %v3086 = vpack.c.b16 %v2718, %v2710
    %v3087 = vpack.c.b16 %v2719, %v2711
    %v3088 = vpack.c.b16 %v2720, %v2712
    %v3089 = vpack.c.b16 %v2721, %v2713
    %v3090 = vpack.c.b16 %v2722, %v2714
    %v3091 = vpack.c.b16 %v2723, %v2715
    %v3092 = vpack.c.b16 %v2724, %v2716
    %v3093 = vpack.c.b16 %v2733, %v2725
    %v3094 = vpack.c.b16 %v2734, %v2726
    %v3095 = vpack.c.b16 %v2735, %v2727
    %v3096 = vpack.c.b16 %v2736, %v2728
    %v3097 = vpack.c.b16 %v2737, %v2729
    %v3098 = vpack.c.b16 %v2738, %v2730
    %v3099 = vpack.c.b16 %v2739, %v2731
    %v3100 = vpack.c.b16 %v2740, %v2732
    %v3101 = vpack.c.b16 %v2749, %v2741
    %v3102 = vpack.c.b16 %v2750, %v2742
    %v3103 = vpack.c.b16 %v2751, %v2743
    %v3104 = vpack.c.b16 %v2752, %v2744
    %v3105 = vpack.c.b16 %v2753, %v2745
    %v3106 = vpack.c.b16 %v2754, %v2746
    %v3107 = vpack.c.b16 %v2755, %v2747
    %v3108 = vpack.c.b16 %v2756, %v2748
    %v3109 = vpack.c.b16 %v2765, %v2757
    %v3110 = vpack.c.b16 %v2766, %v2758
    %v3111 = vpack.c.b16 %v2767, %v2759
    %v3112 = vpack.c.b16 %v2768, %v2760
    %v3113 = vpack.c.b16 %v2769, %v2761
    %v3114 = vpack.c.b16 %v2770, %v2762
    %v3115 = vpack.c.b16 %v2771, %v2763
    %v3116 = vpack.c.b16 %v2772, %v2764
    %v3117 = vpack.c.b16 %v2781, %v2773
    %v3118 = vpack.c.b16 %v2782, %v2774
    %v3119 = vpack.c.b16 %v2783, %v2775
    %v3120 = vpack.c.b16 %v2784, %v2776
    %v3121 = vpack.c.b16 %v2785, %v2777
    %v3122 = vpack.c.b16 %v2786, %v2778
    %v3123 = vpack.c.b16 %v2787, %v2779
    %v3124 = vpack.c.b16 %v2788, %v2780
    %v3125 = vpack.c.b16 %v2797, %v2789
    %v3126 = vpack.c.b16 %v2798, %v2790
    %v3127 = vpack.c.b16 %v2799, %v2791
    %v3128 = vpack.c.b16 %v2800, %v2792
    %v3129 = vpack.c.b16 %v2801, %v2793
    %v3130 = vpack.c.b16 %v2802, %v2794
    %v3131 = vpack.c.b16 %v2803, %v2795
    %v3132 = vpack.c.b16 %v2804, %v2796
    %v3133 = vpack.c.b16 %v2813, %v2805
    %v3134 = vpack.c.b16 %v2814, %v2806
    %v3135 = vpack.c.b16 %v2815, %v2807
    %v3136 = vpack.c.b16 %v2816, %v2808
    %v3137 = vpack.c.b16 %v2817, %v2809
    %v3138 = vpack.c.b16 %v2818, %v2810
    %v3139 = vpack.c.b16 %v2819, %v2811
    %v3140 = vpack.c.b16 %v2820, %v2812
    %v3141 = vpack.c.b16 %v2829, %v2821
    %v3142 = vpack.c.b16 %v2830, %v2822
    %v3143 = vpack.c.b16 %v2831, %v2823
    %v3144 = vpack.c.b16 %v2832, %v2824
    %v3145 = vpack.c.b16 %v2833, %v2825
    %v3146 = vpack.c.b16 %v2834, %v2826
    %v3147 = vpack.c.b16 %v2835, %v2827
    %v3148 = vpack.c.b16 %v2836, %v2828
    %v3149 = vpack.c.b16 %v2845, %v2837
    %v3150 = vpack.c.b16 %v2846, %v2838
    %v3151 = vpack.c.b16 %v2847, %v2839
    %v3152 = vpack.c.b16 %v2848, %v2840
    %v3153 = vpack.c.b16 %v2849, %v2841
    %v3154 = vpack.c.b16 %v2850, %v2842
    %v3155 = vpack.c.b16 %v2851, %v2843
    %v3156 = vpack.c.b16 %v2852, %v2844
    %v3157 = vpack.c.b16 %v2861, %v2853
    %v3158 = vpack.c.b16 %v2862, %v2854
    %v3159 = vpack.c.b16 %v2863, %v2855
    %v3160 = vpack.c.b16 %v2864, %v2856
    %v3161 = vpack.c.b16 %v2865, %v2857
    %v3162 = vpack.c.b16 %v2866, %v2858
    %v3163 = vpack.c.b16 %v2867, %v2859
    %v3164 = vpack.c.b16 %v2868, %v2860
    %v3165 = vpack.c.b16 %v2877, %v2869
    %v3166 = vpack.c.b16 %v2878, %v2870
    %v3167 = vpack.c.b16 %v2879, %v2871
    %v3168 = vpack.c.b16 %v2880, %v2872
    %v3169 = vpack.c.b16 %v2881, %v2873
    %v3170 = vpack.c.b16 %v2882, %v2874
    %v3171 = vpack.c.b16 %v2883, %v2875
    %v3172 = vpack.c.b16 %v2884, %v2876
    %v3173 = vpack.c.b16 %v2893, %v2885
    %v3174 = vpack.c.b16 %v2894, %v2886
    %v3175 = vpack.c.b16 %v2895, %v2887
    %v3176 = vpack.c.b16 %v2896, %v2888
    %v3177 = vpack.c.b16 %v2897, %v2889
    %v3178 = vpack.c.b16 %v2898, %v2890
    %v3179 = vpack.c.b16 %v2899, %v2891
    %v3180 = vpack.c.b16 %v2900, %v2892
    %v3181 = vpack.c.b16 %v2909, %v2901
    %v3182 = vpack.c.b16 %v2910, %v2902
    %v3183 = vpack.c.b16 %v2911, %v2903
    %v3184 = vpack.c.b16 %v2912, %v2904
    %v3185 = vpack.c.b16 %v2913, %v2905
    %v3186 = vpack.c.b16 %v2914, %v2906
    %v3187 = vpack.c.b16 %v2915, %v2907
    %v3188 = vpack.c.b16 %v2916, %v2908
    %v3189 = vpack.c.b16 %v2925, %v2917
    %v3190 = vpack.c.b16 %v2926, %v2918
    %v3191 = vpack.c.b16 %v2927, %v2919
    %v3192 = vpack.c.b16 %v2928, %v2920
    %v3193 = vpack.c.b16 %v2929, %v2921
    %v3194 = vpack.c.b16 %v2930, %v2922
    %v3195 = vpack.c.b16 %v2931, %v2923
    %v3196 = vpack.c.b16 %v2932, %v2924
    %v3197 = vpack.c.b16 %v2941, %v2933
    %v3198 = vpack.c.b16 %v2942, %v2934
    %v3199 = vpack.c.b16 %v2943, %v2935
    %v3200 = vpack.c.b16 %v2944, %v2936
    %v3201 = vpack.c.b16 %v2945, %v2937
    %v3202 = vpack.c.b16 %v2946, %v2938
    %v3203 = vpack.c.b16 %v2947, %v2939
    %v3204 = vpack.c.b16 %v2948, %v2940
    %3461 = vmatprep.subr.bf16.mxu0 %v2950
    %3462 = vmatpush1.bf16.msra.mxu0 %v2949
    %3463 = vmatprep.subr.bf16.mxu0 %v2958
    %3464 = vmatpush1.bf16.msra.mxu0 %v2957
    %3465 = vmatprep.subr.bf16.mxu0 %v2966
    %3466 = vmatpush1.bf16.msra.mxu0 %v2965
    %3467 = vmatprep.subr.bf16.mxu0 %v2974
    %3468 = vmatpush1.bf16.msra.mxu0 %v2973
    %3469 = vmatprep.subr.bf16.mxu0 %v2982
    %3470 = vmatpush1.bf16.msra.mxu0 %v2981
    %3471 = vmatprep.subr.bf16.mxu0 %v2990
    %3472 = vmatpush1.bf16.msra.mxu0 %v2989
    %3473 = vmatprep.subr.bf16.mxu0 %v2998
    %3474 = vmatpush1.bf16.msra.mxu0 %v2997
    %3475 = vmatprep.subr.bf16.mxu0 %v3006
    %3476 = vmatpush1.bf16.msra.mxu0 %v3005
    %3477 = vmatprep.subr.bf16.mxu0 %v3014
    %3478 = vmatpush1.bf16.msra.mxu0 %v3013
    %3479 = vmatprep.subr.bf16.mxu0 %v3022
    %3480 = vmatpush1.bf16.msra.mxu0 %v3021
    %3481 = vmatprep.subr.bf16.mxu0 %v3030
    %3482 = vmatpush1.bf16.msra.mxu0 %v3029
    %3483 = vmatprep.subr.bf16.mxu0 %v3038
    %3484 = vmatpush1.bf16.msra.mxu0 %v3037
    %3485 = vmatprep.subr.bf16.mxu0 %v3046
    %3486 = vmatpush1.bf16.msra.mxu0 %v3045
    %3487 = vmatprep.subr.bf16.mxu0 %v3054
    %3488 = vmatpush1.bf16.msra.mxu0 %v3053
    %3489 = vmatprep.subr.bf16.mxu0 %v3062
    %3490 = vmatpush1.bf16.msra.mxu0 %v3061
    %3491 = vmatprep.subr.bf16.mxu0 %v3070
    %3492 = vmatpush1.bf16.msra.mxu0 %v3069
    %3493 = vmatprep.mubr.bf16.mxu0 %v1868
    %3494 = vmatmul.mubr.bf16.gmra.mrb[0].mxu0 %v1867
    %v3495 = vpop.f32.mrb[0].mxu0
    %v3496 = vadd.f32 %v2144, %v3495
    %v3497 = vpop.f32.mrb[0].mxu0
    %v3498 = vadd.f32 %v2148, %v3497
    %v3499 = vpop.f32.mrb[0].mxu0
    %v3500 = vadd.f32 %v2144, %v3499
    %v3501 = vpop.f32.mrb[0].mxu0
    %v3502 = vadd.f32 %v2148, %v3501
    %3503 = vmatprep.mubr.bf16.mxu0 %v1872
    %3504 = vmatmul.mubr.bf16.gmra.mrb[0].mxu0 %v1871
    %v3505 = vpop.f32.mrb[0].mxu0
    %v3506 = vadd.f32 %v2144, %v3505
    %v3507 = vpop.f32.mrb[0].mxu0
    %v3508 = vadd.f32 %v2148, %v3507
    %v3509 = vpop.f32.mrb[0].mxu0
    %v3510 = vadd.f32 %v2144, %v3509
    %v3511 = vpop.f32.mrb[0].mxu0
    %v3512 = vadd.f32 %v2148, %v3511
    %3513 = vmatprep.mubr.bf16.mxu0 %v1876
    %3514 = vmatmul.mubr.bf16.gmra.mrb[0].mxu0 %v1875
    %v3515 = vpop.f32.mrb[0].mxu0
    %v3516 = vadd.f32 %v2144, %v3515
    %v3517 = vpop.f32.mrb[0].mxu0
    %v3518 = vadd.f32 %v2148, %v3517
    %v3519 = vpop.f32.mrb[0].mxu0
    %v3520 = vadd.f32 %v2144, %v3519
    %v3521 = vpop.f32.mrb[0].mxu0
    %v3522 = vadd.f32 %v2148, %v3521
    %3523 = vmatprep.mubr.bf16.mxu0 %v1880
    %3524 = vmatmul.mubr.bf16.gmra.mrb[0].mxu0 %v1879
    %v3525 = vpop.f32.mrb[0].mxu0
    %v3526 = vadd.f32 %v2144, %v3525
    %v3527 = vpop.f32.mrb[0].mxu0
    %v3528 = vadd.f32 %v2148, %v3527
    %v3529 = vpop.f32.mrb[0].mxu0
    %v3530 = vadd.f32 %v2144, %v3529
    %v3531 = vpop.f32.mrb[0].mxu0
    %v3532 = vadd.f32 %v2148, %v3531
    %3533 = vdwg.mxu0
    %3534 = vmatprep.subr.bf16.mxu0 %v3078
    %3535 = vmatpush1.bf16.msra.mxu0 %v3077
    %3536 = vmatprep.subr.bf16.mxu0 %v3086
    %3537 = vmatpush1.bf16.msra.mxu0 %v3085
    %3538 = vmatprep.subr.bf16.mxu0 %v3094
    %3539 = vmatpush1.bf16.msra.mxu0 %v3093
    %3540 = vmatprep.subr.bf16.mxu0 %v3102
    %3541 = vmatpush1.bf16.msra.mxu0 %v3101
    %3542 = vmatprep.subr.bf16.mxu0 %v3110
    %3543 = vmatpush1.bf16.msra.mxu0 %v3109
    %3544 = vmatprep.subr.bf16.mxu0 %v3118
    %3545 = vmatpush1.bf16.msra.mxu0 %v3117
    %3546 = vmatprep.subr.bf16.mxu0 %v3126
    %3547 = vmatpush1.bf16.msra.mxu0 %v3125
    %3548 = vmatprep.subr.bf16.mxu0 %v3134
    %3549 = vmatpush1.bf16.msra.mxu0 %v3133
    %3550 = vmatprep.subr.bf16.mxu0 %v3142
    %3551 = vmatpush1.bf16.msra.mxu0 %v3141
    %3552 = vmatprep.subr.bf16.mxu0 %v3150
    %3553 = vmatpush1.bf16.msra.mxu0 %v3149
    %3554 = vmatprep.subr.bf16.mxu0 %v3158
    %3555 = vmatpush1.bf16.msra.mxu0 %v3157
    %3556 = vmatprep.subr.bf16.mxu0 %v3166
    %3557 = vmatpush1.bf16.msra.mxu0 %v3165
    %3558 = vmatprep.subr.bf16.mxu0 %v3174
    %3559 = vmatpush1.bf16.msra.mxu0 %v3173
    %3560 = vmatprep.subr.bf16.mxu0 %v3182
    %3561 = vmatpush1.bf16.msra.mxu0 %v3181
    %3562 = vmatprep.subr.bf16.mxu0 %v3190
    %3563 = vmatpush1.bf16.msra.mxu0 %v3189
    %3564 = vmatprep.subr.bf16.mxu0 %v3198
    %3565 = vmatpush1.bf16.msra.mxu0 %v3197
    %3566 = vmatprep.mubr.bf16.mxu0 %v1870
    %3567 = vmatmul.mubr.bf16.gmra.mrb[0].mxu0 %v1869
    %v3568 = vpop.f32.mrb[0].mxu0
    %v3569 = vadd.f32 %v3496, %v3568
    %v3570 = vpop.f32.mrb[0].mxu0
    %v3571 = vadd.f32 %v3498, %v3570
    %v3572 = vpop.f32.mrb[0].mxu0
    %v3573 = vadd.f32 %v3500, %v3572
    %v3574 = vpop.f32.mrb[0].mxu0
    %v3575 = vadd.f32 %v3502, %v3574
    %3576 = vmatprep.mubr.bf16.mxu0 %v1874
    %3577 = vmatmul.mubr.bf16.gmra.mrb[0].mxu0 %v1873
    %v3578 = vpop.f32.mrb[0].mxu0
    %v3579 = vadd.f32 %v3506, %v3578
    %v3580 = vpop.f32.mrb[0].mxu0
    %v3581 = vadd.f32 %v3508, %v3580
    %v3582 = vpop.f32.mrb[0].mxu0
    %v3583 = vadd.f32 %v3510, %v3582
    %v3584 = vpop.f32.mrb[0].mxu0
    %v3585 = vadd.f32 %v3512, %v3584
    %3586 = vmatprep.mubr.bf16.mxu0 %v1878
    %3587 = vmatmul.mubr.bf16.gmra.mrb[0].mxu0 %v1877
    %v3588 = vpop.f32.mrb[0].mxu0
    %v3589 = vadd.f32 %v3516, %v3588
    %v3590 = vpop.f32.mrb[0].mxu0
    %v3591 = vadd.f32 %v3518, %v3590
    %v3592 = vpop.f32.mrb[0].mxu0
    %v3593 = vadd.f32 %v3520, %v3592
    %v3594 = vpop.f32.mrb[0].mxu0
    %v3595 = vadd.f32 %v3522, %v3594
    %3596 = vmatprep.mubr.bf16.mxu0 %v1882
    %3597 = vmatmul.mubr.bf16.gmra.mrb[0].mxu0 %v1881
    %v3598 = vpop.f32.mrb[0].mxu0
    %v3599 = vadd.f32 %v3526, %v3598
    %v3600 = vpop.f32.mrb[0].mxu0
    %v3601 = vadd.f32 %v3528, %v3600
    %v3602 = vpop.f32.mrb[0].mxu0
    %v3603 = vadd.f32 %v3530, %v3602
    %v3604 = vpop.f32.mrb[0].mxu0
    %v3605 = vadd.f32 %v3532, %v3604
    %3606 = vdwg.mxu0
    %3607 = vmatprep.subr.bf16.mxu0 %v2952
    %3608 = vmatpush1.bf16.msra.mxu0 %v2951
    %3609 = vmatprep.subr.bf16.mxu0 %v2960
    %3610 = vmatpush1.bf16.msra.mxu0 %v2959
    %3611 = vmatprep.subr.bf16.mxu0 %v2968
    %3612 = vmatpush1.bf16.msra.mxu0 %v2967
    %3613 = vmatprep.subr.bf16.mxu0 %v2976
    %3614 = vmatpush1.bf16.msra.mxu0 %v2975
    %3615 = vmatprep.subr.bf16.mxu0 %v2984
    %3616 = vmatpush1.bf16.msra.mxu0 %v2983
    %3617 = vmatprep.subr.bf16.mxu0 %v2992
    %3618 = vmatpush1.bf16.msra.mxu0 %v2991
    %3619 = vmatprep.subr.bf16.mxu0 %v3000
    %3620 = vmatpush1.bf16.msra.mxu0 %v2999
    %3621 = vmatprep.subr.bf16.mxu0 %v3008
    %3622 = vmatpush1.bf16.msra.mxu0 %v3007
    %3623 = vmatprep.subr.bf16.mxu0 %v3016
    %3624 = vmatpush1.bf16.msra.mxu0 %v3015
    %3625 = vmatprep.subr.bf16.mxu0 %v3024
    %3626 = vmatpush1.bf16.msra.mxu0 %v3023
    %3627 = vmatprep.subr.bf16.mxu0 %v3032
    %3628 = vmatpush1.bf16.msra.mxu0 %v3031
    %3629 = vmatprep.subr.bf16.mxu0 %v3040
    %3630 = vmatpush1.bf16.msra.mxu0 %v3039
    %3631 = vmatprep.subr.bf16.mxu0 %v3048
    %3632 = vmatpush1.bf16.msra.mxu0 %v3047
    %3633 = vmatprep.subr.bf16.mxu0 %v3056
    %3634 = vmatpush1.bf16.msra.mxu0 %v3055
    %3635 = vmatprep.subr.bf16.mxu0 %v3064
    %3636 = vmatpush1.bf16.msra.mxu0 %v3063
    %3637 = vmatprep.subr.bf16.mxu0 %v3072
    %3638 = vmatpush1.bf16.msra.mxu0 %v3071
    %3639 = vmatprep.mubr.bf16.mxu0 %v1868
    %3640 = vmatmul.mubr.bf16.gmra.mrb[0].mxu0 %v1867
    %v3641 = vpop.f32.mrb[0].mxu0
    %v3642 = vadd.f32 %v2152, %v3641
    %v3643 = vpop.f32.mrb[0].mxu0
    %v3644 = vadd.f32 %v2156, %v3643
    %v3645 = vpop.f32.mrb[0].mxu0
    %v3646 = vadd.f32 %v2152, %v3645
    %v3647 = vpop.f32.mrb[0].mxu0
    %v3648 = vadd.f32 %v2156, %v3647
    %3649 = vmatprep.mubr.bf16.mxu0 %v1872
    %3650 = vmatmul.mubr.bf16.gmra.mrb[0].mxu0 %v1871
    %v3651 = vpop.f32.mrb[0].mxu0
    %v3652 = vadd.f32 %v2152, %v3651
    %v3653 = vpop.f32.mrb[0].mxu0
    %v3654 = vadd.f32 %v2156, %v3653
    %v3655 = vpop.f32.mrb[0].mxu0
    %v3656 = vadd.f32 %v2152, %v3655
    %v3657 = vpop.f32.mrb[0].mxu0
    %v3658 = vadd.f32 %v2156, %v3657
    %3659 = vmatprep.mubr.bf16.mxu0 %v1876
    %3660 = vmatmul.mubr.bf16.gmra.mrb[0].mxu0 %v1875
    %v3661 = vpop.f32.mrb[0].mxu0
    %v3662 = vadd.f32 %v2152, %v3661
    %v3663 = vpop.f32.mrb[0].mxu0
    %v3664 = vadd.f32 %v2156, %v3663
    %v3665 = vpop.f32.mrb[0].mxu0
    %v3666 = vadd.f32 %v2152, %v3665
    %v3667 = vpop.f32.mrb[0].mxu0
    %v3668 = vadd.f32 %v2156, %v3667
    %3669 = vmatprep.mubr.bf16.mxu0 %v1880
    %3670 = vmatmul.mubr.bf16.gmra.mrb[0].mxu0 %v1879
    %v3671 = vpop.f32.mrb[0].mxu0
    %v3672 = vadd.f32 %v2152, %v3671
    %v3673 = vpop.f32.mrb[0].mxu0
    %v3674 = vadd.f32 %v2156, %v3673
    %v3675 = vpop.f32.mrb[0].mxu0
    %v3676 = vadd.f32 %v2152, %v3675
    %v3677 = vpop.f32.mrb[0].mxu0
    %v3678 = vadd.f32 %v2156, %v3677
    %3679 = vdwg.mxu0
    %3680 = vmatprep.subr.bf16.mxu0 %v3080
    %3681 = vmatpush1.bf16.msra.mxu0 %v3079
    %3682 = vmatprep.subr.bf16.mxu0 %v3088
    %3683 = vmatpush1.bf16.msra.mxu0 %v3087
    %3684 = vmatprep.subr.bf16.mxu0 %v3096
    %3685 = vmatpush1.bf16.msra.mxu0 %v3095
    %3686 = vmatprep.subr.bf16.mxu0 %v3104
    %3687 = vmatpush1.bf16.msra.mxu0 %v3103
    %3688 = vmatprep.subr.bf16.mxu0 %v3112
    %3689 = vmatpush1.bf16.msra.mxu0 %v3111
    %3690 = vmatprep.subr.bf16.mxu0 %v3120
    %3691 = vmatpush1.bf16.msra.mxu0 %v3119
    %3692 = vmatprep.subr.bf16.mxu0 %v3128
    %3693 = vmatpush1.bf16.msra.mxu0 %v3127
    %3694 = vmatprep.subr.bf16.mxu0 %v3136
    %3695 = vmatpush1.bf16.msra.mxu0 %v3135
    %3696 = vmatprep.subr.bf16.mxu0 %v3144
    %3697 = vmatpush1.bf16.msra.mxu0 %v3143
    %3698 = vmatprep.subr.bf16.mxu0 %v3152
    %3699 = vmatpush1.bf16.msra.mxu0 %v3151
    %3700 = vmatprep.subr.bf16.mxu0 %v3160
    %3701 = vmatpush1.bf16.msra.mxu0 %v3159
    %3702 = vmatprep.subr.bf16.mxu0 %v3168
    %3703 = vmatpush1.bf16.msra.mxu0 %v3167
    %3704 = vmatprep.subr.bf16.mxu0 %v3176
    %3705 = vmatpush1.bf16.msra.mxu0 %v3175
    %3706 = vmatprep.subr.bf16.mxu0 %v3184
    %3707 = vmatpush1.bf16.msra.mxu0 %v3183
    %3708 = vmatprep.subr.bf16.mxu0 %v3192
    %3709 = vmatpush1.bf16.msra.mxu0 %v3191
    %3710 = vmatprep.subr.bf16.mxu0 %v3200
    %3711 = vmatpush1.bf16.msra.mxu0 %v3199
    %3712 = vmatprep.mubr.bf16.mxu0 %v1870
    %3713 = vmatmul.mubr.bf16.gmra.mrb[0].mxu0 %v1869
    %v3714 = vpop.f32.mrb[0].mxu0
    %v3715 = vadd.f32 %v3642, %v3714
    %v3716 = vpop.f32.mrb[0].mxu0
    %v3717 = vadd.f32 %v3644, %v3716
    %v3718 = vpop.f32.mrb[0].mxu0
    %v3719 = vadd.f32 %v3646, %v3718
    %v3720 = vpop.f32.mrb[0].mxu0
    %v3721 = vadd.f32 %v3648, %v3720
    %3722 = vmatprep.mubr.bf16.mxu0 %v1874
    %3723 = vmatmul.mubr.bf16.gmra.mrb[0].mxu0 %v1873
    %v3724 = vpop.f32.mrb[0].mxu0
    %v3725 = vadd.f32 %v3652, %v3724
    %v3726 = vpop.f32.mrb[0].mxu0
    %v3727 = vadd.f32 %v3654, %v3726
    %v3728 = vpop.f32.mrb[0].mxu0
    %v3729 = vadd.f32 %v3656, %v3728
    %v3730 = vpop.f32.mrb[0].mxu0
    %v3731 = vadd.f32 %v3658, %v3730
    %3732 = vmatprep.mubr.bf16.mxu0 %v1878
    %3733 = vmatmul.mubr.bf16.gmra.mrb[0].mxu0 %v1877
    %v3734 = vpop.f32.mrb[0].mxu0
    %v3735 = vadd.f32 %v3662, %v3734
    %v3736 = vpop.f32.mrb[0].mxu0
    %v3737 = vadd.f32 %v3664, %v3736
    %v3738 = vpop.f32.mrb[0].mxu0
    %v3739 = vadd.f32 %v3666, %v3738
    %v3740 = vpop.f32.mrb[0].mxu0
    %v3741 = vadd.f32 %v3668, %v3740
    %3742 = vmatprep.mubr.bf16.mxu0 %v1882
    %3743 = vmatmul.mubr.bf16.gmra.mrb[0].mxu0 %v1881
    %v3744 = vpop.f32.mrb[0].mxu0
    %v3745 = vadd.f32 %v3672, %v3744
    %v3746 = vpop.f32.mrb[0].mxu0
    %v3747 = vadd.f32 %v3674, %v3746
    %v3748 = vpop.f32.mrb[0].mxu0
    %v3749 = vadd.f32 %v3676, %v3748
    %v3750 = vpop.f32.mrb[0].mxu0
    %v3751 = vadd.f32 %v3678, %v3750
    %3752 = vdwg.mxu0
    %3753 = vmatprep.subr.bf16.mxu0 %v2954
    %3754 = vmatpush1.bf16.msra.mxu0 %v2953
    %3755 = vmatprep.subr.bf16.mxu0 %v2962
    %3756 = vmatpush1.bf16.msra.mxu0 %v2961
    %3757 = vmatprep.subr.bf16.mxu0 %v2970
    %3758 = vmatpush1.bf16.msra.mxu0 %v2969
    %3759 = vmatprep.subr.bf16.mxu0 %v2978
    %3760 = vmatpush1.bf16.msra.mxu0 %v2977
    %3761 = vmatprep.subr.bf16.mxu0 %v2986
    %3762 = vmatpush1.bf16.msra.mxu0 %v2985
    %3763 = vmatprep.subr.bf16.mxu0 %v2994
    %3764 = vmatpush1.bf16.msra.mxu0 %v2993
    %3765 = vmatprep.subr.bf16.mxu0 %v3002
    %3766 = vmatpush1.bf16.msra.mxu0 %v3001
    %3767 = vmatprep.subr.bf16.mxu0 %v3010
    %3768 = vmatpush1.bf16.msra.mxu0 %v3009
    %3769 = vmatprep.subr.bf16.mxu0 %v3018
    %3770 = vmatpush1.bf16.msra.mxu0 %v3017
    %3771 = vmatprep.subr.bf16.mxu0 %v3026
    %3772 = vmatpush1.bf16.msra.mxu0 %v3025
    %3773 = vmatprep.subr.bf16.mxu0 %v3034
    %3774 = vmatpush1.bf16.msra.mxu0 %v3033
    %3775 = vmatprep.subr.bf16.mxu0 %v3042
    %3776 = vmatpush1.bf16.msra.mxu0 %v3041
    %3777 = vmatprep.subr.bf16.mxu0 %v3050
    %3778 = vmatpush1.bf16.msra.mxu0 %v3049
    %3779 = vmatprep.subr.bf16.mxu0 %v3058
    %3780 = vmatpush1.bf16.msra.mxu0 %v3057
    %3781 = vmatprep.subr.bf16.mxu0 %v3066
    %3782 = vmatpush1.bf16.msra.mxu0 %v3065
    %3783 = vmatprep.subr.bf16.mxu0 %v3074
    %3784 = vmatpush1.bf16.msra.mxu0 %v3073
    %3785 = vmatprep.mubr.bf16.mxu0 %v1868
    %3786 = vmatmul.mubr.bf16.gmra.mrb[0].mxu0 %v1867
    %v3787 = vpop.f32.mrb[0].mxu0
    %v3788 = vadd.f32 %v2160, %v3787
    %v3789 = vpop.f32.mrb[0].mxu0
    %v3790 = vadd.f32 %v2164, %v3789
    %v3791 = vpop.f32.mrb[0].mxu0
    %v3792 = vadd.f32 %v2160, %v3791
    %v3793 = vpop.f32.mrb[0].mxu0
    %v3794 = vadd.f32 %v2164, %v3793
    %3795 = vmatprep.mubr.bf16.mxu0 %v1872
    %3796 = vmatmul.mubr.bf16.gmra.mrb[0].mxu0 %v1871
    %v3797 = vpop.f32.mrb[0].mxu0
    %v3798 = vadd.f32 %v2160, %v3797
    %v3799 = vpop.f32.mrb[0].mxu0
    %v3800 = vadd.f32 %v2164, %v3799
    %v3801 = vpop.f32.mrb[0].mxu0
    %v3802 = vadd.f32 %v2160, %v3801
    %v3803 = vpop.f32.mrb[0].mxu0
    %v3804 = vadd.f32 %v2164, %v3803
    %3805 = vmatprep.mubr.bf16.mxu0 %v1876
    %3806 = vmatmul.mubr.bf16.gmra.mrb[0].mxu0 %v1875
    %v3807 = vpop.f32.mrb[0].mxu0
    %v3808 = vadd.f32 %v2160, %v3807
    %v3809 = vpop.f32.mrb[0].mxu0
    %v3810 = vadd.f32 %v2164, %v3809
    %v3811 = vpop.f32.mrb[0].mxu0
    %v3812 = vadd.f32 %v2160, %v3811
    %v3813 = vpop.f32.mrb[0].mxu0
    %v3814 = vadd.f32 %v2164, %v3813
    %3815 = vmatprep.mubr.bf16.mxu0 %v1880
    %3816 = vmatmul.mubr.bf16.gmra.mrb[0].mxu0 %v1879
    %v3817 = vpop.f32.mrb[0].mxu0
    %v3818 = vadd.f32 %v2160, %v3817
    %v3819 = vpop.f32.mrb[0].mxu0
    %v3820 = vadd.f32 %v2164, %v3819
    %v3821 = vpop.f32.mrb[0].mxu0
    %v3822 = vadd.f32 %v2160, %v3821
    %v3823 = vpop.f32.mrb[0].mxu0
    %v3824 = vadd.f32 %v2164, %v3823
    %3825 = vdwg.mxu0
    %3826 = vmatprep.subr.bf16.mxu0 %v3082
    %3827 = vmatpush1.bf16.msra.mxu0 %v3081
    %3828 = vmatprep.subr.bf16.mxu0 %v3090
    %3829 = vmatpush1.bf16.msra.mxu0 %v3089
    %3830 = vmatprep.subr.bf16.mxu0 %v3098
    %3831 = vmatpush1.bf16.msra.mxu0 %v3097
    %3832 = vmatprep.subr.bf16.mxu0 %v3106
    %3833 = vmatpush1.bf16.msra.mxu0 %v3105
    %3834 = vmatprep.subr.bf16.mxu0 %v3114
    %3835 = vmatpush1.bf16.msra.mxu0 %v3113
    %3836 = vmatprep.subr.bf16.mxu0 %v3122
    %3837 = vmatpush1.bf16.msra.mxu0 %v3121
    %3838 = vmatprep.subr.bf16.mxu0 %v3130
    %3839 = vmatpush1.bf16.msra.mxu0 %v3129
    %3840 = vmatprep.subr.bf16.mxu0 %v3138
    %3841 = vmatpush1.bf16.msra.mxu0 %v3137
    %3842 = vmatprep.subr.bf16.mxu0 %v3146
    %3843 = vmatpush1.bf16.msra.mxu0 %v3145
    %3844 = vmatprep.subr.bf16.mxu0 %v3154
    %3845 = vmatpush1.bf16.msra.mxu0 %v3153
    %3846 = vmatprep.subr.bf16.mxu0 %v3162
    %3847 = vmatpush1.bf16.msra.mxu0 %v3161
    %3848 = vmatprep.subr.bf16.mxu0 %v3170
    %3849 = vmatpush1.bf16.msra.mxu0 %v3169
    %3850 = vmatprep.subr.bf16.mxu0 %v3178
    %3851 = vmatpush1.bf16.msra.mxu0 %v3177
    %3852 = vmatprep.subr.bf16.mxu0 %v3186
    %3853 = vmatpush1.bf16.msra.mxu0 %v3185
    %3854 = vmatprep.subr.bf16.mxu0 %v3194
    %3855 = vmatpush1.bf16.msra.mxu0 %v3193
    %3856 = vmatprep.subr.bf16.mxu0 %v3202
    %3857 = vmatpush1.bf16.msra.mxu0 %v3201
    %3858 = vmatprep.mubr.bf16.mxu0 %v1870
    %3859 = vmatmul.mubr.bf16.gmra.mrb[0].mxu0 %v1869
    %v3860 = vpop.f32.mrb[0].mxu0
    %v3861 = vadd.f32 %v3788, %v3860
    %v3862 = vpop.f32.mrb[0].mxu0
    %v3863 = vadd.f32 %v3790, %v3862
    %v3864 = vpop.f32.mrb[0].mxu0
    %v3865 = vadd.f32 %v3792, %v3864
    %v3866 = vpop.f32.mrb[0].mxu0
    %v3867 = vadd.f32 %v3794, %v3866
    %3868 = vmatprep.mubr.bf16.mxu0 %v1874
    %3869 = vmatmul.mubr.bf16.gmra.mrb[0].mxu0 %v1873
    %v3870 = vpop.f32.mrb[0].mxu0
    %v3871 = vadd.f32 %v3798, %v3870
    %v3872 = vpop.f32.mrb[0].mxu0
    %v3873 = vadd.f32 %v3800, %v3872
    %v3874 = vpop.f32.mrb[0].mxu0
    %v3875 = vadd.f32 %v3802, %v3874
    %v3876 = vpop.f32.mrb[0].mxu0
    %v3877 = vadd.f32 %v3804, %v3876
    %3878 = vmatprep.mubr.bf16.mxu0 %v1878
    %3879 = vmatmul.mubr.bf16.gmra.mrb[0].mxu0 %v1877
    %v3880 = vpop.f32.mrb[0].mxu0
    %v3881 = vadd.f32 %v3808, %v3880
    %v3882 = vpop.f32.mrb[0].mxu0
    %v3883 = vadd.f32 %v3810, %v3882
    %v3884 = vpop.f32.mrb[0].mxu0
    %v3885 = vadd.f32 %v3812, %v3884
    %v3886 = vpop.f32.mrb[0].mxu0
    %v3887 = vadd.f32 %v3814, %v3886
    %3888 = vmatprep.mubr.bf16.mxu0 %v1882
    %3889 = vmatmul.mubr.bf16.gmra.mrb[0].mxu0 %v1881
    %v3890 = vpop.f32.mrb[0].mxu0
    %v3891 = vadd.f32 %v3818, %v3890
    %v3892 = vpop.f32.mrb[0].mxu0
    %v3893 = vadd.f32 %v3820, %v3892
    %v3894 = vpop.f32.mrb[0].mxu0
    %v3895 = vadd.f32 %v3822, %v3894
    %v3896 = vpop.f32.mrb[0].mxu0
    %v3897 = vadd.f32 %v3824, %v3896
    %3898 = vdwg.mxu0
    %3899 = vmatprep.subr.bf16.mxu0 %v2956
    %3900 = vmatpush1.bf16.msra.mxu0 %v2955
    %3901 = vmatprep.subr.bf16.mxu0 %v2964
    %3902 = vmatpush1.bf16.msra.mxu0 %v2963
    %3903 = vmatprep.subr.bf16.mxu0 %v2972
    %3904 = vmatpush1.bf16.msra.mxu0 %v2971
    %3905 = vmatprep.subr.bf16.mxu0 %v2980
    %3906 = vmatpush1.bf16.msra.mxu0 %v2979
    %3907 = vmatprep.subr.bf16.mxu0 %v2988
    %3908 = vmatpush1.bf16.msra.mxu0 %v2987
    %3909 = vmatprep.subr.bf16.mxu0 %v2996
    %3910 = vmatpush1.bf16.msra.mxu0 %v2995
    %3911 = vmatprep.subr.bf16.mxu0 %v3004
    %3912 = vmatpush1.bf16.msra.mxu0 %v3003
    %3913 = vmatprep.subr.bf16.mxu0 %v3012
    %3914 = vmatpush1.bf16.msra.mxu0 %v3011
    %3915 = vmatprep.subr.bf16.mxu0 %v3020
    %3916 = vmatpush1.bf16.msra.mxu0 %v3019
    %3917 = vmatprep.subr.bf16.mxu0 %v3028
    %3918 = vmatpush1.bf16.msra.mxu0 %v3027
    %3919 = vmatprep.subr.bf16.mxu0 %v3036
    %3920 = vmatpush1.bf16.msra.mxu0 %v3035
    %3921 = vmatprep.subr.bf16.mxu0 %v3044
    %3922 = vmatpush1.bf16.msra.mxu0 %v3043
    %3923 = vmatprep.subr.bf16.mxu0 %v3052
    %3924 = vmatpush1.bf16.msra.mxu0 %v3051
    %3925 = vmatprep.subr.bf16.mxu0 %v3060
    %3926 = vmatpush1.bf16.msra.mxu0 %v3059
    %3927 = vmatprep.subr.bf16.mxu0 %v3068
    %3928 = vmatpush1.bf16.msra.mxu0 %v3067
    %3929 = vmatprep.subr.bf16.mxu0 %v3076
    %3930 = vmatpush1.bf16.msra.mxu0 %v3075
    %3931 = vmatprep.mubr.bf16.mxu0 %v1868
    %3932 = vmatmul.mubr.bf16.gmra.mrb[0].mxu0 %v1867
    %v3933 = vpop.f32.mrb[0].mxu0
    %v3934 = vadd.f32 %v2168, %v3933
    %v3935 = vpop.f32.mrb[0].mxu0
    %v3936 = vadd.f32 %v2172, %v3935
    %v3937 = vpop.f32.mrb[0].mxu0
    %v3938 = vadd.f32 %v2168, %v3937
    %v3939 = vpop.f32.mrb[0].mxu0
    %v3940 = vadd.f32 %v2172, %v3939
    %3941 = vmatprep.mubr.bf16.mxu0 %v1872
    %3942 = vmatmul.mubr.bf16.gmra.mrb[0].mxu0 %v1871
    %v3943 = vpop.f32.mrb[0].mxu0
    %v3944 = vadd.f32 %v2168, %v3943
    %v3945 = vpop.f32.mrb[0].mxu0
    %v3946 = vadd.f32 %v2172, %v3945
    %v3947 = vpop.f32.mrb[0].mxu0
    %v3948 = vadd.f32 %v2168, %v3947
    %v3949 = vpop.f32.mrb[0].mxu0
    %v3950 = vadd.f32 %v2172, %v3949
    %3951 = vmatprep.mubr.bf16.mxu0 %v1876
    %3952 = vmatmul.mubr.bf16.gmra.mrb[0].mxu0 %v1875
    %v3953 = vpop.f32.mrb[0].mxu0
    %v3954 = vadd.f32 %v2168, %v3953
    %v3955 = vpop.f32.mrb[0].mxu0
    %v3956 = vadd.f32 %v2172, %v3955
    %v3957 = vpop.f32.mrb[0].mxu0
    %v3958 = vadd.f32 %v2168, %v3957
    %v3959 = vpop.f32.mrb[0].mxu0
    %v3960 = vadd.f32 %v2172, %v3959
    %3961 = vmatprep.mubr.bf16.mxu0 %v1880
    %3962 = vmatmul.mubr.bf16.gmra.mrb[0].mxu0 %v1879
    %v3963 = vpop.f32.mrb[0].mxu0
    %v3964 = vadd.f32 %v2168, %v3963
    %v3965 = vpop.f32.mrb[0].mxu0
    %v3966 = vadd.f32 %v2172, %v3965
    %v3967 = vpop.f32.mrb[0].mxu0
    %v3968 = vadd.f32 %v2168, %v3967
    %v3969 = vpop.f32.mrb[0].mxu0
    %v3970 = vadd.f32 %v2172, %v3969
    %3971 = vdwg.mxu0
    %3972 = vmatprep.subr.bf16.mxu0 %v3084
    %3973 = vmatpush1.bf16.msra.mxu0 %v3083
    %3974 = vmatprep.subr.bf16.mxu0 %v3092
    %3975 = vmatpush1.bf16.msra.mxu0 %v3091
    %3976 = vmatprep.subr.bf16.mxu0 %v3100
    %3977 = vmatpush1.bf16.msra.mxu0 %v3099
    %3978 = vmatprep.subr.bf16.mxu0 %v3108
    %3979 = vmatpush1.bf16.msra.mxu0 %v3107
    %3980 = vmatprep.subr.bf16.mxu0 %v3116
    %3981 = vmatpush1.bf16.msra.mxu0 %v3115
    %3982 = vmatprep.subr.bf16.mxu0 %v3124
    %3983 = vmatpush1.bf16.msra.mxu0 %v3123
    %3984 = vmatprep.subr.bf16.mxu0 %v3132
    %3985 = vmatpush1.bf16.msra.mxu0 %v3131
    %3986 = vmatprep.subr.bf16.mxu0 %v3140
    %3987 = vmatpush1.bf16.msra.mxu0 %v3139
    %3988 = vmatprep.subr.bf16.mxu0 %v3148
    %3989 = vmatpush1.bf16.msra.mxu0 %v3147
    %3990 = vmatprep.subr.bf16.mxu0 %v3156
    %3991 = vmatpush1.bf16.msra.mxu0 %v3155
    %3992 = vmatprep.subr.bf16.mxu0 %v3164
    %3993 = vmatpush1.bf16.msra.mxu0 %v3163
    %3994 = vmatprep.subr.bf16.mxu0 %v3172
    %3995 = vmatpush1.bf16.msra.mxu0 %v3171
    %3996 = vmatprep.subr.bf16.mxu0 %v3180
    %3997 = vmatpush1.bf16.msra.mxu0 %v3179
    %3998 = vmatprep.subr.bf16.mxu0 %v3188
    %3999 = vmatpush1.bf16.msra.mxu0 %v3187
    %4000 = vmatprep.subr.bf16.mxu0 %v3196
    %4001 = vmatpush1.bf16.msra.mxu0 %v3195
    %4002 = vmatprep.subr.bf16.mxu0 %v3204
    %4003 = vmatpush1.bf16.msra.mxu0 %v3203
    %4004 = vmatprep.mubr.bf16.mxu0 %v1870
    %4005 = vmatmul.mubr.bf16.gmra.mrb[0].mxu0 %v1869
    %v4006 = vpop.f32.mrb[0].mxu0
    %v4007 = vadd.f32 %v3934, %v4006
    %v4008 = vpop.f32.mrb[0].mxu0
    %v4009 = vadd.f32 %v3936, %v4008
    %v4010 = vpop.f32.mrb[0].mxu0
    %v4011 = vadd.f32 %v3938, %v4010
    %v4012 = vpop.f32.mrb[0].mxu0
    %v4013 = vadd.f32 %v3940, %v4012
    %4014 = vmatprep.mubr.bf16.mxu0 %v1874
    %4015 = vmatmul.mubr.bf16.gmra.mrb[0].mxu0 %v1873
    %v4016 = vpop.f32.mrb[0].mxu0
    %v4017 = vadd.f32 %v3944, %v4016
    %v4018 = vpop.f32.mrb[0].mxu0
    %v4019 = vadd.f32 %v3946, %v4018
    %v4020 = vpop.f32.mrb[0].mxu0
    %v4021 = vadd.f32 %v3948, %v4020
    %v4022 = vpop.f32.mrb[0].mxu0
    %v4023 = vadd.f32 %v3950, %v4022
    %4024 = vmatprep.mubr.bf16.mxu0 %v1878
    %4025 = vmatmul.mubr.bf16.gmra.mrb[0].mxu0 %v1877
    %v4026 = vpop.f32.mrb[0].mxu0
    %v4027 = vadd.f32 %v3954, %v4026
    %v4028 = vpop.f32.mrb[0].mxu0
    %v4029 = vadd.f32 %v3956, %v4028
    %v4030 = vpop.f32.mrb[0].mxu0
    %v4031 = vadd.f32 %v3958, %v4030
    %v4032 = vpop.f32.mrb[0].mxu0
    %v4033 = vadd.f32 %v3960, %v4032
    %4034 = vmatprep.mubr.bf16.mxu0 %v1882
    %4035 = vmatmul.mubr.bf16.gmra.mrb[0].mxu0 %v1881
    %v4036 = vpop.f32.mrb[0].mxu0
    %v4037 = vadd.f32 %v3964, %v4036
    %v4038 = vpop.f32.mrb[0].mxu0
    %v4039 = vadd.f32 %v3966, %v4038
    %v4040 = vpop.f32.mrb[0].mxu0
    %v4041 = vadd.f32 %v3968, %v4040
    %v4042 = vpop.f32.mrb[0].mxu0
    %v4043 = vadd.f32 %v3970, %v4042
    %4044 = vdwg.mxu0
    %v4045 = vld [vmem:[#allocation2] sm:$0xff]
    %v4046 = vld [vmem:[#allocation2 + $0x8] sm:$0xff]
    %v4047 = vld [vmem:[#allocation3] sm:$0xff]
    %v4048 = vld [vmem:[#allocation3 + $0x8] sm:$0xff]
    %v4049 = vpack.c.bf16 %v4045, %v4045
    %v4050 = vpack.c.bf16 %v4046, %v4046
    %v4051 = vld [vmem:[#allocation7] sm:$0xff]
    %v4052 = vld [vmem:[#allocation7 + $0x8] sm:$0xff]
    %v4053 = vld [vmem:[#allocation7 + $0x10] sm:$0xff]
    %v4054 = vld [vmem:[#allocation7 + $0x18] sm:$0xff]
    %v4055 = vld [vmem:[#allocation7 + $0x20] sm:$0xff]
    %v4056 = vld [vmem:[#allocation7 + $0x28] sm:$0xff]
    %v4057 = vld [vmem:[#allocation7 + $0x30] sm:$0xff]
    %v4058 = vld [vmem:[#allocation7 + $0x38] sm:$0xff]
    %v4059 = vld [vmem:[#allocation7 + $0x40] sm:$0xff]
    %v4060 = vld [vmem:[#allocation7 + $0x48] sm:$0xff]
    %v4061 = vld [vmem:[#allocation7 + $0x50] sm:$0xff]
    %v4062 = vld [vmem:[#allocation7 + $0x58] sm:$0xff]
    %v4063 = vld [vmem:[#allocation7 + $0x60] sm:$0xff]
    %v4064 = vld [vmem:[#allocation7 + $0x68] sm:$0xff]
    %v4065 = vld [vmem:[#allocation7 + $0x70] sm:$0xff]
    %v4066 = vld [vmem:[#allocation7 + $0x78] sm:$0xff]
    %v4067 = vld [vmem:[#allocation7 + $0x80] sm:$0xff]
    %v4068 = vld [vmem:[#allocation7 + $0x88] sm:$0xff]
    %v4069 = vld [vmem:[#allocation7 + $0x90] sm:$0xff]
    %v4070 = vld [vmem:[#allocation7 + $0x98] sm:$0xff]
    %v4071 = vld [vmem:[#allocation7 + $0xa0] sm:$0xff]
    %v4072 = vld [vmem:[#allocation7 + $0xa8] sm:$0xff]
    %v4073 = vld [vmem:[#allocation7 + $0xb0] sm:$0xff]
    %v4074 = vld [vmem:[#allocation7 + $0xb8] sm:$0xff]
    %v4075 = vld [vmem:[#allocation7 + $0xc0] sm:$0xff]
    %v4076 = vld [vmem:[#allocation7 + $0xc8] sm:$0xff]
    %v4077 = vld [vmem:[#allocation7 + $0xd0] sm:$0xff]
    %v4078 = vld [vmem:[#allocation7 + $0xd8] sm:$0xff]
    %v4079 = vld [vmem:[#allocation7 + $0xe0] sm:$0xff]
    %v4080 = vld [vmem:[#allocation7 + $0xe8] sm:$0xff]
    %v4081 = vld [vmem:[#allocation7 + $0xf0] sm:$0xff]
    %v4082 = vld [vmem:[#allocation7 + $0xf8] sm:$0xff]
    %v4083 = vld [vmem:[#allocation7 + $0x100] sm:$0xff]
    %v4084 = vld [vmem:[#allocation7 + $0x108] sm:$0xff]
    %v4085 = vld [vmem:[#allocation7 + $0x110] sm:$0xff]
    %v4086 = vld [vmem:[#allocation7 + $0x118] sm:$0xff]
    %v4087 = vld [vmem:[#allocation7 + $0x120] sm:$0xff]
    %v4088 = vld [vmem:[#allocation7 + $0x128] sm:$0xff]
    %v4089 = vld [vmem:[#allocation7 + $0x130] sm:$0xff]
    %v4090 = vld [vmem:[#allocation7 + $0x138] sm:$0xff]
    %v4091 = vld [vmem:[#allocation7 + $0x140] sm:$0xff]
    %v4092 = vld [vmem:[#allocation7 + $0x148] sm:$0xff]
    %v4093 = vld [vmem:[#allocation7 + $0x150] sm:$0xff]
    %v4094 = vld [vmem:[#allocation7 + $0x158] sm:$0xff]
    %v4095 = vld [vmem:[#allocation7 + $0x160] sm:$0xff]
    %v4096 = vld [vmem:[#allocation7 + $0x168] sm:$0xff]
    %v4097 = vld [vmem:[#allocation7 + $0x170] sm:$0xff]
    %v4098 = vld [vmem:[#allocation7 + $0x178] sm:$0xff]
    %v4099 = vld [vmem:[#allocation7 + $0x180] sm:$0xff]
    %v4100 = vld [vmem:[#allocation7 + $0x188] sm:$0xff]
    %v4101 = vld [vmem:[#allocation7 + $0x190] sm:$0xff]
    %v4102 = vld [vmem:[#allocation7 + $0x198] sm:$0xff]
    %v4103 = vld [vmem:[#allocation7 + $0x1a0] sm:$0xff]
    %v4104 = vld [vmem:[#allocation7 + $0x1a8] sm:$0xff]
    %v4105 = vld [vmem:[#allocation7 + $0x1b0] sm:$0xff]
    %v4106 = vld [vmem:[#allocation7 + $0x1b8] sm:$0xff]
    %v4107 = vld [vmem:[#allocation7 + $0x1c0] sm:$0xff]
    %v4108 = vld [vmem:[#allocation7 + $0x1c8] sm:$0xff]
    %v4109 = vld [vmem:[#allocation7 + $0x1d0] sm:$0xff]
    %v4110 = vld [vmem:[#allocation7 + $0x1d8] sm:$0xff]
    %v4111 = vld [vmem:[#allocation7 + $0x1e0] sm:$0xff]
    %v4112 = vld [vmem:[#allocation7 + $0x1e8] sm:$0xff]
    %v4113 = vld [vmem:[#allocation7 + $0x1f0] sm:$0xff]
    %v4114 = vld [vmem:[#allocation7 + $0x1f8] sm:$0xff]
    %v4115 = vld [vmem:[#allocation7 + $0x200] sm:$0xff]
    %v4116 = vld [vmem:[#allocation7 + $0x208] sm:$0xff]
    %v4117 = vld [vmem:[#allocation7 + $0x210] sm:$0xff]
    %v4118 = vld [vmem:[#allocation7 + $0x218] sm:$0xff]
    %v4119 = vld [vmem:[#allocation7 + $0x220] sm:$0xff]
    %v4120 = vld [vmem:[#allocation7 + $0x228] sm:$0xff]
    %v4121 = vld [vmem:[#allocation7 + $0x230] sm:$0xff]
    %v4122 = vld [vmem:[#allocation7 + $0x238] sm:$0xff]
    %v4123 = vld [vmem:[#allocation7 + $0x240] sm:$0xff]
    %v4124 = vld [vmem:[#allocation7 + $0x248] sm:$0xff]
    %v4125 = vld [vmem:[#allocation7 + $0x250] sm:$0xff]
    %v4126 = vld [vmem:[#allocation7 + $0x258] sm:$0xff]
    %v4127 = vld [vmem:[#allocation7 + $0x260] sm:$0xff]
    %v4128 = vld [vmem:[#allocation7 + $0x268] sm:$0xff]
    %v4129 = vld [vmem:[#allocation7 + $0x270] sm:$0xff]
    %v4130 = vld [vmem:[#allocation7 + $0x278] sm:$0xff]
    %v4131 = vld [vmem:[#allocation7 + $0x280] sm:$0xff]
    %v4132 = vld [vmem:[#allocation7 + $0x288] sm:$0xff]
    %v4133 = vld [vmem:[#allocation7 + $0x290] sm:$0xff]
    %v4134 = vld [vmem:[#allocation7 + $0x298] sm:$0xff]
    %v4135 = vld [vmem:[#allocation7 + $0x2a0] sm:$0xff]
    %v4136 = vld [vmem:[#allocation7 + $0x2a8] sm:$0xff]
    %v4137 = vld [vmem:[#allocation7 + $0x2b0] sm:$0xff]
    %v4138 = vld [vmem:[#allocation7 + $0x2b8] sm:$0xff]
    %v4139 = vld [vmem:[#allocation7 + $0x2c0] sm:$0xff]
    %v4140 = vld [vmem:[#allocation7 + $0x2c8] sm:$0xff]
    %v4141 = vld [vmem:[#allocation7 + $0x2d0] sm:$0xff]
    %v4142 = vld [vmem:[#allocation7 + $0x2d8] sm:$0xff]
    %v4143 = vld [vmem:[#allocation7 + $0x2e0] sm:$0xff]
    %v4144 = vld [vmem:[#allocation7 + $0x2e8] sm:$0xff]
    %v4145 = vld [vmem:[#allocation7 + $0x2f0] sm:$0xff]
    %v4146 = vld [vmem:[#allocation7 + $0x2f8] sm:$0xff]
    %v4147 = vld [vmem:[#allocation7 + $0x300] sm:$0xff]
    %v4148 = vld [vmem:[#allocation7 + $0x308] sm:$0xff]
    %v4149 = vld [vmem:[#allocation7 + $0x310] sm:$0xff]
    %v4150 = vld [vmem:[#allocation7 + $0x318] sm:$0xff]
    %v4151 = vld [vmem:[#allocation7 + $0x320] sm:$0xff]
    %v4152 = vld [vmem:[#allocation7 + $0x328] sm:$0xff]
    %v4153 = vld [vmem:[#allocation7 + $0x330] sm:$0xff]
    %v4154 = vld [vmem:[#allocation7 + $0x338] sm:$0xff]
    %v4155 = vld [vmem:[#allocation7 + $0x340] sm:$0xff]
    %v4156 = vld [vmem:[#allocation7 + $0x348] sm:$0xff]
    %v4157 = vld [vmem:[#allocation7 + $0x350] sm:$0xff]
    %v4158 = vld [vmem:[#allocation7 + $0x358] sm:$0xff]
    %v4159 = vld [vmem:[#allocation7 + $0x360] sm:$0xff]
    %v4160 = vld [vmem:[#allocation7 + $0x368] sm:$0xff]
    %v4161 = vld [vmem:[#allocation7 + $0x370] sm:$0xff]
    %v4162 = vld [vmem:[#allocation7 + $0x378] sm:$0xff]
    %v4163 = vld [vmem:[#allocation7 + $0x380] sm:$0xff]
    %v4164 = vld [vmem:[#allocation7 + $0x388] sm:$0xff]
    %v4165 = vld [vmem:[#allocation7 + $0x390] sm:$0xff]
    %v4166 = vld [vmem:[#allocation7 + $0x398] sm:$0xff]
    %v4167 = vld [vmem:[#allocation7 + $0x3a0] sm:$0xff]
    %v4168 = vld [vmem:[#allocation7 + $0x3a8] sm:$0xff]
    %v4169 = vld [vmem:[#allocation7 + $0x3b0] sm:$0xff]
    %v4170 = vld [vmem:[#allocation7 + $0x3b8] sm:$0xff]
    %v4171 = vld [vmem:[#allocation7 + $0x3c0] sm:$0xff]
    %v4172 = vld [vmem:[#allocation7 + $0x3c8] sm:$0xff]
    %v4173 = vld [vmem:[#allocation7 + $0x3d0] sm:$0xff]
    %v4174 = vld [vmem:[#allocation7 + $0x3d8] sm:$0xff]
    %v4175 = vld [vmem:[#allocation7 + $0x3e0] sm:$0xff]
    %v4176 = vld [vmem:[#allocation7 + $0x3e8] sm:$0xff]
    %v4177 = vld [vmem:[#allocation7 + $0x3f0] sm:$0xff]
    %v4178 = vld [vmem:[#allocation7 + $0x3f8] sm:$0xff]
    %v4307 = vunpack.c.l.b16 %v4051
    %v4308 = vunpack.c.h.b16 %v4051
    %v4309 = vunpack.c.l.b16 %v4052
    %v4310 = vunpack.c.h.b16 %v4052
    %v4311 = vunpack.c.l.b16 %v4053
    %v4312 = vunpack.c.h.b16 %v4053
    %v4313 = vunpack.c.l.b16 %v4054
    %v4314 = vunpack.c.h.b16 %v4054
    %v4315 = vunpack.c.l.b16 %v4055
    %v4316 = vunpack.c.h.b16 %v4055
    %v4317 = vunpack.c.l.b16 %v4056
    %v4318 = vunpack.c.h.b16 %v4056
    %v4319 = vunpack.c.l.b16 %v4057
    %v4320 = vunpack.c.h.b16 %v4057
    %v4321 = vunpack.c.l.b16 %v4058
    %v4322 = vunpack.c.h.b16 %v4058
    %v4323 = vunpack.c.l.b16 %v4059
    %v4324 = vunpack.c.h.b16 %v4059
    %v4325 = vunpack.c.l.b16 %v4060
    %v4326 = vunpack.c.h.b16 %v4060
    %v4327 = vunpack.c.l.b16 %v4061
    %v4328 = vunpack.c.h.b16 %v4061
    %v4329 = vunpack.c.l.b16 %v4062
    %v4330 = vunpack.c.h.b16 %v4062
    %v4331 = vunpack.c.l.b16 %v4063
    %v4332 = vunpack.c.h.b16 %v4063
    %v4333 = vunpack.c.l.b16 %v4064
    %v4334 = vunpack.c.h.b16 %v4064
    %v4335 = vunpack.c.l.b16 %v4065
    %v4336 = vunpack.c.h.b16 %v4065
    %v4337 = vunpack.c.l.b16 %v4066
    %v4338 = vunpack.c.h.b16 %v4066
    %v4339 = vunpack.c.l.b16 %v4067
    %v4340 = vunpack.c.h.b16 %v4067
    %v4341 = vunpack.c.l.b16 %v4068
    %v4342 = vunpack.c.h.b16 %v4068
    %v4343 = vunpack.c.l.b16 %v4069
    %v4344 = vunpack.c.h.b16 %v4069
    %v4345 = vunpack.c.l.b16 %v4070
    %v4346 = vunpack.c.h.b16 %v4070
    %v4347 = vunpack.c.l.b16 %v4071
    %v4348 = vunpack.c.h.b16 %v4071
    %v4349 = vunpack.c.l.b16 %v4072
    %v4350 = vunpack.c.h.b16 %v4072
    %v4351 = vunpack.c.l.b16 %v4073
    %v4352 = vunpack.c.h.b16 %v4073
    %v4353 = vunpack.c.l.b16 %v4074
    %v4354 = vunpack.c.h.b16 %v4074
    %v4355 = vunpack.c.l.b16 %v4075
    %v4356 = vunpack.c.h.b16 %v4075
    %v4357 = vunpack.c.l.b16 %v4076
    %v4358 = vunpack.c.h.b16 %v4076
    %v4359 = vunpack.c.l.b16 %v4077
    %v4360 = vunpack.c.h.b16 %v4077
    %v4361 = vunpack.c.l.b16 %v4078
    %v4362 = vunpack.c.h.b16 %v4078
    %v4363 = vunpack.c.l.b16 %v4079
    %v4364 = vunpack.c.h.b16 %v4079
    %v4365 = vunpack.c.l.b16 %v4080
    %v4366 = vunpack.c.h.b16 %v4080
    %v4367 = vunpack.c.l.b16 %v4081
    %v4368 = vunpack.c.h.b16 %v4081
    %v4369 = vunpack.c.l.b16 %v4082
    %v4370 = vunpack.c.h.b16 %v4082
    %v4371 = vunpack.c.l.b16 %v4083
    %v4372 = vunpack.c.h.b16 %v4083
    %v4373 = vunpack.c.l.b16 %v4084
    %v4374 = vunpack.c.h.b16 %v4084
    %v4375 = vunpack.c.l.b16 %v4085
    %v4376 = vunpack.c.h.b16 %v4085
    %v4377 = vunpack.c.l.b16 %v4086
    %v4378 = vunpack.c.h.b16 %v4086
    %v4379 = vunpack.c.l.b16 %v4087
    %v4380 = vunpack.c.h.b16 %v4087
    %v4381 = vunpack.c.l.b16 %v4088
    %v4382 = vunpack.c.h.b16 %v4088
    %v4383 = vunpack.c.l.b16 %v4089
    %v4384 = vunpack.c.h.b16 %v4089
    %v4385 = vunpack.c.l.b16 %v4090
    %v4386 = vunpack.c.h.b16 %v4090
    %v4387 = vunpack.c.l.b16 %v4091
    %v4388 = vunpack.c.h.b16 %v4091
    %v4389 = vunpack.c.l.b16 %v4092
    %v4390 = vunpack.c.h.b16 %v4092
    %v4391 = vunpack.c.l.b16 %v4093
    %v4392 = vunpack.c.h.b16 %v4093
    %v4393 = vunpack.c.l.b16 %v4094
    %v4394 = vunpack.c.h.b16 %v4094
    %v4395 = vunpack.c.l.b16 %v4095
    %v4396 = vunpack.c.h.b16 %v4095
    %v4397 = vunpack.c.l.b16 %v4096
    %v4398 = vunpack.c.h.b16 %v4096
    %v4399 = vunpack.c.l.b16 %v4097
    %v4400 = vunpack.c.h.b16 %v4097
    %v4401 = vunpack.c.l.b16 %v4098
    %v4402 = vunpack.c.h.b16 %v4098
    %v4403 = vunpack.c.l.b16 %v4099
    %v4404 = vunpack.c.h.b16 %v4099
    %v4405 = vunpack.c.l.b16 %v4100
    %v4406 = vunpack.c.h.b16 %v4100
    %v4407 = vunpack.c.l.b16 %v4101
    %v4408 = vunpack.c.h.b16 %v4101
    %v4409 = vunpack.c.l.b16 %v4102
    %v4410 = vunpack.c.h.b16 %v4102
    %v4411 = vunpack.c.l.b16 %v4103
    %v4412 = vunpack.c.h.b16 %v4103
    %v4413 = vunpack.c.l.b16 %v4104
    %v4414 = vunpack.c.h.b16 %v4104
    %v4415 = vunpack.c.l.b16 %v4105
    %v4416 = vunpack.c.h.b16 %v4105
    %v4417 = vunpack.c.l.b16 %v4106
    %v4418 = vunpack.c.h.b16 %v4106
    %v4419 = vunpack.c.l.b16 %v4107
    %v4420 = vunpack.c.h.b16 %v4107
    %v4421 = vunpack.c.l.b16 %v4108
    %v4422 = vunpack.c.h.b16 %v4108
    %v4423 = vunpack.c.l.b16 %v4109
    %v4424 = vunpack.c.h.b16 %v4109
    %v4425 = vunpack.c.l.b16 %v4110
    %v4426 = vunpack.c.h.b16 %v4110
    %v4427 = vunpack.c.l.b16 %v4111
    %v4428 = vunpack.c.h.b16 %v4111
    %v4429 = vunpack.c.l.b16 %v4112
    %v4430 = vunpack.c.h.b16 %v4112
    %v4431 = vunpack.c.l.b16 %v4113
    %v4432 = vunpack.c.h.b16 %v4113
    %v4433 = vunpack.c.l.b16 %v4114
    %v4434 = vunpack.c.h.b16 %v4114
    %v4435 = vunpack.c.l.b16 %v4115
    %v4436 = vunpack.c.h.b16 %v4115
    %v4437 = vunpack.c.l.b16 %v4116
    %v4438 = vunpack.c.h.b16 %v4116
    %v4439 = vunpack.c.l.b16 %v4117
    %v4440 = vunpack.c.h.b16 %v4117
    %v4441 = vunpack.c.l.b16 %v4118
    %v4442 = vunpack.c.h.b16 %v4118
    %v4443 = vunpack.c.l.b16 %v4119
    %v4444 = vunpack.c.h.b16 %v4119
    %v4445 = vunpack.c.l.b16 %v4120
    %v4446 = vunpack.c.h.b16 %v4120
    %v4447 = vunpack.c.l.b16 %v4121
    %v4448 = vunpack.c.h.b16 %v4121
    %v4449 = vunpack.c.l.b16 %v4122
    %v4450 = vunpack.c.h.b16 %v4122
    %v4451 = vunpack.c.l.b16 %v4123
    %v4452 = vunpack.c.h.b16 %v4123
    %v4453 = vunpack.c.l.b16 %v4124
    %v4454 = vunpack.c.h.b16 %v4124
    %v4455 = vunpack.c.l.b16 %v4125
    %v4456 = vunpack.c.h.b16 %v4125
    %v4457 = vunpack.c.l.b16 %v4126
    %v4458 = vunpack.c.h.b16 %v4126
    %v4459 = vunpack.c.l.b16 %v4127
    %v4460 = vunpack.c.h.b16 %v4127
    %v4461 = vunpack.c.l.b16 %v4128
    %v4462 = vunpack.c.h.b16 %v4128
    %v4463 = vunpack.c.l.b16 %v4129
    %v4464 = vunpack.c.h.b16 %v4129
    %v4465 = vunpack.c.l.b16 %v4130
    %v4466 = vunpack.c.h.b16 %v4130
    %v4467 = vunpack.c.l.b16 %v4131
    %v4468 = vunpack.c.h.b16 %v4131
    %v4469 = vunpack.c.l.b16 %v4132
    %v4470 = vunpack.c.h.b16 %v4132
    %v4471 = vunpack.c.l.b16 %v4133
    %v4472 = vunpack.c.h.b16 %v4133
    %v4473 = vunpack.c.l.b16 %v4134
    %v4474 = vunpack.c.h.b16 %v4134
    %v4475 = vunpack.c.l.b16 %v4135
    %v4476 = vunpack.c.h.b16 %v4135
    %v4477 = vunpack.c.l.b16 %v4136
    %v4478 = vunpack.c.h.b16 %v4136
    %v4479 = vunpack.c.l.b16 %v4137
    %v4480 = vunpack.c.h.b16 %v4137
    %v4481 = vunpack.c.l.b16 %v4138
    %v4482 = vunpack.c.h.b16 %v4138
    %v4483 = vunpack.c.l.b16 %v4139
    %v4484 = vunpack.c.h.b16 %v4139
    %v4485 = vunpack.c.l.b16 %v4140
    %v4486 = vunpack.c.h.b16 %v4140
    %v4487 = vunpack.c.l.b16 %v4141
    %v4488 = vunpack.c.h.b16 %v4141
    %v4489 = vunpack.c.l.b16 %v4142
    %v4490 = vunpack.c.h.b16 %v4142
    %v4491 = vunpack.c.l.b16 %v4143
    %v4492 = vunpack.c.h.b16 %v4143
    %v4493 = vunpack.c.l.b16 %v4144
    %v4494 = vunpack.c.h.b16 %v4144
    %v4495 = vunpack.c.l.b16 %v4145
    %v4496 = vunpack.c.h.b16 %v4145
    %v4497 = vunpack.c.l.b16 %v4146
    %v4498 = vunpack.c.h.b16 %v4146
    %v4499 = vunpack.c.l.b16 %v4147
    %v4500 = vunpack.c.h.b16 %v4147
    %v4501 = vunpack.c.l.b16 %v4148
    %v4502 = vunpack.c.h.b16 %v4148
    %v4503 = vunpack.c.l.b16 %v4149
    %v4504 = vunpack.c.h.b16 %v4149
    %v4505 = vunpack.c.l.b16 %v4150
    %v4506 = vunpack.c.h.b16 %v4150
    %v4507 = vunpack.c.l.b16 %v4151
    %v4508 = vunpack.c.h.b16 %v4151
    %v4509 = vunpack.c.l.b16 %v4152
    %v4510 = vunpack.c.h.b16 %v4152
    %v4511 = vunpack.c.l.b16 %v4153
    %v4512 = vunpack.c.h.b16 %v4153
    %v4513 = vunpack.c.l.b16 %v4154
    %v4514 = vunpack.c.h.b16 %v4154
    %v4515 = vunpack.c.l.b16 %v4155
    %v4516 = vunpack.c.h.b16 %v4155
    %v4517 = vunpack.c.l.b16 %v4156
    %v4518 = vunpack.c.h.b16 %v4156
    %v4519 = vunpack.c.l.b16 %v4157
    %v4520 = vunpack.c.h.b16 %v4157
    %v4521 = vunpack.c.l.b16 %v4158
    %v4522 = vunpack.c.h.b16 %v4158
    %v4523 = vunpack.c.l.b16 %v4159
    %v4524 = vunpack.c.h.b16 %v4159
    %v4525 = vunpack.c.l.b16 %v4160
    %v4526 = vunpack.c.h.b16 %v4160
    %v4527 = vunpack.c.l.b16 %v4161
    %v4528 = vunpack.c.h.b16 %v4161
    %v4529 = vunpack.c.l.b16 %v4162
    %v4530 = vunpack.c.h.b16 %v4162
    %v4531 = vunpack.c.l.b16 %v4163
    %v4532 = vunpack.c.h.b16 %v4163
    %v4533 = vunpack.c.l.b16 %v4164
    %v4534 = vunpack.c.h.b16 %v4164
    %v4535 = vunpack.c.l.b16 %v4165
    %v4536 = vunpack.c.h.b16 %v4165
    %v4537 = vunpack.c.l.b16 %v4166
    %v4538 = vunpack.c.h.b16 %v4166
    %v4539 = vunpack.c.l.b16 %v4167
    %v4540 = vunpack.c.h.b16 %v4167
    %v4541 = vunpack.c.l.b16 %v4168
    %v4542 = vunpack.c.h.b16 %v4168
    %v4543 = vunpack.c.l.b16 %v4169
    %v4544 = vunpack.c.h.b16 %v4169
    %v4545 = vunpack.c.l.b16 %v4170
    %v4546 = vunpack.c.h.b16 %v4170
    %v4547 = vunpack.c.l.b16 %v4171
    %v4548 = vunpack.c.h.b16 %v4171
    %v4549 = vunpack.c.l.b16 %v4172
    %v4550 = vunpack.c.h.b16 %v4172
    %v4551 = vunpack.c.l.b16 %v4173
    %v4552 = vunpack.c.h.b16 %v4173
    %v4553 = vunpack.c.l.b16 %v4174
    %v4554 = vunpack.c.h.b16 %v4174
    %v4555 = vunpack.c.l.b16 %v4175
    %v4556 = vunpack.c.h.b16 %v4175
    %v4557 = vunpack.c.l.b16 %v4176
    %v4558 = vunpack.c.h.b16 %v4176
    %v4559 = vunpack.c.l.b16 %v4177
    %v4560 = vunpack.c.h.b16 %v4177
    %v4561 = vunpack.c.l.b16 %v4178
    %v4562 = vunpack.c.h.b16 %v4178
    %v4563 = vpack.c.b16 %v4315, %v4307
    %v4564 = vpack.c.b16 %v4316, %v4308
    %v4565 = vpack.c.b16 %v4317, %v4309
    %v4566 = vpack.c.b16 %v4318, %v4310
    %v4567 = vpack.c.b16 %v4319, %v4311
    %v4568 = vpack.c.b16 %v4320, %v4312
    %v4569 = vpack.c.b16 %v4321, %v4313
    %v4570 = vpack.c.b16 %v4322, %v4314
    %v4571 = vpack.c.b16 %v4331, %v4323
    %v4572 = vpack.c.b16 %v4332, %v4324
    %v4573 = vpack.c.b16 %v4333, %v4325
    %v4574 = vpack.c.b16 %v4334, %v4326
    %v4575 = vpack.c.b16 %v4335, %v4327
    %v4576 = vpack.c.b16 %v4336, %v4328
    %v4577 = vpack.c.b16 %v4337, %v4329
    %v4578 = vpack.c.b16 %v4338, %v4330
    %v4579 = vpack.c.b16 %v4347, %v4339
    %v4580 = vpack.c.b16 %v4348, %v4340
    %v4581 = vpack.c.b16 %v4349, %v4341
    %v4582 = vpack.c.b16 %v4350, %v4342
    %v4583 = vpack.c.b16 %v4351, %v4343
    %v4584 = vpack.c.b16 %v4352, %v4344
    %v4585 = vpack.c.b16 %v4353, %v4345
    %v4586 = vpack.c.b16 %v4354, %v4346
    %v4587 = vpack.c.b16 %v4363, %v4355
    %v4588 = vpack.c.b16 %v4364, %v4356
    %v4589 = vpack.c.b16 %v4365, %v4357
    %v4590 = vpack.c.b16 %v4366, %v4358
    %v4591 = vpack.c.b16 %v4367, %v4359
    %v4592 = vpack.c.b16 %v4368, %v4360
    %v4593 = vpack.c.b16 %v4369, %v4361
    %v4594 = vpack.c.b16 %v4370, %v4362
    %v4595 = vpack.c.b16 %v4379, %v4371
    %v4596 = vpack.c.b16 %v4380, %v4372
    %v4597 = vpack.c.b16 %v4381, %v4373
    %v4598 = vpack.c.b16 %v4382, %v4374
    %v4599 = vpack.c.b16 %v4383, %v4375
    %v4600 = vpack.c.b16 %v4384, %v4376
    %v4601 = vpack.c.b16 %v4385, %v4377
    %v4602 = vpack.c.b16 %v4386, %v4378
    %v4603 = vpack.c.b16 %v4395, %v4387
    %v4604 = vpack.c.b16 %v4396, %v4388
    %v4605 = vpack.c.b16 %v4397, %v4389
    %v4606 = vpack.c.b16 %v4398, %v4390
    %v4607 = vpack.c.b16 %v4399, %v4391
    %v4608 = vpack.c.b16 %v4400, %v4392
    %v4609 = vpack.c.b16 %v4401, %v4393
    %v4610 = vpack.c.b16 %v4402, %v4394
    %v4611 = vpack.c.b16 %v4411, %v4403
    %v4612 = vpack.c.b16 %v4412, %v4404
    %v4613 = vpack.c.b16 %v4413, %v4405
    %v4614 = vpack.c.b16 %v4414, %v4406
    %v4615 = vpack.c.b16 %v4415, %v4407
    %v4616 = vpack.c.b16 %v4416, %v4408
    %v4617 = vpack.c.b16 %v4417, %v4409
    %v4618 = vpack.c.b16 %v4418, %v4410
    %v4619 = vpack.c.b16 %v4427, %v4419
    %v4620 = vpack.c.b16 %v4428, %v4420
    %v4621 = vpack.c.b16 %v4429, %v4421
    %v4622 = vpack.c.b16 %v4430, %v4422
    %v4623 = vpack.c.b16 %v4431, %v4423
    %v4624 = vpack.c.b16 %v4432, %v4424
    %v4625 = vpack.c.b16 %v4433, %v4425
    %v4626 = vpack.c.b16 %v4434, %v4426
    %v4627 = vpack.c.b16 %v4443, %v4435
    %v4628 = vpack.c.b16 %v4444, %v4436
    %v4629 = vpack.c.b16 %v4445, %v4437
    %v4630 = vpack.c.b16 %v4446, %v4438
    %v4631 = vpack.c.b16 %v4447, %v4439
    %v4632 = vpack.c.b16 %v4448, %v4440
    %v4633 = vpack.c.b16 %v4449, %v4441
    %v4634 = vpack.c.b16 %v4450, %v4442
    %v4635 = vpack.c.b16 %v4459, %v4451
    %v4636 = vpack.c.b16 %v4460, %v4452
    %v4637 = vpack.c.b16 %v4461, %v4453
    %v4638 = vpack.c.b16 %v4462, %v4454
    %v4639 = vpack.c.b16 %v4463, %v4455
    %v4640 = vpack.c.b16 %v4464, %v4456
    %v4641 = vpack.c.b16 %v4465, %v4457
    %v4642 = vpack.c.b16 %v4466, %v4458
    %v4643 = vpack.c.b16 %v4475, %v4467
    %v4644 = vpack.c.b16 %v4476, %v4468
    %v4645 = vpack.c.b16 %v4477, %v4469
    %v4646 = vpack.c.b16 %v4478, %v4470
    %v4647 = vpack.c.b16 %v4479, %v4471
    %v4648 = vpack.c.b16 %v4480, %v4472
    %v4649 = vpack.c.b16 %v4481, %v4473
    %v4650 = vpack.c.b16 %v4482, %v4474
    %v4651 = vpack.c.b16 %v4491, %v4483
    %v4652 = vpack.c.b16 %v4492, %v4484
    %v4653 = vpack.c.b16 %v4493, %v4485
    %v4654 = vpack.c.b16 %v4494, %v4486
    %v4655 = vpack.c.b16 %v4495, %v4487
    %v4656 = vpack.c.b16 %v4496, %v4488
    %v4657 = vpack.c.b16 %v4497, %v4489
    %v4658 = vpack.c.b16 %v4498, %v4490
    %v4659 = vpack.c.b16 %v4507, %v4499
    %v4660 = vpack.c.b16 %v4508, %v4500
    %v4661 = vpack.c.b16 %v4509, %v4501
    %v4662 = vpack.c.b16 %v4510, %v4502
    %v4663 = vpack.c.b16 %v4511, %v4503
    %v4664 = vpack.c.b16 %v4512, %v4504
    %v4665 = vpack.c.b16 %v4513, %v4505
    %v4666 = vpack.c.b16 %v4514, %v4506
    %v4667 = vpack.c.b16 %v4523, %v4515
    %v4668 = vpack.c.b16 %v4524, %v4516
    %v4669 = vpack.c.b16 %v4525, %v4517
    %v4670 = vpack.c.b16 %v4526, %v4518
    %v4671 = vpack.c.b16 %v4527, %v4519
    %v4672 = vpack.c.b16 %v4528, %v4520
    %v4673 = vpack.c.b16 %v4529, %v4521
    %v4674 = vpack.c.b16 %v4530, %v4522
    %v4675 = vpack.c.b16 %v4539, %v4531
    %v4676 = vpack.c.b16 %v4540, %v4532
    %v4677 = vpack.c.b16 %v4541, %v4533
    %v4678 = vpack.c.b16 %v4542, %v4534
    %v4679 = vpack.c.b16 %v4543, %v4535
    %v4680 = vpack.c.b16 %v4544, %v4536
    %v4681 = vpack.c.b16 %v4545, %v4537
    %v4682 = vpack.c.b16 %v4546, %v4538
    %v4683 = vpack.c.b16 %v4555, %v4547
    %v4684 = vpack.c.b16 %v4556, %v4548
    %v4685 = vpack.c.b16 %v4557, %v4549
    %v4686 = vpack.c.b16 %v4558, %v4550
    %v4687 = vpack.c.b16 %v4559, %v4551
    %v4688 = vpack.c.b16 %v4560, %v4552
    %v4689 = vpack.c.b16 %v4561, %v4553
    %v4690 = vpack.c.b16 %v4562, %v4554
    %4819 = vmatprep.subr.bf16.mxu0 %v4564
    %4820 = vmatpush1.bf16.msra.mxu0 %v4563
    %4821 = vmatprep.subr.bf16.mxu0 %v4572
    %4822 = vmatpush1.bf16.msra.mxu0 %v4571
    %4823 = vmatprep.subr.bf16.mxu0 %v4580
    %4824 = vmatpush1.bf16.msra.mxu0 %v4579
    %4825 = vmatprep.subr.bf16.mxu0 %v4588
    %4826 = vmatpush1.bf16.msra.mxu0 %v4587
    %4827 = vmatprep.subr.bf16.mxu0 %v4596
    %4828 = vmatpush1.bf16.msra.mxu0 %v4595
    %4829 = vmatprep.subr.bf16.mxu0 %v4604
    %4830 = vmatpush1.bf16.msra.mxu0 %v4603
    %4831 = vmatprep.subr.bf16.mxu0 %v4612
    %4832 = vmatpush1.bf16.msra.mxu0 %v4611
    %4833 = vmatprep.subr.bf16.mxu0 %v4620
    %4834 = vmatpush1.bf16.msra.mxu0 %v4619
    %4835 = vmatprep.subr.bf16.mxu0 %v4628
    %4836 = vmatpush1.bf16.msra.mxu0 %v4627
    %4837 = vmatprep.subr.bf16.mxu0 %v4636
    %4838 = vmatpush1.bf16.msra.mxu0 %v4635
    %4839 = vmatprep.subr.bf16.mxu0 %v4644
    %4840 = vmatpush1.bf16.msra.mxu0 %v4643
    %4841 = vmatprep.subr.bf16.mxu0 %v4652
    %4842 = vmatpush1.bf16.msra.mxu0 %v4651
    %4843 = vmatprep.subr.bf16.mxu0 %v4660
    %4844 = vmatpush1.bf16.msra.mxu0 %v4659
    %4845 = vmatprep.subr.bf16.mxu0 %v4668
    %4846 = vmatpush1.bf16.msra.mxu0 %v4667
    %4847 = vmatprep.subr.bf16.mxu0 %v4676
    %4848 = vmatpush1.bf16.msra.mxu0 %v4675
    %4849 = vmatprep.subr.bf16.mxu0 %v4684
    %4850 = vmatpush1.bf16.msra.mxu0 %v4683
    %4851 = vmatprep.mubr.bf16.mxu0 %v4050
    %4852 = vmatmul.mubr.bf16.gmra.mrb[0].mxu0 %v4049
    %v4853 = vpop.f32.mrb[0].mxu0
    %v4854 = vadd.f32 0.0, %v4853
    %v4855 = vpop.f32.mrb[0].mxu0
    %v4856 = vadd.f32 0.0, %v4855
    %v4857 = vpop.f32.mrb[0].mxu0
    %v4858 = vpop.f32.mrb[0].mxu0
    %4859 = vdwg.mxu0
    %4860 = vmatprep.subr.bf16.mxu0 %v4566
    %4861 = vmatpush1.bf16.msra.mxu0 %v4565
    %4862 = vmatprep.subr.bf16.mxu0 %v4574
    %4863 = vmatpush1.bf16.msra.mxu0 %v4573
    %4864 = vmatprep.subr.bf16.mxu0 %v4582
    %4865 = vmatpush1.bf16.msra.mxu0 %v4581
    %4866 = vmatprep.subr.bf16.mxu0 %v4590
    %4867 = vmatpush1.bf16.msra.mxu0 %v4589
    %4868 = vmatprep.subr.bf16.mxu0 %v4598
    %4869 = vmatpush1.bf16.msra.mxu0 %v4597
    %4870 = vmatprep.subr.bf16.mxu0 %v4606
    %4871 = vmatpush1.bf16.msra.mxu0 %v4605
    %4872 = vmatprep.subr.bf16.mxu0 %v4614
    %4873 = vmatpush1.bf16.msra.mxu0 %v4613
    %4874 = vmatprep.subr.bf16.mxu0 %v4622
    %4875 = vmatpush1.bf16.msra.mxu0 %v4621
    %4876 = vmatprep.subr.bf16.mxu0 %v4630
    %4877 = vmatpush1.bf16.msra.mxu0 %v4629
    %4878 = vmatprep.subr.bf16.mxu0 %v4638
    %4879 = vmatpush1.bf16.msra.mxu0 %v4637
    %4880 = vmatprep.subr.bf16.mxu0 %v4646
    %4881 = vmatpush1.bf16.msra.mxu0 %v4645
    %4882 = vmatprep.subr.bf16.mxu0 %v4654
    %4883 = vmatpush1.bf16.msra.mxu0 %v4653
    %4884 = vmatprep.subr.bf16.mxu0 %v4662
    %4885 = vmatpush1.bf16.msra.mxu0 %v4661
    %4886 = vmatprep.subr.bf16.mxu0 %v4670
    %4887 = vmatpush1.bf16.msra.mxu0 %v4669
    %4888 = vmatprep.subr.bf16.mxu0 %v4678
    %4889 = vmatpush1.bf16.msra.mxu0 %v4677
    %4890 = vmatprep.subr.bf16.mxu0 %v4686
    %4891 = vmatpush1.bf16.msra.mxu0 %v4685
    %4892 = vmatprep.mubr.bf16.mxu0 %v4050
    %4893 = vmatmul.mubr.bf16.gmra.mrb[0].mxu0 %v4049
    %v4894 = vpop.f32.mrb[0].mxu0
    %v4895 = vadd.f32 0.0, %v4894
    %v4896 = vpop.f32.mrb[0].mxu0
    %v4897 = vadd.f32 0.0, %v4896
    %v4898 = vpop.f32.mrb[0].mxu0
    %v4899 = vpop.f32.mrb[0].mxu0
    %4900 = vdwg.mxu0
    %4901 = vmatprep.subr.bf16.mxu0 %v4568
    %4902 = vmatpush1.bf16.msra.mxu0 %v4567
    %4903 = vmatprep.subr.bf16.mxu0 %v4576
    %4904 = vmatpush1.bf16.msra.mxu0 %v4575
    %4905 = vmatprep.subr.bf16.mxu0 %v4584
    %4906 = vmatpush1.bf16.msra.mxu0 %v4583
    %4907 = vmatprep.subr.bf16.mxu0 %v4592
    %4908 = vmatpush1.bf16.msra.mxu0 %v4591
    %4909 = vmatprep.subr.bf16.mxu0 %v4600
    %4910 = vmatpush1.bf16.msra.mxu0 %v4599
    %4911 = vmatprep.subr.bf16.mxu0 %v4608
    %4912 = vmatpush1.bf16.msra.mxu0 %v4607
    %4913 = vmatprep.subr.bf16.mxu0 %v4616
    %4914 = vmatpush1.bf16.msra.mxu0 %v4615
    %4915 = vmatprep.subr.bf16.mxu0 %v4624
    %4916 = vmatpush1.bf16.msra.mxu0 %v4623
    %4917 = vmatprep.subr.bf16.mxu0 %v4632
    %4918 = vmatpush1.bf16.msra.mxu0 %v4631
    %4919 = vmatprep.subr.bf16.mxu0 %v4640
    %4920 = vmatpush1.bf16.msra.mxu0 %v4639
    %4921 = vmatprep.subr.bf16.mxu0 %v4648
    %4922 = vmatpush1.bf16.msra.mxu0 %v4647
    %4923 = vmatprep.subr.bf16.mxu0 %v4656
    %4924 = vmatpush1.bf16.msra.mxu0 %v4655
    %4925 = vmatprep.subr.bf16.mxu0 %v4664
    %4926 = vmatpush1.bf16.msra.mxu0 %v4663
    %4927 = vmatprep.subr.bf16.mxu0 %v4672
    %4928 = vmatpush1.bf16.msra.mxu0 %v4671
    %4929 = vmatprep.subr.bf16.mxu0 %v4680
    %4930 = vmatpush1.bf16.msra.mxu0 %v4679
    %4931 = vmatprep.subr.bf16.mxu0 %v4688
    %4932 = vmatpush1.bf16.msra.mxu0 %v4687
    %4933 = vmatprep.mubr.bf16.mxu0 %v4050
    %4934 = vmatmul.mubr.bf16.gmra.mrb[0].mxu0 %v4049
    %v4935 = vpop.f32.mrb[0].mxu0
    %v4936 = vadd.f32 0.0, %v4935
    %v4937 = vpop.f32.mrb[0].mxu0
    %v4938 = vadd.f32 0.0, %v4937
    %v4939 = vpop.f32.mrb[0].mxu0
    %v4940 = vpop.f32.mrb[0].mxu0
    %4941 = vdwg.mxu0
    %4942 = vmatprep.subr.bf16.mxu0 %v4570
    %4943 = vmatpush1.bf16.msra.mxu0 %v4569
    %4944 = vmatprep.subr.bf16.mxu0 %v4578
    %4945 = vmatpush1.bf16.msra.mxu0 %v4577
    %4946 = vmatprep.subr.bf16.mxu0 %v4586
    %4947 = vmatpush1.bf16.msra.mxu0 %v4585
    %4948 = vmatprep.subr.bf16.mxu0 %v4594
    %4949 = vmatpush1.bf16.msra.mxu0 %v4593
    %4950 = vmatprep.subr.bf16.mxu0 %v4602
    %4951 = vmatpush1.bf16.msra.mxu0 %v4601
    %4952 = vmatprep.subr.bf16.mxu0 %v4610
    %4953 = vmatpush1.bf16.msra.mxu0 %v4609
    %4954 = vmatprep.subr.bf16.mxu0 %v4618
    %4955 = vmatpush1.bf16.msra.mxu0 %v4617
    %4956 = vmatprep.subr.bf16.mxu0 %v4626
    %4957 = vmatpush1.bf16.msra.mxu0 %v4625
    %4958 = vmatprep.subr.bf16.mxu0 %v4634
    %4959 = vmatpush1.bf16.msra.mxu0 %v4633
    %4960 = vmatprep.subr.bf16.mxu0 %v4642
    %4961 = vmatpush1.bf16.msra.mxu0 %v4641
    %4962 = vmatprep.subr.bf16.mxu0 %v4650
    %4963 = vmatpush1.bf16.msra.mxu0 %v4649
    %4964 = vmatprep.subr.bf16.mxu0 %v4658
    %4965 = vmatpush1.bf16.msra.mxu0 %v4657
    %4966 = vmatprep.subr.bf16.mxu0 %v4666
    %4967 = vmatpush1.bf16.msra.mxu0 %v4665
    %4968 = vmatprep.subr.bf16.mxu0 %v4674
    %4969 = vmatpush1.bf16.msra.mxu0 %v4673
    %4970 = vmatprep.subr.bf16.mxu0 %v4682
    %4971 = vmatpush1.bf16.msra.mxu0 %v4681
    %4972 = vmatprep.subr.bf16.mxu0 %v4690
    %4973 = vmatpush1.bf16.msra.mxu0 %v4689
    %4974 = vmatprep.mubr.bf16.mxu0 %v4050
    %4975 = vmatmul.mubr.bf16.gmra.mrb[0].mxu0 %v4049
    %v4976 = vpop.f32.mrb[0].mxu0
    %v4977 = vadd.f32 0.0, %v4976
    %v4978 = vpop.f32.mrb[0].mxu0
    %v4979 = vadd.f32 0.0, %v4978
    %v4980 = vpop.f32.mrb[0].mxu0
    %v4981 = vpop.f32.mrb[0].mxu0
    %4982 = vdwg.mxu0
    %v4983 = vadd.f32 %v3569, %v4854
    %v4984 = vadd.f32 %v3571, %v4856
    %v4985 = vadd.f32 %v3715, %v4895
    %v4986 = vadd.f32 %v3717, %v4897
    %v4987 = vadd.f32 %v3861, %v4936
    %v4988 = vadd.f32 %v3863, %v4938
    %v4989 = vadd.f32 %v4007, %v4977
    %v4990 = vadd.f32 %v4009, %v4979
    %v4991 = vxor.u32 %v4983, 2147483648
    %v4992 = vxor.u32 %v4984, 2147483648
    %v4993 = vmul.f32 %v4991, 1.442695
    %v4994 = vpow.pop %v4993
    %v4995 = vmul.f32 %v4992, 1.442695
    %v4996 = vpow.pop %v4995
    %v4997 = vadd.f32 %v4994, 1.0
    %v4998 = vadd.f32 %v4996, 1.0
    %v4999 = vrcp.pop %v4997
    %v5000 = vmul.f32 1.0, %v4999
    %v5001 = vrcp.pop %v4998
    %v5002 = vmul.f32 1.0, %v5001
    %v5003 = vxor.u32 %v4985, 2147483648
    %v5004 = vxor.u32 %v4986, 2147483648
    %v5005 = vmul.f32 %v5003, 1.442695
    %v5006 = vpow.pop %v5005
    %v5007 = vmul.f32 %v5004, 1.442695
    %v5008 = vpow.pop %v5007
    %v5009 = vadd.f32 %v5006, 1.0
    %v5010 = vadd.f32 %v5008, 1.0
    %v5011 = vrcp.pop %v5009
    %v5012 = vmul.f32 1.0, %v5011
    %v5013 = vrcp.pop %v5010
    %v5014 = vmul.f32 1.0, %v5013
    %v5015 = vtanh.pop %v4987
    %v5016 = vtanh.pop %v4988
    %v5017 = vxor.u32 %v4989, 2147483648
    %v5018 = vxor.u32 %v4990, 2147483648
    %v5019 = vmul.f32 %v5017, 1.442695
    %v5020 = vpow.pop %v5019
    %v5021 = vmul.f32 %v5018, 1.442695
    %v5022 = vpow.pop %v5021
    %v5023 = vadd.f32 %v5020, 1.0
    %v5024 = vadd.f32 %v5022, 1.0
    %v5025 = vrcp.pop %v5023
    %v5026 = vmul.f32 1.0, %v5025
    %v5027 = vrcp.pop %v5024
    %v5028 = vmul.f32 1.0, %v5027
    %v5029 = vmul.f32 %v5012, %v4047
    %v5030 = vmul.f32 %v5014, %v4048
    %v5031 = vmul.f32 %v5000, %v5015
    %v5032 = vmul.f32 %v5002, %v5016
    %v5033 = vadd.f32 %v5029, %v5031
    %v5034 = vadd.f32 %v5030, %v5032
    %v5035 = vtanh.pop %v5033
    %v5036 = vtanh.pop %v5034
    %v5037 = vmul.f32 %v5026, %v5035
    %v5038 = vmul.f32 %v5028, %v5036
    %5039 = vst [vmem:[#allocation4] sm:$0xff] %v5037
    %5040 = vst [vmem:[#allocation4 + $0x8] sm:$0xff] %v5038
    %v5041 = vpack.c.bf16 %v5037, %v5037
    %v5042 = vpack.c.bf16 %v5038, %v5038
    %v5043 = vld [vmem:[#allocation7] sm:$0xff]
    %v5044 = vld [vmem:[#allocation7 + $0x8] sm:$0xff]
    %v5045 = vld [vmem:[#allocation7 + $0x10] sm:$0xff]
    %v5046 = vld [vmem:[#allocation7 + $0x18] sm:$0xff]
    %v5047 = vld [vmem:[#allocation7 + $0x20] sm:$0xff]
    %v5048 = vld [vmem:[#allocation7 + $0x28] sm:$0xff]
    %v5049 = vld [vmem:[#allocation7 + $0x30] sm:$0xff]
    %v5050 = vld [vmem:[#allocation7 + $0x38] sm:$0xff]
    %v5051 = vld [vmem:[#allocation7 + $0x40] sm:$0xff]
    %v5052 = vld [vmem:[#allocation7 + $0x48] sm:$0xff]
    %v5053 = vld [vmem:[#allocation7 + $0x50] sm:$0xff]
    %v5054 = vld [vmem:[#allocation7 + $0x58] sm:$0xff]
    %v5055 = vld [vmem:[#allocation7 + $0x60] sm:$0xff]
    %v5056 = vld [vmem:[#allocation7 + $0x68] sm:$0xff]
    %v5057 = vld [vmem:[#allocation7 + $0x70] sm:$0xff]
    %v5058 = vld [vmem:[#allocation7 + $0x78] sm:$0xff]
    %v5059 = vld [vmem:[#allocation7 + $0x80] sm:$0xff]
    %v5060 = vld [vmem:[#allocation7 + $0x88] sm:$0xff]
    %v5061 = vld [vmem:[#allocation7 + $0x90] sm:$0xff]
    %v5062 = vld [vmem:[#allocation7 + $0x98] sm:$0xff]
    %v5063 = vld [vmem:[#allocation7 + $0xa0] sm:$0xff]
    %v5064 = vld [vmem:[#allocation7 + $0xa8] sm:$0xff]
    %v5065 = vld [vmem:[#allocation7 + $0xb0] sm:$0xff]
    %v5066 = vld [vmem:[#allocation7 + $0xb8] sm:$0xff]
    %v5067 = vld [vmem:[#allocation7 + $0xc0] sm:$0xff]
    %v5068 = vld [vmem:[#allocation7 + $0xc8] sm:$0xff]
    %v5069 = vld [vmem:[#allocation7 + $0xd0] sm:$0xff]
    %v5070 = vld [vmem:[#allocation7 + $0xd8] sm:$0xff]
    %v5071 = vld [vmem:[#allocation7 + $0xe0] sm:$0xff]
    %v5072 = vld [vmem:[#allocation7 + $0xe8] sm:$0xff]
    %v5073 = vld [vmem:[#allocation7 + $0xf0] sm:$0xff]
    %v5074 = vld [vmem:[#allocation7 + $0xf8] sm:$0xff]
    %v5075 = vld [vmem:[#allocation7 + $0x100] sm:$0xff]
    %v5076 = vld [vmem:[#allocation7 + $0x108] sm:$0xff]
    %v5077 = vld [vmem:[#allocation7 + $0x110] sm:$0xff]
    %v5078 = vld [vmem:[#allocation7 + $0x118] sm:$0xff]
    %v5079 = vld [vmem:[#allocation7 + $0x120] sm:$0xff]
    %v5080 = vld [vmem:[#allocation7 + $0x128] sm:$0xff]
    %v5081 = vld [vmem:[#allocation7 + $0x130] sm:$0xff]
    %v5082 = vld [vmem:[#allocation7 + $0x138] sm:$0xff]
    %v5083 = vld [vmem:[#allocation7 + $0x140] sm:$0xff]
    %v5084 = vld [vmem:[#allocation7 + $0x148] sm:$0xff]
    %v5085 = vld [vmem:[#allocation7 + $0x150] sm:$0xff]
    %v5086 = vld [vmem:[#allocation7 + $0x158] sm:$0xff]
    %v5087 = vld [vmem:[#allocation7 + $0x160] sm:$0xff]
    %v5088 = vld [vmem:[#allocation7 + $0x168] sm:$0xff]
    %v5089 = vld [vmem:[#allocation7 + $0x170] sm:$0xff]
    %v5090 = vld [vmem:[#allocation7 + $0x178] sm:$0xff]
    %v5091 = vld [vmem:[#allocation7 + $0x180] sm:$0xff]
    %v5092 = vld [vmem:[#allocation7 + $0x188] sm:$0xff]
    %v5093 = vld [vmem:[#allocation7 + $0x190] sm:$0xff]
    %v5094 = vld [vmem:[#allocation7 + $0x198] sm:$0xff]
    %v5095 = vld [vmem:[#allocation7 + $0x1a0] sm:$0xff]
    %v5096 = vld [vmem:[#allocation7 + $0x1a8] sm:$0xff]
    %v5097 = vld [vmem:[#allocation7 + $0x1b0] sm:$0xff]
    %v5098 = vld [vmem:[#allocation7 + $0x1b8] sm:$0xff]
    %v5099 = vld [vmem:[#allocation7 + $0x1c0] sm:$0xff]
    %v5100 = vld [vmem:[#allocation7 + $0x1c8] sm:$0xff]
    %v5101 = vld [vmem:[#allocation7 + $0x1d0] sm:$0xff]
    %v5102 = vld [vmem:[#allocation7 + $0x1d8] sm:$0xff]
    %v5103 = vld [vmem:[#allocation7 + $0x1e0] sm:$0xff]
    %v5104 = vld [vmem:[#allocation7 + $0x1e8] sm:$0xff]
    %v5105 = vld [vmem:[#allocation7 + $0x1f0] sm:$0xff]
    %v5106 = vld [vmem:[#allocation7 + $0x1f8] sm:$0xff]
    %v5107 = vld [vmem:[#allocation7 + $0x200] sm:$0xff]
    %v5108 = vld [vmem:[#allocation7 + $0x208] sm:$0xff]
    %v5109 = vld [vmem:[#allocation7 + $0x210] sm:$0xff]
    %v5110 = vld [vmem:[#allocation7 + $0x218] sm:$0xff]
    %v5111 = vld [vmem:[#allocation7 + $0x220] sm:$0xff]
    %v5112 = vld [vmem:[#allocation7 + $0x228] sm:$0xff]
    %v5113 = vld [vmem:[#allocation7 + $0x230] sm:$0xff]
    %v5114 = vld [vmem:[#allocation7 + $0x238] sm:$0xff]
    %v5115 = vld [vmem:[#allocation7 + $0x240] sm:$0xff]
    %v5116 = vld [vmem:[#allocation7 + $0x248] sm:$0xff]
    %v5117 = vld [vmem:[#allocation7 + $0x250] sm:$0xff]
    %v5118 = vld [vmem:[#allocation7 + $0x258] sm:$0xff]
    %v5119 = vld [vmem:[#allocation7 + $0x260] sm:$0xff]
    %v5120 = vld [vmem:[#allocation7 + $0x268] sm:$0xff]
    %v5121 = vld [vmem:[#allocation7 + $0x270] sm:$0xff]
    %v5122 = vld [vmem:[#allocation7 + $0x278] sm:$0xff]
    %v5123 = vld [vmem:[#allocation7 + $0x280] sm:$0xff]
    %v5124 = vld [vmem:[#allocation7 + $0x288] sm:$0xff]
    %v5125 = vld [vmem:[#allocation7 + $0x290] sm:$0xff]
    %v5126 = vld [vmem:[#allocation7 + $0x298] sm:$0xff]
    %v5127 = vld [vmem:[#allocation7 + $0x2a0] sm:$0xff]
    %v5128 = vld [vmem:[#allocation7 + $0x2a8] sm:$0xff]
    %v5129 = vld [vmem:[#allocation7 + $0x2b0] sm:$0xff]
    %v5130 = vld [vmem:[#allocation7 + $0x2b8] sm:$0xff]
    %v5131 = vld [vmem:[#allocation7 + $0x2c0] sm:$0xff]
    %v5132 = vld [vmem:[#allocation7 + $0x2c8] sm:$0xff]
    %v5133 = vld [vmem:[#allocation7 + $0x2d0] sm:$0xff]
    %v5134 = vld [vmem:[#allocation7 + $0x2d8] sm:$0xff]
    %v5135 = vld [vmem:[#allocation7 + $0x2e0] sm:$0xff]
    %v5136 = vld [vmem:[#allocation7 + $0x2e8] sm:$0xff]
    %v5137 = vld [vmem:[#allocation7 + $0x2f0] sm:$0xff]
    %v5138 = vld [vmem:[#allocation7 + $0x2f8] sm:$0xff]
    %v5139 = vld [vmem:[#allocation7 + $0x300] sm:$0xff]
    %v5140 = vld [vmem:[#allocation7 + $0x308] sm:$0xff]
    %v5141 = vld [vmem:[#allocation7 + $0x310] sm:$0xff]
    %v5142 = vld [vmem:[#allocation7 + $0x318] sm:$0xff]
    %v5143 = vld [vmem:[#allocation7 + $0x320] sm:$0xff]
    %v5144 = vld [vmem:[#allocation7 + $0x328] sm:$0xff]
    %v5145 = vld [vmem:[#allocation7 + $0x330] sm:$0xff]
    %v5146 = vld [vmem:[#allocation7 + $0x338] sm:$0xff]
    %v5147 = vld [vmem:[#allocation7 + $0x340] sm:$0xff]
    %v5148 = vld [vmem:[#allocation7 + $0x348] sm:$0xff]
    %v5149 = vld [vmem:[#allocation7 + $0x350] sm:$0xff]
    %v5150 = vld [vmem:[#allocation7 + $0x358] sm:$0xff]
    %v5151 = vld [vmem:[#allocation7 + $0x360] sm:$0xff]
    %v5152 = vld [vmem:[#allocation7 + $0x368] sm:$0xff]
    %v5153 = vld [vmem:[#allocation7 + $0x370] sm:$0xff]
    %v5154 = vld [vmem:[#allocation7 + $0x378] sm:$0xff]
    %v5155 = vld [vmem:[#allocation7 + $0x380] sm:$0xff]
    %v5156 = vld [vmem:[#allocation7 + $0x388] sm:$0xff]
    %v5157 = vld [vmem:[#allocation7 + $0x390] sm:$0xff]
    %v5158 = vld [vmem:[#allocation7 + $0x398] sm:$0xff]
    %v5159 = vld [vmem:[#allocation7 + $0x3a0] sm:$0xff]
    %v5160 = vld [vmem:[#allocation7 + $0x3a8] sm:$0xff]
    %v5161 = vld [vmem:[#allocation7 + $0x3b0] sm:$0xff]
    %v5162 = vld [vmem:[#allocation7 + $0x3b8] sm:$0xff]
    %v5163 = vld [vmem:[#allocation7 + $0x3c0] sm:$0xff]
    %v5164 = vld [vmem:[#allocation7 + $0x3c8] sm:$0xff]
    %v5165 = vld [vmem:[#allocation7 + $0x3d0] sm:$0xff]
    %v5166 = vld [vmem:[#allocation7 + $0x3d8] sm:$0xff]
    %v5167 = vld [vmem:[#allocation7 + $0x3e0] sm:$0xff]
    %v5168 = vld [vmem:[#allocation7 + $0x3e8] sm:$0xff]
    %v5169 = vld [vmem:[#allocation7 + $0x3f0] sm:$0xff]
    %v5170 = vld [vmem:[#allocation7 + $0x3f8] sm:$0xff]
    %v5299 = vunpack.c.l.b16 %v5043
    %v5300 = vunpack.c.h.b16 %v5043
    %v5301 = vunpack.c.l.b16 %v5044
    %v5302 = vunpack.c.h.b16 %v5044
    %v5303 = vunpack.c.l.b16 %v5045
    %v5304 = vunpack.c.h.b16 %v5045
    %v5305 = vunpack.c.l.b16 %v5046
    %v5306 = vunpack.c.h.b16 %v5046
    %v5307 = vunpack.c.l.b16 %v5047
    %v5308 = vunpack.c.h.b16 %v5047
    %v5309 = vunpack.c.l.b16 %v5048
    %v5310 = vunpack.c.h.b16 %v5048
    %v5311 = vunpack.c.l.b16 %v5049
    %v5312 = vunpack.c.h.b16 %v5049
    %v5313 = vunpack.c.l.b16 %v5050
    %v5314 = vunpack.c.h.b16 %v5050
    %v5315 = vunpack.c.l.b16 %v5051
    %v5316 = vunpack.c.h.b16 %v5051
    %v5317 = vunpack.c.l.b16 %v5052
    %v5318 = vunpack.c.h.b16 %v5052
    %v5319 = vunpack.c.l.b16 %v5053
    %v5320 = vunpack.c.h.b16 %v5053
    %v5321 = vunpack.c.l.b16 %v5054
    %v5322 = vunpack.c.h.b16 %v5054
    %v5323 = vunpack.c.l.b16 %v5055
    %v5324 = vunpack.c.h.b16 %v5055
    %v5325 = vunpack.c.l.b16 %v5056
    %v5326 = vunpack.c.h.b16 %v5056
    %v5327 = vunpack.c.l.b16 %v5057
    %v5328 = vunpack.c.h.b16 %v5057
    %v5329 = vunpack.c.l.b16 %v5058
    %v5330 = vunpack.c.h.b16 %v5058
    %v5331 = vunpack.c.l.b16 %v5059
    %v5332 = vunpack.c.h.b16 %v5059
    %v5333 = vunpack.c.l.b16 %v5060
    %v5334 = vunpack.c.h.b16 %v5060
    %v5335 = vunpack.c.l.b16 %v5061
    %v5336 = vunpack.c.h.b16 %v5061
    %v5337 = vunpack.c.l.b16 %v5062
    %v5338 = vunpack.c.h.b16 %v5062
    %v5339 = vunpack.c.l.b16 %v5063
    %v5340 = vunpack.c.h.b16 %v5063
    %v5341 = vunpack.c.l.b16 %v5064
    %v5342 = vunpack.c.h.b16 %v5064
    %v5343 = vunpack.c.l.b16 %v5065
    %v5344 = vunpack.c.h.b16 %v5065
    %v5345 = vunpack.c.l.b16 %v5066
    %v5346 = vunpack.c.h.b16 %v5066
    %v5347 = vunpack.c.l.b16 %v5067
    %v5348 = vunpack.c.h.b16 %v5067
    %v5349 = vunpack.c.l.b16 %v5068
    %v5350 = vunpack.c.h.b16 %v5068
    %v5351 = vunpack.c.l.b16 %v5069
    %v5352 = vunpack.c.h.b16 %v5069
    %v5353 = vunpack.c.l.b16 %v5070
    %v5354 = vunpack.c.h.b16 %v5070
    %v5355 = vunpack.c.l.b16 %v5071
    %v5356 = vunpack.c.h.b16 %v5071
    %v5357 = vunpack.c.l.b16 %v5072
    %v5358 = vunpack.c.h.b16 %v5072
    %v5359 = vunpack.c.l.b16 %v5073
    %v5360 = vunpack.c.h.b16 %v5073
    %v5361 = vunpack.c.l.b16 %v5074
    %v5362 = vunpack.c.h.b16 %v5074
    %v5363 = vunpack.c.l.b16 %v5075
    %v5364 = vunpack.c.h.b16 %v5075
    %v5365 = vunpack.c.l.b16 %v5076
    %v5366 = vunpack.c.h.b16 %v5076
    %v5367 = vunpack.c.l.b16 %v5077
    %v5368 = vunpack.c.h.b16 %v5077
    %v5369 = vunpack.c.l.b16 %v5078
    %v5370 = vunpack.c.h.b16 %v5078
    %v5371 = vunpack.c.l.b16 %v5079
    %v5372 = vunpack.c.h.b16 %v5079
    %v5373 = vunpack.c.l.b16 %v5080
    %v5374 = vunpack.c.h.b16 %v5080
    %v5375 = vunpack.c.l.b16 %v5081
    %v5376 = vunpack.c.h.b16 %v5081
    %v5377 = vunpack.c.l.b16 %v5082
    %v5378 = vunpack.c.h.b16 %v5082
    %v5379 = vunpack.c.l.b16 %v5083
    %v5380 = vunpack.c.h.b16 %v5083
    %v5381 = vunpack.c.l.b16 %v5084
    %v5382 = vunpack.c.h.b16 %v5084
    %v5383 = vunpack.c.l.b16 %v5085
    %v5384 = vunpack.c.h.b16 %v5085
    %v5385 = vunpack.c.l.b16 %v5086
    %v5386 = vunpack.c.h.b16 %v5086
    %v5387 = vunpack.c.l.b16 %v5087
    %v5388 = vunpack.c.h.b16 %v5087
    %v5389 = vunpack.c.l.b16 %v5088
    %v5390 = vunpack.c.h.b16 %v5088
    %v5391 = vunpack.c.l.b16 %v5089
    %v5392 = vunpack.c.h.b16 %v5089
    %v5393 = vunpack.c.l.b16 %v5090
    %v5394 = vunpack.c.h.b16 %v5090
    %v5395 = vunpack.c.l.b16 %v5091
    %v5396 = vunpack.c.h.b16 %v5091
    %v5397 = vunpack.c.l.b16 %v5092
    %v5398 = vunpack.c.h.b16 %v5092
    %v5399 = vunpack.c.l.b16 %v5093
    %v5400 = vunpack.c.h.b16 %v5093
    %v5401 = vunpack.c.l.b16 %v5094
    %v5402 = vunpack.c.h.b16 %v5094
    %v5403 = vunpack.c.l.b16 %v5095
    %v5404 = vunpack.c.h.b16 %v5095
    %v5405 = vunpack.c.l.b16 %v5096
    %v5406 = vunpack.c.h.b16 %v5096
    %v5407 = vunpack.c.l.b16 %v5097
    %v5408 = vunpack.c.h.b16 %v5097
    %v5409 = vunpack.c.l.b16 %v5098
    %v5410 = vunpack.c.h.b16 %v5098
    %v5411 = vunpack.c.l.b16 %v5099
    %v5412 = vunpack.c.h.b16 %v5099
    %v5413 = vunpack.c.l.b16 %v5100
    %v5414 = vunpack.c.h.b16 %v5100
    %v5415 = vunpack.c.l.b16 %v5101
    %v5416 = vunpack.c.h.b16 %v5101
    %v5417 = vunpack.c.l.b16 %v5102
    %v5418 = vunpack.c.h.b16 %v5102
    %v5419 = vunpack.c.l.b16 %v5103
    %v5420 = vunpack.c.h.b16 %v5103
    %v5421 = vunpack.c.l.b16 %v5104
    %v5422 = vunpack.c.h.b16 %v5104
    %v5423 = vunpack.c.l.b16 %v5105
    %v5424 = vunpack.c.h.b16 %v5105
    %v5425 = vunpack.c.l.b16 %v5106
    %v5426 = vunpack.c.h.b16 %v5106
    %v5427 = vunpack.c.l.b16 %v5107
    %v5428 = vunpack.c.h.b16 %v5107
    %v5429 = vunpack.c.l.b16 %v5108
    %v5430 = vunpack.c.h.b16 %v5108
    %v5431 = vunpack.c.l.b16 %v5109
    %v5432 = vunpack.c.h.b16 %v5109
    %v5433 = vunpack.c.l.b16 %v5110
    %v5434 = vunpack.c.h.b16 %v5110
    %v5435 = vunpack.c.l.b16 %v5111
    %v5436 = vunpack.c.h.b16 %v5111
    %v5437 = vunpack.c.l.b16 %v5112
    %v5438 = vunpack.c.h.b16 %v5112
    %v5439 = vunpack.c.l.b16 %v5113
    %v5440 = vunpack.c.h.b16 %v5113
    %v5441 = vunpack.c.l.b16 %v5114
    %v5442 = vunpack.c.h.b16 %v5114
    %v5443 = vunpack.c.l.b16 %v5115
    %v5444 = vunpack.c.h.b16 %v5115
    %v5445 = vunpack.c.l.b16 %v5116
    %v5446 = vunpack.c.h.b16 %v5116
    %v5447 = vunpack.c.l.b16 %v5117
    %v5448 = vunpack.c.h.b16 %v5117
    %v5449 = vunpack.c.l.b16 %v5118
    %v5450 = vunpack.c.h.b16 %v5118
    %v5451 = vunpack.c.l.b16 %v5119
    %v5452 = vunpack.c.h.b16 %v5119
    %v5453 = vunpack.c.l.b16 %v5120
    %v5454 = vunpack.c.h.b16 %v5120
    %v5455 = vunpack.c.l.b16 %v5121
    %v5456 = vunpack.c.h.b16 %v5121
    %v5457 = vunpack.c.l.b16 %v5122
    %v5458 = vunpack.c.h.b16 %v5122
    %v5459 = vunpack.c.l.b16 %v5123
    %v5460 = vunpack.c.h.b16 %v5123
    %v5461 = vunpack.c.l.b16 %v5124
    %v5462 = vunpack.c.h.b16 %v5124
    %v5463 = vunpack.c.l.b16 %v5125
    %v5464 = vunpack.c.h.b16 %v5125
    %v5465 = vunpack.c.l.b16 %v5126
    %v5466 = vunpack.c.h.b16 %v5126
    %v5467 = vunpack.c.l.b16 %v5127
    %v5468 = vunpack.c.h.b16 %v5127
    %v5469 = vunpack.c.l.b16 %v5128
    %v5470 = vunpack.c.h.b16 %v5128
    %v5471 = vunpack.c.l.b16 %v5129
    %v5472 = vunpack.c.h.b16 %v5129
    %v5473 = vunpack.c.l.b16 %v5130
    %v5474 = vunpack.c.h.b16 %v5130
    %v5475 = vunpack.c.l.b16 %v5131
    %v5476 = vunpack.c.h.b16 %v5131
    %v5477 = vunpack.c.l.b16 %v5132
    %v5478 = vunpack.c.h.b16 %v5132
    %v5479 = vunpack.c.l.b16 %v5133
    %v5480 = vunpack.c.h.b16 %v5133
    %v5481 = vunpack.c.l.b16 %v5134
    %v5482 = vunpack.c.h.b16 %v5134
    %v5483 = vunpack.c.l.b16 %v5135
    %v5484 = vunpack.c.h.b16 %v5135
    %v5485 = vunpack.c.l.b16 %v5136
    %v5486 = vunpack.c.h.b16 %v5136
    %v5487 = vunpack.c.l.b16 %v5137
    %v5488 = vunpack.c.h.b16 %v5137
    %v5489 = vunpack.c.l.b16 %v5138
    %v5490 = vunpack.c.h.b16 %v5138
    %v5491 = vunpack.c.l.b16 %v5139
    %v5492 = vunpack.c.h.b16 %v5139
    %v5493 = vunpack.c.l.b16 %v5140
    %v5494 = vunpack.c.h.b16 %v5140
    %v5495 = vunpack.c.l.b16 %v5141
    %v5496 = vunpack.c.h.b16 %v5141
    %v5497 = vunpack.c.l.b16 %v5142
    %v5498 = vunpack.c.h.b16 %v5142
    %v5499 = vunpack.c.l.b16 %v5143
    %v5500 = vunpack.c.h.b16 %v5143
    %v5501 = vunpack.c.l.b16 %v5144
    %v5502 = vunpack.c.h.b16 %v5144
    %v5503 = vunpack.c.l.b16 %v5145
    %v5504 = vunpack.c.h.b16 %v5145
    %v5505 = vunpack.c.l.b16 %v5146
    %v5506 = vunpack.c.h.b16 %v5146
    %v5507 = vunpack.c.l.b16 %v5147
    %v5508 = vunpack.c.h.b16 %v5147
    %v5509 = vunpack.c.l.b16 %v5148
    %v5510 = vunpack.c.h.b16 %v5148
    %v5511 = vunpack.c.l.b16 %v5149
    %v5512 = vunpack.c.h.b16 %v5149
    %v5513 = vunpack.c.l.b16 %v5150
    %v5514 = vunpack.c.h.b16 %v5150
    %v5515 = vunpack.c.l.b16 %v5151
    %v5516 = vunpack.c.h.b16 %v5151
    %v5517 = vunpack.c.l.b16 %v5152
    %v5518 = vunpack.c.h.b16 %v5152
    %v5519 = vunpack.c.l.b16 %v5153
    %v5520 = vunpack.c.h.b16 %v5153
    %v5521 = vunpack.c.l.b16 %v5154
    %v5522 = vunpack.c.h.b16 %v5154
    %v5523 = vunpack.c.l.b16 %v5155
    %v5524 = vunpack.c.h.b16 %v5155
    %v5525 = vunpack.c.l.b16 %v5156
    %v5526 = vunpack.c.h.b16 %v5156
    %v5527 = vunpack.c.l.b16 %v5157
    %v5528 = vunpack.c.h.b16 %v5157
    %v5529 = vunpack.c.l.b16 %v5158
    %v5530 = vunpack.c.h.b16 %v5158
    %v5531 = vunpack.c.l.b16 %v5159
    %v5532 = vunpack.c.h.b16 %v5159
    %v5533 = vunpack.c.l.b16 %v5160
    %v5534 = vunpack.c.h.b16 %v5160
    %v5535 = vunpack.c.l.b16 %v5161
    %v5536 = vunpack.c.h.b16 %v5161
    %v5537 = vunpack.c.l.b16 %v5162
    %v5538 = vunpack.c.h.b16 %v5162
    %v5539 = vunpack.c.l.b16 %v5163
    %v5540 = vunpack.c.h.b16 %v5163
    %v5541 = vunpack.c.l.b16 %v5164
    %v5542 = vunpack.c.h.b16 %v5164
    %v5543 = vunpack.c.l.b16 %v5165
    %v5544 = vunpack.c.h.b16 %v5165
    %v5545 = vunpack.c.l.b16 %v5166
    %v5546 = vunpack.c.h.b16 %v5166
    %v5547 = vunpack.c.l.b16 %v5167
    %v5548 = vunpack.c.h.b16 %v5167
    %v5549 = vunpack.c.l.b16 %v5168
    %v5550 = vunpack.c.h.b16 %v5168
    %v5551 = vunpack.c.l.b16 %v5169
    %v5552 = vunpack.c.h.b16 %v5169
    %v5553 = vunpack.c.l.b16 %v5170
    %v5554 = vunpack.c.h.b16 %v5170
    %v5555 = vpack.c.b16 %v5307, %v5299
    %v5556 = vpack.c.b16 %v5308, %v5300
    %v5557 = vpack.c.b16 %v5309, %v5301
    %v5558 = vpack.c.b16 %v5310, %v5302
    %v5559 = vpack.c.b16 %v5311, %v5303
    %v5560 = vpack.c.b16 %v5312, %v5304
    %v5561 = vpack.c.b16 %v5313, %v5305
    %v5562 = vpack.c.b16 %v5314, %v5306
    %v5563 = vpack.c.b16 %v5323, %v5315
    %v5564 = vpack.c.b16 %v5324, %v5316
    %v5565 = vpack.c.b16 %v5325, %v5317
    %v5566 = vpack.c.b16 %v5326, %v5318
    %v5567 = vpack.c.b16 %v5327, %v5319
    %v5568 = vpack.c.b16 %v5328, %v5320
    %v5569 = vpack.c.b16 %v5329, %v5321
    %v5570 = vpack.c.b16 %v5330, %v5322
    %v5571 = vpack.c.b16 %v5339, %v5331
    %v5572 = vpack.c.b16 %v5340, %v5332
    %v5573 = vpack.c.b16 %v5341, %v5333
    %v5574 = vpack.c.b16 %v5342, %v5334
    %v5575 = vpack.c.b16 %v5343, %v5335
    %v5576 = vpack.c.b16 %v5344, %v5336
    %v5577 = vpack.c.b16 %v5345, %v5337
    %v5578 = vpack.c.b16 %v5346, %v5338
    %v5579 = vpack.c.b16 %v5355, %v5347
    %v5580 = vpack.c.b16 %v5356, %v5348
    %v5581 = vpack.c.b16 %v5357, %v5349
    %v5582 = vpack.c.b16 %v5358, %v5350
    %v5583 = vpack.c.b16 %v5359, %v5351
    %v5584 = vpack.c.b16 %v5360, %v5352
    %v5585 = vpack.c.b16 %v5361, %v5353
    %v5586 = vpack.c.b16 %v5362, %v5354
    %v5587 = vpack.c.b16 %v5371, %v5363
    %v5588 = vpack.c.b16 %v5372, %v5364
    %v5589 = vpack.c.b16 %v5373, %v5365
    %v5590 = vpack.c.b16 %v5374, %v5366
    %v5591 = vpack.c.b16 %v5375, %v5367
    %v5592 = vpack.c.b16 %v5376, %v5368
    %v5593 = vpack.c.b16 %v5377, %v5369
    %v5594 = vpack.c.b16 %v5378, %v5370
    %v5595 = vpack.c.b16 %v5387, %v5379
    %v5596 = vpack.c.b16 %v5388, %v5380
    %v5597 = vpack.c.b16 %v5389, %v5381
    %v5598 = vpack.c.b16 %v5390, %v5382
    %v5599 = vpack.c.b16 %v5391, %v5383
    %v5600 = vpack.c.b16 %v5392, %v5384
    %v5601 = vpack.c.b16 %v5393, %v5385
    %v5602 = vpack.c.b16 %v5394, %v5386
    %v5603 = vpack.c.b16 %v5403, %v5395
    %v5604 = vpack.c.b16 %v5404, %v5396
    %v5605 = vpack.c.b16 %v5405, %v5397
    %v5606 = vpack.c.b16 %v5406, %v5398
    %v5607 = vpack.c.b16 %v5407, %v5399
    %v5608 = vpack.c.b16 %v5408, %v5400
    %v5609 = vpack.c.b16 %v5409, %v5401
    %v5610 = vpack.c.b16 %v5410, %v5402
    %v5611 = vpack.c.b16 %v5419, %v5411
    %v5612 = vpack.c.b16 %v5420, %v5412
    %v5613 = vpack.c.b16 %v5421, %v5413
    %v5614 = vpack.c.b16 %v5422, %v5414
    %v5615 = vpack.c.b16 %v5423, %v5415
    %v5616 = vpack.c.b16 %v5424, %v5416
    %v5617 = vpack.c.b16 %v5425, %v5417
    %v5618 = vpack.c.b16 %v5426, %v5418
    %v5619 = vpack.c.b16 %v5435, %v5427
    %v5620 = vpack.c.b16 %v5436, %v5428
    %v5621 = vpack.c.b16 %v5437, %v5429
    %v5622 = vpack.c.b16 %v5438, %v5430
    %v5623 = vpack.c.b16 %v5439, %v5431
    %v5624 = vpack.c.b16 %v5440, %v5432
    %v5625 = vpack.c.b16 %v5441, %v5433
    %v5626 = vpack.c.b16 %v5442, %v5434
    %v5627 = vpack.c.b16 %v5451, %v5443
    %v5628 = vpack.c.b16 %v5452, %v5444
    %v5629 = vpack.c.b16 %v5453, %v5445
    %v5630 = vpack.c.b16 %v5454, %v5446
    %v5631 = vpack.c.b16 %v5455, %v5447
    %v5632 = vpack.c.b16 %v5456, %v5448
    %v5633 = vpack.c.b16 %v5457, %v5449
    %v5634 = vpack.c.b16 %v5458, %v5450
    %v5635 = vpack.c.b16 %v5467, %v5459
    %v5636 = vpack.c.b16 %v5468, %v5460
    %v5637 = vpack.c.b16 %v5469, %v5461
    %v5638 = vpack.c.b16 %v5470, %v5462
    %v5639 = vpack.c.b16 %v5471, %v5463
    %v5640 = vpack.c.b16 %v5472, %v5464
    %v5641 = vpack.c.b16 %v5473, %v5465
    %v5642 = vpack.c.b16 %v5474, %v5466
    %v5643 = vpack.c.b16 %v5483, %v5475
    %v5644 = vpack.c.b16 %v5484, %v5476
    %v5645 = vpack.c.b16 %v5485, %v5477
    %v5646 = vpack.c.b16 %v5486, %v5478
    %v5647 = vpack.c.b16 %v5487, %v5479
    %v5648 = vpack.c.b16 %v5488, %v5480
    %v5649 = vpack.c.b16 %v5489, %v5481
    %v5650 = vpack.c.b16 %v5490, %v5482
    %v5651 = vpack.c.b16 %v5499, %v5491
    %v5652 = vpack.c.b16 %v5500, %v5492
    %v5653 = vpack.c.b16 %v5501, %v5493
    %v5654 = vpack.c.b16 %v5502, %v5494
    %v5655 = vpack.c.b16 %v5503, %v5495
    %v5656 = vpack.c.b16 %v5504, %v5496
    %v5657 = vpack.c.b16 %v5505, %v5497
    %v5658 = vpack.c.b16 %v5506, %v5498
    %v5659 = vpack.c.b16 %v5515, %v5507
    %v5660 = vpack.c.b16 %v5516, %v5508
    %v5661 = vpack.c.b16 %v5517, %v5509
    %v5662 = vpack.c.b16 %v5518, %v5510
    %v5663 = vpack.c.b16 %v5519, %v5511
    %v5664 = vpack.c.b16 %v5520, %v5512
    %v5665 = vpack.c.b16 %v5521, %v5513
    %v5666 = vpack.c.b16 %v5522, %v5514
    %v5667 = vpack.c.b16 %v5531, %v5523
    %v5668 = vpack.c.b16 %v5532, %v5524
    %v5669 = vpack.c.b16 %v5533, %v5525
    %v5670 = vpack.c.b16 %v5534, %v5526
    %v5671 = vpack.c.b16 %v5535, %v5527
    %v5672 = vpack.c.b16 %v5536, %v5528
    %v5673 = vpack.c.b16 %v5537, %v5529
    %v5674 = vpack.c.b16 %v5538, %v5530
    %v5675 = vpack.c.b16 %v5547, %v5539
    %v5676 = vpack.c.b16 %v5548, %v5540
    %v5677 = vpack.c.b16 %v5549, %v5541
    %v5678 = vpack.c.b16 %v5550, %v5542
    %v5679 = vpack.c.b16 %v5551, %v5543
    %v5680 = vpack.c.b16 %v5552, %v5544
    %v5681 = vpack.c.b16 %v5553, %v5545
    %v5682 = vpack.c.b16 %v5554, %v5546
    %5811 = vmatprep.subr.bf16.mxu0 %v5556
    %5812 = vmatpush1.bf16.msra.mxu0 %v5555
    %5813 = vmatprep.subr.bf16.mxu0 %v5564
    %5814 = vmatpush1.bf16.msra.mxu0 %v5563
    %5815 = vmatprep.subr.bf16.mxu0 %v5572
    %5816 = vmatpush1.bf16.msra.mxu0 %v5571
    %5817 = vmatprep.subr.bf16.mxu0 %v5580
    %5818 = vmatpush1.bf16.msra.mxu0 %v5579
    %5819 = vmatprep.subr.bf16.mxu0 %v5588
    %5820 = vmatpush1.bf16.msra.mxu0 %v5587
    %5821 = vmatprep.subr.bf16.mxu0 %v5596
    %5822 = vmatpush1.bf16.msra.mxu0 %v5595
    %5823 = vmatprep.subr.bf16.mxu0 %v5604
    %5824 = vmatpush1.bf16.msra.mxu0 %v5603
    %5825 = vmatprep.subr.bf16.mxu0 %v5612
    %5826 = vmatpush1.bf16.msra.mxu0 %v5611
    %5827 = vmatprep.subr.bf16.mxu0 %v5620
    %5828 = vmatpush1.bf16.msra.mxu0 %v5619
    %5829 = vmatprep.subr.bf16.mxu0 %v5628
    %5830 = vmatpush1.bf16.msra.mxu0 %v5627
    %5831 = vmatprep.subr.bf16.mxu0 %v5636
    %5832 = vmatpush1.bf16.msra.mxu0 %v5635
    %5833 = vmatprep.subr.bf16.mxu0 %v5644
    %5834 = vmatpush1.bf16.msra.mxu0 %v5643
    %5835 = vmatprep.subr.bf16.mxu0 %v5652
    %5836 = vmatpush1.bf16.msra.mxu0 %v5651
    %5837 = vmatprep.subr.bf16.mxu0 %v5660
    %5838 = vmatpush1.bf16.msra.mxu0 %v5659
    %5839 = vmatprep.subr.bf16.mxu0 %v5668
    %5840 = vmatpush1.bf16.msra.mxu0 %v5667
    %5841 = vmatprep.subr.bf16.mxu0 %v5676
    %5842 = vmatpush1.bf16.msra.mxu0 %v5675
    %5843 = vmatprep.mubr.bf16.mxu0 %v5042
    %5844 = vmatmul.mubr.bf16.gmra.mrb[0].mxu0 %v5041
    %v5845 = vpop.f32.mrb[0].mxu0
    %v5846 = vadd.f32 0.0, %v5845
    %v5847 = vpop.f32.mrb[0].mxu0
    %v5848 = vadd.f32 0.0, %v5847
    %v5849 = vpop.f32.mrb[0].mxu0
    %v5850 = vpop.f32.mrb[0].mxu0
    %5851 = vdwg.mxu0
    %5852 = vmatprep.subr.bf16.mxu0 %v5558
    %5853 = vmatpush1.bf16.msra.mxu0 %v5557
    %5854 = vmatprep.subr.bf16.mxu0 %v5566
    %5855 = vmatpush1.bf16.msra.mxu0 %v5565
    %5856 = vmatprep.subr.bf16.mxu0 %v5574
    %5857 = vmatpush1.bf16.msra.mxu0 %v5573
    %5858 = vmatprep.subr.bf16.mxu0 %v5582
    %5859 = vmatpush1.bf16.msra.mxu0 %v5581
    %5860 = vmatprep.subr.bf16.mxu0 %v5590
    %5861 = vmatpush1.bf16.msra.mxu0 %v5589
    %5862 = vmatprep.subr.bf16.mxu0 %v5598
    %5863 = vmatpush1.bf16.msra.mxu0 %v5597
    %5864 = vmatprep.subr.bf16.mxu0 %v5606
    %5865 = vmatpush1.bf16.msra.mxu0 %v5605
    %5866 = vmatprep.subr.bf16.mxu0 %v5614
    %5867 = vmatpush1.bf16.msra.mxu0 %v5613
    %5868 = vmatprep.subr.bf16.mxu0 %v5622
    %5869 = vmatpush1.bf16.msra.mxu0 %v5621
    %5870 = vmatprep.subr.bf16.mxu0 %v5630
    %5871 = vmatpush1.bf16.msra.mxu0 %v5629
    %5872 = vmatprep.subr.bf16.mxu0 %v5638
    %5873 = vmatpush1.bf16.msra.mxu0 %v5637
    %5874 = vmatprep.subr.bf16.mxu0 %v5646
    %5875 = vmatpush1.bf16.msra.mxu0 %v5645
    %5876 = vmatprep.subr.bf16.mxu0 %v5654
    %5877 = vmatpush1.bf16.msra.mxu0 %v5653
    %5878 = vmatprep.subr.bf16.mxu0 %v5662
    %5879 = vmatpush1.bf16.msra.mxu0 %v5661
    %5880 = vmatprep.subr.bf16.mxu0 %v5670
    %5881 = vmatpush1.bf16.msra.mxu0 %v5669
    %5882 = vmatprep.subr.bf16.mxu0 %v5678
    %5883 = vmatpush1.bf16.msra.mxu0 %v5677
    %5884 = vmatprep.mubr.bf16.mxu0 %v5042
    %5885 = vmatmul.mubr.bf16.gmra.mrb[0].mxu0 %v5041
    %v5886 = vpop.f32.mrb[0].mxu0
    %v5887 = vadd.f32 0.0, %v5886
    %v5888 = vpop.f32.mrb[0].mxu0
    %v5889 = vadd.f32 0.0, %v5888
    %v5890 = vpop.f32.mrb[0].mxu0
    %v5891 = vpop.f32.mrb[0].mxu0
    %5892 = vdwg.mxu0
    %5893 = vmatprep.subr.bf16.mxu0 %v5560
    %5894 = vmatpush1.bf16.msra.mxu0 %v5559
    %5895 = vmatprep.subr.bf16.mxu0 %v5568
    %5896 = vmatpush1.bf16.msra.mxu0 %v5567
    %5897 = vmatprep.subr.bf16.mxu0 %v5576
    %5898 = vmatpush1.bf16.msra.mxu0 %v5575
    %5899 = vmatprep.subr.bf16.mxu0 %v5584
    %5900 = vmatpush1.bf16.msra.mxu0 %v5583
    %5901 = vmatprep.subr.bf16.mxu0 %v5592
    %5902 = vmatpush1.bf16.msra.mxu0 %v5591
    %5903 = vmatprep.subr.bf16.mxu0 %v5600
    %5904 = vmatpush1.bf16.msra.mxu0 %v5599
    %5905 = vmatprep.subr.bf16.mxu0 %v5608
    %5906 = vmatpush1.bf16.msra.mxu0 %v5607
    %5907 = vmatprep.subr.bf16.mxu0 %v5616
    %5908 = vmatpush1.bf16.msra.mxu0 %v5615
    %5909 = vmatprep.subr.bf16.mxu0 %v5624
    %5910 = vmatpush1.bf16.msra.mxu0 %v5623
    %5911 = vmatprep.subr.bf16.mxu0 %v5632
    %5912 = vmatpush1.bf16.msra.mxu0 %v5631
    %5913 = vmatprep.subr.bf16.mxu0 %v5640
    %5914 = vmatpush1.bf16.msra.mxu0 %v5639
    %5915 = vmatprep.subr.bf16.mxu0 %v5648
    %5916 = vmatpush1.bf16.msra.mxu0 %v5647
    %5917 = vmatprep.subr.bf16.mxu0 %v5656
    %5918 = vmatpush1.bf16.msra.mxu0 %v5655
    %5919 = vmatprep.subr.bf16.mxu0 %v5664
    %5920 = vmatpush1.bf16.msra.mxu0 %v5663
    %5921 = vmatprep.subr.bf16.mxu0 %v5672
    %5922 = vmatpush1.bf16.msra.mxu0 %v5671
    %5923 = vmatprep.subr.bf16.mxu0 %v5680
    %5924 = vmatpush1.bf16.msra.mxu0 %v5679
    %5925 = vmatprep.mubr.bf16.mxu0 %v5042
    %5926 = vmatmul.mubr.bf16.gmra.mrb[0].mxu0 %v5041
    %v5927 = vpop.f32.mrb[0].mxu0
    %v5928 = vadd.f32 0.0, %v5927
    %v5929 = vpop.f32.mrb[0].mxu0
    %v5930 = vadd.f32 0.0, %v5929
    %v5931 = vpop.f32.mrb[0].mxu0
    %v5932 = vpop.f32.mrb[0].mxu0
    %5933 = vdwg.mxu0
    %5934 = vmatprep.subr.bf16.mxu0 %v5562
    %5935 = vmatpush1.bf16.msra.mxu0 %v5561
    %5936 = vmatprep.subr.bf16.mxu0 %v5570
    %5937 = vmatpush1.bf16.msra.mxu0 %v5569
    %5938 = vmatprep.subr.bf16.mxu0 %v5578
    %5939 = vmatpush1.bf16.msra.mxu0 %v5577
    %5940 = vmatprep.subr.bf16.mxu0 %v5586
    %5941 = vmatpush1.bf16.msra.mxu0 %v5585
    %5942 = vmatprep.subr.bf16.mxu0 %v5594
    %5943 = vmatpush1.bf16.msra.mxu0 %v5593
    %5944 = vmatprep.subr.bf16.mxu0 %v5602
    %5945 = vmatpush1.bf16.msra.mxu0 %v5601
    %5946 = vmatprep.subr.bf16.mxu0 %v5610
    %5947 = vmatpush1.bf16.msra.mxu0 %v5609
    %5948 = vmatprep.subr.bf16.mxu0 %v5618
    %5949 = vmatpush1.bf16.msra.mxu0 %v5617
    %5950 = vmatprep.subr.bf16.mxu0 %v5626
    %5951 = vmatpush1.bf16.msra.mxu0 %v5625
    %5952 = vmatprep.subr.bf16.mxu0 %v5634
    %5953 = vmatpush1.bf16.msra.mxu0 %v5633
    %5954 = vmatprep.subr.bf16.mxu0 %v5642
    %5955 = vmatpush1.bf16.msra.mxu0 %v5641
    %5956 = vmatprep.subr.bf16.mxu0 %v5650
    %5957 = vmatpush1.bf16.msra.mxu0 %v5649
    %5958 = vmatprep.subr.bf16.mxu0 %v5658
    %5959 = vmatpush1.bf16.msra.mxu0 %v5657
    %5960 = vmatprep.subr.bf16.mxu0 %v5666
    %5961 = vmatpush1.bf16.msra.mxu0 %v5665
    %5962 = vmatprep.subr.bf16.mxu0 %v5674
    %5963 = vmatpush1.bf16.msra.mxu0 %v5673
    %5964 = vmatprep.subr.bf16.mxu0 %v5682
    %5965 = vmatpush1.bf16.msra.mxu0 %v5681
    %5966 = vmatprep.mubr.bf16.mxu0 %v5042
    %5967 = vmatmul.mubr.bf16.gmra.mrb[0].mxu0 %v5041
    %v5968 = vpop.f32.mrb[0].mxu0
    %v5969 = vadd.f32 0.0, %v5968
    %v5970 = vpop.f32.mrb[0].mxu0
    %v5971 = vadd.f32 0.0, %v5970
    %v5972 = vpop.f32.mrb[0].mxu0
    %v5973 = vpop.f32.mrb[0].mxu0
    %5974 = vdwg.mxu0
    %v5975 = vadd.f32 %v3573, %v5846
    %v5976 = vadd.f32 %v3575, %v5848
    %v5977 = vadd.f32 %v3719, %v5887
    %v5978 = vadd.f32 %v3721, %v5889
    %v5979 = vadd.f32 %v3865, %v5928
    %v5980 = vadd.f32 %v3867, %v5930
    %v5981 = vadd.f32 %v4011, %v5969
    %v5982 = vadd.f32 %v4013, %v5971
    %v5983 = vxor.u32 %v5975, 2147483648
    %v5984 = vxor.u32 %v5976, 2147483648
    %v5985 = vmul.f32 %v5983, 1.442695
    %v5986 = vpow.pop %v5985
    %v5987 = vmul.f32 %v5984, 1.442695
    %v5988 = vpow.pop %v5987
    %v5989 = vadd.f32 %v5986, 1.0
    %v5990 = vadd.f32 %v5988, 1.0
    %v5991 = vrcp.pop %v5989
    %v5992 = vmul.f32 1.0, %v5991
    %v5993 = vrcp.pop %v5990
    %v5994 = vmul.f32 1.0, %v5993
    %v5995 = vxor.u32 %v5977, 2147483648
    %v5996 = vxor.u32 %v5978, 2147483648
    %v5997 = vmul.f32 %v5995, 1.442695
    %v5998 = vpow.pop %v5997
    %v5999 = vmul.f32 %v5996, 1.442695
    %v6000 = vpow.pop %v5999
    %v6001 = vadd.f32 %v5998, 1.0
    %v6002 = vadd.f32 %v6000, 1.0
    %v6003 = vrcp.pop %v6001
    %v6004 = vmul.f32 1.0, %v6003
    %v6005 = vrcp.pop %v6002
    %v6006 = vmul.f32 1.0, %v6005
    %v6007 = vtanh.pop %v5979
    %v6008 = vtanh.pop %v5980
    %v6009 = vxor.u32 %v5981, 2147483648
    %v6010 = vxor.u32 %v5982, 2147483648
    %v6011 = vmul.f32 %v6009, 1.442695
    %v6012 = vpow.pop %v6011
    %v6013 = vmul.f32 %v6010, 1.442695
    %v6014 = vpow.pop %v6013
    %v6015 = vadd.f32 %v6012, 1.0
    %v6016 = vadd.f32 %v6014, 1.0
    %v6017 = vrcp.pop %v6015
    %v6018 = vmul.f32 1.0, %v6017
    %v6019 = vrcp.pop %v6016
    %v6020 = vmul.f32 1.0, %v6019
    %v6021 = vmul.f32 %v6004, %v5033
    %v6022 = vmul.f32 %v6006, %v5034
    %v6023 = vmul.f32 %v5992, %v6007
    %v6024 = vmul.f32 %v5994, %v6008
    %v6025 = vadd.f32 %v6021, %v6023
    %v6026 = vadd.f32 %v6022, %v6024
    %v6027 = vtanh.pop %v6025
    %v6028 = vtanh.pop %v6026
    %v6029 = vmul.f32 %v6018, %v6027
    %v6030 = vmul.f32 %v6020, %v6028
    %s6031 = scalar_lea.vmem [#allocation4], 16
    %6032 = vst [vmem:[%s6031] sm:$0xff] %v6029
    %6033 = vst [vmem:[%s6031 + $0x8] sm:$0xff] %v6030
    %v6034 = vpack.c.bf16 %v6029, %v6029
    %v6035 = vpack.c.bf16 %v6030, %v6030
    %v6036 = vld [vmem:[#allocation7] sm:$0xff]
    %v6037 = vld [vmem:[#allocation7 + $0x8] sm:$0xff]
    %v6038 = vld [vmem:[#allocation7 + $0x10] sm:$0xff]
    %v6039 = vld [vmem:[#allocation7 + $0x18] sm:$0xff]
    %v6040 = vld [vmem:[#allocation7 + $0x20] sm:$0xff]
    %v6041 = vld [vmem:[#allocation7 + $0x28] sm:$0xff]
    %v6042 = vld [vmem:[#allocation7 + $0x30] sm:$0xff]
    %v6043 = vld [vmem:[#allocation7 + $0x38] sm:$0xff]
    %v6044 = vld [vmem:[#allocation7 + $0x40] sm:$0xff]
    %v6045 = vld [vmem:[#allocation7 + $0x48] sm:$0xff]
    %v6046 = vld [vmem:[#allocation7 + $0x50] sm:$0xff]
    %v6047 = vld [vmem:[#allocation7 + $0x58] sm:$0xff]
    %v6048 = vld [vmem:[#allocation7 + $0x60] sm:$0xff]
    %v6049 = vld [vmem:[#allocation7 + $0x68] sm:$0xff]
    %v6050 = vld [vmem:[#allocation7 + $0x70] sm:$0xff]
    %v6051 = vld [vmem:[#allocation7 + $0x78] sm:$0xff]
    %v6052 = vld [vmem:[#allocation7 + $0x80] sm:$0xff]
    %v6053 = vld [vmem:[#allocation7 + $0x88] sm:$0xff]
    %v6054 = vld [vmem:[#allocation7 + $0x90] sm:$0xff]
    %v6055 = vld [vmem:[#allocation7 + $0x98] sm:$0xff]
    %v6056 = vld [vmem:[#allocation7 + $0xa0] sm:$0xff]
    %v6057 = vld [vmem:[#allocation7 + $0xa8] sm:$0xff]
    %v6058 = vld [vmem:[#allocation7 + $0xb0] sm:$0xff]
    %v6059 = vld [vmem:[#allocation7 + $0xb8] sm:$0xff]
    %v6060 = vld [vmem:[#allocation7 + $0xc0] sm:$0xff]
    %v6061 = vld [vmem:[#allocation7 + $0xc8] sm:$0xff]
    %v6062 = vld [vmem:[#allocation7 + $0xd0] sm:$0xff]
    %v6063 = vld [vmem:[#allocation7 + $0xd8] sm:$0xff]
    %v6064 = vld [vmem:[#allocation7 + $0xe0] sm:$0xff]
    %v6065 = vld [vmem:[#allocation7 + $0xe8] sm:$0xff]
    %v6066 = vld [vmem:[#allocation7 + $0xf0] sm:$0xff]
    %v6067 = vld [vmem:[#allocation7 + $0xf8] sm:$0xff]
    %v6068 = vld [vmem:[#allocation7 + $0x100] sm:$0xff]
    %v6069 = vld [vmem:[#allocation7 + $0x108] sm:$0xff]
    %v6070 = vld [vmem:[#allocation7 + $0x110] sm:$0xff]
    %v6071 = vld [vmem:[#allocation7 + $0x118] sm:$0xff]
    %v6072 = vld [vmem:[#allocation7 + $0x120] sm:$0xff]
    %v6073 = vld [vmem:[#allocation7 + $0x128] sm:$0xff]
    %v6074 = vld [vmem:[#allocation7 + $0x130] sm:$0xff]
    %v6075 = vld [vmem:[#allocation7 + $0x138] sm:$0xff]
    %v6076 = vld [vmem:[#allocation7 + $0x140] sm:$0xff]
    %v6077 = vld [vmem:[#allocation7 + $0x148] sm:$0xff]
    %v6078 = vld [vmem:[#allocation7 + $0x150] sm:$0xff]
    %v6079 = vld [vmem:[#allocation7 + $0x158] sm:$0xff]
    %v6080 = vld [vmem:[#allocation7 + $0x160] sm:$0xff]
    %v6081 = vld [vmem:[#allocation7 + $0x168] sm:$0xff]
    %v6082 = vld [vmem:[#allocation7 + $0x170] sm:$0xff]
    %v6083 = vld [vmem:[#allocation7 + $0x178] sm:$0xff]
    %v6084 = vld [vmem:[#allocation7 + $0x180] sm:$0xff]
    %v6085 = vld [vmem:[#allocation7 + $0x188] sm:$0xff]
    %v6086 = vld [vmem:[#allocation7 + $0x190] sm:$0xff]
    %v6087 = vld [vmem:[#allocation7 + $0x198] sm:$0xff]
    %v6088 = vld [vmem:[#allocation7 + $0x1a0] sm:$0xff]
    %v6089 = vld [vmem:[#allocation7 + $0x1a8] sm:$0xff]
    %v6090 = vld [vmem:[#allocation7 + $0x1b0] sm:$0xff]
    %v6091 = vld [vmem:[#allocation7 + $0x1b8] sm:$0xff]
    %v6092 = vld [vmem:[#allocation7 + $0x1c0] sm:$0xff]
    %v6093 = vld [vmem:[#allocation7 + $0x1c8] sm:$0xff]
    %v6094 = vld [vmem:[#allocation7 + $0x1d0] sm:$0xff]
    %v6095 = vld [vmem:[#allocation7 + $0x1d8] sm:$0xff]
    %v6096 = vld [vmem:[#allocation7 + $0x1e0] sm:$0xff]
    %v6097 = vld [vmem:[#allocation7 + $0x1e8] sm:$0xff]
    %v6098 = vld [vmem:[#allocation7 + $0x1f0] sm:$0xff]
    %v6099 = vld [vmem:[#allocation7 + $0x1f8] sm:$0xff]
    %v6100 = vld [vmem:[#allocation7 + $0x200] sm:$0xff]
    %v6101 = vld [vmem:[#allocation7 + $0x208] sm:$0xff]
    %v6102 = vld [vmem:[#allocation7 + $0x210] sm:$0xff]
    %v6103 = vld [vmem:[#allocation7 + $0x218] sm:$0xff]
    %v6104 = vld [vmem:[#allocation7 + $0x220] sm:$0xff]
    %v6105 = vld [vmem:[#allocation7 + $0x228] sm:$0xff]
    %v6106 = vld [vmem:[#allocation7 + $0x230] sm:$0xff]
    %v6107 = vld [vmem:[#allocation7 + $0x238] sm:$0xff]
    %v6108 = vld [vmem:[#allocation7 + $0x240] sm:$0xff]
    %v6109 = vld [vmem:[#allocation7 + $0x248] sm:$0xff]
    %v6110 = vld [vmem:[#allocation7 + $0x250] sm:$0xff]
    %v6111 = vld [vmem:[#allocation7 + $0x258] sm:$0xff]
    %v6112 = vld [vmem:[#allocation7 + $0x260] sm:$0xff]
    %v6113 = vld [vmem:[#allocation7 + $0x268] sm:$0xff]
    %v6114 = vld [vmem:[#allocation7 + $0x270] sm:$0xff]
    %v6115 = vld [vmem:[#allocation7 + $0x278] sm:$0xff]
    %v6116 = vld [vmem:[#allocation7 + $0x280] sm:$0xff]
    %v6117 = vld [vmem:[#allocation7 + $0x288] sm:$0xff]
    %v6118 = vld [vmem:[#allocation7 + $0x290] sm:$0xff]
    %v6119 = vld [vmem:[#allocation7 + $0x298] sm:$0xff]
    %v6120 = vld [vmem:[#allocation7 + $0x2a0] sm:$0xff]
    %v6121 = vld [vmem:[#allocation7 + $0x2a8] sm:$0xff]
    %v6122 = vld [vmem:[#allocation7 + $0x2b0] sm:$0xff]
    %v6123 = vld [vmem:[#allocation7 + $0x2b8] sm:$0xff]
    %v6124 = vld [vmem:[#allocation7 + $0x2c0] sm:$0xff]
    %v6125 = vld [vmem:[#allocation7 + $0x2c8] sm:$0xff]
    %v6126 = vld [vmem:[#allocation7 + $0x2d0] sm:$0xff]
    %v6127 = vld [vmem:[#allocation7 + $0x2d8] sm:$0xff]
    %v6128 = vld [vmem:[#allocation7 + $0x2e0] sm:$0xff]
    %v6129 = vld [vmem:[#allocation7 + $0x2e8] sm:$0xff]
    %v6130 = vld [vmem:[#allocation7 + $0x2f0] sm:$0xff]
    %v6131 = vld [vmem:[#allocation7 + $0x2f8] sm:$0xff]
    %v6132 = vld [vmem:[#allocation7 + $0x300] sm:$0xff]
    %v6133 = vld [vmem:[#allocation7 + $0x308] sm:$0xff]
    %v6134 = vld [vmem:[#allocation7 + $0x310] sm:$0xff]
    %v6135 = vld [vmem:[#allocation7 + $0x318] sm:$0xff]
    %v6136 = vld [vmem:[#allocation7 + $0x320] sm:$0xff]
    %v6137 = vld [vmem:[#allocation7 + $0x328] sm:$0xff]
    %v6138 = vld [vmem:[#allocation7 + $0x330] sm:$0xff]
    %v6139 = vld [vmem:[#allocation7 + $0x338] sm:$0xff]
    %v6140 = vld [vmem:[#allocation7 + $0x340] sm:$0xff]
    %v6141 = vld [vmem:[#allocation7 + $0x348] sm:$0xff]
    %v6142 = vld [vmem:[#allocation7 + $0x350] sm:$0xff]
    %v6143 = vld [vmem:[#allocation7 + $0x358] sm:$0xff]
    %v6144 = vld [vmem:[#allocation7 + $0x360] sm:$0xff]
    %v6145 = vld [vmem:[#allocation7 + $0x368] sm:$0xff]
    %v6146 = vld [vmem:[#allocation7 + $0x370] sm:$0xff]
    %v6147 = vld [vmem:[#allocation7 + $0x378] sm:$0xff]
    %v6148 = vld [vmem:[#allocation7 + $0x380] sm:$0xff]
    %v6149 = vld [vmem:[#allocation7 + $0x388] sm:$0xff]
    %v6150 = vld [vmem:[#allocation7 + $0x390] sm:$0xff]
    %v6151 = vld [vmem:[#allocation7 + $0x398] sm:$0xff]
    %v6152 = vld [vmem:[#allocation7 + $0x3a0] sm:$0xff]
    %v6153 = vld [vmem:[#allocation7 + $0x3a8] sm:$0xff]
    %v6154 = vld [vmem:[#allocation7 + $0x3b0] sm:$0xff]
    %v6155 = vld [vmem:[#allocation7 + $0x3b8] sm:$0xff]
    %v6156 = vld [vmem:[#allocation7 + $0x3c0] sm:$0xff]
    %v6157 = vld [vmem:[#allocation7 + $0x3c8] sm:$0xff]
    %v6158 = vld [vmem:[#allocation7 + $0x3d0] sm:$0xff]
    %v6159 = vld [vmem:[#allocation7 + $0x3d8] sm:$0xff]
    %v6160 = vld [vmem:[#allocation7 + $0x3e0] sm:$0xff]
    %v6161 = vld [vmem:[#allocation7 + $0x3e8] sm:$0xff]
    %v6162 = vld [vmem:[#allocation7 + $0x3f0] sm:$0xff]
    %v6163 = vld [vmem:[#allocation7 + $0x3f8] sm:$0xff]
    %v6292 = vunpack.c.l.b16 %v6036
    %v6293 = vunpack.c.h.b16 %v6036
    %v6294 = vunpack.c.l.b16 %v6037
    %v6295 = vunpack.c.h.b16 %v6037
    %v6296 = vunpack.c.l.b16 %v6038
    %v6297 = vunpack.c.h.b16 %v6038
    %v6298 = vunpack.c.l.b16 %v6039
    %v6299 = vunpack.c.h.b16 %v6039
    %v6300 = vunpack.c.l.b16 %v6040
    %v6301 = vunpack.c.h.b16 %v6040
    %v6302 = vunpack.c.l.b16 %v6041
    %v6303 = vunpack.c.h.b16 %v6041
    %v6304 = vunpack.c.l.b16 %v6042
    %v6305 = vunpack.c.h.b16 %v6042
    %v6306 = vunpack.c.l.b16 %v6043
    %v6307 = vunpack.c.h.b16 %v6043
    %v6308 = vunpack.c.l.b16 %v6044
    %v6309 = vunpack.c.h.b16 %v6044
    %v6310 = vunpack.c.l.b16 %v6045
    %v6311 = vunpack.c.h.b16 %v6045
    %v6312 = vunpack.c.l.b16 %v6046
    %v6313 = vunpack.c.h.b16 %v6046
    %v6314 = vunpack.c.l.b16 %v6047
    %v6315 = vunpack.c.h.b16 %v6047
    %v6316 = vunpack.c.l.b16 %v6048
    %v6317 = vunpack.c.h.b16 %v6048
    %v6318 = vunpack.c.l.b16 %v6049
    %v6319 = vunpack.c.h.b16 %v6049
    %v6320 = vunpack.c.l.b16 %v6050
    %v6321 = vunpack.c.h.b16 %v6050
    %v6322 = vunpack.c.l.b16 %v6051
    %v6323 = vunpack.c.h.b16 %v6051
    %v6324 = vunpack.c.l.b16 %v6052
    %v6325 = vunpack.c.h.b16 %v6052
    %v6326 = vunpack.c.l.b16 %v6053
    %v6327 = vunpack.c.h.b16 %v6053
    %v6328 = vunpack.c.l.b16 %v6054
    %v6329 = vunpack.c.h.b16 %v6054
    %v6330 = vunpack.c.l.b16 %v6055
    %v6331 = vunpack.c.h.b16 %v6055
    %v6332 = vunpack.c.l.b16 %v6056
    %v6333 = vunpack.c.h.b16 %v6056
    %v6334 = vunpack.c.l.b16 %v6057
    %v6335 = vunpack.c.h.b16 %v6057
    %v6336 = vunpack.c.l.b16 %v6058
    %v6337 = vunpack.c.h.b16 %v6058
    %v6338 = vunpack.c.l.b16 %v6059
    %v6339 = vunpack.c.h.b16 %v6059
    %v6340 = vunpack.c.l.b16 %v6060
    %v6341 = vunpack.c.h.b16 %v6060
    %v6342 = vunpack.c.l.b16 %v6061
    %v6343 = vunpack.c.h.b16 %v6061
    %v6344 = vunpack.c.l.b16 %v6062
    %v6345 = vunpack.c.h.b16 %v6062
    %v6346 = vunpack.c.l.b16 %v6063
    %v6347 = vunpack.c.h.b16 %v6063
    %v6348 = vunpack.c.l.b16 %v6064
    %v6349 = vunpack.c.h.b16 %v6064
    %v6350 = vunpack.c.l.b16 %v6065
    %v6351 = vunpack.c.h.b16 %v6065
    %v6352 = vunpack.c.l.b16 %v6066
    %v6353 = vunpack.c.h.b16 %v6066
    %v6354 = vunpack.c.l.b16 %v6067
    %v6355 = vunpack.c.h.b16 %v6067
    %v6356 = vunpack.c.l.b16 %v6068
    %v6357 = vunpack.c.h.b16 %v6068
    %v6358 = vunpack.c.l.b16 %v6069
    %v6359 = vunpack.c.h.b16 %v6069
    %v6360 = vunpack.c.l.b16 %v6070
    %v6361 = vunpack.c.h.b16 %v6070
    %v6362 = vunpack.c.l.b16 %v6071
    %v6363 = vunpack.c.h.b16 %v6071
    %v6364 = vunpack.c.l.b16 %v6072
    %v6365 = vunpack.c.h.b16 %v6072
    %v6366 = vunpack.c.l.b16 %v6073
    %v6367 = vunpack.c.h.b16 %v6073
    %v6368 = vunpack.c.l.b16 %v6074
    %v6369 = vunpack.c.h.b16 %v6074
    %v6370 = vunpack.c.l.b16 %v6075
    %v6371 = vunpack.c.h.b16 %v6075
    %v6372 = vunpack.c.l.b16 %v6076
    %v6373 = vunpack.c.h.b16 %v6076
    %v6374 = vunpack.c.l.b16 %v6077
    %v6375 = vunpack.c.h.b16 %v6077
    %v6376 = vunpack.c.l.b16 %v6078
    %v6377 = vunpack.c.h.b16 %v6078
    %v6378 = vunpack.c.l.b16 %v6079
    %v6379 = vunpack.c.h.b16 %v6079
    %v6380 = vunpack.c.l.b16 %v6080
    %v6381 = vunpack.c.h.b16 %v6080
    %v6382 = vunpack.c.l.b16 %v6081
    %v6383 = vunpack.c.h.b16 %v6081
    %v6384 = vunpack.c.l.b16 %v6082
    %v6385 = vunpack.c.h.b16 %v6082
    %v6386 = vunpack.c.l.b16 %v6083
    %v6387 = vunpack.c.h.b16 %v6083
    %v6388 = vunpack.c.l.b16 %v6084
    %v6389 = vunpack.c.h.b16 %v6084
    %v6390 = vunpack.c.l.b16 %v6085
    %v6391 = vunpack.c.h.b16 %v6085
    %v6392 = vunpack.c.l.b16 %v6086
    %v6393 = vunpack.c.h.b16 %v6086
    %v6394 = vunpack.c.l.b16 %v6087
    %v6395 = vunpack.c.h.b16 %v6087
    %v6396 = vunpack.c.l.b16 %v6088
    %v6397 = vunpack.c.h.b16 %v6088
    %v6398 = vunpack.c.l.b16 %v6089
    %v6399 = vunpack.c.h.b16 %v6089
    %v6400 = vunpack.c.l.b16 %v6090
    %v6401 = vunpack.c.h.b16 %v6090
    %v6402 = vunpack.c.l.b16 %v6091
    %v6403 = vunpack.c.h.b16 %v6091
    %v6404 = vunpack.c.l.b16 %v6092
    %v6405 = vunpack.c.h.b16 %v6092
    %v6406 = vunpack.c.l.b16 %v6093
    %v6407 = vunpack.c.h.b16 %v6093
    %v6408 = vunpack.c.l.b16 %v6094
    %v6409 = vunpack.c.h.b16 %v6094
    %v6410 = vunpack.c.l.b16 %v6095
    %v6411 = vunpack.c.h.b16 %v6095
    %v6412 = vunpack.c.l.b16 %v6096
    %v6413 = vunpack.c.h.b16 %v6096
    %v6414 = vunpack.c.l.b16 %v6097
    %v6415 = vunpack.c.h.b16 %v6097
    %v6416 = vunpack.c.l.b16 %v6098
    %v6417 = vunpack.c.h.b16 %v6098
    %v6418 = vunpack.c.l.b16 %v6099
    %v6419 = vunpack.c.h.b16 %v6099
    %v6420 = vunpack.c.l.b16 %v6100
    %v6421 = vunpack.c.h.b16 %v6100
    %v6422 = vunpack.c.l.b16 %v6101
    %v6423 = vunpack.c.h.b16 %v6101
    %v6424 = vunpack.c.l.b16 %v6102
    %v6425 = vunpack.c.h.b16 %v6102
    %v6426 = vunpack.c.l.b16 %v6103
    %v6427 = vunpack.c.h.b16 %v6103
    %v6428 = vunpack.c.l.b16 %v6104
    %v6429 = vunpack.c.h.b16 %v6104
    %v6430 = vunpack.c.l.b16 %v6105
    %v6431 = vunpack.c.h.b16 %v6105
    %v6432 = vunpack.c.l.b16 %v6106
    %v6433 = vunpack.c.h.b16 %v6106
    %v6434 = vunpack.c.l.b16 %v6107
    %v6435 = vunpack.c.h.b16 %v6107
    %v6436 = vunpack.c.l.b16 %v6108
    %v6437 = vunpack.c.h.b16 %v6108
    %v6438 = vunpack.c.l.b16 %v6109
    %v6439 = vunpack.c.h.b16 %v6109
    %v6440 = vunpack.c.l.b16 %v6110
    %v6441 = vunpack.c.h.b16 %v6110
    %v6442 = vunpack.c.l.b16 %v6111
    %v6443 = vunpack.c.h.b16 %v6111
    %v6444 = vunpack.c.l.b16 %v6112
    %v6445 = vunpack.c.h.b16 %v6112
    %v6446 = vunpack.c.l.b16 %v6113
    %v6447 = vunpack.c.h.b16 %v6113
    %v6448 = vunpack.c.l.b16 %v6114
    %v6449 = vunpack.c.h.b16 %v6114
    %v6450 = vunpack.c.l.b16 %v6115
    %v6451 = vunpack.c.h.b16 %v6115
    %v6452 = vunpack.c.l.b16 %v6116
    %v6453 = vunpack.c.h.b16 %v6116
    %v6454 = vunpack.c.l.b16 %v6117
    %v6455 = vunpack.c.h.b16 %v6117
    %v6456 = vunpack.c.l.b16 %v6118
    %v6457 = vunpack.c.h.b16 %v6118
    %v6458 = vunpack.c.l.b16 %v6119
    %v6459 = vunpack.c.h.b16 %v6119
    %v6460 = vunpack.c.l.b16 %v6120
    %v6461 = vunpack.c.h.b16 %v6120
    %v6462 = vunpack.c.l.b16 %v6121
    %v6463 = vunpack.c.h.b16 %v6121
    %v6464 = vunpack.c.l.b16 %v6122
    %v6465 = vunpack.c.h.b16 %v6122
    %v6466 = vunpack.c.l.b16 %v6123
    %v6467 = vunpack.c.h.b16 %v6123
    %v6468 = vunpack.c.l.b16 %v6124
    %v6469 = vunpack.c.h.b16 %v6124
    %v6470 = vunpack.c.l.b16 %v6125
    %v6471 = vunpack.c.h.b16 %v6125
    %v6472 = vunpack.c.l.b16 %v6126
    %v6473 = vunpack.c.h.b16 %v6126
    %v6474 = vunpack.c.l.b16 %v6127
    %v6475 = vunpack.c.h.b16 %v6127
    %v6476 = vunpack.c.l.b16 %v6128
    %v6477 = vunpack.c.h.b16 %v6128
    %v6478 = vunpack.c.l.b16 %v6129
    %v6479 = vunpack.c.h.b16 %v6129
    %v6480 = vunpack.c.l.b16 %v6130
    %v6481 = vunpack.c.h.b16 %v6130
    %v6482 = vunpack.c.l.b16 %v6131
    %v6483 = vunpack.c.h.b16 %v6131
    %v6484 = vunpack.c.l.b16 %v6132
    %v6485 = vunpack.c.h.b16 %v6132
    %v6486 = vunpack.c.l.b16 %v6133
    %v6487 = vunpack.c.h.b16 %v6133
    %v6488 = vunpack.c.l.b16 %v6134
    %v6489 = vunpack.c.h.b16 %v6134
    %v6490 = vunpack.c.l.b16 %v6135
    %v6491 = vunpack.c.h.b16 %v6135
    %v6492 = vunpack.c.l.b16 %v6136
    %v6493 = vunpack.c.h.b16 %v6136
    %v6494 = vunpack.c.l.b16 %v6137
    %v6495 = vunpack.c.h.b16 %v6137
    %v6496 = vunpack.c.l.b16 %v6138
    %v6497 = vunpack.c.h.b16 %v6138
    %v6498 = vunpack.c.l.b16 %v6139
    %v6499 = vunpack.c.h.b16 %v6139
    %v6500 = vunpack.c.l.b16 %v6140
    %v6501 = vunpack.c.h.b16 %v6140
    %v6502 = vunpack.c.l.b16 %v6141
    %v6503 = vunpack.c.h.b16 %v6141
    %v6504 = vunpack.c.l.b16 %v6142
    %v6505 = vunpack.c.h.b16 %v6142
    %v6506 = vunpack.c.l.b16 %v6143
    %v6507 = vunpack.c.h.b16 %v6143
    %v6508 = vunpack.c.l.b16 %v6144
    %v6509 = vunpack.c.h.b16 %v6144
    %v6510 = vunpack.c.l.b16 %v6145
    %v6511 = vunpack.c.h.b16 %v6145
    %v6512 = vunpack.c.l.b16 %v6146
    %v6513 = vunpack.c.h.b16 %v6146
    %v6514 = vunpack.c.l.b16 %v6147
    %v6515 = vunpack.c.h.b16 %v6147
    %v6516 = vunpack.c.l.b16 %v6148
    %v6517 = vunpack.c.h.b16 %v6148
    %v6518 = vunpack.c.l.b16 %v6149
    %v6519 = vunpack.c.h.b16 %v6149
    %v6520 = vunpack.c.l.b16 %v6150
    %v6521 = vunpack.c.h.b16 %v6150
    %v6522 = vunpack.c.l.b16 %v6151
    %v6523 = vunpack.c.h.b16 %v6151
    %v6524 = vunpack.c.l.b16 %v6152
    %v6525 = vunpack.c.h.b16 %v6152
    %v6526 = vunpack.c.l.b16 %v6153
    %v6527 = vunpack.c.h.b16 %v6153
    %v6528 = vunpack.c.l.b16 %v6154
    %v6529 = vunpack.c.h.b16 %v6154
    %v6530 = vunpack.c.l.b16 %v6155
    %v6531 = vunpack.c.h.b16 %v6155
    %v6532 = vunpack.c.l.b16 %v6156
    %v6533 = vunpack.c.h.b16 %v6156
    %v6534 = vunpack.c.l.b16 %v6157
    %v6535 = vunpack.c.h.b16 %v6157
    %v6536 = vunpack.c.l.b16 %v6158
    %v6537 = vunpack.c.h.b16 %v6158
    %v6538 = vunpack.c.l.b16 %v6159
    %v6539 = vunpack.c.h.b16 %v6159
    %v6540 = vunpack.c.l.b16 %v6160
    %v6541 = vunpack.c.h.b16 %v6160
    %v6542 = vunpack.c.l.b16 %v6161
    %v6543 = vunpack.c.h.b16 %v6161
    %v6544 = vunpack.c.l.b16 %v6162
    %v6545 = vunpack.c.h.b16 %v6162
    %v6546 = vunpack.c.l.b16 %v6163
    %v6547 = vunpack.c.h.b16 %v6163
    %v6548 = vpack.c.b16 %v6300, %v6292
    %v6549 = vpack.c.b16 %v6301, %v6293
    %v6550 = vpack.c.b16 %v6302, %v6294
    %v6551 = vpack.c.b16 %v6303, %v6295
    %v6552 = vpack.c.b16 %v6304, %v6296
    %v6553 = vpack.c.b16 %v6305, %v6297
    %v6554 = vpack.c.b16 %v6306, %v6298
    %v6555 = vpack.c.b16 %v6307, %v6299
    %v6556 = vpack.c.b16 %v6316, %v6308
    %v6557 = vpack.c.b16 %v6317, %v6309
    %v6558 = vpack.c.b16 %v6318, %v6310
    %v6559 = vpack.c.b16 %v6319, %v6311
    %v6560 = vpack.c.b16 %v6320, %v6312
    %v6561 = vpack.c.b16 %v6321, %v6313
    %v6562 = vpack.c.b16 %v6322, %v6314
    %v6563 = vpack.c.b16 %v6323, %v6315
    %v6564 = vpack.c.b16 %v6332, %v6324
    %v6565 = vpack.c.b16 %v6333, %v6325
    %v6566 = vpack.c.b16 %v6334, %v6326
    %v6567 = vpack.c.b16 %v6335, %v6327
    %v6568 = vpack.c.b16 %v6336, %v6328
    %v6569 = vpack.c.b16 %v6337, %v6329
    %v6570 = vpack.c.b16 %v6338, %v6330
    %v6571 = vpack.c.b16 %v6339, %v6331
    %v6572 = vpack.c.b16 %v6348, %v6340
    %v6573 = vpack.c.b16 %v6349, %v6341
    %v6574 = vpack.c.b16 %v6350, %v6342
    %v6575 = vpack.c.b16 %v6351, %v6343
    %v6576 = vpack.c.b16 %v6352, %v6344
    %v6577 = vpack.c.b16 %v6353, %v6345
    %v6578 = vpack.c.b16 %v6354, %v6346
    %v6579 = vpack.c.b16 %v6355, %v6347
    %v6580 = vpack.c.b16 %v6364, %v6356
    %v6581 = vpack.c.b16 %v6365, %v6357
    %v6582 = vpack.c.b16 %v6366, %v6358
    %v6583 = vpack.c.b16 %v6367, %v6359
    %v6584 = vpack.c.b16 %v6368, %v6360
    %v6585 = vpack.c.b16 %v6369, %v6361
    %v6586 = vpack.c.b16 %v6370, %v6362
    %v6587 = vpack.c.b16 %v6371, %v6363
    %v6588 = vpack.c.b16 %v6380, %v6372
    %v6589 = vpack.c.b16 %v6381, %v6373
    %v6590 = vpack.c.b16 %v6382, %v6374
    %v6591 = vpack.c.b16 %v6383, %v6375
    %v6592 = vpack.c.b16 %v6384, %v6376
    %v6593 = vpack.c.b16 %v6385, %v6377
    %v6594 = vpack.c.b16 %v6386, %v6378
    %v6595 = vpack.c.b16 %v6387, %v6379
    %v6596 = vpack.c.b16 %v6396, %v6388
    %v6597 = vpack.c.b16 %v6397, %v6389
    %v6598 = vpack.c.b16 %v6398, %v6390
    %v6599 = vpack.c.b16 %v6399, %v6391
    %v6600 = vpack.c.b16 %v6400, %v6392
    %v6601 = vpack.c.b16 %v6401, %v6393
    %v6602 = vpack.c.b16 %v6402, %v6394
    %v6603 = vpack.c.b16 %v6403, %v6395
    %v6604 = vpack.c.b16 %v6412, %v6404
    %v6605 = vpack.c.b16 %v6413, %v6405
    %v6606 = vpack.c.b16 %v6414, %v6406
    %v6607 = vpack.c.b16 %v6415, %v6407
    %v6608 = vpack.c.b16 %v6416, %v6408
    %v6609 = vpack.c.b16 %v6417, %v6409
    %v6610 = vpack.c.b16 %v6418, %v6410
    %v6611 = vpack.c.b16 %v6419, %v6411
    %v6612 = vpack.c.b16 %v6428, %v6420
    %v6613 = vpack.c.b16 %v6429, %v6421
    %v6614 = vpack.c.b16 %v6430, %v6422
    %v6615 = vpack.c.b16 %v6431, %v6423
    %v6616 = vpack.c.b16 %v6432, %v6424
    %v6617 = vpack.c.b16 %v6433, %v6425
    %v6618 = vpack.c.b16 %v6434, %v6426
    %v6619 = vpack.c.b16 %v6435, %v6427
    %v6620 = vpack.c.b16 %v6444, %v6436
    %v6621 = vpack.c.b16 %v6445, %v6437
    %v6622 = vpack.c.b16 %v6446, %v6438
    %v6623 = vpack.c.b16 %v6447, %v6439
    %v6624 = vpack.c.b16 %v6448, %v6440
    %v6625 = vpack.c.b16 %v6449, %v6441
    %v6626 = vpack.c.b16 %v6450, %v6442
    %v6627 = vpack.c.b16 %v6451, %v6443
    %v6628 = vpack.c.b16 %v6460, %v6452
    %v6629 = vpack.c.b16 %v6461, %v6453
    %v6630 = vpack.c.b16 %v6462, %v6454
    %v6631 = vpack.c.b16 %v6463, %v6455
    %v6632 = vpack.c.b16 %v6464, %v6456
    %v6633 = vpack.c.b16 %v6465, %v6457
    %v6634 = vpack.c.b16 %v6466, %v6458
    %v6635 = vpack.c.b16 %v6467, %v6459
    %v6636 = vpack.c.b16 %v6476, %v6468
    %v6637 = vpack.c.b16 %v6477, %v6469
    %v6638 = vpack.c.b16 %v6478, %v6470
    %v6639 = vpack.c.b16 %v6479, %v6471
    %v6640 = vpack.c.b16 %v6480, %v6472
    %v6641 = vpack.c.b16 %v6481, %v6473
    %v6642 = vpack.c.b16 %v6482, %v6474
    %v6643 = vpack.c.b16 %v6483, %v6475
    %v6644 = vpack.c.b16 %v6492, %v6484
    %v6645 = vpack.c.b16 %v6493, %v6485
    %v6646 = vpack.c.b16 %v6494, %v6486
    %v6647 = vpack.c.b16 %v6495, %v6487
    %v6648 = vpack.c.b16 %v6496, %v6488
    %v6649 = vpack.c.b16 %v6497, %v6489
    %v6650 = vpack.c.b16 %v6498, %v6490
    %v6651 = vpack.c.b16 %v6499, %v6491
    %v6652 = vpack.c.b16 %v6508, %v6500
    %v6653 = vpack.c.b16 %v6509, %v6501
    %v6654 = vpack.c.b16 %v6510, %v6502
    %v6655 = vpack.c.b16 %v6511, %v6503
    %v6656 = vpack.c.b16 %v6512, %v6504
    %v6657 = vpack.c.b16 %v6513, %v6505
    %v6658 = vpack.c.b16 %v6514, %v6506
    %v6659 = vpack.c.b16 %v6515, %v6507
    %v6660 = vpack.c.b16 %v6524, %v6516
    %v6661 = vpack.c.b16 %v6525, %v6517
    %v6662 = vpack.c.b16 %v6526, %v6518
    %v6663 = vpack.c.b16 %v6527, %v6519
    %v6664 = vpack.c.b16 %v6528, %v6520
    %v6665 = vpack.c.b16 %v6529, %v6521
    %v6666 = vpack.c.b16 %v6530, %v6522
    %v6667 = vpack.c.b16 %v6531, %v6523
    %v6668 = vpack.c.b16 %v6540, %v6532
    %v6669 = vpack.c.b16 %v6541, %v6533
    %v6670 = vpack.c.b16 %v6542, %v6534
    %v6671 = vpack.c.b16 %v6543, %v6535
    %v6672 = vpack.c.b16 %v6544, %v6536
    %v6673 = vpack.c.b16 %v6545, %v6537
    %v6674 = vpack.c.b16 %v6546, %v6538
    %v6675 = vpack.c.b16 %v6547, %v6539
    %6804 = vmatprep.subr.bf16.mxu0 %v6549
    %6805 = vmatpush1.bf16.msra.mxu0 %v6548
    %6806 = vmatprep.subr.bf16.mxu0 %v6557
    %6807 = vmatpush1.bf16.msra.mxu0 %v6556
    %6808 = vmatprep.subr.bf16.mxu0 %v6565
    %6809 = vmatpush1.bf16.msra.mxu0 %v6564
    %6810 = vmatprep.subr.bf16.mxu0 %v6573
    %6811 = vmatpush1.bf16.msra.mxu0 %v6572
    %6812 = vmatprep.subr.bf16.mxu0 %v6581
    %6813 = vmatpush1.bf16.msra.mxu0 %v6580
    %6814 = vmatprep.subr.bf16.mxu0 %v6589
    %6815 = vmatpush1.bf16.msra.mxu0 %v6588
    %6816 = vmatprep.subr.bf16.mxu0 %v6597
    %6817 = vmatpush1.bf16.msra.mxu0 %v6596
    %6818 = vmatprep.subr.bf16.mxu0 %v6605
    %6819 = vmatpush1.bf16.msra.mxu0 %v6604
    %6820 = vmatprep.subr.bf16.mxu0 %v6613
    %6821 = vmatpush1.bf16.msra.mxu0 %v6612
    %6822 = vmatprep.subr.bf16.mxu0 %v6621
    %6823 = vmatpush1.bf16.msra.mxu0 %v6620
    %6824 = vmatprep.subr.bf16.mxu0 %v6629
    %6825 = vmatpush1.bf16.msra.mxu0 %v6628
    %6826 = vmatprep.subr.bf16.mxu0 %v6637
    %6827 = vmatpush1.bf16.msra.mxu0 %v6636
    %6828 = vmatprep.subr.bf16.mxu0 %v6645
    %6829 = vmatpush1.bf16.msra.mxu0 %v6644
    %6830 = vmatprep.subr.bf16.mxu0 %v6653
    %6831 = vmatpush1.bf16.msra.mxu0 %v6652
    %6832 = vmatprep.subr.bf16.mxu0 %v6661
    %6833 = vmatpush1.bf16.msra.mxu0 %v6660
    %6834 = vmatprep.subr.bf16.mxu0 %v6669
    %6835 = vmatpush1.bf16.msra.mxu0 %v6668
    %6836 = vmatprep.mubr.bf16.mxu0 %v6035
    %6837 = vmatmul.mubr.bf16.gmra.mrb[0].mxu0 %v6034
    %v6838 = vpop.f32.mrb[0].mxu0
    %v6839 = vadd.f32 0.0, %v6838
    %v6840 = vpop.f32.mrb[0].mxu0
    %v6841 = vadd.f32 0.0, %v6840
    %v6842 = vpop.f32.mrb[0].mxu0
    %v6843 = vpop.f32.mrb[0].mxu0
    %6844 = vdwg.mxu0
    %6845 = vmatprep.subr.bf16.mxu0 %v6551
    %6846 = vmatpush1.bf16.msra.mxu0 %v6550
    %6847 = vmatprep.subr.bf16.mxu0 %v6559
    %6848 = vmatpush1.bf16.msra.mxu0 %v6558
    %6849 = vmatprep.subr.bf16.mxu0 %v6567
    %6850 = vmatpush1.bf16.msra.mxu0 %v6566
    %6851 = vmatprep.subr.bf16.mxu0 %v6575
    %6852 = vmatpush1.bf16.msra.mxu0 %v6574
    %6853 = vmatprep.subr.bf16.mxu0 %v6583
    %6854 = vmatpush1.bf16.msra.mxu0 %v6582
    %6855 = vmatprep.subr.bf16.mxu0 %v6591
    %6856 = vmatpush1.bf16.msra.mxu0 %v6590
    %6857 = vmatprep.subr.bf16.mxu0 %v6599
    %6858 = vmatpush1.bf16.msra.mxu0 %v6598
    %6859 = vmatprep.subr.bf16.mxu0 %v6607
    %6860 = vmatpush1.bf16.msra.mxu0 %v6606
    %6861 = vmatprep.subr.bf16.mxu0 %v6615
    %6862 = vmatpush1.bf16.msra.mxu0 %v6614
    %6863 = vmatprep.subr.bf16.mxu0 %v6623
    %6864 = vmatpush1.bf16.msra.mxu0 %v6622
    %6865 = vmatprep.subr.bf16.mxu0 %v6631
    %6866 = vmatpush1.bf16.msra.mxu0 %v6630
    %6867 = vmatprep.subr.bf16.mxu0 %v6639
    %6868 = vmatpush1.bf16.msra.mxu0 %v6638
    %6869 = vmatprep.subr.bf16.mxu0 %v6647
    %6870 = vmatpush1.bf16.msra.mxu0 %v6646
    %6871 = vmatprep.subr.bf16.mxu0 %v6655
    %6872 = vmatpush1.bf16.msra.mxu0 %v6654
    %6873 = vmatprep.subr.bf16.mxu0 %v6663
    %6874 = vmatpush1.bf16.msra.mxu0 %v6662
    %6875 = vmatprep.subr.bf16.mxu0 %v6671
    %6876 = vmatpush1.bf16.msra.mxu0 %v6670
    %6877 = vmatprep.mubr.bf16.mxu0 %v6035
    %6878 = vmatmul.mubr.bf16.gmra.mrb[0].mxu0 %v6034
    %v6879 = vpop.f32.mrb[0].mxu0
    %v6880 = vadd.f32 0.0, %v6879
    %v6881 = vpop.f32.mrb[0].mxu0
    %v6882 = vadd.f32 0.0, %v6881
    %v6883 = vpop.f32.mrb[0].mxu0
    %v6884 = vpop.f32.mrb[0].mxu0
    %6885 = vdwg.mxu0
    %6886 = vmatprep.subr.bf16.mxu0 %v6553
    %6887 = vmatpush1.bf16.msra.mxu0 %v6552
    %6888 = vmatprep.subr.bf16.mxu0 %v6561
    %6889 = vmatpush1.bf16.msra.mxu0 %v6560
    %6890 = vmatprep.subr.bf16.mxu0 %v6569
    %6891 = vmatpush1.bf16.msra.mxu0 %v6568
    %6892 = vmatprep.subr.bf16.mxu0 %v6577
    %6893 = vmatpush1.bf16.msra.mxu0 %v6576
    %6894 = vmatprep.subr.bf16.mxu0 %v6585
    %6895 = vmatpush1.bf16.msra.mxu0 %v6584
    %6896 = vmatprep.subr.bf16.mxu0 %v6593
    %6897 = vmatpush1.bf16.msra.mxu0 %v6592
    %6898 = vmatprep.subr.bf16.mxu0 %v6601
    %6899 = vmatpush1.bf16.msra.mxu0 %v6600
    %6900 = vmatprep.subr.bf16.mxu0 %v6609
    %6901 = vmatpush1.bf16.msra.mxu0 %v6608
    %6902 = vmatprep.subr.bf16.mxu0 %v6617
    %6903 = vmatpush1.bf16.msra.mxu0 %v6616
    %6904 = vmatprep.subr.bf16.mxu0 %v6625
    %6905 = vmatpush1.bf16.msra.mxu0 %v6624
    %6906 = vmatprep.subr.bf16.mxu0 %v6633
    %6907 = vmatpush1.bf16.msra.mxu0 %v6632
    %6908 = vmatprep.subr.bf16.mxu0 %v6641
    %6909 = vmatpush1.bf16.msra.mxu0 %v6640
    %6910 = vmatprep.subr.bf16.mxu0 %v6649
    %6911 = vmatpush1.bf16.msra.mxu0 %v6648
    %6912 = vmatprep.subr.bf16.mxu0 %v6657
    %6913 = vmatpush1.bf16.msra.mxu0 %v6656
    %6914 = vmatprep.subr.bf16.mxu0 %v6665
    %6915 = vmatpush1.bf16.msra.mxu0 %v6664
    %6916 = vmatprep.subr.bf16.mxu0 %v6673
    %6917 = vmatpush1.bf16.msra.mxu0 %v6672
    %6918 = vmatprep.mubr.bf16.mxu0 %v6035
    %6919 = vmatmul.mubr.bf16.gmra.mrb[0].mxu0 %v6034
    %v6920 = vpop.f32.mrb[0].mxu0
    %v6921 = vadd.f32 0.0, %v6920
    %v6922 = vpop.f32.mrb[0].mxu0
    %v6923 = vadd.f32 0.0, %v6922
    %v6924 = vpop.f32.mrb[0].mxu0
    %v6925 = vpop.f32.mrb[0].mxu0
    %6926 = vdwg.mxu0
    %6927 = vmatprep.subr.bf16.mxu0 %v6555
    %6928 = vmatpush1.bf16.msra.mxu0 %v6554
    %6929 = vmatprep.subr.bf16.mxu0 %v6563
    %6930 = vmatpush1.bf16.msra.mxu0 %v6562
    %6931 = vmatprep.subr.bf16.mxu0 %v6571
    %6932 = vmatpush1.bf16.msra.mxu0 %v6570
    %6933 = vmatprep.subr.bf16.mxu0 %v6579
    %6934 = vmatpush1.bf16.msra.mxu0 %v6578
    %6935 = vmatprep.subr.bf16.mxu0 %v6587
    %6936 = vmatpush1.bf16.msra.mxu0 %v6586
    %6937 = vmatprep.subr.bf16.mxu0 %v6595
    %6938 = vmatpush1.bf16.msra.mxu0 %v6594
    %6939 = vmatprep.subr.bf16.mxu0 %v6603
    %6940 = vmatpush1.bf16.msra.mxu0 %v6602
    %6941 = vmatprep.subr.bf16.mxu0 %v6611
    %6942 = vmatpush1.bf16.msra.mxu0 %v6610
    %6943 = vmatprep.subr.bf16.mxu0 %v6619
    %6944 = vmatpush1.bf16.msra.mxu0 %v6618
    %6945 = vmatprep.subr.bf16.mxu0 %v6627
    %6946 = vmatpush1.bf16.msra.mxu0 %v6626
    %6947 = vmatprep.subr.bf16.mxu0 %v6635
    %6948 = vmatpush1.bf16.msra.mxu0 %v6634
    %6949 = vmatprep.subr.bf16.mxu0 %v6643
    %6950 = vmatpush1.bf16.msra.mxu0 %v6642
    %6951 = vmatprep.subr.bf16.mxu0 %v6651
    %6952 = vmatpush1.bf16.msra.mxu0 %v6650
    %6953 = vmatprep.subr.bf16.mxu0 %v6659
    %6954 = vmatpush1.bf16.msra.mxu0 %v6658
    %6955 = vmatprep.subr.bf16.mxu0 %v6667
    %6956 = vmatpush1.bf16.msra.mxu0 %v6666
    %6957 = vmatprep.subr.bf16.mxu0 %v6675
    %6958 = vmatpush1.bf16.msra.mxu0 %v6674
    %6959 = vmatprep.mubr.bf16.mxu0 %v6035
    %6960 = vmatmul.mubr.bf16.gmra.mrb[0].mxu0 %v6034
    %v6961 = vpop.f32.mrb[0].mxu0
    %v6962 = vadd.f32 0.0, %v6961
    %v6963 = vpop.f32.mrb[0].mxu0
    %v6964 = vadd.f32 0.0, %v6963
    %v6965 = vpop.f32.mrb[0].mxu0
    %v6966 = vpop.f32.mrb[0].mxu0
    %6967 = vdwg.mxu0
    %v6968 = vadd.f32 %v3579, %v6839
    %v6969 = vadd.f32 %v3581, %v6841
    %v6970 = vadd.f32 %v3725, %v6880
    %v6971 = vadd.f32 %v3727, %v6882
    %v6972 = vadd.f32 %v3871, %v6921
    %v6973 = vadd.f32 %v3873, %v6923
    %v6974 = vadd.f32 %v4017, %v6962
    %v6975 = vadd.f32 %v4019, %v6964
    %v6976 = vxor.u32 %v6968, 2147483648
    %v6977 = vxor.u32 %v6969, 2147483648
    %v6978 = vmul.f32 %v6976, 1.442695
    %v6979 = vpow.pop %v6978
    %v6980 = vmul.f32 %v6977, 1.442695
    %v6981 = vpow.pop %v6980
    %v6982 = vadd.f32 %v6979, 1.0
    %v6983 = vadd.f32 %v6981, 1.0
    %v6984 = vrcp.pop %v6982
    %v6985 = vmul.f32 1.0, %v6984
    %v6986 = vrcp.pop %v6983
    %v6987 = vmul.f32 1.0, %v6986
    %v6988 = vxor.u32 %v6970, 2147483648
    %v6989 = vxor.u32 %v6971, 2147483648
    %v6990 = vmul.f32 %v6988, 1.442695
    %v6991 = vpow.pop %v6990
    %v6992 = vmul.f32 %v6989, 1.442695
    %v6993 = vpow.pop %v6992
    %v6994 = vadd.f32 %v6991, 1.0
    %v6995 = vadd.f32 %v6993, 1.0
    %v6996 = vrcp.pop %v6994
    %v6997 = vmul.f32 1.0, %v6996
    %v6998 = vrcp.pop %v6995
    %v6999 = vmul.f32 1.0, %v6998
    %v7000 = vtanh.pop %v6972
    %v7001 = vtanh.pop %v6973
    %v7002 = vxor.u32 %v6974, 2147483648
    %v7003 = vxor.u32 %v6975, 2147483648
    %v7004 = vmul.f32 %v7002, 1.442695
    %v7005 = vpow.pop %v7004
    %v7006 = vmul.f32 %v7003, 1.442695
    %v7007 = vpow.pop %v7006
    %v7008 = vadd.f32 %v7005, 1.0
    %v7009 = vadd.f32 %v7007, 1.0
    %v7010 = vrcp.pop %v7008
    %v7011 = vmul.f32 1.0, %v7010
    %v7012 = vrcp.pop %v7009
    %v7013 = vmul.f32 1.0, %v7012
    %v7014 = vmul.f32 %v6997, %v6025
    %v7015 = vmul.f32 %v6999, %v6026
    %v7016 = vmul.f32 %v6985, %v7000
    %v7017 = vmul.f32 %v6987, %v7001
    %v7018 = vadd.f32 %v7014, %v7016
    %v7019 = vadd.f32 %v7015, %v7017
    %v7020 = vtanh.pop %v7018
    %v7021 = vtanh.pop %v7019
    %v7022 = vmul.f32 %v7011, %v7020
    %v7023 = vmul.f32 %v7013, %v7021
    %s7024 = scalar_lea.vmem [#allocation4], 32
    %7025 = vst [vmem:[%s7024] sm:$0xff] %v7022
    %7026 = vst [vmem:[%s7024 + $0x8] sm:$0xff] %v7023
    %v7027 = vpack.c.bf16 %v7022, %v7022
    %v7028 = vpack.c.bf16 %v7023, %v7023
    %v7029 = vld [vmem:[#allocation7] sm:$0xff]
    %v7030 = vld [vmem:[#allocation7 + $0x8] sm:$0xff]
    %v7031 = vld [vmem:[#allocation7 + $0x10] sm:$0xff]
    %v7032 = vld [vmem:[#allocation7 + $0x18] sm:$0xff]
    %v7033 = vld [vmem:[#allocation7 + $0x20] sm:$0xff]
    %v7034 = vld [vmem:[#allocation7 + $0x28] sm:$0xff]
    %v7035 = vld [vmem:[#allocation7 + $0x30] sm:$0xff]
    %v7036 = vld [vmem:[#allocation7 + $0x38] sm:$0xff]
    %v7037 = vld [vmem:[#allocation7 + $0x40] sm:$0xff]
    %v7038 = vld [vmem:[#allocation7 + $0x48] sm:$0xff]
    %v7039 = vld [vmem:[#allocation7 + $0x50] sm:$0xff]
    %v7040 = vld [vmem:[#allocation7 + $0x58] sm:$0xff]
    %v7041 = vld [vmem:[#allocation7 + $0x60] sm:$0xff]
    %v7042 = vld [vmem:[#allocation7 + $0x68] sm:$0xff]
    %v7043 = vld [vmem:[#allocation7 + $0x70] sm:$0xff]
    %v7044 = vld [vmem:[#allocation7 + $0x78] sm:$0xff]
    %v7045 = vld [vmem:[#allocation7 + $0x80] sm:$0xff]
    %v7046 = vld [vmem:[#allocation7 + $0x88] sm:$0xff]
    %v7047 = vld [vmem:[#allocation7 + $0x90] sm:$0xff]
    %v7048 = vld [vmem:[#allocation7 + $0x98] sm:$0xff]
    %v7049 = vld [vmem:[#allocation7 + $0xa0] sm:$0xff]
    %v7050 = vld [vmem:[#allocation7 + $0xa8] sm:$0xff]
    %v7051 = vld [vmem:[#allocation7 + $0xb0] sm:$0xff]
    %v7052 = vld [vmem:[#allocation7 + $0xb8] sm:$0xff]
    %v7053 = vld [vmem:[#allocation7 + $0xc0] sm:$0xff]
    %v7054 = vld [vmem:[#allocation7 + $0xc8] sm:$0xff]
    %v7055 = vld [vmem:[#allocation7 + $0xd0] sm:$0xff]
    %v7056 = vld [vmem:[#allocation7 + $0xd8] sm:$0xff]
    %v7057 = vld [vmem:[#allocation7 + $0xe0] sm:$0xff]
    %v7058 = vld [vmem:[#allocation7 + $0xe8] sm:$0xff]
    %v7059 = vld [vmem:[#allocation7 + $0xf0] sm:$0xff]
    %v7060 = vld [vmem:[#allocation7 + $0xf8] sm:$0xff]
    %v7061 = vld [vmem:[#allocation7 + $0x100] sm:$0xff]
    %v7062 = vld [vmem:[#allocation7 + $0x108] sm:$0xff]
    %v7063 = vld [vmem:[#allocation7 + $0x110] sm:$0xff]
    %v7064 = vld [vmem:[#allocation7 + $0x118] sm:$0xff]
    %v7065 = vld [vmem:[#allocation7 + $0x120] sm:$0xff]
    %v7066 = vld [vmem:[#allocation7 + $0x128] sm:$0xff]
    %v7067 = vld [vmem:[#allocation7 + $0x130] sm:$0xff]
    %v7068 = vld [vmem:[#allocation7 + $0x138] sm:$0xff]
    %v7069 = vld [vmem:[#allocation7 + $0x140] sm:$0xff]
    %v7070 = vld [vmem:[#allocation7 + $0x148] sm:$0xff]
    %v7071 = vld [vmem:[#allocation7 + $0x150] sm:$0xff]
    %v7072 = vld [vmem:[#allocation7 + $0x158] sm:$0xff]
    %v7073 = vld [vmem:[#allocation7 + $0x160] sm:$0xff]
    %v7074 = vld [vmem:[#allocation7 + $0x168] sm:$0xff]
    %v7075 = vld [vmem:[#allocation7 + $0x170] sm:$0xff]
    %v7076 = vld [vmem:[#allocation7 + $0x178] sm:$0xff]
    %v7077 = vld [vmem:[#allocation7 + $0x180] sm:$0xff]
    %v7078 = vld [vmem:[#allocation7 + $0x188] sm:$0xff]
    %v7079 = vld [vmem:[#allocation7 + $0x190] sm:$0xff]
    %v7080 = vld [vmem:[#allocation7 + $0x198] sm:$0xff]
    %v7081 = vld [vmem:[#allocation7 + $0x1a0] sm:$0xff]
    %v7082 = vld [vmem:[#allocation7 + $0x1a8] sm:$0xff]
    %v7083 = vld [vmem:[#allocation7 + $0x1b0] sm:$0xff]
    %v7084 = vld [vmem:[#allocation7 + $0x1b8] sm:$0xff]
    %v7085 = vld [vmem:[#allocation7 + $0x1c0] sm:$0xff]
    %v7086 = vld [vmem:[#allocation7 + $0x1c8] sm:$0xff]
    %v7087 = vld [vmem:[#allocation7 + $0x1d0] sm:$0xff]
    %v7088 = vld [vmem:[#allocation7 + $0x1d8] sm:$0xff]
    %v7089 = vld [vmem:[#allocation7 + $0x1e0] sm:$0xff]
    %v7090 = vld [vmem:[#allocation7 + $0x1e8] sm:$0xff]
    %v7091 = vld [vmem:[#allocation7 + $0x1f0] sm:$0xff]
    %v7092 = vld [vmem:[#allocation7 + $0x1f8] sm:$0xff]
    %v7093 = vld [vmem:[#allocation7 + $0x200] sm:$0xff]
    %v7094 = vld [vmem:[#allocation7 + $0x208] sm:$0xff]
    %v7095 = vld [vmem:[#allocation7 + $0x210] sm:$0xff]
    %v7096 = vld [vmem:[#allocation7 + $0x218] sm:$0xff]
    %v7097 = vld [vmem:[#allocation7 + $0x220] sm:$0xff]
    %v7098 = vld [vmem:[#allocation7 + $0x228] sm:$0xff]
    %v7099 = vld [vmem:[#allocation7 + $0x230] sm:$0xff]
    %v7100 = vld [vmem:[#allocation7 + $0x238] sm:$0xff]
    %v7101 = vld [vmem:[#allocation7 + $0x240] sm:$0xff]
    %v7102 = vld [vmem:[#allocation7 + $0x248] sm:$0xff]
    %v7103 = vld [vmem:[#allocation7 + $0x250] sm:$0xff]
    %v7104 = vld [vmem:[#allocation7 + $0x258] sm:$0xff]
    %v7105 = vld [vmem:[#allocation7 + $0x260] sm:$0xff]
    %v7106 = vld [vmem:[#allocation7 + $0x268] sm:$0xff]
    %v7107 = vld [vmem:[#allocation7 + $0x270] sm:$0xff]
    %v7108 = vld [vmem:[#allocation7 + $0x278] sm:$0xff]
    %v7109 = vld [vmem:[#allocation7 + $0x280] sm:$0xff]
    %v7110 = vld [vmem:[#allocation7 + $0x288] sm:$0xff]
    %v7111 = vld [vmem:[#allocation7 + $0x290] sm:$0xff]
    %v7112 = vld [vmem:[#allocation7 + $0x298] sm:$0xff]
    %v7113 = vld [vmem:[#allocation7 + $0x2a0] sm:$0xff]
    %v7114 = vld [vmem:[#allocation7 + $0x2a8] sm:$0xff]
    %v7115 = vld [vmem:[#allocation7 + $0x2b0] sm:$0xff]
    %v7116 = vld [vmem:[#allocation7 + $0x2b8] sm:$0xff]
    %v7117 = vld [vmem:[#allocation7 + $0x2c0] sm:$0xff]
    %v7118 = vld [vmem:[#allocation7 + $0x2c8] sm:$0xff]
    %v7119 = vld [vmem:[#allocation7 + $0x2d0] sm:$0xff]
    %v7120 = vld [vmem:[#allocation7 + $0x2d8] sm:$0xff]
    %v7121 = vld [vmem:[#allocation7 + $0x2e0] sm:$0xff]
    %v7122 = vld [vmem:[#allocation7 + $0x2e8] sm:$0xff]
    %v7123 = vld [vmem:[#allocation7 + $0x2f0] sm:$0xff]
    %v7124 = vld [vmem:[#allocation7 + $0x2f8] sm:$0xff]
    %v7125 = vld [vmem:[#allocation7 + $0x300] sm:$0xff]
    %v7126 = vld [vmem:[#allocation7 + $0x308] sm:$0xff]
    %v7127 = vld [vmem:[#allocation7 + $0x310] sm:$0xff]
    %v7128 = vld [vmem:[#allocation7 + $0x318] sm:$0xff]
    %v7129 = vld [vmem:[#allocation7 + $0x320] sm:$0xff]
    %v7130 = vld [vmem:[#allocation7 + $0x328] sm:$0xff]
    %v7131 = vld [vmem:[#allocation7 + $0x330] sm:$0xff]
    %v7132 = vld [vmem:[#allocation7 + $0x338] sm:$0xff]
    %v7133 = vld [vmem:[#allocation7 + $0x340] sm:$0xff]
    %v7134 = vld [vmem:[#allocation7 + $0x348] sm:$0xff]
    %v7135 = vld [vmem:[#allocation7 + $0x350] sm:$0xff]
    %v7136 = vld [vmem:[#allocation7 + $0x358] sm:$0xff]
    %v7137 = vld [vmem:[#allocation7 + $0x360] sm:$0xff]
    %v7138 = vld [vmem:[#allocation7 + $0x368] sm:$0xff]
    %v7139 = vld [vmem:[#allocation7 + $0x370] sm:$0xff]
    %v7140 = vld [vmem:[#allocation7 + $0x378] sm:$0xff]
    %v7141 = vld [vmem:[#allocation7 + $0x380] sm:$0xff]
    %v7142 = vld [vmem:[#allocation7 + $0x388] sm:$0xff]
    %v7143 = vld [vmem:[#allocation7 + $0x390] sm:$0xff]
    %v7144 = vld [vmem:[#allocation7 + $0x398] sm:$0xff]
    %v7145 = vld [vmem:[#allocation7 + $0x3a0] sm:$0xff]
    %v7146 = vld [vmem:[#allocation7 + $0x3a8] sm:$0xff]
    %v7147 = vld [vmem:[#allocation7 + $0x3b0] sm:$0xff]
    %v7148 = vld [vmem:[#allocation7 + $0x3b8] sm:$0xff]
    %v7149 = vld [vmem:[#allocation7 + $0x3c0] sm:$0xff]
    %v7150 = vld [vmem:[#allocation7 + $0x3c8] sm:$0xff]
    %v7151 = vld [vmem:[#allocation7 + $0x3d0] sm:$0xff]
    %v7152 = vld [vmem:[#allocation7 + $0x3d8] sm:$0xff]
    %v7153 = vld [vmem:[#allocation7 + $0x3e0] sm:$0xff]
    %v7154 = vld [vmem:[#allocation7 + $0x3e8] sm:$0xff]
    %v7155 = vld [vmem:[#allocation7 + $0x3f0] sm:$0xff]
    %v7156 = vld [vmem:[#allocation7 + $0x3f8] sm:$0xff]
    %v7285 = vunpack.c.l.b16 %v7029
    %v7286 = vunpack.c.h.b16 %v7029
    %v7287 = vunpack.c.l.b16 %v7030
    %v7288 = vunpack.c.h.b16 %v7030
    %v7289 = vunpack.c.l.b16 %v7031
    %v7290 = vunpack.c.h.b16 %v7031
    %v7291 = vunpack.c.l.b16 %v7032
    %v7292 = vunpack.c.h.b16 %v7032
    %v7293 = vunpack.c.l.b16 %v7033
    %v7294 = vunpack.c.h.b16 %v7033
    %v7295 = vunpack.c.l.b16 %v7034
    %v7296 = vunpack.c.h.b16 %v7034
    %v7297 = vunpack.c.l.b16 %v7035
    %v7298 = vunpack.c.h.b16 %v7035
    %v7299 = vunpack.c.l.b16 %v7036
    %v7300 = vunpack.c.h.b16 %v7036
    %v7301 = vunpack.c.l.b16 %v7037
    %v7302 = vunpack.c.h.b16 %v7037
    %v7303 = vunpack.c.l.b16 %v7038
    %v7304 = vunpack.c.h.b16 %v7038
    %v7305 = vunpack.c.l.b16 %v7039
    %v7306 = vunpack.c.h.b16 %v7039
    %v7307 = vunpack.c.l.b16 %v7040
    %v7308 = vunpack.c.h.b16 %v7040
    %v7309 = vunpack.c.l.b16 %v7041
    %v7310 = vunpack.c.h.b16 %v7041
    %v7311 = vunpack.c.l.b16 %v7042
    %v7312 = vunpack.c.h.b16 %v7042
    %v7313 = vunpack.c.l.b16 %v7043
    %v7314 = vunpack.c.h.b16 %v7043
    %v7315 = vunpack.c.l.b16 %v7044
    %v7316 = vunpack.c.h.b16 %v7044
    %v7317 = vunpack.c.l.b16 %v7045
    %v7318 = vunpack.c.h.b16 %v7045
    %v7319 = vunpack.c.l.b16 %v7046
    %v7320 = vunpack.c.h.b16 %v7046
    %v7321 = vunpack.c.l.b16 %v7047
    %v7322 = vunpack.c.h.b16 %v7047
    %v7323 = vunpack.c.l.b16 %v7048
    %v7324 = vunpack.c.h.b16 %v7048
    %v7325 = vunpack.c.l.b16 %v7049
    %v7326 = vunpack.c.h.b16 %v7049
    %v7327 = vunpack.c.l.b16 %v7050
    %v7328 = vunpack.c.h.b16 %v7050
    %v7329 = vunpack.c.l.b16 %v7051
    %v7330 = vunpack.c.h.b16 %v7051
    %v7331 = vunpack.c.l.b16 %v7052
    %v7332 = vunpack.c.h.b16 %v7052
    %v7333 = vunpack.c.l.b16 %v7053
    %v7334 = vunpack.c.h.b16 %v7053
    %v7335 = vunpack.c.l.b16 %v7054
    %v7336 = vunpack.c.h.b16 %v7054
    %v7337 = vunpack.c.l.b16 %v7055
    %v7338 = vunpack.c.h.b16 %v7055
    %v7339 = vunpack.c.l.b16 %v7056
    %v7340 = vunpack.c.h.b16 %v7056
    %v7341 = vunpack.c.l.b16 %v7057
    %v7342 = vunpack.c.h.b16 %v7057
    %v7343 = vunpack.c.l.b16 %v7058
    %v7344 = vunpack.c.h.b16 %v7058
    %v7345 = vunpack.c.l.b16 %v7059
    %v7346 = vunpack.c.h.b16 %v7059
    %v7347 = vunpack.c.l.b16 %v7060
    %v7348 = vunpack.c.h.b16 %v7060
    %v7349 = vunpack.c.l.b16 %v7061
    %v7350 = vunpack.c.h.b16 %v7061
    %v7351 = vunpack.c.l.b16 %v7062
    %v7352 = vunpack.c.h.b16 %v7062
    %v7353 = vunpack.c.l.b16 %v7063
    %v7354 = vunpack.c.h.b16 %v7063
    %v7355 = vunpack.c.l.b16 %v7064
    %v7356 = vunpack.c.h.b16 %v7064
    %v7357 = vunpack.c.l.b16 %v7065
    %v7358 = vunpack.c.h.b16 %v7065
    %v7359 = vunpack.c.l.b16 %v7066
    %v7360 = vunpack.c.h.b16 %v7066
    %v7361 = vunpack.c.l.b16 %v7067
    %v7362 = vunpack.c.h.b16 %v7067
    %v7363 = vunpack.c.l.b16 %v7068
    %v7364 = vunpack.c.h.b16 %v7068
    %v7365 = vunpack.c.l.b16 %v7069
    %v7366 = vunpack.c.h.b16 %v7069
    %v7367 = vunpack.c.l.b16 %v7070
    %v7368 = vunpack.c.h.b16 %v7070
    %v7369 = vunpack.c.l.b16 %v7071
    %v7370 = vunpack.c.h.b16 %v7071
    %v7371 = vunpack.c.l.b16 %v7072
    %v7372 = vunpack.c.h.b16 %v7072
    %v7373 = vunpack.c.l.b16 %v7073
    %v7374 = vunpack.c.h.b16 %v7073
    %v7375 = vunpack.c.l.b16 %v7074
    %v7376 = vunpack.c.h.b16 %v7074
    %v7377 = vunpack.c.l.b16 %v7075
    %v7378 = vunpack.c.h.b16 %v7075
    %v7379 = vunpack.c.l.b16 %v7076
    %v7380 = vunpack.c.h.b16 %v7076
    %v7381 = vunpack.c.l.b16 %v7077
    %v7382 = vunpack.c.h.b16 %v7077
    %v7383 = vunpack.c.l.b16 %v7078
    %v7384 = vunpack.c.h.b16 %v7078
    %v7385 = vunpack.c.l.b16 %v7079
    %v7386 = vunpack.c.h.b16 %v7079
    %v7387 = vunpack.c.l.b16 %v7080
    %v7388 = vunpack.c.h.b16 %v7080
    %v7389 = vunpack.c.l.b16 %v7081
    %v7390 = vunpack.c.h.b16 %v7081
    %v7391 = vunpack.c.l.b16 %v7082
    %v7392 = vunpack.c.h.b16 %v7082
    %v7393 = vunpack.c.l.b16 %v7083
    %v7394 = vunpack.c.h.b16 %v7083
    %v7395 = vunpack.c.l.b16 %v7084
    %v7396 = vunpack.c.h.b16 %v7084
    %v7397 = vunpack.c.l.b16 %v7085
    %v7398 = vunpack.c.h.b16 %v7085
    %v7399 = vunpack.c.l.b16 %v7086
    %v7400 = vunpack.c.h.b16 %v7086
    %v7401 = vunpack.c.l.b16 %v7087
    %v7402 = vunpack.c.h.b16 %v7087
    %v7403 = vunpack.c.l.b16 %v7088
    %v7404 = vunpack.c.h.b16 %v7088
    %v7405 = vunpack.c.l.b16 %v7089
    %v7406 = vunpack.c.h.b16 %v7089
    %v7407 = vunpack.c.l.b16 %v7090
    %v7408 = vunpack.c.h.b16 %v7090
    %v7409 = vunpack.c.l.b16 %v7091
    %v7410 = vunpack.c.h.b16 %v7091
    %v7411 = vunpack.c.l.b16 %v7092
    %v7412 = vunpack.c.h.b16 %v7092
    %v7413 = vunpack.c.l.b16 %v7093
    %v7414 = vunpack.c.h.b16 %v7093
    %v7415 = vunpack.c.l.b16 %v7094
    %v7416 = vunpack.c.h.b16 %v7094
    %v7417 = vunpack.c.l.b16 %v7095
    %v7418 = vunpack.c.h.b16 %v7095
    %v7419 = vunpack.c.l.b16 %v7096
    %v7420 = vunpack.c.h.b16 %v7096
    %v7421 = vunpack.c.l.b16 %v7097
    %v7422 = vunpack.c.h.b16 %v7097
    %v7423 = vunpack.c.l.b16 %v7098
    %v7424 = vunpack.c.h.b16 %v7098
    %v7425 = vunpack.c.l.b16 %v7099
    %v7426 = vunpack.c.h.b16 %v7099
    %v7427 = vunpack.c.l.b16 %v7100
    %v7428 = vunpack.c.h.b16 %v7100
    %v7429 = vunpack.c.l.b16 %v7101
    %v7430 = vunpack.c.h.b16 %v7101
    %v7431 = vunpack.c.l.b16 %v7102
    %v7432 = vunpack.c.h.b16 %v7102
    %v7433 = vunpack.c.l.b16 %v7103
    %v7434 = vunpack.c.h.b16 %v7103
    %v7435 = vunpack.c.l.b16 %v7104
    %v7436 = vunpack.c.h.b16 %v7104
    %v7437 = vunpack.c.l.b16 %v7105
    %v7438 = vunpack.c.h.b16 %v7105
    %v7439 = vunpack.c.l.b16 %v7106
    %v7440 = vunpack.c.h.b16 %v7106
    %v7441 = vunpack.c.l.b16 %v7107
    %v7442 = vunpack.c.h.b16 %v7107
    %v7443 = vunpack.c.l.b16 %v7108
    %v7444 = vunpack.c.h.b16 %v7108
    %v7445 = vunpack.c.l.b16 %v7109
    %v7446 = vunpack.c.h.b16 %v7109
    %v7447 = vunpack.c.l.b16 %v7110
    %v7448 = vunpack.c.h.b16 %v7110
    %v7449 = vunpack.c.l.b16 %v7111
    %v7450 = vunpack.c.h.b16 %v7111
    %v7451 = vunpack.c.l.b16 %v7112
    %v7452 = vunpack.c.h.b16 %v7112
    %v7453 = vunpack.c.l.b16 %v7113
    %v7454 = vunpack.c.h.b16 %v7113
    %v7455 = vunpack.c.l.b16 %v7114
    %v7456 = vunpack.c.h.b16 %v7114
    %v7457 = vunpack.c.l.b16 %v7115
    %v7458 = vunpack.c.h.b16 %v7115
    %v7459 = vunpack.c.l.b16 %v7116
    %v7460 = vunpack.c.h.b16 %v7116
    %v7461 = vunpack.c.l.b16 %v7117
    %v7462 = vunpack.c.h.b16 %v7117
    %v7463 = vunpack.c.l.b16 %v7118
    %v7464 = vunpack.c.h.b16 %v7118
    %v7465 = vunpack.c.l.b16 %v7119
    %v7466 = vunpack.c.h.b16 %v7119
    %v7467 = vunpack.c.l.b16 %v7120
    %v7468 = vunpack.c.h.b16 %v7120
    %v7469 = vunpack.c.l.b16 %v7121
    %v7470 = vunpack.c.h.b16 %v7121
    %v7471 = vunpack.c.l.b16 %v7122
    %v7472 = vunpack.c.h.b16 %v7122
    %v7473 = vunpack.c.l.b16 %v7123
    %v7474 = vunpack.c.h.b16 %v7123
    %v7475 = vunpack.c.l.b16 %v7124
    %v7476 = vunpack.c.h.b16 %v7124
    %v7477 = vunpack.c.l.b16 %v7125
    %v7478 = vunpack.c.h.b16 %v7125
    %v7479 = vunpack.c.l.b16 %v7126
    %v7480 = vunpack.c.h.b16 %v7126
    %v7481 = vunpack.c.l.b16 %v7127
    %v7482 = vunpack.c.h.b16 %v7127
    %v7483 = vunpack.c.l.b16 %v7128
    %v7484 = vunpack.c.h.b16 %v7128
    %v7485 = vunpack.c.l.b16 %v7129
    %v7486 = vunpack.c.h.b16 %v7129
    %v7487 = vunpack.c.l.b16 %v7130
    %v7488 = vunpack.c.h.b16 %v7130
    %v7489 = vunpack.c.l.b16 %v7131
    %v7490 = vunpack.c.h.b16 %v7131
    %v7491 = vunpack.c.l.b16 %v7132
    %v7492 = vunpack.c.h.b16 %v7132
    %v7493 = vunpack.c.l.b16 %v7133
    %v7494 = vunpack.c.h.b16 %v7133
    %v7495 = vunpack.c.l.b16 %v7134
    %v7496 = vunpack.c.h.b16 %v7134
    %v7497 = vunpack.c.l.b16 %v7135
    %v7498 = vunpack.c.h.b16 %v7135
    %v7499 = vunpack.c.l.b16 %v7136
    %v7500 = vunpack.c.h.b16 %v7136
    %v7501 = vunpack.c.l.b16 %v7137
    %v7502 = vunpack.c.h.b16 %v7137
    %v7503 = vunpack.c.l.b16 %v7138
    %v7504 = vunpack.c.h.b16 %v7138
    %v7505 = vunpack.c.l.b16 %v7139
    %v7506 = vunpack.c.h.b16 %v7139
    %v7507 = vunpack.c.l.b16 %v7140
    %v7508 = vunpack.c.h.b16 %v7140
    %v7509 = vunpack.c.l.b16 %v7141
    %v7510 = vunpack.c.h.b16 %v7141
    %v7511 = vunpack.c.l.b16 %v7142
    %v7512 = vunpack.c.h.b16 %v7142
    %v7513 = vunpack.c.l.b16 %v7143
    %v7514 = vunpack.c.h.b16 %v7143
    %v7515 = vunpack.c.l.b16 %v7144
    %v7516 = vunpack.c.h.b16 %v7144
    %v7517 = vunpack.c.l.b16 %v7145
    %v7518 = vunpack.c.h.b16 %v7145
    %v7519 = vunpack.c.l.b16 %v7146
    %v7520 = vunpack.c.h.b16 %v7146
    %v7521 = vunpack.c.l.b16 %v7147
    %v7522 = vunpack.c.h.b16 %v7147
    %v7523 = vunpack.c.l.b16 %v7148
    %v7524 = vunpack.c.h.b16 %v7148
    %v7525 = vunpack.c.l.b16 %v7149
    %v7526 = vunpack.c.h.b16 %v7149
    %v7527 = vunpack.c.l.b16 %v7150
    %v7528 = vunpack.c.h.b16 %v7150
    %v7529 = vunpack.c.l.b16 %v7151
    %v7530 = vunpack.c.h.b16 %v7151
    %v7531 = vunpack.c.l.b16 %v7152
    %v7532 = vunpack.c.h.b16 %v7152
    %v7533 = vunpack.c.l.b16 %v7153
    %v7534 = vunpack.c.h.b16 %v7153
    %v7535 = vunpack.c.l.b16 %v7154
    %v7536 = vunpack.c.h.b16 %v7154
    %v7537 = vunpack.c.l.b16 %v7155
    %v7538 = vunpack.c.h.b16 %v7155
    %v7539 = vunpack.c.l.b16 %v7156
    %v7540 = vunpack.c.h.b16 %v7156
    %v7541 = vpack.c.b16 %v7293, %v7285
    %v7542 = vpack.c.b16 %v7294, %v7286
    %v7543 = vpack.c.b16 %v7295, %v7287
    %v7544 = vpack.c.b16 %v7296, %v7288
    %v7545 = vpack.c.b16 %v7297, %v7289
    %v7546 = vpack.c.b16 %v7298, %v7290
    %v7547 = vpack.c.b16 %v7299, %v7291
    %v7548 = vpack.c.b16 %v7300, %v7292
    %v7549 = vpack.c.b16 %v7309, %v7301
    %v7550 = vpack.c.b16 %v7310, %v7302
    %v7551 = vpack.c.b16 %v7311, %v7303
    %v7552 = vpack.c.b16 %v7312, %v7304
    %v7553 = vpack.c.b16 %v7313, %v7305
    %v7554 = vpack.c.b16 %v7314, %v7306
    %v7555 = vpack.c.b16 %v7315, %v7307
    %v7556 = vpack.c.b16 %v7316, %v7308
    %v7557 = vpack.c.b16 %v7325, %v7317
    %v7558 = vpack.c.b16 %v7326, %v7318
    %v7559 = vpack.c.b16 %v7327, %v7319
    %v7560 = vpack.c.b16 %v7328, %v7320
    %v7561 = vpack.c.b16 %v7329, %v7321
    %v7562 = vpack.c.b16 %v7330, %v7322
    %v7563 = vpack.c.b16 %v7331, %v7323
    %v7564 = vpack.c.b16 %v7332, %v7324
    %v7565 = vpack.c.b16 %v7341, %v7333
    %v7566 = vpack.c.b16 %v7342, %v7334
    %v7567 = vpack.c.b16 %v7343, %v7335
    %v7568 = vpack.c.b16 %v7344, %v7336
    %v7569 = vpack.c.b16 %v7345, %v7337
    %v7570 = vpack.c.b16 %v7346, %v7338
    %v7571 = vpack.c.b16 %v7347, %v7339
    %v7572 = vpack.c.b16 %v7348, %v7340
    %v7573 = vpack.c.b16 %v7357, %v7349
    %v7574 = vpack.c.b16 %v7358, %v7350
    %v7575 = vpack.c.b16 %v7359, %v7351
    %v7576 = vpack.c.b16 %v7360, %v7352
    %v7577 = vpack.c.b16 %v7361, %v7353
    %v7578 = vpack.c.b16 %v7362, %v7354
    %v7579 = vpack.c.b16 %v7363, %v7355
    %v7580 = vpack.c.b16 %v7364, %v7356
    %v7581 = vpack.c.b16 %v7373, %v7365
    %v7582 = vpack.c.b16 %v7374, %v7366
    %v7583 = vpack.c.b16 %v7375, %v7367
    %v7584 = vpack.c.b16 %v7376, %v7368
    %v7585 = vpack.c.b16 %v7377, %v7369
    %v7586 = vpack.c.b16 %v7378, %v7370
    %v7587 = vpack.c.b16 %v7379, %v7371
    %v7588 = vpack.c.b16 %v7380, %v7372
    %v7589 = vpack.c.b16 %v7389, %v7381
    %v7590 = vpack.c.b16 %v7390, %v7382
    %v7591 = vpack.c.b16 %v7391, %v7383
    %v7592 = vpack.c.b16 %v7392, %v7384
    %v7593 = vpack.c.b16 %v7393, %v7385
    %v7594 = vpack.c.b16 %v7394, %v7386
    %v7595 = vpack.c.b16 %v7395, %v7387
    %v7596 = vpack.c.b16 %v7396, %v7388
    %v7597 = vpack.c.b16 %v7405, %v7397
    %v7598 = vpack.c.b16 %v7406, %v7398
    %v7599 = vpack.c.b16 %v7407, %v7399
    %v7600 = vpack.c.b16 %v7408, %v7400
    %v7601 = vpack.c.b16 %v7409, %v7401
    %v7602 = vpack.c.b16 %v7410, %v7402
    %v7603 = vpack.c.b16 %v7411, %v7403
    %v7604 = vpack.c.b16 %v7412, %v7404
    %v7605 = vpack.c.b16 %v7421, %v7413
    %v7606 = vpack.c.b16 %v7422, %v7414
    %v7607 = vpack.c.b16 %v7423, %v7415
    %v7608 = vpack.c.b16 %v7424, %v7416
    %v7609 = vpack.c.b16 %v7425, %v7417
    %v7610 = vpack.c.b16 %v7426, %v7418
    %v7611 = vpack.c.b16 %v7427, %v7419
    %v7612 = vpack.c.b16 %v7428, %v7420
    %v7613 = vpack.c.b16 %v7437, %v7429
    %v7614 = vpack.c.b16 %v7438, %v7430
    %v7615 = vpack.c.b16 %v7439, %v7431
    %v7616 = vpack.c.b16 %v7440, %v7432
    %v7617 = vpack.c.b16 %v7441, %v7433
    %v7618 = vpack.c.b16 %v7442, %v7434
    %v7619 = vpack.c.b16 %v7443, %v7435
    %v7620 = vpack.c.b16 %v7444, %v7436
    %v7621 = vpack.c.b16 %v7453, %v7445
    %v7622 = vpack.c.b16 %v7454, %v7446
    %v7623 = vpack.c.b16 %v7455, %v7447
    %v7624 = vpack.c.b16 %v7456, %v7448
    %v7625 = vpack.c.b16 %v7457, %v7449
    %v7626 = vpack.c.b16 %v7458, %v7450
    %v7627 = vpack.c.b16 %v7459, %v7451
    %v7628 = vpack.c.b16 %v7460, %v7452
    %v7629 = vpack.c.b16 %v7469, %v7461
    %v7630 = vpack.c.b16 %v7470, %v7462
    %v7631 = vpack.c.b16 %v7471, %v7463
    %v7632 = vpack.c.b16 %v7472, %v7464
    %v7633 = vpack.c.b16 %v7473, %v7465
    %v7634 = vpack.c.b16 %v7474, %v7466
    %v7635 = vpack.c.b16 %v7475, %v7467
    %v7636 = vpack.c.b16 %v7476, %v7468
    %v7637 = vpack.c.b16 %v7485, %v7477
    %v7638 = vpack.c.b16 %v7486, %v7478
    %v7639 = vpack.c.b16 %v7487, %v7479
    %v7640 = vpack.c.b16 %v7488, %v7480
    %v7641 = vpack.c.b16 %v7489, %v7481
    %v7642 = vpack.c.b16 %v7490, %v7482
    %v7643 = vpack.c.b16 %v7491, %v7483
    %v7644 = vpack.c.b16 %v7492, %v7484
    %v7645 = vpack.c.b16 %v7501, %v7493
    %v7646 = vpack.c.b16 %v7502, %v7494
    %v7647 = vpack.c.b16 %v7503, %v7495
    %v7648 = vpack.c.b16 %v7504, %v7496
    %v7649 = vpack.c.b16 %v7505, %v7497
    %v7650 = vpack.c.b16 %v7506, %v7498
    %v7651 = vpack.c.b16 %v7507, %v7499
    %v7652 = vpack.c.b16 %v7508, %v7500
    %v7653 = vpack.c.b16 %v7517, %v7509
    %v7654 = vpack.c.b16 %v7518, %v7510
    %v7655 = vpack.c.b16 %v7519, %v7511
    %v7656 = vpack.c.b16 %v7520, %v7512
    %v7657 = vpack.c.b16 %v7521, %v7513
    %v7658 = vpack.c.b16 %v7522, %v7514
    %v7659 = vpack.c.b16 %v7523, %v7515
    %v7660 = vpack.c.b16 %v7524, %v7516
    %v7661 = vpack.c.b16 %v7533, %v7525
    %v7662 = vpack.c.b16 %v7534, %v7526
    %v7663 = vpack.c.b16 %v7535, %v7527
    %v7664 = vpack.c.b16 %v7536, %v7528
    %v7665 = vpack.c.b16 %v7537, %v7529
    %v7666 = vpack.c.b16 %v7538, %v7530
    %v7667 = vpack.c.b16 %v7539, %v7531
    %v7668 = vpack.c.b16 %v7540, %v7532
    %7797 = vmatprep.subr.bf16.mxu0 %v7542
    %7798 = vmatpush1.bf16.msra.mxu0 %v7541
    %7799 = vmatprep.subr.bf16.mxu0 %v7550
    %7800 = vmatpush1.bf16.msra.mxu0 %v7549
    %7801 = vmatprep.subr.bf16.mxu0 %v7558
    %7802 = vmatpush1.bf16.msra.mxu0 %v7557
    %7803 = vmatprep.subr.bf16.mxu0 %v7566
    %7804 = vmatpush1.bf16.msra.mxu0 %v7565
    %7805 = vmatprep.subr.bf16.mxu0 %v7574
    %7806 = vmatpush1.bf16.msra.mxu0 %v7573
    %7807 = vmatprep.subr.bf16.mxu0 %v7582
    %7808 = vmatpush1.bf16.msra.mxu0 %v7581
    %7809 = vmatprep.subr.bf16.mxu0 %v7590
    %7810 = vmatpush1.bf16.msra.mxu0 %v7589
    %7811 = vmatprep.subr.bf16.mxu0 %v7598
    %7812 = vmatpush1.bf16.msra.mxu0 %v7597
    %7813 = vmatprep.subr.bf16.mxu0 %v7606
    %7814 = vmatpush1.bf16.msra.mxu0 %v7605
    %7815 = vmatprep.subr.bf16.mxu0 %v7614
    %7816 = vmatpush1.bf16.msra.mxu0 %v7613
    %7817 = vmatprep.subr.bf16.mxu0 %v7622
    %7818 = vmatpush1.bf16.msra.mxu0 %v7621
    %7819 = vmatprep.subr.bf16.mxu0 %v7630
    %7820 = vmatpush1.bf16.msra.mxu0 %v7629
    %7821 = vmatprep.subr.bf16.mxu0 %v7638
    %7822 = vmatpush1.bf16.msra.mxu0 %v7637
    %7823 = vmatprep.subr.bf16.mxu0 %v7646
    %7824 = vmatpush1.bf16.msra.mxu0 %v7645
    %7825 = vmatprep.subr.bf16.mxu0 %v7654
    %7826 = vmatpush1.bf16.msra.mxu0 %v7653
    %7827 = vmatprep.subr.bf16.mxu0 %v7662
    %7828 = vmatpush1.bf16.msra.mxu0 %v7661
    %7829 = vmatprep.mubr.bf16.mxu0 %v7028
    %7830 = vmatmul.mubr.bf16.gmra.mrb[0].mxu0 %v7027
    %v7831 = vpop.f32.mrb[0].mxu0
    %v7832 = vadd.f32 0.0, %v7831
    %v7833 = vpop.f32.mrb[0].mxu0
    %v7834 = vadd.f32 0.0, %v7833
    %v7835 = vpop.f32.mrb[0].mxu0
    %v7836 = vpop.f32.mrb[0].mxu0
    %7837 = vdwg.mxu0
    %7838 = vmatprep.subr.bf16.mxu0 %v7544
    %7839 = vmatpush1.bf16.msra.mxu0 %v7543
    %7840 = vmatprep.subr.bf16.mxu0 %v7552
    %7841 = vmatpush1.bf16.msra.mxu0 %v7551
    %7842 = vmatprep.subr.bf16.mxu0 %v7560
    %7843 = vmatpush1.bf16.msra.mxu0 %v7559
    %7844 = vmatprep.subr.bf16.mxu0 %v7568
    %7845 = vmatpush1.bf16.msra.mxu0 %v7567
    %7846 = vmatprep.subr.bf16.mxu0 %v7576
    %7847 = vmatpush1.bf16.msra.mxu0 %v7575
    %7848 = vmatprep.subr.bf16.mxu0 %v7584
    %7849 = vmatpush1.bf16.msra.mxu0 %v7583
    %7850 = vmatprep.subr.bf16.mxu0 %v7592
    %7851 = vmatpush1.bf16.msra.mxu0 %v7591
    %7852 = vmatprep.subr.bf16.mxu0 %v7600
    %7853 = vmatpush1.bf16.msra.mxu0 %v7599
    %7854 = vmatprep.subr.bf16.mxu0 %v7608
    %7855 = vmatpush1.bf16.msra.mxu0 %v7607
    %7856 = vmatprep.subr.bf16.mxu0 %v7616
    %7857 = vmatpush1.bf16.msra.mxu0 %v7615
    %7858 = vmatprep.subr.bf16.mxu0 %v7624
    %7859 = vmatpush1.bf16.msra.mxu0 %v7623
    %7860 = vmatprep.subr.bf16.mxu0 %v7632
    %7861 = vmatpush1.bf16.msra.mxu0 %v7631
    %7862 = vmatprep.subr.bf16.mxu0 %v7640
    %7863 = vmatpush1.bf16.msra.mxu0 %v7639
    %7864 = vmatprep.subr.bf16.mxu0 %v7648
    %7865 = vmatpush1.bf16.msra.mxu0 %v7647
    %7866 = vmatprep.subr.bf16.mxu0 %v7656
    %7867 = vmatpush1.bf16.msra.mxu0 %v7655
    %7868 = vmatprep.subr.bf16.mxu0 %v7664
    %7869 = vmatpush1.bf16.msra.mxu0 %v7663
    %7870 = vmatprep.mubr.bf16.mxu0 %v7028
    %7871 = vmatmul.mubr.bf16.gmra.mrb[0].mxu0 %v7027
    %v7872 = vpop.f32.mrb[0].mxu0
    %v7873 = vadd.f32 0.0, %v7872
    %v7874 = vpop.f32.mrb[0].mxu0
    %v7875 = vadd.f32 0.0, %v7874
    %v7876 = vpop.f32.mrb[0].mxu0
    %v7877 = vpop.f32.mrb[0].mxu0
    %7878 = vdwg.mxu0
    %7879 = vmatprep.subr.bf16.mxu0 %v7546
    %7880 = vmatpush1.bf16.msra.mxu0 %v7545
    %7881 = vmatprep.subr.bf16.mxu0 %v7554
    %7882 = vmatpush1.bf16.msra.mxu0 %v7553
    %7883 = vmatprep.subr.bf16.mxu0 %v7562
    %7884 = vmatpush1.bf16.msra.mxu0 %v7561
    %7885 = vmatprep.subr.bf16.mxu0 %v7570
    %7886 = vmatpush1.bf16.msra.mxu0 %v7569
    %7887 = vmatprep.subr.bf16.mxu0 %v7578
    %7888 = vmatpush1.bf16.msra.mxu0 %v7577
    %7889 = vmatprep.subr.bf16.mxu0 %v7586
    %7890 = vmatpush1.bf16.msra.mxu0 %v7585
    %7891 = vmatprep.subr.bf16.mxu0 %v7594
    %7892 = vmatpush1.bf16.msra.mxu0 %v7593
    %7893 = vmatprep.subr.bf16.mxu0 %v7602
    %7894 = vmatpush1.bf16.msra.mxu0 %v7601
    %7895 = vmatprep.subr.bf16.mxu0 %v7610
    %7896 = vmatpush1.bf16.msra.mxu0 %v7609
    %7897 = vmatprep.subr.bf16.mxu0 %v7618
    %7898 = vmatpush1.bf16.msra.mxu0 %v7617
    %7899 = vmatprep.subr.bf16.mxu0 %v7626
    %7900 = vmatpush1.bf16.msra.mxu0 %v7625
    %7901 = vmatprep.subr.bf16.mxu0 %v7634
    %7902 = vmatpush1.bf16.msra.mxu0 %v7633
    %7903 = vmatprep.subr.bf16.mxu0 %v7642
    %7904 = vmatpush1.bf16.msra.mxu0 %v7641
    %7905 = vmatprep.subr.bf16.mxu0 %v7650
    %7906 = vmatpush1.bf16.msra.mxu0 %v7649
    %7907 = vmatprep.subr.bf16.mxu0 %v7658
    %7908 = vmatpush1.bf16.msra.mxu0 %v7657
    %7909 = vmatprep.subr.bf16.mxu0 %v7666
    %7910 = vmatpush1.bf16.msra.mxu0 %v7665
    %7911 = vmatprep.mubr.bf16.mxu0 %v7028
    %7912 = vmatmul.mubr.bf16.gmra.mrb[0].mxu0 %v7027
    %v7913 = vpop.f32.mrb[0].mxu0
    %v7914 = vadd.f32 0.0, %v7913
    %v7915 = vpop.f32.mrb[0].mxu0
    %v7916 = vadd.f32 0.0, %v7915
    %v7917 = vpop.f32.mrb[0].mxu0
    %v7918 = vpop.f32.mrb[0].mxu0
    %7919 = vdwg.mxu0
    %7920 = vmatprep.subr.bf16.mxu0 %v7548
    %7921 = vmatpush1.bf16.msra.mxu0 %v7547
    %7922 = vmatprep.subr.bf16.mxu0 %v7556
    %7923 = vmatpush1.bf16.msra.mxu0 %v7555
    %7924 = vmatprep.subr.bf16.mxu0 %v7564
    %7925 = vmatpush1.bf16.msra.mxu0 %v7563
    %7926 = vmatprep.subr.bf16.mxu0 %v7572
    %7927 = vmatpush1.bf16.msra.mxu0 %v7571
    %7928 = vmatprep.subr.bf16.mxu0 %v7580
    %7929 = vmatpush1.bf16.msra.mxu0 %v7579
    %7930 = vmatprep.subr.bf16.mxu0 %v7588
    %7931 = vmatpush1.bf16.msra.mxu0 %v7587
    %7932 = vmatprep.subr.bf16.mxu0 %v7596
    %7933 = vmatpush1.bf16.msra.mxu0 %v7595
    %7934 = vmatprep.subr.bf16.mxu0 %v7604
    %7935 = vmatpush1.bf16.msra.mxu0 %v7603
    %7936 = vmatprep.subr.bf16.mxu0 %v7612
    %7937 = vmatpush1.bf16.msra.mxu0 %v7611
    %7938 = vmatprep.subr.bf16.mxu0 %v7620
    %7939 = vmatpush1.bf16.msra.mxu0 %v7619
    %7940 = vmatprep.subr.bf16.mxu0 %v7628
    %7941 = vmatpush1.bf16.msra.mxu0 %v7627
    %7942 = vmatprep.subr.bf16.mxu0 %v7636
    %7943 = vmatpush1.bf16.msra.mxu0 %v7635
    %7944 = vmatprep.subr.bf16.mxu0 %v7644
    %7945 = vmatpush1.bf16.msra.mxu0 %v7643
    %7946 = vmatprep.subr.bf16.mxu0 %v7652
    %7947 = vmatpush1.bf16.msra.mxu0 %v7651
    %7948 = vmatprep.subr.bf16.mxu0 %v7660
    %7949 = vmatpush1.bf16.msra.mxu0 %v7659
    %7950 = vmatprep.subr.bf16.mxu0 %v7668
    %7951 = vmatpush1.bf16.msra.mxu0 %v7667
    %7952 = vmatprep.mubr.bf16.mxu0 %v7028
    %7953 = vmatmul.mubr.bf16.gmra.mrb[0].mxu0 %v7027
    %v7954 = vpop.f32.mrb[0].mxu0
    %v7955 = vadd.f32 0.0, %v7954
    %v7956 = vpop.f32.mrb[0].mxu0
    %v7957 = vadd.f32 0.0, %v7956
    %v7958 = vpop.f32.mrb[0].mxu0
    %v7959 = vpop.f32.mrb[0].mxu0
    %7960 = vdwg.mxu0
    %v7961 = vadd.f32 %v3583, %v7832
    %v7962 = vadd.f32 %v3585, %v7834
    %v7963 = vadd.f32 %v3729, %v7873
    %v7964 = vadd.f32 %v3731, %v7875
    %v7965 = vadd.f32 %v3875, %v7914
    %v7966 = vadd.f32 %v3877, %v7916
    %v7967 = vadd.f32 %v4021, %v7955
    %v7968 = vadd.f32 %v4023, %v7957
    %v7969 = vxor.u32 %v7961, 2147483648
    %v7970 = vxor.u32 %v7962, 2147483648
    %v7971 = vmul.f32 %v7969, 1.442695
    %v7972 = vpow.pop %v7971
    %v7973 = vmul.f32 %v7970, 1.442695
    %v7974 = vpow.pop %v7973
    %v7975 = vadd.f32 %v7972, 1.0
    %v7976 = vadd.f32 %v7974, 1.0
    %v7977 = vrcp.pop %v7975
    %v7978 = vmul.f32 1.0, %v7977
    %v7979 = vrcp.pop %v7976
    %v7980 = vmul.f32 1.0, %v7979
    %v7981 = vxor.u32 %v7963, 2147483648
    %v7982 = vxor.u32 %v7964, 2147483648
    %v7983 = vmul.f32 %v7981, 1.442695
    %v7984 = vpow.pop %v7983
    %v7985 = vmul.f32 %v7982, 1.442695
    %v7986 = vpow.pop %v7985
    %v7987 = vadd.f32 %v7984, 1.0
    %v7988 = vadd.f32 %v7986, 1.0
    %v7989 = vrcp.pop %v7987
    %v7990 = vmul.f32 1.0, %v7989
    %v7991 = vrcp.pop %v7988
    %v7992 = vmul.f32 1.0, %v7991
    %v7993 = vtanh.pop %v7965
    %v7994 = vtanh.pop %v7966
    %v7995 = vxor.u32 %v7967, 2147483648
    %v7996 = vxor.u32 %v7968, 2147483648
    %v7997 = vmul.f32 %v7995, 1.442695
    %v7998 = vpow.pop %v7997
    %v7999 = vmul.f32 %v7996, 1.442695
    %v8000 = vpow.pop %v7999
    %v8001 = vadd.f32 %v7998, 1.0
    %v8002 = vadd.f32 %v8000, 1.0
    %v8003 = vrcp.pop %v8001
    %v8004 = vmul.f32 1.0, %v8003
    %v8005 = vrcp.pop %v8002
    %v8006 = vmul.f32 1.0, %v8005
    %v8007 = vmul.f32 %v7990, %v7018
    %v8008 = vmul.f32 %v7992, %v7019
    %v8009 = vmul.f32 %v7978, %v7993
    %v8010 = vmul.f32 %v7980, %v7994
    %v8011 = vadd.f32 %v8007, %v8009
    %v8012 = vadd.f32 %v8008, %v8010
    %v8013 = vtanh.pop %v8011
    %v8014 = vtanh.pop %v8012
    %v8015 = vmul.f32 %v8004, %v8013
    %v8016 = vmul.f32 %v8006, %v8014
    %s8017 = scalar_lea.vmem [#allocation4], 48
    %8018 = vst [vmem:[%s8017] sm:$0xff] %v8015
    %8019 = vst [vmem:[%s8017 + $0x8] sm:$0xff] %v8016
    %v8020 = vpack.c.bf16 %v8015, %v8015
    %v8021 = vpack.c.bf16 %v8016, %v8016
    %v8022 = vld [vmem:[#allocation7] sm:$0xff]
    %v8023 = vld [vmem:[#allocation7 + $0x8] sm:$0xff]
    %v8024 = vld [vmem:[#allocation7 + $0x10] sm:$0xff]
    %v8025 = vld [vmem:[#allocation7 + $0x18] sm:$0xff]
    %v8026 = vld [vmem:[#allocation7 + $0x20] sm:$0xff]
    %v8027 = vld [vmem:[#allocation7 + $0x28] sm:$0xff]
    %v8028 = vld [vmem:[#allocation7 + $0x30] sm:$0xff]
    %v8029 = vld [vmem:[#allocation7 + $0x38] sm:$0xff]
    %v8030 = vld [vmem:[#allocation7 + $0x40] sm:$0xff]
    %v8031 = vld [vmem:[#allocation7 + $0x48] sm:$0xff]
    %v8032 = vld [vmem:[#allocation7 + $0x50] sm:$0xff]
    %v8033 = vld [vmem:[#allocation7 + $0x58] sm:$0xff]
    %v8034 = vld [vmem:[#allocation7 + $0x60] sm:$0xff]
    %v8035 = vld [vmem:[#allocation7 + $0x68] sm:$0xff]
    %v8036 = vld [vmem:[#allocation7 + $0x70] sm:$0xff]
    %v8037 = vld [vmem:[#allocation7 + $0x78] sm:$0xff]
    %v8038 = vld [vmem:[#allocation7 + $0x80] sm:$0xff]
    %v8039 = vld [vmem:[#allocation7 + $0x88] sm:$0xff]
    %v8040 = vld [vmem:[#allocation7 + $0x90] sm:$0xff]
    %v8041 = vld [vmem:[#allocation7 + $0x98] sm:$0xff]
    %v8042 = vld [vmem:[#allocation7 + $0xa0] sm:$0xff]
    %v8043 = vld [vmem:[#allocation7 + $0xa8] sm:$0xff]
    %v8044 = vld [vmem:[#allocation7 + $0xb0] sm:$0xff]
    %v8045 = vld [vmem:[#allocation7 + $0xb8] sm:$0xff]
    %v8046 = vld [vmem:[#allocation7 + $0xc0] sm:$0xff]
    %v8047 = vld [vmem:[#allocation7 + $0xc8] sm:$0xff]
    %v8048 = vld [vmem:[#allocation7 + $0xd0] sm:$0xff]
    %v8049 = vld [vmem:[#allocation7 + $0xd8] sm:$0xff]
    %v8050 = vld [vmem:[#allocation7 + $0xe0] sm:$0xff]
    %v8051 = vld [vmem:[#allocation7 + $0xe8] sm:$0xff]
    %v8052 = vld [vmem:[#allocation7 + $0xf0] sm:$0xff]
    %v8053 = vld [vmem:[#allocation7 + $0xf8] sm:$0xff]
    %v8054 = vld [vmem:[#allocation7 + $0x100] sm:$0xff]
    %v8055 = vld [vmem:[#allocation7 + $0x108] sm:$0xff]
    %v8056 = vld [vmem:[#allocation7 + $0x110] sm:$0xff]
    %v8057 = vld [vmem:[#allocation7 + $0x118] sm:$0xff]
    %v8058 = vld [vmem:[#allocation7 + $0x120] sm:$0xff]
    %v8059 = vld [vmem:[#allocation7 + $0x128] sm:$0xff]
    %v8060 = vld [vmem:[#allocation7 + $0x130] sm:$0xff]
    %v8061 = vld [vmem:[#allocation7 + $0x138] sm:$0xff]
    %v8062 = vld [vmem:[#allocation7 + $0x140] sm:$0xff]
    %v8063 = vld [vmem:[#allocation7 + $0x148] sm:$0xff]
    %v8064 = vld [vmem:[#allocation7 + $0x150] sm:$0xff]
    %v8065 = vld [vmem:[#allocation7 + $0x158] sm:$0xff]
    %v8066 = vld [vmem:[#allocation7 + $0x160] sm:$0xff]
    %v8067 = vld [vmem:[#allocation7 + $0x168] sm:$0xff]
    %v8068 = vld [vmem:[#allocation7 + $0x170] sm:$0xff]
    %v8069 = vld [vmem:[#allocation7 + $0x178] sm:$0xff]
    %v8070 = vld [vmem:[#allocation7 + $0x180] sm:$0xff]
    %v8071 = vld [vmem:[#allocation7 + $0x188] sm:$0xff]
    %v8072 = vld [vmem:[#allocation7 + $0x190] sm:$0xff]
    %v8073 = vld [vmem:[#allocation7 + $0x198] sm:$0xff]
    %v8074 = vld [vmem:[#allocation7 + $0x1a0] sm:$0xff]
    %v8075 = vld [vmem:[#allocation7 + $0x1a8] sm:$0xff]
    %v8076 = vld [vmem:[#allocation7 + $0x1b0] sm:$0xff]
    %v8077 = vld [vmem:[#allocation7 + $0x1b8] sm:$0xff]
    %v8078 = vld [vmem:[#allocation7 + $0x1c0] sm:$0xff]
    %v8079 = vld [vmem:[#allocation7 + $0x1c8] sm:$0xff]
    %v8080 = vld [vmem:[#allocation7 + $0x1d0] sm:$0xff]
    %v8081 = vld [vmem:[#allocation7 + $0x1d8] sm:$0xff]
    %v8082 = vld [vmem:[#allocation7 + $0x1e0] sm:$0xff]
    %v8083 = vld [vmem:[#allocation7 + $0x1e8] sm:$0xff]
    %v8084 = vld [vmem:[#allocation7 + $0x1f0] sm:$0xff]
    %v8085 = vld [vmem:[#allocation7 + $0x1f8] sm:$0xff]
    %v8086 = vld [vmem:[#allocation7 + $0x200] sm:$0xff]
    %v8087 = vld [vmem:[#allocation7 + $0x208] sm:$0xff]
    %v8088 = vld [vmem:[#allocation7 + $0x210] sm:$0xff]
    %v8089 = vld [vmem:[#allocation7 + $0x218] sm:$0xff]
    %v8090 = vld [vmem:[#allocation7 + $0x220] sm:$0xff]
    %v8091 = vld [vmem:[#allocation7 + $0x228] sm:$0xff]
    %v8092 = vld [vmem:[#allocation7 + $0x230] sm:$0xff]
    %v8093 = vld [vmem:[#allocation7 + $0x238] sm:$0xff]
    %v8094 = vld [vmem:[#allocation7 + $0x240] sm:$0xff]
    %v8095 = vld [vmem:[#allocation7 + $0x248] sm:$0xff]
    %v8096 = vld [vmem:[#allocation7 + $0x250] sm:$0xff]
    %v8097 = vld [vmem:[#allocation7 + $0x258] sm:$0xff]
    %v8098 = vld [vmem:[#allocation7 + $0x260] sm:$0xff]
    %v8099 = vld [vmem:[#allocation7 + $0x268] sm:$0xff]
    %v8100 = vld [vmem:[#allocation7 + $0x270] sm:$0xff]
    %v8101 = vld [vmem:[#allocation7 + $0x278] sm:$0xff]
    %v8102 = vld [vmem:[#allocation7 + $0x280] sm:$0xff]
    %v8103 = vld [vmem:[#allocation7 + $0x288] sm:$0xff]
    %v8104 = vld [vmem:[#allocation7 + $0x290] sm:$0xff]
    %v8105 = vld [vmem:[#allocation7 + $0x298] sm:$0xff]
    %v8106 = vld [vmem:[#allocation7 + $0x2a0] sm:$0xff]
    %v8107 = vld [vmem:[#allocation7 + $0x2a8] sm:$0xff]
    %v8108 = vld [vmem:[#allocation7 + $0x2b0] sm:$0xff]
    %v8109 = vld [vmem:[#allocation7 + $0x2b8] sm:$0xff]
    %v8110 = vld [vmem:[#allocation7 + $0x2c0] sm:$0xff]
    %v8111 = vld [vmem:[#allocation7 + $0x2c8] sm:$0xff]
    %v8112 = vld [vmem:[#allocation7 + $0x2d0] sm:$0xff]
    %v8113 = vld [vmem:[#allocation7 + $0x2d8] sm:$0xff]
    %v8114 = vld [vmem:[#allocation7 + $0x2e0] sm:$0xff]
    %v8115 = vld [vmem:[#allocation7 + $0x2e8] sm:$0xff]
    %v8116 = vld [vmem:[#allocation7 + $0x2f0] sm:$0xff]
    %v8117 = vld [vmem:[#allocation7 + $0x2f8] sm:$0xff]
    %v8118 = vld [vmem:[#allocation7 + $0x300] sm:$0xff]
    %v8119 = vld [vmem:[#allocation7 + $0x308] sm:$0xff]
    %v8120 = vld [vmem:[#allocation7 + $0x310] sm:$0xff]
    %v8121 = vld [vmem:[#allocation7 + $0x318] sm:$0xff]
    %v8122 = vld [vmem:[#allocation7 + $0x320] sm:$0xff]
    %v8123 = vld [vmem:[#allocation7 + $0x328] sm:$0xff]
    %v8124 = vld [vmem:[#allocation7 + $0x330] sm:$0xff]
    %v8125 = vld [vmem:[#allocation7 + $0x338] sm:$0xff]
    %v8126 = vld [vmem:[#allocation7 + $0x340] sm:$0xff]
    %v8127 = vld [vmem:[#allocation7 + $0x348] sm:$0xff]
    %v8128 = vld [vmem:[#allocation7 + $0x350] sm:$0xff]
    %v8129 = vld [vmem:[#allocation7 + $0x358] sm:$0xff]
    %v8130 = vld [vmem:[#allocation7 + $0x360] sm:$0xff]
    %v8131 = vld [vmem:[#allocation7 + $0x368] sm:$0xff]
    %v8132 = vld [vmem:[#allocation7 + $0x370] sm:$0xff]
    %v8133 = vld [vmem:[#allocation7 + $0x378] sm:$0xff]
    %v8134 = vld [vmem:[#allocation7 + $0x380] sm:$0xff]
    %v8135 = vld [vmem:[#allocation7 + $0x388] sm:$0xff]
    %v8136 = vld [vmem:[#allocation7 + $0x390] sm:$0xff]
    %v8137 = vld [vmem:[#allocation7 + $0x398] sm:$0xff]
    %v8138 = vld [vmem:[#allocation7 + $0x3a0] sm:$0xff]
    %v8139 = vld [vmem:[#allocation7 + $0x3a8] sm:$0xff]
    %v8140 = vld [vmem:[#allocation7 + $0x3b0] sm:$0xff]
    %v8141 = vld [vmem:[#allocation7 + $0x3b8] sm:$0xff]
    %v8142 = vld [vmem:[#allocation7 + $0x3c0] sm:$0xff]
    %v8143 = vld [vmem:[#allocation7 + $0x3c8] sm:$0xff]
    %v8144 = vld [vmem:[#allocation7 + $0x3d0] sm:$0xff]
    %v8145 = vld [vmem:[#allocation7 + $0x3d8] sm:$0xff]
    %v8146 = vld [vmem:[#allocation7 + $0x3e0] sm:$0xff]
    %v8147 = vld [vmem:[#allocation7 + $0x3e8] sm:$0xff]
    %v8148 = vld [vmem:[#allocation7 + $0x3f0] sm:$0xff]
    %v8149 = vld [vmem:[#allocation7 + $0x3f8] sm:$0xff]
    %v8278 = vunpack.c.l.b16 %v8022
    %v8279 = vunpack.c.h.b16 %v8022
    %v8280 = vunpack.c.l.b16 %v8023
    %v8281 = vunpack.c.h.b16 %v8023
    %v8282 = vunpack.c.l.b16 %v8024
    %v8283 = vunpack.c.h.b16 %v8024
    %v8284 = vunpack.c.l.b16 %v8025
    %v8285 = vunpack.c.h.b16 %v8025
    %v8286 = vunpack.c.l.b16 %v8026
    %v8287 = vunpack.c.h.b16 %v8026
    %v8288 = vunpack.c.l.b16 %v8027
    %v8289 = vunpack.c.h.b16 %v8027
    %v8290 = vunpack.c.l.b16 %v8028
    %v8291 = vunpack.c.h.b16 %v8028
    %v8292 = vunpack.c.l.b16 %v8029
    %v8293 = vunpack.c.h.b16 %v8029
    %v8294 = vunpack.c.l.b16 %v8030
    %v8295 = vunpack.c.h.b16 %v8030
    %v8296 = vunpack.c.l.b16 %v8031
    %v8297 = vunpack.c.h.b16 %v8031
    %v8298 = vunpack.c.l.b16 %v8032
    %v8299 = vunpack.c.h.b16 %v8032
    %v8300 = vunpack.c.l.b16 %v8033
    %v8301 = vunpack.c.h.b16 %v8033
    %v8302 = vunpack.c.l.b16 %v8034
    %v8303 = vunpack.c.h.b16 %v8034
    %v8304 = vunpack.c.l.b16 %v8035
    %v8305 = vunpack.c.h.b16 %v8035
    %v8306 = vunpack.c.l.b16 %v8036
    %v8307 = vunpack.c.h.b16 %v8036
    %v8308 = vunpack.c.l.b16 %v8037
    %v8309 = vunpack.c.h.b16 %v8037
    %v8310 = vunpack.c.l.b16 %v8038
    %v8311 = vunpack.c.h.b16 %v8038
    %v8312 = vunpack.c.l.b16 %v8039
    %v8313 = vunpack.c.h.b16 %v8039
    %v8314 = vunpack.c.l.b16 %v8040
    %v8315 = vunpack.c.h.b16 %v8040
    %v8316 = vunpack.c.l.b16 %v8041
    %v8317 = vunpack.c.h.b16 %v8041
    %v8318 = vunpack.c.l.b16 %v8042
    %v8319 = vunpack.c.h.b16 %v8042
    %v8320 = vunpack.c.l.b16 %v8043
    %v8321 = vunpack.c.h.b16 %v8043
    %v8322 = vunpack.c.l.b16 %v8044
    %v8323 = vunpack.c.h.b16 %v8044
    %v8324 = vunpack.c.l.b16 %v8045
    %v8325 = vunpack.c.h.b16 %v8045
    %v8326 = vunpack.c.l.b16 %v8046
    %v8327 = vunpack.c.h.b16 %v8046
    %v8328 = vunpack.c.l.b16 %v8047
    %v8329 = vunpack.c.h.b16 %v8047
    %v8330 = vunpack.c.l.b16 %v8048
    %v8331 = vunpack.c.h.b16 %v8048
    %v8332 = vunpack.c.l.b16 %v8049
    %v8333 = vunpack.c.h.b16 %v8049
    %v8334 = vunpack.c.l.b16 %v8050
    %v8335 = vunpack.c.h.b16 %v8050
    %v8336 = vunpack.c.l.b16 %v8051
    %v8337 = vunpack.c.h.b16 %v8051
    %v8338 = vunpack.c.l.b16 %v8052
    %v8339 = vunpack.c.h.b16 %v8052
    %v8340 = vunpack.c.l.b16 %v8053
    %v8341 = vunpack.c.h.b16 %v8053
    %v8342 = vunpack.c.l.b16 %v8054
    %v8343 = vunpack.c.h.b16 %v8054
    %v8344 = vunpack.c.l.b16 %v8055
    %v8345 = vunpack.c.h.b16 %v8055
    %v8346 = vunpack.c.l.b16 %v8056
    %v8347 = vunpack.c.h.b16 %v8056
    %v8348 = vunpack.c.l.b16 %v8057
    %v8349 = vunpack.c.h.b16 %v8057
    %v8350 = vunpack.c.l.b16 %v8058
    %v8351 = vunpack.c.h.b16 %v8058
    %v8352 = vunpack.c.l.b16 %v8059
    %v8353 = vunpack.c.h.b16 %v8059
    %v8354 = vunpack.c.l.b16 %v8060
    %v8355 = vunpack.c.h.b16 %v8060
    %v8356 = vunpack.c.l.b16 %v8061
    %v8357 = vunpack.c.h.b16 %v8061
    %v8358 = vunpack.c.l.b16 %v8062
    %v8359 = vunpack.c.h.b16 %v8062
    %v8360 = vunpack.c.l.b16 %v8063
    %v8361 = vunpack.c.h.b16 %v8063
    %v8362 = vunpack.c.l.b16 %v8064
    %v8363 = vunpack.c.h.b16 %v8064
    %v8364 = vunpack.c.l.b16 %v8065
    %v8365 = vunpack.c.h.b16 %v8065
    %v8366 = vunpack.c.l.b16 %v8066
    %v8367 = vunpack.c.h.b16 %v8066
    %v8368 = vunpack.c.l.b16 %v8067
    %v8369 = vunpack.c.h.b16 %v8067
    %v8370 = vunpack.c.l.b16 %v8068
    %v8371 = vunpack.c.h.b16 %v8068
    %v8372 = vunpack.c.l.b16 %v8069
    %v8373 = vunpack.c.h.b16 %v8069
    %v8374 = vunpack.c.l.b16 %v8070
    %v8375 = vunpack.c.h.b16 %v8070
    %v8376 = vunpack.c.l.b16 %v8071
    %v8377 = vunpack.c.h.b16 %v8071
    %v8378 = vunpack.c.l.b16 %v8072
    %v8379 = vunpack.c.h.b16 %v8072
    %v8380 = vunpack.c.l.b16 %v8073
    %v8381 = vunpack.c.h.b16 %v8073
    %v8382 = vunpack.c.l.b16 %v8074
    %v8383 = vunpack.c.h.b16 %v8074
    %v8384 = vunpack.c.l.b16 %v8075
    %v8385 = vunpack.c.h.b16 %v8075
    %v8386 = vunpack.c.l.b16 %v8076
    %v8387 = vunpack.c.h.b16 %v8076
    %v8388 = vunpack.c.l.b16 %v8077
    %v8389 = vunpack.c.h.b16 %v8077
    %v8390 = vunpack.c.l.b16 %v8078
    %v8391 = vunpack.c.h.b16 %v8078
    %v8392 = vunpack.c.l.b16 %v8079
    %v8393 = vunpack.c.h.b16 %v8079
    %v8394 = vunpack.c.l.b16 %v8080
    %v8395 = vunpack.c.h.b16 %v8080
    %v8396 = vunpack.c.l.b16 %v8081
    %v8397 = vunpack.c.h.b16 %v8081
    %v8398 = vunpack.c.l.b16 %v8082
    %v8399 = vunpack.c.h.b16 %v8082
    %v8400 = vunpack.c.l.b16 %v8083
    %v8401 = vunpack.c.h.b16 %v8083
    %v8402 = vunpack.c.l.b16 %v8084
    %v8403 = vunpack.c.h.b16 %v8084
    %v8404 = vunpack.c.l.b16 %v8085
    %v8405 = vunpack.c.h.b16 %v8085
    %v8406 = vunpack.c.l.b16 %v8086
    %v8407 = vunpack.c.h.b16 %v8086
    %v8408 = vunpack.c.l.b16 %v8087
    %v8409 = vunpack.c.h.b16 %v8087
    %v8410 = vunpack.c.l.b16 %v8088
    %v8411 = vunpack.c.h.b16 %v8088
    %v8412 = vunpack.c.l.b16 %v8089
    %v8413 = vunpack.c.h.b16 %v8089
    %v8414 = vunpack.c.l.b16 %v8090
    %v8415 = vunpack.c.h.b16 %v8090
    %v8416 = vunpack.c.l.b16 %v8091
    %v8417 = vunpack.c.h.b16 %v8091
    %v8418 = vunpack.c.l.b16 %v8092
    %v8419 = vunpack.c.h.b16 %v8092
    %v8420 = vunpack.c.l.b16 %v8093
    %v8421 = vunpack.c.h.b16 %v8093
    %v8422 = vunpack.c.l.b16 %v8094
    %v8423 = vunpack.c.h.b16 %v8094
    %v8424 = vunpack.c.l.b16 %v8095
    %v8425 = vunpack.c.h.b16 %v8095
    %v8426 = vunpack.c.l.b16 %v8096
    %v8427 = vunpack.c.h.b16 %v8096
    %v8428 = vunpack.c.l.b16 %v8097
    %v8429 = vunpack.c.h.b16 %v8097
    %v8430 = vunpack.c.l.b16 %v8098
    %v8431 = vunpack.c.h.b16 %v8098
    %v8432 = vunpack.c.l.b16 %v8099
    %v8433 = vunpack.c.h.b16 %v8099
    %v8434 = vunpack.c.l.b16 %v8100
    %v8435 = vunpack.c.h.b16 %v8100
    %v8436 = vunpack.c.l.b16 %v8101
    %v8437 = vunpack.c.h.b16 %v8101
    %v8438 = vunpack.c.l.b16 %v8102
    %v8439 = vunpack.c.h.b16 %v8102
    %v8440 = vunpack.c.l.b16 %v8103
    %v8441 = vunpack.c.h.b16 %v8103
    %v8442 = vunpack.c.l.b16 %v8104
    %v8443 = vunpack.c.h.b16 %v8104
    %v8444 = vunpack.c.l.b16 %v8105
    %v8445 = vunpack.c.h.b16 %v8105
    %v8446 = vunpack.c.l.b16 %v8106
    %v8447 = vunpack.c.h.b16 %v8106
    %v8448 = vunpack.c.l.b16 %v8107
    %v8449 = vunpack.c.h.b16 %v8107
    %v8450 = vunpack.c.l.b16 %v8108
    %v8451 = vunpack.c.h.b16 %v8108
    %v8452 = vunpack.c.l.b16 %v8109
    %v8453 = vunpack.c.h.b16 %v8109
    %v8454 = vunpack.c.l.b16 %v8110
    %v8455 = vunpack.c.h.b16 %v8110
    %v8456 = vunpack.c.l.b16 %v8111
    %v8457 = vunpack.c.h.b16 %v8111
    %v8458 = vunpack.c.l.b16 %v8112
    %v8459 = vunpack.c.h.b16 %v8112
    %v8460 = vunpack.c.l.b16 %v8113
    %v8461 = vunpack.c.h.b16 %v8113
    %v8462 = vunpack.c.l.b16 %v8114
    %v8463 = vunpack.c.h.b16 %v8114
    %v8464 = vunpack.c.l.b16 %v8115
    %v8465 = vunpack.c.h.b16 %v8115
    %v8466 = vunpack.c.l.b16 %v8116
    %v8467 = vunpack.c.h.b16 %v8116
    %v8468 = vunpack.c.l.b16 %v8117
    %v8469 = vunpack.c.h.b16 %v8117
    %v8470 = vunpack.c.l.b16 %v8118
    %v8471 = vunpack.c.h.b16 %v8118
    %v8472 = vunpack.c.l.b16 %v8119
    %v8473 = vunpack.c.h.b16 %v8119
    %v8474 = vunpack.c.l.b16 %v8120
    %v8475 = vunpack.c.h.b16 %v8120
    %v8476 = vunpack.c.l.b16 %v8121
    %v8477 = vunpack.c.h.b16 %v8121
    %v8478 = vunpack.c.l.b16 %v8122
    %v8479 = vunpack.c.h.b16 %v8122
    %v8480 = vunpack.c.l.b16 %v8123
    %v8481 = vunpack.c.h.b16 %v8123
    %v8482 = vunpack.c.l.b16 %v8124
    %v8483 = vunpack.c.h.b16 %v8124
    %v8484 = vunpack.c.l.b16 %v8125
    %v8485 = vunpack.c.h.b16 %v8125
    %v8486 = vunpack.c.l.b16 %v8126
    %v8487 = vunpack.c.h.b16 %v8126
    %v8488 = vunpack.c.l.b16 %v8127
    %v8489 = vunpack.c.h.b16 %v8127
    %v8490 = vunpack.c.l.b16 %v8128
    %v8491 = vunpack.c.h.b16 %v8128
    %v8492 = vunpack.c.l.b16 %v8129
    %v8493 = vunpack.c.h.b16 %v8129
    %v8494 = vunpack.c.l.b16 %v8130
    %v8495 = vunpack.c.h.b16 %v8130
    %v8496 = vunpack.c.l.b16 %v8131
    %v8497 = vunpack.c.h.b16 %v8131
    %v8498 = vunpack.c.l.b16 %v8132
    %v8499 = vunpack.c.h.b16 %v8132
    %v8500 = vunpack.c.l.b16 %v8133
    %v8501 = vunpack.c.h.b16 %v8133
    %v8502 = vunpack.c.l.b16 %v8134
    %v8503 = vunpack.c.h.b16 %v8134
    %v8504 = vunpack.c.l.b16 %v8135
    %v8505 = vunpack.c.h.b16 %v8135
    %v8506 = vunpack.c.l.b16 %v8136
    %v8507 = vunpack.c.h.b16 %v8136
    %v8508 = vunpack.c.l.b16 %v8137
    %v8509 = vunpack.c.h.b16 %v8137
    %v8510 = vunpack.c.l.b16 %v8138
    %v8511 = vunpack.c.h.b16 %v8138
    %v8512 = vunpack.c.l.b16 %v8139
    %v8513 = vunpack.c.h.b16 %v8139
    %v8514 = vunpack.c.l.b16 %v8140
    %v8515 = vunpack.c.h.b16 %v8140
    %v8516 = vunpack.c.l.b16 %v8141
    %v8517 = vunpack.c.h.b16 %v8141
    %v8518 = vunpack.c.l.b16 %v8142
    %v8519 = vunpack.c.h.b16 %v8142
    %v8520 = vunpack.c.l.b16 %v8143
    %v8521 = vunpack.c.h.b16 %v8143
    %v8522 = vunpack.c.l.b16 %v8144
    %v8523 = vunpack.c.h.b16 %v8144
    %v8524 = vunpack.c.l.b16 %v8145
    %v8525 = vunpack.c.h.b16 %v8145
    %v8526 = vunpack.c.l.b16 %v8146
    %v8527 = vunpack.c.h.b16 %v8146
    %v8528 = vunpack.c.l.b16 %v8147
    %v8529 = vunpack.c.h.b16 %v8147
    %v8530 = vunpack.c.l.b16 %v8148
    %v8531 = vunpack.c.h.b16 %v8148
    %v8532 = vunpack.c.l.b16 %v8149
    %v8533 = vunpack.c.h.b16 %v8149
    %v8534 = vpack.c.b16 %v8286, %v8278
    %v8535 = vpack.c.b16 %v8287, %v8279
    %v8536 = vpack.c.b16 %v8288, %v8280
    %v8537 = vpack.c.b16 %v8289, %v8281
    %v8538 = vpack.c.b16 %v8290, %v8282
    %v8539 = vpack.c.b16 %v8291, %v8283
    %v8540 = vpack.c.b16 %v8292, %v8284
    %v8541 = vpack.c.b16 %v8293, %v8285
    %v8542 = vpack.c.b16 %v8302, %v8294
    %v8543 = vpack.c.b16 %v8303, %v8295
    %v8544 = vpack.c.b16 %v8304, %v8296
    %v8545 = vpack.c.b16 %v8305, %v8297
    %v8546 = vpack.c.b16 %v8306, %v8298
    %v8547 = vpack.c.b16 %v8307, %v8299
    %v8548 = vpack.c.b16 %v8308, %v8300
    %v8549 = vpack.c.b16 %v8309, %v8301
    %v8550 = vpack.c.b16 %v8318, %v8310
    %v8551 = vpack.c.b16 %v8319, %v8311
    %v8552 = vpack.c.b16 %v8320, %v8312
    %v8553 = vpack.c.b16 %v8321, %v8313
    %v8554 = vpack.c.b16 %v8322, %v8314
    %v8555 = vpack.c.b16 %v8323, %v8315
    %v8556 = vpack.c.b16 %v8324, %v8316
    %v8557 = vpack.c.b16 %v8325, %v8317
    %v8558 = vpack.c.b16 %v8334, %v8326
    %v8559 = vpack.c.b16 %v8335, %v8327
    %v8560 = vpack.c.b16 %v8336, %v8328
    %v8561 = vpack.c.b16 %v8337, %v8329
    %v8562 = vpack.c.b16 %v8338, %v8330
    %v8563 = vpack.c.b16 %v8339, %v8331
    %v8564 = vpack.c.b16 %v8340, %v8332
    %v8565 = vpack.c.b16 %v8341, %v8333
    %v8566 = vpack.c.b16 %v8350, %v8342
    %v8567 = vpack.c.b16 %v8351, %v8343
    %v8568 = vpack.c.b16 %v8352, %v8344
    %v8569 = vpack.c.b16 %v8353, %v8345
    %v8570 = vpack.c.b16 %v8354, %v8346
    %v8571 = vpack.c.b16 %v8355, %v8347
    %v8572 = vpack.c.b16 %v8356, %v8348
    %v8573 = vpack.c.b16 %v8357, %v8349
    %v8574 = vpack.c.b16 %v8366, %v8358
    %v8575 = vpack.c.b16 %v8367, %v8359
    %v8576 = vpack.c.b16 %v8368, %v8360
    %v8577 = vpack.c.b16 %v8369, %v8361
    %v8578 = vpack.c.b16 %v8370, %v8362
    %v8579 = vpack.c.b16 %v8371, %v8363
    %v8580 = vpack.c.b16 %v8372, %v8364
    %v8581 = vpack.c.b16 %v8373, %v8365
    %v8582 = vpack.c.b16 %v8382, %v8374
    %v8583 = vpack.c.b16 %v8383, %v8375
    %v8584 = vpack.c.b16 %v8384, %v8376
    %v8585 = vpack.c.b16 %v8385, %v8377
    %v8586 = vpack.c.b16 %v8386, %v8378
    %v8587 = vpack.c.b16 %v8387, %v8379
    %v8588 = vpack.c.b16 %v8388, %v8380
    %v8589 = vpack.c.b16 %v8389, %v8381
    %v8590 = vpack.c.b16 %v8398, %v8390
    %v8591 = vpack.c.b16 %v8399, %v8391
    %v8592 = vpack.c.b16 %v8400, %v8392
    %v8593 = vpack.c.b16 %v8401, %v8393
    %v8594 = vpack.c.b16 %v8402, %v8394
    %v8595 = vpack.c.b16 %v8403, %v8395
    %v8596 = vpack.c.b16 %v8404, %v8396
    %v8597 = vpack.c.b16 %v8405, %v8397
    %v8598 = vpack.c.b16 %v8414, %v8406
    %v8599 = vpack.c.b16 %v8415, %v8407
    %v8600 = vpack.c.b16 %v8416, %v8408
    %v8601 = vpack.c.b16 %v8417, %v8409
    %v8602 = vpack.c.b16 %v8418, %v8410
    %v8603 = vpack.c.b16 %v8419, %v8411
    %v8604 = vpack.c.b16 %v8420, %v8412
    %v8605 = vpack.c.b16 %v8421, %v8413
    %v8606 = vpack.c.b16 %v8430, %v8422
    %v8607 = vpack.c.b16 %v8431, %v8423
    %v8608 = vpack.c.b16 %v8432, %v8424
    %v8609 = vpack.c.b16 %v8433, %v8425
    %v8610 = vpack.c.b16 %v8434, %v8426
    %v8611 = vpack.c.b16 %v8435, %v8427
    %v8612 = vpack.c.b16 %v8436, %v8428
    %v8613 = vpack.c.b16 %v8437, %v8429
    %v8614 = vpack.c.b16 %v8446, %v8438
    %v8615 = vpack.c.b16 %v8447, %v8439
    %v8616 = vpack.c.b16 %v8448, %v8440
    %v8617 = vpack.c.b16 %v8449, %v8441
    %v8618 = vpack.c.b16 %v8450, %v8442
    %v8619 = vpack.c.b16 %v8451, %v8443
    %v8620 = vpack.c.b16 %v8452, %v8444
    %v8621 = vpack.c.b16 %v8453, %v8445
    %v8622 = vpack.c.b16 %v8462, %v8454
    %v8623 = vpack.c.b16 %v8463, %v8455
    %v8624 = vpack.c.b16 %v8464, %v8456
    %v8625 = vpack.c.b16 %v8465, %v8457
    %v8626 = vpack.c.b16 %v8466, %v8458
    %v8627 = vpack.c.b16 %v8467, %v8459
    %v8628 = vpack.c.b16 %v8468, %v8460
    %v8629 = vpack.c.b16 %v8469, %v8461
    %v8630 = vpack.c.b16 %v8478, %v8470
    %v8631 = vpack.c.b16 %v8479, %v8471
    %v8632 = vpack.c.b16 %v8480, %v8472
    %v8633 = vpack.c.b16 %v8481, %v8473
    %v8634 = vpack.c.b16 %v8482, %v8474
    %v8635 = vpack.c.b16 %v8483, %v8475
    %v8636 = vpack.c.b16 %v8484, %v8476
    %v8637 = vpack.c.b16 %v8485, %v8477
    %v8638 = vpack.c.b16 %v8494, %v8486
    %v8639 = vpack.c.b16 %v8495, %v8487
    %v8640 = vpack.c.b16 %v8496, %v8488
    %v8641 = vpack.c.b16 %v8497, %v8489
    %v8642 = vpack.c.b16 %v8498, %v8490
    %v8643 = vpack.c.b16 %v8499, %v8491
    %v8644 = vpack.c.b16 %v8500, %v8492
    %v8645 = vpack.c.b16 %v8501, %v8493
    %v8646 = vpack.c.b16 %v8510, %v8502
    %v8647 = vpack.c.b16 %v8511, %v8503
    %v8648 = vpack.c.b16 %v8512, %v8504
    %v8649 = vpack.c.b16 %v8513, %v8505
    %v8650 = vpack.c.b16 %v8514, %v8506
    %v8651 = vpack.c.b16 %v8515, %v8507
    %v8652 = vpack.c.b16 %v8516, %v8508
    %v8653 = vpack.c.b16 %v8517, %v8509
    %v8654 = vpack.c.b16 %v8526, %v8518
    %v8655 = vpack.c.b16 %v8527, %v8519
    %v8656 = vpack.c.b16 %v8528, %v8520
    %v8657 = vpack.c.b16 %v8529, %v8521
    %v8658 = vpack.c.b16 %v8530, %v8522
    %v8659 = vpack.c.b16 %v8531, %v8523
    %v8660 = vpack.c.b16 %v8532, %v8524
    %v8661 = vpack.c.b16 %v8533, %v8525
    %8790 = vmatprep.subr.bf16.mxu0 %v8535
    %8791 = vmatpush1.bf16.msra.mxu0 %v8534
    %8792 = vmatprep.subr.bf16.mxu0 %v8543
    %8793 = vmatpush1.bf16.msra.mxu0 %v8542
    %8794 = vmatprep.subr.bf16.mxu0 %v8551
    %8795 = vmatpush1.bf16.msra.mxu0 %v8550
    %8796 = vmatprep.subr.bf16.mxu0 %v8559
    %8797 = vmatpush1.bf16.msra.mxu0 %v8558
    %8798 = vmatprep.subr.bf16.mxu0 %v8567
    %8799 = vmatpush1.bf16.msra.mxu0 %v8566
    %8800 = vmatprep.subr.bf16.mxu0 %v8575
    %8801 = vmatpush1.bf16.msra.mxu0 %v8574
    %8802 = vmatprep.subr.bf16.mxu0 %v8583
    %8803 = vmatpush1.bf16.msra.mxu0 %v8582
    %8804 = vmatprep.subr.bf16.mxu0 %v8591
    %8805 = vmatpush1.bf16.msra.mxu0 %v8590
    %8806 = vmatprep.subr.bf16.mxu0 %v8599
    %8807 = vmatpush1.bf16.msra.mxu0 %v8598
    %8808 = vmatprep.subr.bf16.mxu0 %v8607
    %8809 = vmatpush1.bf16.msra.mxu0 %v8606
    %8810 = vmatprep.subr.bf16.mxu0 %v8615
    %8811 = vmatpush1.bf16.msra.mxu0 %v8614
    %8812 = vmatprep.subr.bf16.mxu0 %v8623
    %8813 = vmatpush1.bf16.msra.mxu0 %v8622
    %8814 = vmatprep.subr.bf16.mxu0 %v8631
    %8815 = vmatpush1.bf16.msra.mxu0 %v8630
    %8816 = vmatprep.subr.bf16.mxu0 %v8639
    %8817 = vmatpush1.bf16.msra.mxu0 %v8638
    %8818 = vmatprep.subr.bf16.mxu0 %v8647
    %8819 = vmatpush1.bf16.msra.mxu0 %v8646
    %8820 = vmatprep.subr.bf16.mxu0 %v8655
    %8821 = vmatpush1.bf16.msra.mxu0 %v8654
    %8822 = vmatprep.mubr.bf16.mxu0 %v8021
    %8823 = vmatmul.mubr.bf16.gmra.mrb[0].mxu0 %v8020
    %v8824 = vpop.f32.mrb[0].mxu0
    %v8825 = vadd.f32 0.0, %v8824
    %v8826 = vpop.f32.mrb[0].mxu0
    %v8827 = vadd.f32 0.0, %v8826
    %v8828 = vpop.f32.mrb[0].mxu0
    %v8829 = vpop.f32.mrb[0].mxu0
    %8830 = vdwg.mxu0
    %8831 = vmatprep.subr.bf16.mxu0 %v8537
    %8832 = vmatpush1.bf16.msra.mxu0 %v8536
    %8833 = vmatprep.subr.bf16.mxu0 %v8545
    %8834 = vmatpush1.bf16.msra.mxu0 %v8544
    %8835 = vmatprep.subr.bf16.mxu0 %v8553
    %8836 = vmatpush1.bf16.msra.mxu0 %v8552
    %8837 = vmatprep.subr.bf16.mxu0 %v8561
    %8838 = vmatpush1.bf16.msra.mxu0 %v8560
    %8839 = vmatprep.subr.bf16.mxu0 %v8569
    %8840 = vmatpush1.bf16.msra.mxu0 %v8568
    %8841 = vmatprep.subr.bf16.mxu0 %v8577
    %8842 = vmatpush1.bf16.msra.mxu0 %v8576
    %8843 = vmatprep.subr.bf16.mxu0 %v8585
    %8844 = vmatpush1.bf16.msra.mxu0 %v8584
    %8845 = vmatprep.subr.bf16.mxu0 %v8593
    %8846 = vmatpush1.bf16.msra.mxu0 %v8592
    %8847 = vmatprep.subr.bf16.mxu0 %v8601
    %8848 = vmatpush1.bf16.msra.mxu0 %v8600
    %8849 = vmatprep.subr.bf16.mxu0 %v8609
    %8850 = vmatpush1.bf16.msra.mxu0 %v8608
    %8851 = vmatprep.subr.bf16.mxu0 %v8617
    %8852 = vmatpush1.bf16.msra.mxu0 %v8616
    %8853 = vmatprep.subr.bf16.mxu0 %v8625
    %8854 = vmatpush1.bf16.msra.mxu0 %v8624
    %8855 = vmatprep.subr.bf16.mxu0 %v8633
    %8856 = vmatpush1.bf16.msra.mxu0 %v8632
    %8857 = vmatprep.subr.bf16.mxu0 %v8641
    %8858 = vmatpush1.bf16.msra.mxu0 %v8640
    %8859 = vmatprep.subr.bf16.mxu0 %v8649
    %8860 = vmatpush1.bf16.msra.mxu0 %v8648
    %8861 = vmatprep.subr.bf16.mxu0 %v8657
    %8862 = vmatpush1.bf16.msra.mxu0 %v8656
    %8863 = vmatprep.mubr.bf16.mxu0 %v8021
    %8864 = vmatmul.mubr.bf16.gmra.mrb[0].mxu0 %v8020
    %v8865 = vpop.f32.mrb[0].mxu0
    %v8866 = vadd.f32 0.0, %v8865
    %v8867 = vpop.f32.mrb[0].mxu0
    %v8868 = vadd.f32 0.0, %v8867
    %v8869 = vpop.f32.mrb[0].mxu0
    %v8870 = vpop.f32.mrb[0].mxu0
    %8871 = vdwg.mxu0
    %8872 = vmatprep.subr.bf16.mxu0 %v8539
    %8873 = vmatpush1.bf16.msra.mxu0 %v8538
    %8874 = vmatprep.subr.bf16.mxu0 %v8547
    %8875 = vmatpush1.bf16.msra.mxu0 %v8546
    %8876 = vmatprep.subr.bf16.mxu0 %v8555
    %8877 = vmatpush1.bf16.msra.mxu0 %v8554
    %8878 = vmatprep.subr.bf16.mxu0 %v8563
    %8879 = vmatpush1.bf16.msra.mxu0 %v8562
    %8880 = vmatprep.subr.bf16.mxu0 %v8571
    %8881 = vmatpush1.bf16.msra.mxu0 %v8570
    %8882 = vmatprep.subr.bf16.mxu0 %v8579
    %8883 = vmatpush1.bf16.msra.mxu0 %v8578
    %8884 = vmatprep.subr.bf16.mxu0 %v8587
    %8885 = vmatpush1.bf16.msra.mxu0 %v8586
    %8886 = vmatprep.subr.bf16.mxu0 %v8595
    %8887 = vmatpush1.bf16.msra.mxu0 %v8594
    %8888 = vmatprep.subr.bf16.mxu0 %v8603
    %8889 = vmatpush1.bf16.msra.mxu0 %v8602
    %8890 = vmatprep.subr.bf16.mxu0 %v8611
    %8891 = vmatpush1.bf16.msra.mxu0 %v8610
    %8892 = vmatprep.subr.bf16.mxu0 %v8619
    %8893 = vmatpush1.bf16.msra.mxu0 %v8618
    %8894 = vmatprep.subr.bf16.mxu0 %v8627
    %8895 = vmatpush1.bf16.msra.mxu0 %v8626
    %8896 = vmatprep.subr.bf16.mxu0 %v8635
    %8897 = vmatpush1.bf16.msra.mxu0 %v8634
    %8898 = vmatprep.subr.bf16.mxu0 %v8643
    %8899 = vmatpush1.bf16.msra.mxu0 %v8642
    %8900 = vmatprep.subr.bf16.mxu0 %v8651
    %8901 = vmatpush1.bf16.msra.mxu0 %v8650
    %8902 = vmatprep.subr.bf16.mxu0 %v8659
    %8903 = vmatpush1.bf16.msra.mxu0 %v8658
    %8904 = vmatprep.mubr.bf16.mxu0 %v8021
    %8905 = vmatmul.mubr.bf16.gmra.mrb[0].mxu0 %v8020
    %v8906 = vpop.f32.mrb[0].mxu0
    %v8907 = vadd.f32 0.0, %v8906
    %v8908 = vpop.f32.mrb[0].mxu0
    %v8909 = vadd.f32 0.0, %v8908
    %v8910 = vpop.f32.mrb[0].mxu0
    %v8911 = vpop.f32.mrb[0].mxu0
    %8912 = vdwg.mxu0
    %8913 = vmatprep.subr.bf16.mxu0 %v8541
    %8914 = vmatpush1.bf16.msra.mxu0 %v8540
    %8915 = vmatprep.subr.bf16.mxu0 %v8549
    %8916 = vmatpush1.bf16.msra.mxu0 %v8548
    %8917 = vmatprep.subr.bf16.mxu0 %v8557
    %8918 = vmatpush1.bf16.msra.mxu0 %v8556
    %8919 = vmatprep.subr.bf16.mxu0 %v8565
    %8920 = vmatpush1.bf16.msra.mxu0 %v8564
    %8921 = vmatprep.subr.bf16.mxu0 %v8573
    %8922 = vmatpush1.bf16.msra.mxu0 %v8572
    %8923 = vmatprep.subr.bf16.mxu0 %v8581
    %8924 = vmatpush1.bf16.msra.mxu0 %v8580
    %8925 = vmatprep.subr.bf16.mxu0 %v8589
    %8926 = vmatpush1.bf16.msra.mxu0 %v8588
    %8927 = vmatprep.subr.bf16.mxu0 %v8597
    %8928 = vmatpush1.bf16.msra.mxu0 %v8596
    %8929 = vmatprep.subr.bf16.mxu0 %v8605
    %8930 = vmatpush1.bf16.msra.mxu0 %v8604
    %8931 = vmatprep.subr.bf16.mxu0 %v8613
    %8932 = vmatpush1.bf16.msra.mxu0 %v8612
    %8933 = vmatprep.subr.bf16.mxu0 %v8621
    %8934 = vmatpush1.bf16.msra.mxu0 %v8620
    %8935 = vmatprep.subr.bf16.mxu0 %v8629
    %8936 = vmatpush1.bf16.msra.mxu0 %v8628
    %8937 = vmatprep.subr.bf16.mxu0 %v8637
    %8938 = vmatpush1.bf16.msra.mxu0 %v8636
    %8939 = vmatprep.subr.bf16.mxu0 %v8645
    %8940 = vmatpush1.bf16.msra.mxu0 %v8644
    %8941 = vmatprep.subr.bf16.mxu0 %v8653
    %8942 = vmatpush1.bf16.msra.mxu0 %v8652
    %8943 = vmatprep.subr.bf16.mxu0 %v8661
    %8944 = vmatpush1.bf16.msra.mxu0 %v8660
    %8945 = vmatprep.mubr.bf16.mxu0 %v8021
    %8946 = vmatmul.mubr.bf16.gmra.mrb[0].mxu0 %v8020
    %v8947 = vpop.f32.mrb[0].mxu0
    %v8948 = vadd.f32 0.0, %v8947
    %v8949 = vpop.f32.mrb[0].mxu0
    %v8950 = vadd.f32 0.0, %v8949
    %v8951 = vpop.f32.mrb[0].mxu0
    %v8952 = vpop.f32.mrb[0].mxu0
    %8953 = vdwg.mxu0
    %v8954 = vadd.f32 %v3589, %v8825
    %v8955 = vadd.f32 %v3591, %v8827
    %v8956 = vadd.f32 %v3735, %v8866
    %v8957 = vadd.f32 %v3737, %v8868
    %v8958 = vadd.f32 %v3881, %v8907
    %v8959 = vadd.f32 %v3883, %v8909
    %v8960 = vadd.f32 %v4027, %v8948
    %v8961 = vadd.f32 %v4029, %v8950
    %v8962 = vxor.u32 %v8954, 2147483648
    %v8963 = vxor.u32 %v8955, 2147483648
    %v8964 = vmul.f32 %v8962, 1.442695
    %v8965 = vpow.pop %v8964
    %v8966 = vmul.f32 %v8963, 1.442695
    %v8967 = vpow.pop %v8966
    %v8968 = vadd.f32 %v8965, 1.0
    %v8969 = vadd.f32 %v8967, 1.0
    %v8970 = vrcp.pop %v8968
    %v8971 = vmul.f32 1.0, %v8970
    %v8972 = vrcp.pop %v8969
    %v8973 = vmul.f32 1.0, %v8972
    %v8974 = vxor.u32 %v8956, 2147483648
    %v8975 = vxor.u32 %v8957, 2147483648
    %v8976 = vmul.f32 %v8974, 1.442695
    %v8977 = vpow.pop %v8976
    %v8978 = vmul.f32 %v8975, 1.442695
    %v8979 = vpow.pop %v8978
    %v8980 = vadd.f32 %v8977, 1.0
    %v8981 = vadd.f32 %v8979, 1.0
    %v8982 = vrcp.pop %v8980
    %v8983 = vmul.f32 1.0, %v8982
    %v8984 = vrcp.pop %v8981
    %v8985 = vmul.f32 1.0, %v8984
    %v8986 = vtanh.pop %v8958
    %v8987 = vtanh.pop %v8959
    %v8988 = vxor.u32 %v8960, 2147483648
    %v8989 = vxor.u32 %v8961, 2147483648
    %v8990 = vmul.f32 %v8988, 1.442695
    %v8991 = vpow.pop %v8990
    %v8992 = vmul.f32 %v8989, 1.442695
    %v8993 = vpow.pop %v8992
    %v8994 = vadd.f32 %v8991, 1.0
    %v8995 = vadd.f32 %v8993, 1.0
    %v8996 = vrcp.pop %v8994
    %v8997 = vmul.f32 1.0, %v8996
    %v8998 = vrcp.pop %v8995
    %v8999 = vmul.f32 1.0, %v8998
    %v9000 = vmul.f32 %v8983, %v8011
    %v9001 = vmul.f32 %v8985, %v8012
    %v9002 = vmul.f32 %v8971, %v8986
    %v9003 = vmul.f32 %v8973, %v8987
    %v9004 = vadd.f32 %v9000, %v9002
    %v9005 = vadd.f32 %v9001, %v9003
    %v9006 = vtanh.pop %v9004
    %v9007 = vtanh.pop %v9005
    %v9008 = vmul.f32 %v8997, %v9006
    %v9009 = vmul.f32 %v8999, %v9007
    %s9010 = scalar_lea.vmem [#allocation4], 64
    %9011 = vst [vmem:[%s9010] sm:$0xff] %v9008
    %9012 = vst [vmem:[%s9010 + $0x8] sm:$0xff] %v9009
    %v9013 = vpack.c.bf16 %v9008, %v9008
    %v9014 = vpack.c.bf16 %v9009, %v9009
    %v9015 = vld [vmem:[#allocation7] sm:$0xff]
    %v9016 = vld [vmem:[#allocation7 + $0x8] sm:$0xff]
    %v9017 = vld [vmem:[#allocation7 + $0x10] sm:$0xff]
    %v9018 = vld [vmem:[#allocation7 + $0x18] sm:$0xff]
    %v9019 = vld [vmem:[#allocation7 + $0x20] sm:$0xff]
    %v9020 = vld [vmem:[#allocation7 + $0x28] sm:$0xff]
    %v9021 = vld [vmem:[#allocation7 + $0x30] sm:$0xff]
    %v9022 = vld [vmem:[#allocation7 + $0x38] sm:$0xff]
    %v9023 = vld [vmem:[#allocation7 + $0x40] sm:$0xff]
    %v9024 = vld [vmem:[#allocation7 + $0x48] sm:$0xff]
    %v9025 = vld [vmem:[#allocation7 + $0x50] sm:$0xff]
    %v9026 = vld [vmem:[#allocation7 + $0x58] sm:$0xff]
    %v9027 = vld [vmem:[#allocation7 + $0x60] sm:$0xff]
    %v9028 = vld [vmem:[#allocation7 + $0x68] sm:$0xff]
    %v9029 = vld [vmem:[#allocation7 + $0x70] sm:$0xff]
    %v9030 = vld [vmem:[#allocation7 + $0x78] sm:$0xff]
    %v9031 = vld [vmem:[#allocation7 + $0x80] sm:$0xff]
    %v9032 = vld [vmem:[#allocation7 + $0x88] sm:$0xff]
    %v9033 = vld [vmem:[#allocation7 + $0x90] sm:$0xff]
    %v9034 = vld [vmem:[#allocation7 + $0x98] sm:$0xff]
    %v9035 = vld [vmem:[#allocation7 + $0xa0] sm:$0xff]
    %v9036 = vld [vmem:[#allocation7 + $0xa8] sm:$0xff]
    %v9037 = vld [vmem:[#allocation7 + $0xb0] sm:$0xff]
    %v9038 = vld [vmem:[#allocation7 + $0xb8] sm:$0xff]
    %v9039 = vld [vmem:[#allocation7 + $0xc0] sm:$0xff]
    %v9040 = vld [vmem:[#allocation7 + $0xc8] sm:$0xff]
    %v9041 = vld [vmem:[#allocation7 + $0xd0] sm:$0xff]
    %v9042 = vld [vmem:[#allocation7 + $0xd8] sm:$0xff]
    %v9043 = vld [vmem:[#allocation7 + $0xe0] sm:$0xff]
    %v9044 = vld [vmem:[#allocation7 + $0xe8] sm:$0xff]
    %v9045 = vld [vmem:[#allocation7 + $0xf0] sm:$0xff]
    %v9046 = vld [vmem:[#allocation7 + $0xf8] sm:$0xff]
    %v9047 = vld [vmem:[#allocation7 + $0x100] sm:$0xff]
    %v9048 = vld [vmem:[#allocation7 + $0x108] sm:$0xff]
    %v9049 = vld [vmem:[#allocation7 + $0x110] sm:$0xff]
    %v9050 = vld [vmem:[#allocation7 + $0x118] sm:$0xff]
    %v9051 = vld [vmem:[#allocation7 + $0x120] sm:$0xff]
    %v9052 = vld [vmem:[#allocation7 + $0x128] sm:$0xff]
    %v9053 = vld [vmem:[#allocation7 + $0x130] sm:$0xff]
    %v9054 = vld [vmem:[#allocation7 + $0x138] sm:$0xff]
    %v9055 = vld [vmem:[#allocation7 + $0x140] sm:$0xff]
    %v9056 = vld [vmem:[#allocation7 + $0x148] sm:$0xff]
    %v9057 = vld [vmem:[#allocation7 + $0x150] sm:$0xff]
    %v9058 = vld [vmem:[#allocation7 + $0x158] sm:$0xff]
    %v9059 = vld [vmem:[#allocation7 + $0x160] sm:$0xff]
    %v9060 = vld [vmem:[#allocation7 + $0x168] sm:$0xff]
    %v9061 = vld [vmem:[#allocation7 + $0x170] sm:$0xff]
    %v9062 = vld [vmem:[#allocation7 + $0x178] sm:$0xff]
    %v9063 = vld [vmem:[#allocation7 + $0x180] sm:$0xff]
    %v9064 = vld [vmem:[#allocation7 + $0x188] sm:$0xff]
    %v9065 = vld [vmem:[#allocation7 + $0x190] sm:$0xff]
    %v9066 = vld [vmem:[#allocation7 + $0x198] sm:$0xff]
    %v9067 = vld [vmem:[#allocation7 + $0x1a0] sm:$0xff]
    %v9068 = vld [vmem:[#allocation7 + $0x1a8] sm:$0xff]
    %v9069 = vld [vmem:[#allocation7 + $0x1b0] sm:$0xff]
    %v9070 = vld [vmem:[#allocation7 + $0x1b8] sm:$0xff]
    %v9071 = vld [vmem:[#allocation7 + $0x1c0] sm:$0xff]
    %v9072 = vld [vmem:[#allocation7 + $0x1c8] sm:$0xff]
    %v9073 = vld [vmem:[#allocation7 + $0x1d0] sm:$0xff]
    %v9074 = vld [vmem:[#allocation7 + $0x1d8] sm:$0xff]
    %v9075 = vld [vmem:[#allocation7 + $0x1e0] sm:$0xff]
    %v9076 = vld [vmem:[#allocation7 + $0x1e8] sm:$0xff]
    %v9077 = vld [vmem:[#allocation7 + $0x1f0] sm:$0xff]
    %v9078 = vld [vmem:[#allocation7 + $0x1f8] sm:$0xff]
    %v9079 = vld [vmem:[#allocation7 + $0x200] sm:$0xff]
    %v9080 = vld [vmem:[#allocation7 + $0x208] sm:$0xff]
    %v9081 = vld [vmem:[#allocation7 + $0x210] sm:$0xff]
    %v9082 = vld [vmem:[#allocation7 + $0x218] sm:$0xff]
    %v9083 = vld [vmem:[#allocation7 + $0x220] sm:$0xff]
    %v9084 = vld [vmem:[#allocation7 + $0x228] sm:$0xff]
    %v9085 = vld [vmem:[#allocation7 + $0x230] sm:$0xff]
    %v9086 = vld [vmem:[#allocation7 + $0x238] sm:$0xff]
    %v9087 = vld [vmem:[#allocation7 + $0x240] sm:$0xff]
    %v9088 = vld [vmem:[#allocation7 + $0x248] sm:$0xff]
    %v9089 = vld [vmem:[#allocation7 + $0x250] sm:$0xff]
    %v9090 = vld [vmem:[#allocation7 + $0x258] sm:$0xff]
    %v9091 = vld [vmem:[#allocation7 + $0x260] sm:$0xff]
    %v9092 = vld [vmem:[#allocation7 + $0x268] sm:$0xff]
    %v9093 = vld [vmem:[#allocation7 + $0x270] sm:$0xff]
    %v9094 = vld [vmem:[#allocation7 + $0x278] sm:$0xff]
    %v9095 = vld [vmem:[#allocation7 + $0x280] sm:$0xff]
    %v9096 = vld [vmem:[#allocation7 + $0x288] sm:$0xff]
    %v9097 = vld [vmem:[#allocation7 + $0x290] sm:$0xff]
    %v9098 = vld [vmem:[#allocation7 + $0x298] sm:$0xff]
    %v9099 = vld [vmem:[#allocation7 + $0x2a0] sm:$0xff]
    %v9100 = vld [vmem:[#allocation7 + $0x2a8] sm:$0xff]
    %v9101 = vld [vmem:[#allocation7 + $0x2b0] sm:$0xff]
    %v9102 = vld [vmem:[#allocation7 + $0x2b8] sm:$0xff]
    %v9103 = vld [vmem:[#allocation7 + $0x2c0] sm:$0xff]
    %v9104 = vld [vmem:[#allocation7 + $0x2c8] sm:$0xff]
    %v9105 = vld [vmem:[#allocation7 + $0x2d0] sm:$0xff]
    %v9106 = vld [vmem:[#allocation7 + $0x2d8] sm:$0xff]
    %v9107 = vld [vmem:[#allocation7 + $0x2e0] sm:$0xff]
    %v9108 = vld [vmem:[#allocation7 + $0x2e8] sm:$0xff]
    %v9109 = vld [vmem:[#allocation7 + $0x2f0] sm:$0xff]
    %v9110 = vld [vmem:[#allocation7 + $0x2f8] sm:$0xff]
    %v9111 = vld [vmem:[#allocation7 + $0x300] sm:$0xff]
    %v9112 = vld [vmem:[#allocation7 + $0x308] sm:$0xff]
    %v9113 = vld [vmem:[#allocation7 + $0x310] sm:$0xff]
    %v9114 = vld [vmem:[#allocation7 + $0x318] sm:$0xff]
    %v9115 = vld [vmem:[#allocation7 + $0x320] sm:$0xff]
    %v9116 = vld [vmem:[#allocation7 + $0x328] sm:$0xff]
    %v9117 = vld [vmem:[#allocation7 + $0x330] sm:$0xff]
    %v9118 = vld [vmem:[#allocation7 + $0x338] sm:$0xff]
    %v9119 = vld [vmem:[#allocation7 + $0x340] sm:$0xff]
    %v9120 = vld [vmem:[#allocation7 + $0x348] sm:$0xff]
    %v9121 = vld [vmem:[#allocation7 + $0x350] sm:$0xff]
    %v9122 = vld [vmem:[#allocation7 + $0x358] sm:$0xff]
    %v9123 = vld [vmem:[#allocation7 + $0x360] sm:$0xff]
    %v9124 = vld [vmem:[#allocation7 + $0x368] sm:$0xff]
    %v9125 = vld [vmem:[#allocation7 + $0x370] sm:$0xff]
    %v9126 = vld [vmem:[#allocation7 + $0x378] sm:$0xff]
    %v9127 = vld [vmem:[#allocation7 + $0x380] sm:$0xff]
    %v9128 = vld [vmem:[#allocation7 + $0x388] sm:$0xff]
    %v9129 = vld [vmem:[#allocation7 + $0x390] sm:$0xff]
    %v9130 = vld [vmem:[#allocation7 + $0x398] sm:$0xff]
    %v9131 = vld [vmem:[#allocation7 + $0x3a0] sm:$0xff]
    %v9132 = vld [vmem:[#allocation7 + $0x3a8] sm:$0xff]
    %v9133 = vld [vmem:[#allocation7 + $0x3b0] sm:$0xff]
    %v9134 = vld [vmem:[#allocation7 + $0x3b8] sm:$0xff]
    %v9135 = vld [vmem:[#allocation7 + $0x3c0] sm:$0xff]
    %v9136 = vld [vmem:[#allocation7 + $0x3c8] sm:$0xff]
    %v9137 = vld [vmem:[#allocation7 + $0x3d0] sm:$0xff]
    %v9138 = vld [vmem:[#allocation7 + $0x3d8] sm:$0xff]
    %v9139 = vld [vmem:[#allocation7 + $0x3e0] sm:$0xff]
    %v9140 = vld [vmem:[#allocation7 + $0x3e8] sm:$0xff]
    %v9141 = vld [vmem:[#allocation7 + $0x3f0] sm:$0xff]
    %v9142 = vld [vmem:[#allocation7 + $0x3f8] sm:$0xff]
    %v9271 = vunpack.c.l.b16 %v9015
    %v9272 = vunpack.c.h.b16 %v9015
    %v9273 = vunpack.c.l.b16 %v9016
    %v9274 = vunpack.c.h.b16 %v9016
    %v9275 = vunpack.c.l.b16 %v9017
    %v9276 = vunpack.c.h.b16 %v9017
    %v9277 = vunpack.c.l.b16 %v9018
    %v9278 = vunpack.c.h.b16 %v9018
    %v9279 = vunpack.c.l.b16 %v9019
    %v9280 = vunpack.c.h.b16 %v9019
    %v9281 = vunpack.c.l.b16 %v9020
    %v9282 = vunpack.c.h.b16 %v9020
    %v9283 = vunpack.c.l.b16 %v9021
    %v9284 = vunpack.c.h.b16 %v9021
    %v9285 = vunpack.c.l.b16 %v9022
    %v9286 = vunpack.c.h.b16 %v9022
    %v9287 = vunpack.c.l.b16 %v9023
    %v9288 = vunpack.c.h.b16 %v9023
    %v9289 = vunpack.c.l.b16 %v9024
    %v9290 = vunpack.c.h.b16 %v9024
    %v9291 = vunpack.c.l.b16 %v9025
    %v9292 = vunpack.c.h.b16 %v9025
    %v9293 = vunpack.c.l.b16 %v9026
    %v9294 = vunpack.c.h.b16 %v9026
    %v9295 = vunpack.c.l.b16 %v9027
    %v9296 = vunpack.c.h.b16 %v9027
    %v9297 = vunpack.c.l.b16 %v9028
    %v9298 = vunpack.c.h.b16 %v9028
    %v9299 = vunpack.c.l.b16 %v9029
    %v9300 = vunpack.c.h.b16 %v9029
    %v9301 = vunpack.c.l.b16 %v9030
    %v9302 = vunpack.c.h.b16 %v9030
    %v9303 = vunpack.c.l.b16 %v9031
    %v9304 = vunpack.c.h.b16 %v9031
    %v9305 = vunpack.c.l.b16 %v9032
    %v9306 = vunpack.c.h.b16 %v9032
    %v9307 = vunpack.c.l.b16 %v9033
    %v9308 = vunpack.c.h.b16 %v9033
    %v9309 = vunpack.c.l.b16 %v9034
    %v9310 = vunpack.c.h.b16 %v9034
    %v9311 = vunpack.c.l.b16 %v9035
    %v9312 = vunpack.c.h.b16 %v9035
    %v9313 = vunpack.c.l.b16 %v9036
    %v9314 = vunpack.c.h.b16 %v9036
    %v9315 = vunpack.c.l.b16 %v9037
    %v9316 = vunpack.c.h.b16 %v9037
    %v9317 = vunpack.c.l.b16 %v9038
    %v9318 = vunpack.c.h.b16 %v9038
    %v9319 = vunpack.c.l.b16 %v9039
    %v9320 = vunpack.c.h.b16 %v9039
    %v9321 = vunpack.c.l.b16 %v9040
    %v9322 = vunpack.c.h.b16 %v9040
    %v9323 = vunpack.c.l.b16 %v9041
    %v9324 = vunpack.c.h.b16 %v9041
    %v9325 = vunpack.c.l.b16 %v9042
    %v9326 = vunpack.c.h.b16 %v9042
    %v9327 = vunpack.c.l.b16 %v9043
    %v9328 = vunpack.c.h.b16 %v9043
    %v9329 = vunpack.c.l.b16 %v9044
    %v9330 = vunpack.c.h.b16 %v9044
    %v9331 = vunpack.c.l.b16 %v9045
    %v9332 = vunpack.c.h.b16 %v9045
    %v9333 = vunpack.c.l.b16 %v9046
    %v9334 = vunpack.c.h.b16 %v9046
    %v9335 = vunpack.c.l.b16 %v9047
    %v9336 = vunpack.c.h.b16 %v9047
    %v9337 = vunpack.c.l.b16 %v9048
    %v9338 = vunpack.c.h.b16 %v9048
    %v9339 = vunpack.c.l.b16 %v9049
    %v9340 = vunpack.c.h.b16 %v9049
    %v9341 = vunpack.c.l.b16 %v9050
    %v9342 = vunpack.c.h.b16 %v9050
    %v9343 = vunpack.c.l.b16 %v9051
    %v9344 = vunpack.c.h.b16 %v9051
    %v9345 = vunpack.c.l.b16 %v9052
    %v9346 = vunpack.c.h.b16 %v9052
    %v9347 = vunpack.c.l.b16 %v9053
    %v9348 = vunpack.c.h.b16 %v9053
    %v9349 = vunpack.c.l.b16 %v9054
    %v9350 = vunpack.c.h.b16 %v9054
    %v9351 = vunpack.c.l.b16 %v9055
    %v9352 = vunpack.c.h.b16 %v9055
    %v9353 = vunpack.c.l.b16 %v9056
    %v9354 = vunpack.c.h.b16 %v9056
    %v9355 = vunpack.c.l.b16 %v9057
    %v9356 = vunpack.c.h.b16 %v9057
    %v9357 = vunpack.c.l.b16 %v9058
    %v9358 = vunpack.c.h.b16 %v9058
    %v9359 = vunpack.c.l.b16 %v9059
    %v9360 = vunpack.c.h.b16 %v9059
    %v9361 = vunpack.c.l.b16 %v9060
    %v9362 = vunpack.c.h.b16 %v9060
    %v9363 = vunpack.c.l.b16 %v9061
    %v9364 = vunpack.c.h.b16 %v9061
    %v9365 = vunpack.c.l.b16 %v9062
    %v9366 = vunpack.c.h.b16 %v9062
    %v9367 = vunpack.c.l.b16 %v9063
    %v9368 = vunpack.c.h.b16 %v9063
    %v9369 = vunpack.c.l.b16 %v9064
    %v9370 = vunpack.c.h.b16 %v9064
    %v9371 = vunpack.c.l.b16 %v9065
    %v9372 = vunpack.c.h.b16 %v9065
    %v9373 = vunpack.c.l.b16 %v9066
    %v9374 = vunpack.c.h.b16 %v9066
    %v9375 = vunpack.c.l.b16 %v9067
    %v9376 = vunpack.c.h.b16 %v9067
    %v9377 = vunpack.c.l.b16 %v9068
    %v9378 = vunpack.c.h.b16 %v9068
    %v9379 = vunpack.c.l.b16 %v9069
    %v9380 = vunpack.c.h.b16 %v9069
    %v9381 = vunpack.c.l.b16 %v9070
    %v9382 = vunpack.c.h.b16 %v9070
    %v9383 = vunpack.c.l.b16 %v9071
    %v9384 = vunpack.c.h.b16 %v9071
    %v9385 = vunpack.c.l.b16 %v9072
    %v9386 = vunpack.c.h.b16 %v9072
    %v9387 = vunpack.c.l.b16 %v9073
    %v9388 = vunpack.c.h.b16 %v9073
    %v9389 = vunpack.c.l.b16 %v9074
    %v9390 = vunpack.c.h.b16 %v9074
    %v9391 = vunpack.c.l.b16 %v9075
    %v9392 = vunpack.c.h.b16 %v9075
    %v9393 = vunpack.c.l.b16 %v9076
    %v9394 = vunpack.c.h.b16 %v9076
    %v9395 = vunpack.c.l.b16 %v9077
    %v9396 = vunpack.c.h.b16 %v9077
    %v9397 = vunpack.c.l.b16 %v9078
    %v9398 = vunpack.c.h.b16 %v9078
    %v9399 = vunpack.c.l.b16 %v9079
    %v9400 = vunpack.c.h.b16 %v9079
    %v9401 = vunpack.c.l.b16 %v9080
    %v9402 = vunpack.c.h.b16 %v9080
    %v9403 = vunpack.c.l.b16 %v9081
    %v9404 = vunpack.c.h.b16 %v9081
    %v9405 = vunpack.c.l.b16 %v9082
    %v9406 = vunpack.c.h.b16 %v9082
    %v9407 = vunpack.c.l.b16 %v9083
    %v9408 = vunpack.c.h.b16 %v9083
    %v9409 = vunpack.c.l.b16 %v9084
    %v9410 = vunpack.c.h.b16 %v9084
    %v9411 = vunpack.c.l.b16 %v9085
    %v9412 = vunpack.c.h.b16 %v9085
    %v9413 = vunpack.c.l.b16 %v9086
    %v9414 = vunpack.c.h.b16 %v9086
    %v9415 = vunpack.c.l.b16 %v9087
    %v9416 = vunpack.c.h.b16 %v9087
    %v9417 = vunpack.c.l.b16 %v9088
    %v9418 = vunpack.c.h.b16 %v9088
    %v9419 = vunpack.c.l.b16 %v9089
    %v9420 = vunpack.c.h.b16 %v9089
    %v9421 = vunpack.c.l.b16 %v9090
    %v9422 = vunpack.c.h.b16 %v9090
    %v9423 = vunpack.c.l.b16 %v9091
    %v9424 = vunpack.c.h.b16 %v9091
    %v9425 = vunpack.c.l.b16 %v9092
    %v9426 = vunpack.c.h.b16 %v9092
    %v9427 = vunpack.c.l.b16 %v9093
    %v9428 = vunpack.c.h.b16 %v9093
    %v9429 = vunpack.c.l.b16 %v9094
    %v9430 = vunpack.c.h.b16 %v9094
    %v9431 = vunpack.c.l.b16 %v9095
    %v9432 = vunpack.c.h.b16 %v9095
    %v9433 = vunpack.c.l.b16 %v9096
    %v9434 = vunpack.c.h.b16 %v9096
    %v9435 = vunpack.c.l.b16 %v9097
    %v9436 = vunpack.c.h.b16 %v9097
    %v9437 = vunpack.c.l.b16 %v9098
    %v9438 = vunpack.c.h.b16 %v9098
    %v9439 = vunpack.c.l.b16 %v9099
    %v9440 = vunpack.c.h.b16 %v9099
    %v9441 = vunpack.c.l.b16 %v9100
    %v9442 = vunpack.c.h.b16 %v9100
    %v9443 = vunpack.c.l.b16 %v9101
    %v9444 = vunpack.c.h.b16 %v9101
    %v9445 = vunpack.c.l.b16 %v9102
    %v9446 = vunpack.c.h.b16 %v9102
    %v9447 = vunpack.c.l.b16 %v9103
    %v9448 = vunpack.c.h.b16 %v9103
    %v9449 = vunpack.c.l.b16 %v9104
    %v9450 = vunpack.c.h.b16 %v9104
    %v9451 = vunpack.c.l.b16 %v9105
    %v9452 = vunpack.c.h.b16 %v9105
    %v9453 = vunpack.c.l.b16 %v9106
    %v9454 = vunpack.c.h.b16 %v9106
    %v9455 = vunpack.c.l.b16 %v9107
    %v9456 = vunpack.c.h.b16 %v9107
    %v9457 = vunpack.c.l.b16 %v9108
    %v9458 = vunpack.c.h.b16 %v9108
    %v9459 = vunpack.c.l.b16 %v9109
    %v9460 = vunpack.c.h.b16 %v9109
    %v9461 = vunpack.c.l.b16 %v9110
    %v9462 = vunpack.c.h.b16 %v9110
    %v9463 = vunpack.c.l.b16 %v9111
    %v9464 = vunpack.c.h.b16 %v9111
    %v9465 = vunpack.c.l.b16 %v9112
    %v9466 = vunpack.c.h.b16 %v9112
    %v9467 = vunpack.c.l.b16 %v9113
    %v9468 = vunpack.c.h.b16 %v9113
    %v9469 = vunpack.c.l.b16 %v9114
    %v9470 = vunpack.c.h.b16 %v9114
    %v9471 = vunpack.c.l.b16 %v9115
    %v9472 = vunpack.c.h.b16 %v9115
    %v9473 = vunpack.c.l.b16 %v9116
    %v9474 = vunpack.c.h.b16 %v9116
    %v9475 = vunpack.c.l.b16 %v9117
    %v9476 = vunpack.c.h.b16 %v9117
    %v9477 = vunpack.c.l.b16 %v9118
    %v9478 = vunpack.c.h.b16 %v9118
    %v9479 = vunpack.c.l.b16 %v9119
    %v9480 = vunpack.c.h.b16 %v9119
    %v9481 = vunpack.c.l.b16 %v9120
    %v9482 = vunpack.c.h.b16 %v9120
    %v9483 = vunpack.c.l.b16 %v9121
    %v9484 = vunpack.c.h.b16 %v9121
    %v9485 = vunpack.c.l.b16 %v9122
    %v9486 = vunpack.c.h.b16 %v9122
    %v9487 = vunpack.c.l.b16 %v9123
    %v9488 = vunpack.c.h.b16 %v9123
    %v9489 = vunpack.c.l.b16 %v9124
    %v9490 = vunpack.c.h.b16 %v9124
    %v9491 = vunpack.c.l.b16 %v9125
    %v9492 = vunpack.c.h.b16 %v9125
    %v9493 = vunpack.c.l.b16 %v9126
    %v9494 = vunpack.c.h.b16 %v9126
    %v9495 = vunpack.c.l.b16 %v9127
    %v9496 = vunpack.c.h.b16 %v9127
    %v9497 = vunpack.c.l.b16 %v9128
    %v9498 = vunpack.c.h.b16 %v9128
    %v9499 = vunpack.c.l.b16 %v9129
    %v9500 = vunpack.c.h.b16 %v9129
    %v9501 = vunpack.c.l.b16 %v9130
    %v9502 = vunpack.c.h.b16 %v9130
    %v9503 = vunpack.c.l.b16 %v9131
    %v9504 = vunpack.c.h.b16 %v9131
    %v9505 = vunpack.c.l.b16 %v9132
    %v9506 = vunpack.c.h.b16 %v9132
    %v9507 = vunpack.c.l.b16 %v9133
    %v9508 = vunpack.c.h.b16 %v9133
    %v9509 = vunpack.c.l.b16 %v9134
    %v9510 = vunpack.c.h.b16 %v9134
    %v9511 = vunpack.c.l.b16 %v9135
    %v9512 = vunpack.c.h.b16 %v9135
    %v9513 = vunpack.c.l.b16 %v9136
    %v9514 = vunpack.c.h.b16 %v9136
    %v9515 = vunpack.c.l.b16 %v9137
    %v9516 = vunpack.c.h.b16 %v9137
    %v9517 = vunpack.c.l.b16 %v9138
    %v9518 = vunpack.c.h.b16 %v9138
    %v9519 = vunpack.c.l.b16 %v9139
    %v9520 = vunpack.c.h.b16 %v9139
    %v9521 = vunpack.c.l.b16 %v9140
    %v9522 = vunpack.c.h.b16 %v9140
    %v9523 = vunpack.c.l.b16 %v9141
    %v9524 = vunpack.c.h.b16 %v9141
    %v9525 = vunpack.c.l.b16 %v9142
    %v9526 = vunpack.c.h.b16 %v9142
    %v9527 = vpack.c.b16 %v9279, %v9271
    %v9528 = vpack.c.b16 %v9280, %v9272
    %v9529 = vpack.c.b16 %v9281, %v9273
    %v9530 = vpack.c.b16 %v9282, %v9274
    %v9531 = vpack.c.b16 %v9283, %v9275
    %v9532 = vpack.c.b16 %v9284, %v9276
    %v9533 = vpack.c.b16 %v9285, %v9277
    %v9534 = vpack.c.b16 %v9286, %v9278
    %v9535 = vpack.c.b16 %v9295, %v9287
    %v9536 = vpack.c.b16 %v9296, %v9288
    %v9537 = vpack.c.b16 %v9297, %v9289
    %v9538 = vpack.c.b16 %v9298, %v9290
    %v9539 = vpack.c.b16 %v9299, %v9291
    %v9540 = vpack.c.b16 %v9300, %v9292
    %v9541 = vpack.c.b16 %v9301, %v9293
    %v9542 = vpack.c.b16 %v9302, %v9294
    %v9543 = vpack.c.b16 %v9311, %v9303
    %v9544 = vpack.c.b16 %v9312, %v9304
    %v9545 = vpack.c.b16 %v9313, %v9305
    %v9546 = vpack.c.b16 %v9314, %v9306
    %v9547 = vpack.c.b16 %v9315, %v9307
    %v9548 = vpack.c.b16 %v9316, %v9308
    %v9549 = vpack.c.b16 %v9317, %v9309
    %v9550 = vpack.c.b16 %v9318, %v9310
    %v9551 = vpack.c.b16 %v9327, %v9319
    %v9552 = vpack.c.b16 %v9328, %v9320
    %v9553 = vpack.c.b16 %v9329, %v9321
    %v9554 = vpack.c.b16 %v9330, %v9322
    %v9555 = vpack.c.b16 %v9331, %v9323
    %v9556 = vpack.c.b16 %v9332, %v9324
    %v9557 = vpack.c.b16 %v9333, %v9325
    %v9558 = vpack.c.b16 %v9334, %v9326
    %v9559 = vpack.c.b16 %v9343, %v9335
    %v9560 = vpack.c.b16 %v9344, %v9336
    %v9561 = vpack.c.b16 %v9345, %v9337
    %v9562 = vpack.c.b16 %v9346, %v9338
    %v9563 = vpack.c.b16 %v9347, %v9339
    %v9564 = vpack.c.b16 %v9348, %v9340
    %v9565 = vpack.c.b16 %v9349, %v9341
    %v9566 = vpack.c.b16 %v9350, %v9342
    %v9567 = vpack.c.b16 %v9359, %v9351
    %v9568 = vpack.c.b16 %v9360, %v9352
    %v9569 = vpack.c.b16 %v9361, %v9353
    %v9570 = vpack.c.b16 %v9362, %v9354
    %v9571 = vpack.c.b16 %v9363, %v9355
    %v9572 = vpack.c.b16 %v9364, %v9356
    %v9573 = vpack.c.b16 %v9365, %v9357
    %v9574 = vpack.c.b16 %v9366, %v9358
    %v9575 = vpack.c.b16 %v9375, %v9367
    %v9576 = vpack.c.b16 %v9376, %v9368
    %v9577 = vpack.c.b16 %v9377, %v9369
    %v9578 = vpack.c.b16 %v9378, %v9370
    %v9579 = vpack.c.b16 %v9379, %v9371
    %v9580 = vpack.c.b16 %v9380, %v9372
    %v9581 = vpack.c.b16 %v9381, %v9373
    %v9582 = vpack.c.b16 %v9382, %v9374
    %v9583 = vpack.c.b16 %v9391, %v9383
    %v9584 = vpack.c.b16 %v9392, %v9384
    %v9585 = vpack.c.b16 %v9393, %v9385
    %v9586 = vpack.c.b16 %v9394, %v9386
    %v9587 = vpack.c.b16 %v9395, %v9387
    %v9588 = vpack.c.b16 %v9396, %v9388
    %v9589 = vpack.c.b16 %v9397, %v9389
    %v9590 = vpack.c.b16 %v9398, %v9390
    %v9591 = vpack.c.b16 %v9407, %v9399
    %v9592 = vpack.c.b16 %v9408, %v9400
    %v9593 = vpack.c.b16 %v9409, %v9401
    %v9594 = vpack.c.b16 %v9410, %v9402
    %v9595 = vpack.c.b16 %v9411, %v9403
    %v9596 = vpack.c.b16 %v9412, %v9404
    %v9597 = vpack.c.b16 %v9413, %v9405
    %v9598 = vpack.c.b16 %v9414, %v9406
    %v9599 = vpack.c.b16 %v9423, %v9415
    %v9600 = vpack.c.b16 %v9424, %v9416
    %v9601 = vpack.c.b16 %v9425, %v9417
    %v9602 = vpack.c.b16 %v9426, %v9418
    %v9603 = vpack.c.b16 %v9427, %v9419
    %v9604 = vpack.c.b16 %v9428, %v9420
    %v9605 = vpack.c.b16 %v9429, %v9421
    %v9606 = vpack.c.b16 %v9430, %v9422
    %v9607 = vpack.c.b16 %v9439, %v9431
    %v9608 = vpack.c.b16 %v9440, %v9432
    %v9609 = vpack.c.b16 %v9441, %v9433
    %v9610 = vpack.c.b16 %v9442, %v9434
    %v9611 = vpack.c.b16 %v9443, %v9435
    %v9612 = vpack.c.b16 %v9444, %v9436
    %v9613 = vpack.c.b16 %v9445, %v9437
    %v9614 = vpack.c.b16 %v9446, %v9438
    %v9615 = vpack.c.b16 %v9455, %v9447
    %v9616 = vpack.c.b16 %v9456, %v9448
    %v9617 = vpack.c.b16 %v9457, %v9449
    %v9618 = vpack.c.b16 %v9458, %v9450
    %v9619 = vpack.c.b16 %v9459, %v9451
    %v9620 = vpack.c.b16 %v9460, %v9452
    %v9621 = vpack.c.b16 %v9461, %v9453
    %v9622 = vpack.c.b16 %v9462, %v9454
    %v9623 = vpack.c.b16 %v9471, %v9463
    %v9624 = vpack.c.b16 %v9472, %v9464
    %v9625 = vpack.c.b16 %v9473, %v9465
    %v9626 = vpack.c.b16 %v9474, %v9466
    %v9627 = vpack.c.b16 %v9475, %v9467
    %v9628 = vpack.c.b16 %v9476, %v9468
    %v9629 = vpack.c.b16 %v9477, %v9469
    %v9630 = vpack.c.b16 %v9478, %v9470
    %v9631 = vpack.c.b16 %v9487, %v9479
    %v9632 = vpack.c.b16 %v9488, %v9480
    %v9633 = vpack.c.b16 %v9489, %v9481
    %v9634 = vpack.c.b16 %v9490, %v9482
    %v9635 = vpack.c.b16 %v9491, %v9483
    %v9636 = vpack.c.b16 %v9492, %v9484
    %v9637 = vpack.c.b16 %v9493, %v9485
    %v9638 = vpack.c.b16 %v9494, %v9486
    %v9639 = vpack.c.b16 %v9503, %v9495
    %v9640 = vpack.c.b16 %v9504, %v9496
    %v9641 = vpack.c.b16 %v9505, %v9497
    %v9642 = vpack.c.b16 %v9506, %v9498
    %v9643 = vpack.c.b16 %v9507, %v9499
    %v9644 = vpack.c.b16 %v9508, %v9500
    %v9645 = vpack.c.b16 %v9509, %v9501
    %v9646 = vpack.c.b16 %v9510, %v9502
    %v9647 = vpack.c.b16 %v9519, %v9511
    %v9648 = vpack.c.b16 %v9520, %v9512
    %v9649 = vpack.c.b16 %v9521, %v9513
    %v9650 = vpack.c.b16 %v9522, %v9514
    %v9651 = vpack.c.b16 %v9523, %v9515
    %v9652 = vpack.c.b16 %v9524, %v9516
    %v9653 = vpack.c.b16 %v9525, %v9517
    %v9654 = vpack.c.b16 %v9526, %v9518
    %9783 = vmatprep.subr.bf16.mxu0 %v9528
    %9784 = vmatpush1.bf16.msra.mxu0 %v9527
    %9785 = vmatprep.subr.bf16.mxu0 %v9536
    %9786 = vmatpush1.bf16.msra.mxu0 %v9535
    %9787 = vmatprep.subr.bf16.mxu0 %v9544
    %9788 = vmatpush1.bf16.msra.mxu0 %v9543
    %9789 = vmatprep.subr.bf16.mxu0 %v9552
    %9790 = vmatpush1.bf16.msra.mxu0 %v9551
    %9791 = vmatprep.subr.bf16.mxu0 %v9560
    %9792 = vmatpush1.bf16.msra.mxu0 %v9559
    %9793 = vmatprep.subr.bf16.mxu0 %v9568
    %9794 = vmatpush1.bf16.msra.mxu0 %v9567
    %9795 = vmatprep.subr.bf16.mxu0 %v9576
    %9796 = vmatpush1.bf16.msra.mxu0 %v9575
    %9797 = vmatprep.subr.bf16.mxu0 %v9584
    %9798 = vmatpush1.bf16.msra.mxu0 %v9583
    %9799 = vmatprep.subr.bf16.mxu0 %v9592
    %9800 = vmatpush1.bf16.msra.mxu0 %v9591
    %9801 = vmatprep.subr.bf16.mxu0 %v9600
    %9802 = vmatpush1.bf16.msra.mxu0 %v9599
    %9803 = vmatprep.subr.bf16.mxu0 %v9608
    %9804 = vmatpush1.bf16.msra.mxu0 %v9607
    %9805 = vmatprep.subr.bf16.mxu0 %v9616
    %9806 = vmatpush1.bf16.msra.mxu0 %v9615
    %9807 = vmatprep.subr.bf16.mxu0 %v9624
    %9808 = vmatpush1.bf16.msra.mxu0 %v9623
    %9809 = vmatprep.subr.bf16.mxu0 %v9632
    %9810 = vmatpush1.bf16.msra.mxu0 %v9631
    %9811 = vmatprep.subr.bf16.mxu0 %v9640
    %9812 = vmatpush1.bf16.msra.mxu0 %v9639
    %9813 = vmatprep.subr.bf16.mxu0 %v9648
    %9814 = vmatpush1.bf16.msra.mxu0 %v9647
    %9815 = vmatprep.mubr.bf16.mxu0 %v9014
    %9816 = vmatmul.mubr.bf16.gmra.mrb[0].mxu0 %v9013
    %v9817 = vpop.f32.mrb[0].mxu0
    %v9818 = vadd.f32 0.0, %v9817
    %v9819 = vpop.f32.mrb[0].mxu0
    %v9820 = vadd.f32 0.0, %v9819
    %v9821 = vpop.f32.mrb[0].mxu0
    %v9822 = vpop.f32.mrb[0].mxu0
    %9823 = vdwg.mxu0
    %9824 = vmatprep.subr.bf16.mxu0 %v9530
    %9825 = vmatpush1.bf16.msra.mxu0 %v9529
    %9826 = vmatprep.subr.bf16.mxu0 %v9538
    %9827 = vmatpush1.bf16.msra.mxu0 %v9537
    %9828 = vmatprep.subr.bf16.mxu0 %v9546
    %9829 = vmatpush1.bf16.msra.mxu0 %v9545
    %9830 = vmatprep.subr.bf16.mxu0 %v9554
    %9831 = vmatpush1.bf16.msra.mxu0 %v9553
    %9832 = vmatprep.subr.bf16.mxu0 %v9562
    %9833 = vmatpush1.bf16.msra.mxu0 %v9561
    %9834 = vmatprep.subr.bf16.mxu0 %v9570
    %9835 = vmatpush1.bf16.msra.mxu0 %v9569
    %9836 = vmatprep.subr.bf16.mxu0 %v9578
    %9837 = vmatpush1.bf16.msra.mxu0 %v9577
    %9838 = vmatprep.subr.bf16.mxu0 %v9586
    %9839 = vmatpush1.bf16.msra.mxu0 %v9585
    %9840 = vmatprep.subr.bf16.mxu0 %v9594
    %9841 = vmatpush1.bf16.msra.mxu0 %v9593
    %9842 = vmatprep.subr.bf16.mxu0 %v9602
    %9843 = vmatpush1.bf16.msra.mxu0 %v9601
    %9844 = vmatprep.subr.bf16.mxu0 %v9610
    %9845 = vmatpush1.bf16.msra.mxu0 %v9609
    %9846 = vmatprep.subr.bf16.mxu0 %v9618
    %9847 = vmatpush1.bf16.msra.mxu0 %v9617
    %9848 = vmatprep.subr.bf16.mxu0 %v9626
    %9849 = vmatpush1.bf16.msra.mxu0 %v9625
    %9850 = vmatprep.subr.bf16.mxu0 %v9634
    %9851 = vmatpush1.bf16.msra.mxu0 %v9633
    %9852 = vmatprep.subr.bf16.mxu0 %v9642
    %9853 = vmatpush1.bf16.msra.mxu0 %v9641
    %9854 = vmatprep.subr.bf16.mxu0 %v9650
    %9855 = vmatpush1.bf16.msra.mxu0 %v9649
    %9856 = vmatprep.mubr.bf16.mxu0 %v9014
    %9857 = vmatmul.mubr.bf16.gmra.mrb[0].mxu0 %v9013
    %v9858 = vpop.f32.mrb[0].mxu0
    %v9859 = vadd.f32 0.0, %v9858
    %v9860 = vpop.f32.mrb[0].mxu0
    %v9861 = vadd.f32 0.0, %v9860
    %v9862 = vpop.f32.mrb[0].mxu0
    %v9863 = vpop.f32.mrb[0].mxu0
    %9864 = vdwg.mxu0
    %9865 = vmatprep.subr.bf16.mxu0 %v9532
    %9866 = vmatpush1.bf16.msra.mxu0 %v9531
    %9867 = vmatprep.subr.bf16.mxu0 %v9540
    %9868 = vmatpush1.bf16.msra.mxu0 %v9539
    %9869 = vmatprep.subr.bf16.mxu0 %v9548
    %9870 = vmatpush1.bf16.msra.mxu0 %v9547
    %9871 = vmatprep.subr.bf16.mxu0 %v9556
    %9872 = vmatpush1.bf16.msra.mxu0 %v9555
    %9873 = vmatprep.subr.bf16.mxu0 %v9564
    %9874 = vmatpush1.bf16.msra.mxu0 %v9563
    %9875 = vmatprep.subr.bf16.mxu0 %v9572
    %9876 = vmatpush1.bf16.msra.mxu0 %v9571
    %9877 = vmatprep.subr.bf16.mxu0 %v9580
    %9878 = vmatpush1.bf16.msra.mxu0 %v9579
    %9879 = vmatprep.subr.bf16.mxu0 %v9588
    %9880 = vmatpush1.bf16.msra.mxu0 %v9587
    %9881 = vmatprep.subr.bf16.mxu0 %v9596
    %9882 = vmatpush1.bf16.msra.mxu0 %v9595
    %9883 = vmatprep.subr.bf16.mxu0 %v9604
    %9884 = vmatpush1.bf16.msra.mxu0 %v9603
    %9885 = vmatprep.subr.bf16.mxu0 %v9612
    %9886 = vmatpush1.bf16.msra.mxu0 %v9611
    %9887 = vmatprep.subr.bf16.mxu0 %v9620
    %9888 = vmatpush1.bf16.msra.mxu0 %v9619
    %9889 = vmatprep.subr.bf16.mxu0 %v9628
    %9890 = vmatpush1.bf16.msra.mxu0 %v9627
    %9891 = vmatprep.subr.bf16.mxu0 %v9636
    %9892 = vmatpush1.bf16.msra.mxu0 %v9635
    %9893 = vmatprep.subr.bf16.mxu0 %v9644
    %9894 = vmatpush1.bf16.msra.mxu0 %v9643
    %9895 = vmatprep.subr.bf16.mxu0 %v9652
    %9896 = vmatpush1.bf16.msra.mxu0 %v9651
    %9897 = vmatprep.mubr.bf16.mxu0 %v9014
    %9898 = vmatmul.mubr.bf16.gmra.mrb[0].mxu0 %v9013
    %v9899 = vpop.f32.mrb[0].mxu0
    %v9900 = vadd.f32 0.0, %v9899
    %v9901 = vpop.f32.mrb[0].mxu0
    %v9902 = vadd.f32 0.0, %v9901
    %v9903 = vpop.f32.mrb[0].mxu0
    %v9904 = vpop.f32.mrb[0].mxu0
    %9905 = vdwg.mxu0
    %9906 = vmatprep.subr.bf16.mxu0 %v9534
    %9907 = vmatpush1.bf16.msra.mxu0 %v9533
    %9908 = vmatprep.subr.bf16.mxu0 %v9542
    %9909 = vmatpush1.bf16.msra.mxu0 %v9541
    %9910 = vmatprep.subr.bf16.mxu0 %v9550
    %9911 = vmatpush1.bf16.msra.mxu0 %v9549
    %9912 = vmatprep.subr.bf16.mxu0 %v9558
    %9913 = vmatpush1.bf16.msra.mxu0 %v9557
    %9914 = vmatprep.subr.bf16.mxu0 %v9566
    %9915 = vmatpush1.bf16.msra.mxu0 %v9565
    %9916 = vmatprep.subr.bf16.mxu0 %v9574
    %9917 = vmatpush1.bf16.msra.mxu0 %v9573
    %9918 = vmatprep.subr.bf16.mxu0 %v9582
    %9919 = vmatpush1.bf16.msra.mxu0 %v9581
    %9920 = vmatprep.subr.bf16.mxu0 %v9590
    %9921 = vmatpush1.bf16.msra.mxu0 %v9589
    %9922 = vmatprep.subr.bf16.mxu0 %v9598
    %9923 = vmatpush1.bf16.msra.mxu0 %v9597
    %9924 = vmatprep.subr.bf16.mxu0 %v9606
    %9925 = vmatpush1.bf16.msra.mxu0 %v9605
    %9926 = vmatprep.subr.bf16.mxu0 %v9614
    %9927 = vmatpush1.bf16.msra.mxu0 %v9613
    %9928 = vmatprep.subr.bf16.mxu0 %v9622
    %9929 = vmatpush1.bf16.msra.mxu0 %v9621
    %9930 = vmatprep.subr.bf16.mxu0 %v9630
    %9931 = vmatpush1.bf16.msra.mxu0 %v9629
    %9932 = vmatprep.subr.bf16.mxu0 %v9638
    %9933 = vmatpush1.bf16.msra.mxu0 %v9637
    %9934 = vmatprep.subr.bf16.mxu0 %v9646
    %9935 = vmatpush1.bf16.msra.mxu0 %v9645
    %9936 = vmatprep.subr.bf16.mxu0 %v9654
    %9937 = vmatpush1.bf16.msra.mxu0 %v9653
    %9938 = vmatprep.mubr.bf16.mxu0 %v9014
    %9939 = vmatmul.mubr.bf16.gmra.mrb[0].mxu0 %v9013
    %v9940 = vpop.f32.mrb[0].mxu0
    %v9941 = vadd.f32 0.0, %v9940
    %v9942 = vpop.f32.mrb[0].mxu0
    %v9943 = vadd.f32 0.0, %v9942
    %v9944 = vpop.f32.mrb[0].mxu0
    %v9945 = vpop.f32.mrb[0].mxu0
    %9946 = vdwg.mxu0
    %v9947 = vadd.f32 %v3593, %v9818
    %v9948 = vadd.f32 %v3595, %v9820
    %v9949 = vadd.f32 %v3739, %v9859
    %v9950 = vadd.f32 %v3741, %v9861
    %v9951 = vadd.f32 %v3885, %v9900
    %v9952 = vadd.f32 %v3887, %v9902
    %v9953 = vadd.f32 %v4031, %v9941
    %v9954 = vadd.f32 %v4033, %v9943
    %v9955 = vxor.u32 %v9947, 2147483648
    %v9956 = vxor.u32 %v9948, 2147483648
    %v9957 = vmul.f32 %v9955, 1.442695
    %v9958 = vpow.pop %v9957
    %v9959 = vmul.f32 %v9956, 1.442695
    %v9960 = vpow.pop %v9959
    %v9961 = vadd.f32 %v9958, 1.0
    %v9962 = vadd.f32 %v9960, 1.0
    %v9963 = vrcp.pop %v9961
    %v9964 = vmul.f32 1.0, %v9963
    %v9965 = vrcp.pop %v9962
    %v9966 = vmul.f32 1.0, %v9965
    %v9967 = vxor.u32 %v9949, 2147483648
    %v9968 = vxor.u32 %v9950, 2147483648
    %v9969 = vmul.f32 %v9967, 1.442695
    %v9970 = vpow.pop %v9969
    %v9971 = vmul.f32 %v9968, 1.442695
    %v9972 = vpow.pop %v9971
    %v9973 = vadd.f32 %v9970, 1.0
    %v9974 = vadd.f32 %v9972, 1.0
    %v9975 = vrcp.pop %v9973
    %v9976 = vmul.f32 1.0, %v9975
    %v9977 = vrcp.pop %v9974
    %v9978 = vmul.f32 1.0, %v9977
    %v9979 = vtanh.pop %v9951
    %v9980 = vtanh.pop %v9952
    %v9981 = vxor.u32 %v9953, 2147483648
    %v9982 = vxor.u32 %v9954, 2147483648
    %v9983 = vmul.f32 %v9981, 1.442695
    %v9984 = vpow.pop %v9983
    %v9985 = vmul.f32 %v9982, 1.442695
    %v9986 = vpow.pop %v9985
    %v9987 = vadd.f32 %v9984, 1.0
    %v9988 = vadd.f32 %v9986, 1.0
    %v9989 = vrcp.pop %v9987
    %v9990 = vmul.f32 1.0, %v9989
    %v9991 = vrcp.pop %v9988
    %v9992 = vmul.f32 1.0, %v9991
    %v9993 = vmul.f32 %v9976, %v9004
    %v9994 = vmul.f32 %v9978, %v9005
    %v9995 = vmul.f32 %v9964, %v9979
    %v9996 = vmul.f32 %v9966, %v9980
    %v9997 = vadd.f32 %v9993, %v9995
    %v9998 = vadd.f32 %v9994, %v9996
    %v9999 = vtanh.pop %v9997
    %v10000 = vtanh.pop %v9998
    %v10001 = vmul.f32 %v9990, %v9999
    %v10002 = vmul.f32 %v9992, %v10000
    %s10003 = scalar_lea.vmem [#allocation4], 80
    %10004 = vst [vmem:[%s10003] sm:$0xff] %v10001
    %10005 = vst [vmem:[%s10003 + $0x8] sm:$0xff] %v10002
    %v10006 = vpack.c.bf16 %v10001, %v10001
    %v10007 = vpack.c.bf16 %v10002, %v10002
    %v10008 = vld [vmem:[#allocation7] sm:$0xff]
    %v10009 = vld [vmem:[#allocation7 + $0x8] sm:$0xff]
    %v10010 = vld [vmem:[#allocation7 + $0x10] sm:$0xff]
    %v10011 = vld [vmem:[#allocation7 + $0x18] sm:$0xff]
    %v10012 = vld [vmem:[#allocation7 + $0x20] sm:$0xff]
    %v10013 = vld [vmem:[#allocation7 + $0x28] sm:$0xff]
    %v10014 = vld [vmem:[#allocation7 + $0x30] sm:$0xff]
    %v10015 = vld [vmem:[#allocation7 + $0x38] sm:$0xff]
    %v10016 = vld [vmem:[#allocation7 + $0x40] sm:$0xff]
    %v10017 = vld [vmem:[#allocation7 + $0x48] sm:$0xff]
    %v10018 = vld [vmem:[#allocation7 + $0x50] sm:$0xff]
    %v10019 = vld [vmem:[#allocation7 + $0x58] sm:$0xff]
    %v10020 = vld [vmem:[#allocation7 + $0x60] sm:$0xff]
    %v10021 = vld [vmem:[#allocation7 + $0x68] sm:$0xff]
    %v10022 = vld [vmem:[#allocation7 + $0x70] sm:$0xff]
    %v10023 = vld [vmem:[#allocation7 + $0x78] sm:$0xff]
    %v10024 = vld [vmem:[#allocation7 + $0x80] sm:$0xff]
    %v10025 = vld [vmem:[#allocation7 + $0x88] sm:$0xff]
    %v10026 = vld [vmem:[#allocation7 + $0x90] sm:$0xff]
    %v10027 = vld [vmem:[#allocation7 + $0x98] sm:$0xff]
    %v10028 = vld [vmem:[#allocation7 + $0xa0] sm:$0xff]
    %v10029 = vld [vmem:[#allocation7 + $0xa8] sm:$0xff]
    %v10030 = vld [vmem:[#allocation7 + $0xb0] sm:$0xff]
    %v10031 = vld [vmem:[#allocation7 + $0xb8] sm:$0xff]
    %v10032 = vld [vmem:[#allocation7 + $0xc0] sm:$0xff]
    %v10033 = vld [vmem:[#allocation7 + $0xc8] sm:$0xff]
    %v10034 = vld [vmem:[#allocation7 + $0xd0] sm:$0xff]
    %v10035 = vld [vmem:[#allocation7 + $0xd8] sm:$0xff]
    %v10036 = vld [vmem:[#allocation7 + $0xe0] sm:$0xff]
    %v10037 = vld [vmem:[#allocation7 + $0xe8] sm:$0xff]
    %v10038 = vld [vmem:[#allocation7 + $0xf0] sm:$0xff]
    %v10039 = vld [vmem:[#allocation7 + $0xf8] sm:$0xff]
    %v10040 = vld [vmem:[#allocation7 + $0x100] sm:$0xff]
    %v10041 = vld [vmem:[#allocation7 + $0x108] sm:$0xff]
    %v10042 = vld [vmem:[#allocation7 + $0x110] sm:$0xff]
    %v10043 = vld [vmem:[#allocation7 + $0x118] sm:$0xff]
    %v10044 = vld [vmem:[#allocation7 + $0x120] sm:$0xff]
    %v10045 = vld [vmem:[#allocation7 + $0x128] sm:$0xff]
    %v10046 = vld [vmem:[#allocation7 + $0x130] sm:$0xff]
    %v10047 = vld [vmem:[#allocation7 + $0x138] sm:$0xff]
    %v10048 = vld [vmem:[#allocation7 + $0x140] sm:$0xff]
    %v10049 = vld [vmem:[#allocation7 + $0x148] sm:$0xff]
    %v10050 = vld [vmem:[#allocation7 + $0x150] sm:$0xff]
    %v10051 = vld [vmem:[#allocation7 + $0x158] sm:$0xff]
    %v10052 = vld [vmem:[#allocation7 + $0x160] sm:$0xff]
    %v10053 = vld [vmem:[#allocation7 + $0x168] sm:$0xff]
    %v10054 = vld [vmem:[#allocation7 + $0x170] sm:$0xff]
    %v10055 = vld [vmem:[#allocation7 + $0x178] sm:$0xff]
    %v10056 = vld [vmem:[#allocation7 + $0x180] sm:$0xff]
    %v10057 = vld [vmem:[#allocation7 + $0x188] sm:$0xff]
    %v10058 = vld [vmem:[#allocation7 + $0x190] sm:$0xff]
    %v10059 = vld [vmem:[#allocation7 + $0x198] sm:$0xff]
    %v10060 = vld [vmem:[#allocation7 + $0x1a0] sm:$0xff]
    %v10061 = vld [vmem:[#allocation7 + $0x1a8] sm:$0xff]
    %v10062 = vld [vmem:[#allocation7 + $0x1b0] sm:$0xff]
    %v10063 = vld [vmem:[#allocation7 + $0x1b8] sm:$0xff]
    %v10064 = vld [vmem:[#allocation7 + $0x1c0] sm:$0xff]
    %v10065 = vld [vmem:[#allocation7 + $0x1c8] sm:$0xff]
    %v10066 = vld [vmem:[#allocation7 + $0x1d0] sm:$0xff]
    %v10067 = vld [vmem:[#allocation7 + $0x1d8] sm:$0xff]
    %v10068 = vld [vmem:[#allocation7 + $0x1e0] sm:$0xff]
    %v10069 = vld [vmem:[#allocation7 + $0x1e8] sm:$0xff]
    %v10070 = vld [vmem:[#allocation7 + $0x1f0] sm:$0xff]
    %v10071 = vld [vmem:[#allocation7 + $0x1f8] sm:$0xff]
    %v10072 = vld [vmem:[#allocation7 + $0x200] sm:$0xff]
    %v10073 = vld [vmem:[#allocation7 + $0x208] sm:$0xff]
    %v10074 = vld [vmem:[#allocation7 + $0x210] sm:$0xff]
    %v10075 = vld [vmem:[#allocation7 + $0x218] sm:$0xff]
    %v10076 = vld [vmem:[#allocation7 + $0x220] sm:$0xff]
    %v10077 = vld [vmem:[#allocation7 + $0x228] sm:$0xff]
    %v10078 = vld [vmem:[#allocation7 + $0x230] sm:$0xff]
    %v10079 = vld [vmem:[#allocation7 + $0x238] sm:$0xff]
    %v10080 = vld [vmem:[#allocation7 + $0x240] sm:$0xff]
    %v10081 = vld [vmem:[#allocation7 + $0x248] sm:$0xff]
    %v10082 = vld [vmem:[#allocation7 + $0x250] sm:$0xff]
    %v10083 = vld [vmem:[#allocation7 + $0x258] sm:$0xff]
    %v10084 = vld [vmem:[#allocation7 + $0x260] sm:$0xff]
    %v10085 = vld [vmem:[#allocation7 + $0x268] sm:$0xff]
    %v10086 = vld [vmem:[#allocation7 + $0x270] sm:$0xff]
    %v10087 = vld [vmem:[#allocation7 + $0x278] sm:$0xff]
    %v10088 = vld [vmem:[#allocation7 + $0x280] sm:$0xff]
    %v10089 = vld [vmem:[#allocation7 + $0x288] sm:$0xff]
    %v10090 = vld [vmem:[#allocation7 + $0x290] sm:$0xff]
    %v10091 = vld [vmem:[#allocation7 + $0x298] sm:$0xff]
    %v10092 = vld [vmem:[#allocation7 + $0x2a0] sm:$0xff]
    %v10093 = vld [vmem:[#allocation7 + $0x2a8] sm:$0xff]
    %v10094 = vld [vmem:[#allocation7 + $0x2b0] sm:$0xff]
    %v10095 = vld [vmem:[#allocation7 + $0x2b8] sm:$0xff]
    %v10096 = vld [vmem:[#allocation7 + $0x2c0] sm:$0xff]
    %v10097 = vld [vmem:[#allocation7 + $0x2c8] sm:$0xff]
    %v10098 = vld [vmem:[#allocation7 + $0x2d0] sm:$0xff]
    %v10099 = vld [vmem:[#allocation7 + $0x2d8] sm:$0xff]
    %v10100 = vld [vmem:[#allocation7 + $0x2e0] sm:$0xff]
    %v10101 = vld [vmem:[#allocation7 + $0x2e8] sm:$0xff]
    %v10102 = vld [vmem:[#allocation7 + $0x2f0] sm:$0xff]
    %v10103 = vld [vmem:[#allocation7 + $0x2f8] sm:$0xff]
    %v10104 = vld [vmem:[#allocation7 + $0x300] sm:$0xff]
    %v10105 = vld [vmem:[#allocation7 + $0x308] sm:$0xff]
    %v10106 = vld [vmem:[#allocation7 + $0x310] sm:$0xff]
    %v10107 = vld [vmem:[#allocation7 + $0x318] sm:$0xff]
    %v10108 = vld [vmem:[#allocation7 + $0x320] sm:$0xff]
    %v10109 = vld [vmem:[#allocation7 + $0x328] sm:$0xff]
    %v10110 = vld [vmem:[#allocation7 + $0x330] sm:$0xff]
    %v10111 = vld [vmem:[#allocation7 + $0x338] sm:$0xff]
    %v10112 = vld [vmem:[#allocation7 + $0x340] sm:$0xff]
    %v10113 = vld [vmem:[#allocation7 + $0x348] sm:$0xff]
    %v10114 = vld [vmem:[#allocation7 + $0x350] sm:$0xff]
    %v10115 = vld [vmem:[#allocation7 + $0x358] sm:$0xff]
    %v10116 = vld [vmem:[#allocation7 + $0x360] sm:$0xff]
    %v10117 = vld [vmem:[#allocation7 + $0x368] sm:$0xff]
    %v10118 = vld [vmem:[#allocation7 + $0x370] sm:$0xff]
    %v10119 = vld [vmem:[#allocation7 + $0x378] sm:$0xff]
    %v10120 = vld [vmem:[#allocation7 + $0x380] sm:$0xff]
    %v10121 = vld [vmem:[#allocation7 + $0x388] sm:$0xff]
    %v10122 = vld [vmem:[#allocation7 + $0x390] sm:$0xff]
    %v10123 = vld [vmem:[#allocation7 + $0x398] sm:$0xff]
    %v10124 = vld [vmem:[#allocation7 + $0x3a0] sm:$0xff]
    %v10125 = vld [vmem:[#allocation7 + $0x3a8] sm:$0xff]
    %v10126 = vld [vmem:[#allocation7 + $0x3b0] sm:$0xff]
    %v10127 = vld [vmem:[#allocation7 + $0x3b8] sm:$0xff]
    %v10128 = vld [vmem:[#allocation7 + $0x3c0] sm:$0xff]
    %v10129 = vld [vmem:[#allocation7 + $0x3c8] sm:$0xff]
    %v10130 = vld [vmem:[#allocation7 + $0x3d0] sm:$0xff]
    %v10131 = vld [vmem:[#allocation7 + $0x3d8] sm:$0xff]
    %v10132 = vld [vmem:[#allocation7 + $0x3e0] sm:$0xff]
    %v10133 = vld [vmem:[#allocation7 + $0x3e8] sm:$0xff]
    %v10134 = vld [vmem:[#allocation7 + $0x3f0] sm:$0xff]
    %v10135 = vld [vmem:[#allocation7 + $0x3f8] sm:$0xff]
    %v10264 = vunpack.c.l.b16 %v10008
    %v10265 = vunpack.c.h.b16 %v10008
    %v10266 = vunpack.c.l.b16 %v10009
    %v10267 = vunpack.c.h.b16 %v10009
    %v10268 = vunpack.c.l.b16 %v10010
    %v10269 = vunpack.c.h.b16 %v10010
    %v10270 = vunpack.c.l.b16 %v10011
    %v10271 = vunpack.c.h.b16 %v10011
    %v10272 = vunpack.c.l.b16 %v10012
    %v10273 = vunpack.c.h.b16 %v10012
    %v10274 = vunpack.c.l.b16 %v10013
    %v10275 = vunpack.c.h.b16 %v10013
    %v10276 = vunpack.c.l.b16 %v10014
    %v10277 = vunpack.c.h.b16 %v10014
    %v10278 = vunpack.c.l.b16 %v10015
    %v10279 = vunpack.c.h.b16 %v10015
    %v10280 = vunpack.c.l.b16 %v10016
    %v10281 = vunpack.c.h.b16 %v10016
    %v10282 = vunpack.c.l.b16 %v10017
    %v10283 = vunpack.c.h.b16 %v10017
    %v10284 = vunpack.c.l.b16 %v10018
    %v10285 = vunpack.c.h.b16 %v10018
    %v10286 = vunpack.c.l.b16 %v10019
    %v10287 = vunpack.c.h.b16 %v10019
    %v10288 = vunpack.c.l.b16 %v10020
    %v10289 = vunpack.c.h.b16 %v10020
    %v10290 = vunpack.c.l.b16 %v10021
    %v10291 = vunpack.c.h.b16 %v10021
    %v10292 = vunpack.c.l.b16 %v10022
    %v10293 = vunpack.c.h.b16 %v10022
    %v10294 = vunpack.c.l.b16 %v10023
    %v10295 = vunpack.c.h.b16 %v10023
    %v10296 = vunpack.c.l.b16 %v10024
    %v10297 = vunpack.c.h.b16 %v10024
    %v10298 = vunpack.c.l.b16 %v10025
    %v10299 = vunpack.c.h.b16 %v10025
    %v10300 = vunpack.c.l.b16 %v10026
    %v10301 = vunpack.c.h.b16 %v10026
    %v10302 = vunpack.c.l.b16 %v10027
    %v10303 = vunpack.c.h.b16 %v10027
    %v10304 = vunpack.c.l.b16 %v10028
    %v10305 = vunpack.c.h.b16 %v10028
    %v10306 = vunpack.c.l.b16 %v10029
    %v10307 = vunpack.c.h.b16 %v10029
    %v10308 = vunpack.c.l.b16 %v10030
    %v10309 = vunpack.c.h.b16 %v10030
    %v10310 = vunpack.c.l.b16 %v10031
    %v10311 = vunpack.c.h.b16 %v10031
    %v10312 = vunpack.c.l.b16 %v10032
    %v10313 = vunpack.c.h.b16 %v10032
    %v10314 = vunpack.c.l.b16 %v10033
    %v10315 = vunpack.c.h.b16 %v10033
    %v10316 = vunpack.c.l.b16 %v10034
    %v10317 = vunpack.c.h.b16 %v10034
    %v10318 = vunpack.c.l.b16 %v10035
    %v10319 = vunpack.c.h.b16 %v10035
    %v10320 = vunpack.c.l.b16 %v10036
    %v10321 = vunpack.c.h.b16 %v10036
    %v10322 = vunpack.c.l.b16 %v10037
    %v10323 = vunpack.c.h.b16 %v10037
    %v10324 = vunpack.c.l.b16 %v10038
    %v10325 = vunpack.c.h.b16 %v10038
    %v10326 = vunpack.c.l.b16 %v10039
    %v10327 = vunpack.c.h.b16 %v10039
    %v10328 = vunpack.c.l.b16 %v10040
    %v10329 = vunpack.c.h.b16 %v10040
    %v10330 = vunpack.c.l.b16 %v10041
    %v10331 = vunpack.c.h.b16 %v10041
    %v10332 = vunpack.c.l.b16 %v10042
    %v10333 = vunpack.c.h.b16 %v10042
    %v10334 = vunpack.c.l.b16 %v10043
    %v10335 = vunpack.c.h.b16 %v10043
    %v10336 = vunpack.c.l.b16 %v10044
    %v10337 = vunpack.c.h.b16 %v10044
    %v10338 = vunpack.c.l.b16 %v10045
    %v10339 = vunpack.c.h.b16 %v10045
    %v10340 = vunpack.c.l.b16 %v10046
    %v10341 = vunpack.c.h.b16 %v10046
    %v10342 = vunpack.c.l.b16 %v10047
    %v10343 = vunpack.c.h.b16 %v10047
    %v10344 = vunpack.c.l.b16 %v10048
    %v10345 = vunpack.c.h.b16 %v10048
    %v10346 = vunpack.c.l.b16 %v10049
    %v10347 = vunpack.c.h.b16 %v10049
    %v10348 = vunpack.c.l.b16 %v10050
    %v10349 = vunpack.c.h.b16 %v10050
    %v10350 = vunpack.c.l.b16 %v10051
    %v10351 = vunpack.c.h.b16 %v10051
    %v10352 = vunpack.c.l.b16 %v10052
    %v10353 = vunpack.c.h.b16 %v10052
    %v10354 = vunpack.c.l.b16 %v10053
    %v10355 = vunpack.c.h.b16 %v10053
    %v10356 = vunpack.c.l.b16 %v10054
    %v10357 = vunpack.c.h.b16 %v10054
    %v10358 = vunpack.c.l.b16 %v10055
    %v10359 = vunpack.c.h.b16 %v10055
    %v10360 = vunpack.c.l.b16 %v10056
    %v10361 = vunpack.c.h.b16 %v10056
    %v10362 = vunpack.c.l.b16 %v10057
    %v10363 = vunpack.c.h.b16 %v10057
    %v10364 = vunpack.c.l.b16 %v10058
    %v10365 = vunpack.c.h.b16 %v10058
    %v10366 = vunpack.c.l.b16 %v10059
    %v10367 = vunpack.c.h.b16 %v10059
    %v10368 = vunpack.c.l.b16 %v10060
    %v10369 = vunpack.c.h.b16 %v10060
    %v10370 = vunpack.c.l.b16 %v10061
    %v10371 = vunpack.c.h.b16 %v10061
    %v10372 = vunpack.c.l.b16 %v10062
    %v10373 = vunpack.c.h.b16 %v10062
    %v10374 = vunpack.c.l.b16 %v10063
    %v10375 = vunpack.c.h.b16 %v10063
    %v10376 = vunpack.c.l.b16 %v10064
    %v10377 = vunpack.c.h.b16 %v10064
    %v10378 = vunpack.c.l.b16 %v10065
    %v10379 = vunpack.c.h.b16 %v10065
    %v10380 = vunpack.c.l.b16 %v10066
    %v10381 = vunpack.c.h.b16 %v10066
    %v10382 = vunpack.c.l.b16 %v10067
    %v10383 = vunpack.c.h.b16 %v10067
    %v10384 = vunpack.c.l.b16 %v10068
    %v10385 = vunpack.c.h.b16 %v10068
    %v10386 = vunpack.c.l.b16 %v10069
    %v10387 = vunpack.c.h.b16 %v10069
    %v10388 = vunpack.c.l.b16 %v10070
    %v10389 = vunpack.c.h.b16 %v10070
    %v10390 = vunpack.c.l.b16 %v10071
    %v10391 = vunpack.c.h.b16 %v10071
    %v10392 = vunpack.c.l.b16 %v10072
    %v10393 = vunpack.c.h.b16 %v10072
    %v10394 = vunpack.c.l.b16 %v10073
    %v10395 = vunpack.c.h.b16 %v10073
    %v10396 = vunpack.c.l.b16 %v10074
    %v10397 = vunpack.c.h.b16 %v10074
    %v10398 = vunpack.c.l.b16 %v10075
    %v10399 = vunpack.c.h.b16 %v10075
    %v10400 = vunpack.c.l.b16 %v10076
    %v10401 = vunpack.c.h.b16 %v10076
    %v10402 = vunpack.c.l.b16 %v10077
    %v10403 = vunpack.c.h.b16 %v10077
    %v10404 = vunpack.c.l.b16 %v10078
    %v10405 = vunpack.c.h.b16 %v10078
    %v10406 = vunpack.c.l.b16 %v10079
    %v10407 = vunpack.c.h.b16 %v10079
    %v10408 = vunpack.c.l.b16 %v10080
    %v10409 = vunpack.c.h.b16 %v10080
    %v10410 = vunpack.c.l.b16 %v10081
    %v10411 = vunpack.c.h.b16 %v10081
    %v10412 = vunpack.c.l.b16 %v10082
    %v10413 = vunpack.c.h.b16 %v10082
    %v10414 = vunpack.c.l.b16 %v10083
    %v10415 = vunpack.c.h.b16 %v10083
    %v10416 = vunpack.c.l.b16 %v10084
    %v10417 = vunpack.c.h.b16 %v10084
    %v10418 = vunpack.c.l.b16 %v10085
    %v10419 = vunpack.c.h.b16 %v10085
    %v10420 = vunpack.c.l.b16 %v10086
    %v10421 = vunpack.c.h.b16 %v10086
    %v10422 = vunpack.c.l.b16 %v10087
    %v10423 = vunpack.c.h.b16 %v10087
    %v10424 = vunpack.c.l.b16 %v10088
    %v10425 = vunpack.c.h.b16 %v10088
    %v10426 = vunpack.c.l.b16 %v10089
    %v10427 = vunpack.c.h.b16 %v10089
    %v10428 = vunpack.c.l.b16 %v10090
    %v10429 = vunpack.c.h.b16 %v10090
    %v10430 = vunpack.c.l.b16 %v10091
    %v10431 = vunpack.c.h.b16 %v10091
    %v10432 = vunpack.c.l.b16 %v10092
    %v10433 = vunpack.c.h.b16 %v10092
    %v10434 = vunpack.c.l.b16 %v10093
    %v10435 = vunpack.c.h.b16 %v10093
    %v10436 = vunpack.c.l.b16 %v10094
    %v10437 = vunpack.c.h.b16 %v10094
    %v10438 = vunpack.c.l.b16 %v10095
    %v10439 = vunpack.c.h.b16 %v10095
    %v10440 = vunpack.c.l.b16 %v10096
    %v10441 = vunpack.c.h.b16 %v10096
    %v10442 = vunpack.c.l.b16 %v10097
    %v10443 = vunpack.c.h.b16 %v10097
    %v10444 = vunpack.c.l.b16 %v10098
    %v10445 = vunpack.c.h.b16 %v10098
    %v10446 = vunpack.c.l.b16 %v10099
    %v10447 = vunpack.c.h.b16 %v10099
    %v10448 = vunpack.c.l.b16 %v10100
    %v10449 = vunpack.c.h.b16 %v10100
    %v10450 = vunpack.c.l.b16 %v10101
    %v10451 = vunpack.c.h.b16 %v10101
    %v10452 = vunpack.c.l.b16 %v10102
    %v10453 = vunpack.c.h.b16 %v10102
    %v10454 = vunpack.c.l.b16 %v10103
    %v10455 = vunpack.c.h.b16 %v10103
    %v10456 = vunpack.c.l.b16 %v10104
    %v10457 = vunpack.c.h.b16 %v10104
    %v10458 = vunpack.c.l.b16 %v10105
    %v10459 = vunpack.c.h.b16 %v10105
    %v10460 = vunpack.c.l.b16 %v10106
    %v10461 = vunpack.c.h.b16 %v10106
    %v10462 = vunpack.c.l.b16 %v10107
    %v10463 = vunpack.c.h.b16 %v10107
    %v10464 = vunpack.c.l.b16 %v10108
    %v10465 = vunpack.c.h.b16 %v10108
    %v10466 = vunpack.c.l.b16 %v10109
    %v10467 = vunpack.c.h.b16 %v10109
    %v10468 = vunpack.c.l.b16 %v10110
    %v10469 = vunpack.c.h.b16 %v10110
    %v10470 = vunpack.c.l.b16 %v10111
    %v10471 = vunpack.c.h.b16 %v10111
    %v10472 = vunpack.c.l.b16 %v10112
    %v10473 = vunpack.c.h.b16 %v10112
    %v10474 = vunpack.c.l.b16 %v10113
    %v10475 = vunpack.c.h.b16 %v10113
    %v10476 = vunpack.c.l.b16 %v10114
    %v10477 = vunpack.c.h.b16 %v10114
    %v10478 = vunpack.c.l.b16 %v10115
    %v10479 = vunpack.c.h.b16 %v10115
    %v10480 = vunpack.c.l.b16 %v10116
    %v10481 = vunpack.c.h.b16 %v10116
    %v10482 = vunpack.c.l.b16 %v10117
    %v10483 = vunpack.c.h.b16 %v10117
    %v10484 = vunpack.c.l.b16 %v10118
    %v10485 = vunpack.c.h.b16 %v10118
    %v10486 = vunpack.c.l.b16 %v10119
    %v10487 = vunpack.c.h.b16 %v10119
    %v10488 = vunpack.c.l.b16 %v10120
    %v10489 = vunpack.c.h.b16 %v10120
    %v10490 = vunpack.c.l.b16 %v10121
    %v10491 = vunpack.c.h.b16 %v10121
    %v10492 = vunpack.c.l.b16 %v10122
    %v10493 = vunpack.c.h.b16 %v10122
    %v10494 = vunpack.c.l.b16 %v10123
    %v10495 = vunpack.c.h.b16 %v10123
    %v10496 = vunpack.c.l.b16 %v10124
    %v10497 = vunpack.c.h.b16 %v10124
    %v10498 = vunpack.c.l.b16 %v10125
    %v10499 = vunpack.c.h.b16 %v10125
    %v10500 = vunpack.c.l.b16 %v10126
    %v10501 = vunpack.c.h.b16 %v10126
    %v10502 = vunpack.c.l.b16 %v10127
    %v10503 = vunpack.c.h.b16 %v10127
    %v10504 = vunpack.c.l.b16 %v10128
    %v10505 = vunpack.c.h.b16 %v10128
    %v10506 = vunpack.c.l.b16 %v10129
    %v10507 = vunpack.c.h.b16 %v10129
    %v10508 = vunpack.c.l.b16 %v10130
    %v10509 = vunpack.c.h.b16 %v10130
    %v10510 = vunpack.c.l.b16 %v10131
    %v10511 = vunpack.c.h.b16 %v10131
    %v10512 = vunpack.c.l.b16 %v10132
    %v10513 = vunpack.c.h.b16 %v10132
    %v10514 = vunpack.c.l.b16 %v10133
    %v10515 = vunpack.c.h.b16 %v10133
    %v10516 = vunpack.c.l.b16 %v10134
    %v10517 = vunpack.c.h.b16 %v10134
    %v10518 = vunpack.c.l.b16 %v10135
    %v10519 = vunpack.c.h.b16 %v10135
    %v10520 = vpack.c.b16 %v10272, %v10264
    %v10521 = vpack.c.b16 %v10273, %v10265
    %v10522 = vpack.c.b16 %v10274, %v10266
    %v10523 = vpack.c.b16 %v10275, %v10267
    %v10524 = vpack.c.b16 %v10276, %v10268
    %v10525 = vpack.c.b16 %v10277, %v10269
    %v10526 = vpack.c.b16 %v10278, %v10270
    %v10527 = vpack.c.b16 %v10279, %v10271
    %v10528 = vpack.c.b16 %v10288, %v10280
    %v10529 = vpack.c.b16 %v10289, %v10281
    %v10530 = vpack.c.b16 %v10290, %v10282
    %v10531 = vpack.c.b16 %v10291, %v10283
    %v10532 = vpack.c.b16 %v10292, %v10284
    %v10533 = vpack.c.b16 %v10293, %v10285
    %v10534 = vpack.c.b16 %v10294, %v10286
    %v10535 = vpack.c.b16 %v10295, %v10287
    %v10536 = vpack.c.b16 %v10304, %v10296
    %v10537 = vpack.c.b16 %v10305, %v10297
    %v10538 = vpack.c.b16 %v10306, %v10298
    %v10539 = vpack.c.b16 %v10307, %v10299
    %v10540 = vpack.c.b16 %v10308, %v10300
    %v10541 = vpack.c.b16 %v10309, %v10301
    %v10542 = vpack.c.b16 %v10310, %v10302
    %v10543 = vpack.c.b16 %v10311, %v10303
    %v10544 = vpack.c.b16 %v10320, %v10312
    %v10545 = vpack.c.b16 %v10321, %v10313
    %v10546 = vpack.c.b16 %v10322, %v10314
    %v10547 = vpack.c.b16 %v10323, %v10315
    %v10548 = vpack.c.b16 %v10324, %v10316
    %v10549 = vpack.c.b16 %v10325, %v10317
    %v10550 = vpack.c.b16 %v10326, %v10318
    %v10551 = vpack.c.b16 %v10327, %v10319
    %v10552 = vpack.c.b16 %v10336, %v10328
    %v10553 = vpack.c.b16 %v10337, %v10329
    %v10554 = vpack.c.b16 %v10338, %v10330
    %v10555 = vpack.c.b16 %v10339, %v10331
    %v10556 = vpack.c.b16 %v10340, %v10332
    %v10557 = vpack.c.b16 %v10341, %v10333
    %v10558 = vpack.c.b16 %v10342, %v10334
    %v10559 = vpack.c.b16 %v10343, %v10335
    %v10560 = vpack.c.b16 %v10352, %v10344
    %v10561 = vpack.c.b16 %v10353, %v10345
    %v10562 = vpack.c.b16 %v10354, %v10346
    %v10563 = vpack.c.b16 %v10355, %v10347
    %v10564 = vpack.c.b16 %v10356, %v10348
    %v10565 = vpack.c.b16 %v10357, %v10349
    %v10566 = vpack.c.b16 %v10358, %v10350
    %v10567 = vpack.c.b16 %v10359, %v10351
    %v10568 = vpack.c.b16 %v10368, %v10360
    %v10569 = vpack.c.b16 %v10369, %v10361
    %v10570 = vpack.c.b16 %v10370, %v10362
    %v10571 = vpack.c.b16 %v10371, %v10363
    %v10572 = vpack.c.b16 %v10372, %v10364
    %v10573 = vpack.c.b16 %v10373, %v10365
    %v10574 = vpack.c.b16 %v10374, %v10366
    %v10575 = vpack.c.b16 %v10375, %v10367
    %v10576 = vpack.c.b16 %v10384, %v10376
    %v10577 = vpack.c.b16 %v10385, %v10377
    %v10578 = vpack.c.b16 %v10386, %v10378
    %v10579 = vpack.c.b16 %v10387, %v10379
    %v10580 = vpack.c.b16 %v10388, %v10380
    %v10581 = vpack.c.b16 %v10389, %v10381
    %v10582 = vpack.c.b16 %v10390, %v10382
    %v10583 = vpack.c.b16 %v10391, %v10383
    %v10584 = vpack.c.b16 %v10400, %v10392
    %v10585 = vpack.c.b16 %v10401, %v10393
    %v10586 = vpack.c.b16 %v10402, %v10394
    %v10587 = vpack.c.b16 %v10403, %v10395
    %v10588 = vpack.c.b16 %v10404, %v10396
    %v10589 = vpack.c.b16 %v10405, %v10397
    %v10590 = vpack.c.b16 %v10406, %v10398
    %v10591 = vpack.c.b16 %v10407, %v10399
    %v10592 = vpack.c.b16 %v10416, %v10408
    %v10593 = vpack.c.b16 %v10417, %v10409
    %v10594 = vpack.c.b16 %v10418, %v10410
    %v10595 = vpack.c.b16 %v10419, %v10411
    %v10596 = vpack.c.b16 %v10420, %v10412
    %v10597 = vpack.c.b16 %v10421, %v10413
    %v10598 = vpack.c.b16 %v10422, %v10414
    %v10599 = vpack.c.b16 %v10423, %v10415
    %v10600 = vpack.c.b16 %v10432, %v10424
    %v10601 = vpack.c.b16 %v10433, %v10425
    %v10602 = vpack.c.b16 %v10434, %v10426
    %v10603 = vpack.c.b16 %v10435, %v10427
    %v10604 = vpack.c.b16 %v10436, %v10428
    %v10605 = vpack.c.b16 %v10437, %v10429
    %v10606 = vpack.c.b16 %v10438, %v10430
    %v10607 = vpack.c.b16 %v10439, %v10431
    %v10608 = vpack.c.b16 %v10448, %v10440
    %v10609 = vpack.c.b16 %v10449, %v10441
    %v10610 = vpack.c.b16 %v10450, %v10442
    %v10611 = vpack.c.b16 %v10451, %v10443
    %v10612 = vpack.c.b16 %v10452, %v10444
    %v10613 = vpack.c.b16 %v10453, %v10445
    %v10614 = vpack.c.b16 %v10454, %v10446
    %v10615 = vpack.c.b16 %v10455, %v10447
    %v10616 = vpack.c.b16 %v10464, %v10456
    %v10617 = vpack.c.b16 %v10465, %v10457
    %v10618 = vpack.c.b16 %v10466, %v10458
    %v10619 = vpack.c.b16 %v10467, %v10459
    %v10620 = vpack.c.b16 %v10468, %v10460
    %v10621 = vpack.c.b16 %v10469, %v10461
    %v10622 = vpack.c.b16 %v10470, %v10462
    %v10623 = vpack.c.b16 %v10471, %v10463
    %v10624 = vpack.c.b16 %v10480, %v10472
    %v10625 = vpack.c.b16 %v10481, %v10473
    %v10626 = vpack.c.b16 %v10482, %v10474
    %v10627 = vpack.c.b16 %v10483, %v10475
    %v10628 = vpack.c.b16 %v10484, %v10476
    %v10629 = vpack.c.b16 %v10485, %v10477
    %v10630 = vpack.c.b16 %v10486, %v10478
    %v10631 = vpack.c.b16 %v10487, %v10479
    %v10632 = vpack.c.b16 %v10496, %v10488
    %v10633 = vpack.c.b16 %v10497, %v10489
    %v10634 = vpack.c.b16 %v10498, %v10490
    %v10635 = vpack.c.b16 %v10499, %v10491
    %v10636 = vpack.c.b16 %v10500, %v10492
    %v10637 = vpack.c.b16 %v10501, %v10493
    %v10638 = vpack.c.b16 %v10502, %v10494
    %v10639 = vpack.c.b16 %v10503, %v10495
    %v10640 = vpack.c.b16 %v10512, %v10504
    %v10641 = vpack.c.b16 %v10513, %v10505
    %v10642 = vpack.c.b16 %v10514, %v10506
    %v10643 = vpack.c.b16 %v10515, %v10507
    %v10644 = vpack.c.b16 %v10516, %v10508
    %v10645 = vpack.c.b16 %v10517, %v10509
    %v10646 = vpack.c.b16 %v10518, %v10510
    %v10647 = vpack.c.b16 %v10519, %v10511
    %10776 = vmatprep.subr.bf16.mxu0 %v10521
    %10777 = vmatpush1.bf16.msra.mxu0 %v10520
    %10778 = vmatprep.subr.bf16.mxu0 %v10529
    %10779 = vmatpush1.bf16.msra.mxu0 %v10528
    %10780 = vmatprep.subr.bf16.mxu0 %v10537
    %10781 = vmatpush1.bf16.msra.mxu0 %v10536
    %10782 = vmatprep.subr.bf16.mxu0 %v10545
    %10783 = vmatpush1.bf16.msra.mxu0 %v10544
    %10784 = vmatprep.subr.bf16.mxu0 %v10553
    %10785 = vmatpush1.bf16.msra.mxu0 %v10552
    %10786 = vmatprep.subr.bf16.mxu0 %v10561
    %10787 = vmatpush1.bf16.msra.mxu0 %v10560
    %10788 = vmatprep.subr.bf16.mxu0 %v10569
    %10789 = vmatpush1.bf16.msra.mxu0 %v10568
    %10790 = vmatprep.subr.bf16.mxu0 %v10577
    %10791 = vmatpush1.bf16.msra.mxu0 %v10576
    %10792 = vmatprep.subr.bf16.mxu0 %v10585
    %10793 = vmatpush1.bf16.msra.mxu0 %v10584
    %10794 = vmatprep.subr.bf16.mxu0 %v10593
    %10795 = vmatpush1.bf16.msra.mxu0 %v10592
    %10796 = vmatprep.subr.bf16.mxu0 %v10601
    %10797 = vmatpush1.bf16.msra.mxu0 %v10600
    %10798 = vmatprep.subr.bf16.mxu0 %v10609
    %10799 = vmatpush1.bf16.msra.mxu0 %v10608
    %10800 = vmatprep.subr.bf16.mxu0 %v10617
    %10801 = vmatpush1.bf16.msra.mxu0 %v10616
    %10802 = vmatprep.subr.bf16.mxu0 %v10625
    %10803 = vmatpush1.bf16.msra.mxu0 %v10624
    %10804 = vmatprep.subr.bf16.mxu0 %v10633
    %10805 = vmatpush1.bf16.msra.mxu0 %v10632
    %10806 = vmatprep.subr.bf16.mxu0 %v10641
    %10807 = vmatpush1.bf16.msra.mxu0 %v10640
    %10808 = vmatprep.mubr.bf16.mxu0 %v10007
    %10809 = vmatmul.mubr.bf16.gmra.mrb[0].mxu0 %v10006
    %v10810 = vpop.f32.mrb[0].mxu0
    %v10811 = vadd.f32 0.0, %v10810
    %v10812 = vpop.f32.mrb[0].mxu0
    %v10813 = vadd.f32 0.0, %v10812
    %v10814 = vpop.f32.mrb[0].mxu0
    %v10815 = vpop.f32.mrb[0].mxu0
    %10816 = vdwg.mxu0
    %10817 = vmatprep.subr.bf16.mxu0 %v10523
    %10818 = vmatpush1.bf16.msra.mxu0 %v10522
    %10819 = vmatprep.subr.bf16.mxu0 %v10531
    %10820 = vmatpush1.bf16.msra.mxu0 %v10530
    %10821 = vmatprep.subr.bf16.mxu0 %v10539
    %10822 = vmatpush1.bf16.msra.mxu0 %v10538
    %10823 = vmatprep.subr.bf16.mxu0 %v10547
    %10824 = vmatpush1.bf16.msra.mxu0 %v10546
    %10825 = vmatprep.subr.bf16.mxu0 %v10555
    %10826 = vmatpush1.bf16.msra.mxu0 %v10554
    %10827 = vmatprep.subr.bf16.mxu0 %v10563
    %10828 = vmatpush1.bf16.msra.mxu0 %v10562
    %10829 = vmatprep.subr.bf16.mxu0 %v10571
    %10830 = vmatpush1.bf16.msra.mxu0 %v10570
    %10831 = vmatprep.subr.bf16.mxu0 %v10579
    %10832 = vmatpush1.bf16.msra.mxu0 %v10578
    %10833 = vmatprep.subr.bf16.mxu0 %v10587
    %10834 = vmatpush1.bf16.msra.mxu0 %v10586
    %10835 = vmatprep.subr.bf16.mxu0 %v10595
    %10836 = vmatpush1.bf16.msra.mxu0 %v10594
    %10837 = vmatprep.subr.bf16.mxu0 %v10603
    %10838 = vmatpush1.bf16.msra.mxu0 %v10602
    %10839 = vmatprep.subr.bf16.mxu0 %v10611
    %10840 = vmatpush1.bf16.msra.mxu0 %v10610
    %10841 = vmatprep.subr.bf16.mxu0 %v10619
    %10842 = vmatpush1.bf16.msra.mxu0 %v10618
    %10843 = vmatprep.subr.bf16.mxu0 %v10627
    %10844 = vmatpush1.bf16.msra.mxu0 %v10626
    %10845 = vmatprep.subr.bf16.mxu0 %v10635
    %10846 = vmatpush1.bf16.msra.mxu0 %v10634
    %10847 = vmatprep.subr.bf16.mxu0 %v10643
    %10848 = vmatpush1.bf16.msra.mxu0 %v10642
    %10849 = vmatprep.mubr.bf16.mxu0 %v10007
    %10850 = vmatmul.mubr.bf16.gmra.mrb[0].mxu0 %v10006
    %v10851 = vpop.f32.mrb[0].mxu0
    %v10852 = vadd.f32 0.0, %v10851
    %v10853 = vpop.f32.mrb[0].mxu0
    %v10854 = vadd.f32 0.0, %v10853
    %v10855 = vpop.f32.mrb[0].mxu0
    %v10856 = vpop.f32.mrb[0].mxu0
    %10857 = vdwg.mxu0
    %10858 = vmatprep.subr.bf16.mxu0 %v10525
    %10859 = vmatpush1.bf16.msra.mxu0 %v10524
    %10860 = vmatprep.subr.bf16.mxu0 %v10533
    %10861 = vmatpush1.bf16.msra.mxu0 %v10532
    %10862 = vmatprep.subr.bf16.mxu0 %v10541
    %10863 = vmatpush1.bf16.msra.mxu0 %v10540
    %10864 = vmatprep.subr.bf16.mxu0 %v10549
    %10865 = vmatpush1.bf16.msra.mxu0 %v10548
    %10866 = vmatprep.subr.bf16.mxu0 %v10557
    %10867 = vmatpush1.bf16.msra.mxu0 %v10556
    %10868 = vmatprep.subr.bf16.mxu0 %v10565
    %10869 = vmatpush1.bf16.msra.mxu0 %v10564
    %10870 = vmatprep.subr.bf16.mxu0 %v10573
    %10871 = vmatpush1.bf16.msra.mxu0 %v10572
    %10872 = vmatprep.subr.bf16.mxu0 %v10581
    %10873 = vmatpush1.bf16.msra.mxu0 %v10580
    %10874 = vmatprep.subr.bf16.mxu0 %v10589
    %10875 = vmatpush1.bf16.msra.mxu0 %v10588
    %10876 = vmatprep.subr.bf16.mxu0 %v10597
    %10877 = vmatpush1.bf16.msra.mxu0 %v10596
    %10878 = vmatprep.subr.bf16.mxu0 %v10605
    %10879 = vmatpush1.bf16.msra.mxu0 %v10604
    %10880 = vmatprep.subr.bf16.mxu0 %v10613
    %10881 = vmatpush1.bf16.msra.mxu0 %v10612
    %10882 = vmatprep.subr.bf16.mxu0 %v10621
    %10883 = vmatpush1.bf16.msra.mxu0 %v10620
    %10884 = vmatprep.subr.bf16.mxu0 %v10629
    %10885 = vmatpush1.bf16.msra.mxu0 %v10628
    %10886 = vmatprep.subr.bf16.mxu0 %v10637
    %10887 = vmatpush1.bf16.msra.mxu0 %v10636
    %10888 = vmatprep.subr.bf16.mxu0 %v10645
    %10889 = vmatpush1.bf16.msra.mxu0 %v10644
    %10890 = vmatprep.mubr.bf16.mxu0 %v10007
    %10891 = vmatmul.mubr.bf16.gmra.mrb[0].mxu0 %v10006
    %v10892 = vpop.f32.mrb[0].mxu0
    %v10893 = vadd.f32 0.0, %v10892
    %v10894 = vpop.f32.mrb[0].mxu0
    %v10895 = vadd.f32 0.0, %v10894
    %v10896 = vpop.f32.mrb[0].mxu0
    %v10897 = vpop.f32.mrb[0].mxu0
    %10898 = vdwg.mxu0
    %10899 = vmatprep.subr.bf16.mxu0 %v10527
    %10900 = vmatpush1.bf16.msra.mxu0 %v10526
    %10901 = vmatprep.subr.bf16.mxu0 %v10535
    %10902 = vmatpush1.bf16.msra.mxu0 %v10534
    %10903 = vmatprep.subr.bf16.mxu0 %v10543
    %10904 = vmatpush1.bf16.msra.mxu0 %v10542
    %10905 = vmatprep.subr.bf16.mxu0 %v10551
    %10906 = vmatpush1.bf16.msra.mxu0 %v10550
    %10907 = vmatprep.subr.bf16.mxu0 %v10559
    %10908 = vmatpush1.bf16.msra.mxu0 %v10558
    %10909 = vmatprep.subr.bf16.mxu0 %v10567
    %10910 = vmatpush1.bf16.msra.mxu0 %v10566
    %10911 = vmatprep.subr.bf16.mxu0 %v10575
    %10912 = vmatpush1.bf16.msra.mxu0 %v10574
    %10913 = vmatprep.subr.bf16.mxu0 %v10583
    %10914 = vmatpush1.bf16.msra.mxu0 %v10582
    %10915 = vmatprep.subr.bf16.mxu0 %v10591
    %10916 = vmatpush1.bf16.msra.mxu0 %v10590
    %10917 = vmatprep.subr.bf16.mxu0 %v10599
    %10918 = vmatpush1.bf16.msra.mxu0 %v10598
    %10919 = vmatprep.subr.bf16.mxu0 %v10607
    %10920 = vmatpush1.bf16.msra.mxu0 %v10606
    %10921 = vmatprep.subr.bf16.mxu0 %v10615
    %10922 = vmatpush1.bf16.msra.mxu0 %v10614
    %10923 = vmatprep.subr.bf16.mxu0 %v10623
    %10924 = vmatpush1.bf16.msra.mxu0 %v10622
    %10925 = vmatprep.subr.bf16.mxu0 %v10631
    %10926 = vmatpush1.bf16.msra.mxu0 %v10630
    %10927 = vmatprep.subr.bf16.mxu0 %v10639
    %10928 = vmatpush1.bf16.msra.mxu0 %v10638
    %10929 = vmatprep.subr.bf16.mxu0 %v10647
    %10930 = vmatpush1.bf16.msra.mxu0 %v10646
    %10931 = vmatprep.mubr.bf16.mxu0 %v10007
    %10932 = vmatmul.mubr.bf16.gmra.mrb[0].mxu0 %v10006
    %v10933 = vpop.f32.mrb[0].mxu0
    %v10934 = vadd.f32 0.0, %v10933
    %v10935 = vpop.f32.mrb[0].mxu0
    %v10936 = vadd.f32 0.0, %v10935
    %v10937 = vpop.f32.mrb[0].mxu0
    %v10938 = vpop.f32.mrb[0].mxu0
    %10939 = vdwg.mxu0
    %v10940 = vadd.f32 %v3599, %v10811
    %v10941 = vadd.f32 %v3601, %v10813
    %v10942 = vadd.f32 %v3745, %v10852
    %v10943 = vadd.f32 %v3747, %v10854
    %v10944 = vadd.f32 %v3891, %v10893
    %v10945 = vadd.f32 %v3893, %v10895
    %v10946 = vadd.f32 %v4037, %v10934
    %v10947 = vadd.f32 %v4039, %v10936
    %v10948 = vxor.u32 %v10940, 2147483648
    %v10949 = vxor.u32 %v10941, 2147483648
    %v10950 = vmul.f32 %v10948, 1.442695
    %v10951 = vpow.pop %v10950
    %v10952 = vmul.f32 %v10949, 1.442695
    %v10953 = vpow.pop %v10952
    %v10954 = vadd.f32 %v10951, 1.0
    %v10955 = vadd.f32 %v10953, 1.0
    %v10956 = vrcp.pop %v10954
    %v10957 = vmul.f32 1.0, %v10956
    %v10958 = vrcp.pop %v10955
    %v10959 = vmul.f32 1.0, %v10958
    %v10960 = vxor.u32 %v10942, 2147483648
    %v10961 = vxor.u32 %v10943, 2147483648
    %v10962 = vmul.f32 %v10960, 1.442695
    %v10963 = vpow.pop %v10962
    %v10964 = vmul.f32 %v10961, 1.442695
    %v10965 = vpow.pop %v10964
    %v10966 = vadd.f32 %v10963, 1.0
    %v10967 = vadd.f32 %v10965, 1.0
    %v10968 = vrcp.pop %v10966
    %v10969 = vmul.f32 1.0, %v10968
    %v10970 = vrcp.pop %v10967
    %v10971 = vmul.f32 1.0, %v10970
    %v10972 = vtanh.pop %v10944
    %v10973 = vtanh.pop %v10945
    %v10974 = vxor.u32 %v10946, 2147483648
    %v10975 = vxor.u32 %v10947, 2147483648
    %v10976 = vmul.f32 %v10974, 1.442695
    %v10977 = vpow.pop %v10976
    %v10978 = vmul.f32 %v10975, 1.442695
    %v10979 = vpow.pop %v10978
    %v10980 = vadd.f32 %v10977, 1.0
    %v10981 = vadd.f32 %v10979, 1.0
    %v10982 = vrcp.pop %v10980
    %v10983 = vmul.f32 1.0, %v10982
    %v10984 = vrcp.pop %v10981
    %v10985 = vmul.f32 1.0, %v10984
    %v10986 = vmul.f32 %v10969, %v9997
    %v10987 = vmul.f32 %v10971, %v9998
    %v10988 = vmul.f32 %v10957, %v10972
    %v10989 = vmul.f32 %v10959, %v10973
    %v10990 = vadd.f32 %v10986, %v10988
    %v10991 = vadd.f32 %v10987, %v10989
    %v10992 = vtanh.pop %v10990
    %v10993 = vtanh.pop %v10991
    %v10994 = vmul.f32 %v10983, %v10992
    %v10995 = vmul.f32 %v10985, %v10993
    %s10996 = scalar_lea.vmem [#allocation4], 96
    %10997 = vst [vmem:[%s10996] sm:$0xff] %v10994
    %10998 = vst [vmem:[%s10996 + $0x8] sm:$0xff] %v10995
    %v10999 = vpack.c.bf16 %v10994, %v10994
    %v11000 = vpack.c.bf16 %v10995, %v10995
    %v11001 = vld [vmem:[#allocation7] sm:$0xff]
    %v11002 = vld [vmem:[#allocation7 + $0x8] sm:$0xff]
    %v11003 = vld [vmem:[#allocation7 + $0x10] sm:$0xff]
    %v11004 = vld [vmem:[#allocation7 + $0x18] sm:$0xff]
    %v11005 = vld [vmem:[#allocation7 + $0x20] sm:$0xff]
    %v11006 = vld [vmem:[#allocation7 + $0x28] sm:$0xff]
    %v11007 = vld [vmem:[#allocation7 + $0x30] sm:$0xff]
    %v11008 = vld [vmem:[#allocation7 + $0x38] sm:$0xff]
    %v11009 = vld [vmem:[#allocation7 + $0x40] sm:$0xff]
    %v11010 = vld [vmem:[#allocation7 + $0x48] sm:$0xff]
    %v11011 = vld [vmem:[#allocation7 + $0x50] sm:$0xff]
    %v11012 = vld [vmem:[#allocation7 + $0x58] sm:$0xff]
    %v11013 = vld [vmem:[#allocation7 + $0x60] sm:$0xff]
    %v11014 = vld [vmem:[#allocation7 + $0x68] sm:$0xff]
    %v11015 = vld [vmem:[#allocation7 + $0x70] sm:$0xff]
    %v11016 = vld [vmem:[#allocation7 + $0x78] sm:$0xff]
    %v11017 = vld [vmem:[#allocation7 + $0x80] sm:$0xff]
    %v11018 = vld [vmem:[#allocation7 + $0x88] sm:$0xff]
    %v11019 = vld [vmem:[#allocation7 + $0x90] sm:$0xff]
    %v11020 = vld [vmem:[#allocation7 + $0x98] sm:$0xff]
    %v11021 = vld [vmem:[#allocation7 + $0xa0] sm:$0xff]
    %v11022 = vld [vmem:[#allocation7 + $0xa8] sm:$0xff]
    %v11023 = vld [vmem:[#allocation7 + $0xb0] sm:$0xff]
    %v11024 = vld [vmem:[#allocation7 + $0xb8] sm:$0xff]
    %v11025 = vld [vmem:[#allocation7 + $0xc0] sm:$0xff]
    %v11026 = vld [vmem:[#allocation7 + $0xc8] sm:$0xff]
    %v11027 = vld [vmem:[#allocation7 + $0xd0] sm:$0xff]
    %v11028 = vld [vmem:[#allocation7 + $0xd8] sm:$0xff]
    %v11029 = vld [vmem:[#allocation7 + $0xe0] sm:$0xff]
    %v11030 = vld [vmem:[#allocation7 + $0xe8] sm:$0xff]
    %v11031 = vld [vmem:[#allocation7 + $0xf0] sm:$0xff]
    %v11032 = vld [vmem:[#allocation7 + $0xf8] sm:$0xff]
    %v11033 = vld [vmem:[#allocation7 + $0x100] sm:$0xff]
    %v11034 = vld [vmem:[#allocation7 + $0x108] sm:$0xff]
    %v11035 = vld [vmem:[#allocation7 + $0x110] sm:$0xff]
    %v11036 = vld [vmem:[#allocation7 + $0x118] sm:$0xff]
    %v11037 = vld [vmem:[#allocation7 + $0x120] sm:$0xff]
    %v11038 = vld [vmem:[#allocation7 + $0x128] sm:$0xff]
    %v11039 = vld [vmem:[#allocation7 + $0x130] sm:$0xff]
    %v11040 = vld [vmem:[#allocation7 + $0x138] sm:$0xff]
    %v11041 = vld [vmem:[#allocation7 + $0x140] sm:$0xff]
    %v11042 = vld [vmem:[#allocation7 + $0x148] sm:$0xff]
    %v11043 = vld [vmem:[#allocation7 + $0x150] sm:$0xff]
    %v11044 = vld [vmem:[#allocation7 + $0x158] sm:$0xff]
    %v11045 = vld [vmem:[#allocation7 + $0x160] sm:$0xff]
    %v11046 = vld [vmem:[#allocation7 + $0x168] sm:$0xff]
    %v11047 = vld [vmem:[#allocation7 + $0x170] sm:$0xff]
    %v11048 = vld [vmem:[#allocation7 + $0x178] sm:$0xff]
    %v11049 = vld [vmem:[#allocation7 + $0x180] sm:$0xff]
    %v11050 = vld [vmem:[#allocation7 + $0x188] sm:$0xff]
    %v11051 = vld [vmem:[#allocation7 + $0x190] sm:$0xff]
    %v11052 = vld [vmem:[#allocation7 + $0x198] sm:$0xff]
    %v11053 = vld [vmem:[#allocation7 + $0x1a0] sm:$0xff]
    %v11054 = vld [vmem:[#allocation7 + $0x1a8] sm:$0xff]
    %v11055 = vld [vmem:[#allocation7 + $0x1b0] sm:$0xff]
    %v11056 = vld [vmem:[#allocation7 + $0x1b8] sm:$0xff]
    %v11057 = vld [vmem:[#allocation7 + $0x1c0] sm:$0xff]
    %v11058 = vld [vmem:[#allocation7 + $0x1c8] sm:$0xff]
    %v11059 = vld [vmem:[#allocation7 + $0x1d0] sm:$0xff]
    %v11060 = vld [vmem:[#allocation7 + $0x1d8] sm:$0xff]
    %v11061 = vld [vmem:[#allocation7 + $0x1e0] sm:$0xff]
    %v11062 = vld [vmem:[#allocation7 + $0x1e8] sm:$0xff]
    %v11063 = vld [vmem:[#allocation7 + $0x1f0] sm:$0xff]
    %v11064 = vld [vmem:[#allocation7 + $0x1f8] sm:$0xff]
    %v11065 = vld [vmem:[#allocation7 + $0x200] sm:$0xff]
    %v11066 = vld [vmem:[#allocation7 + $0x208] sm:$0xff]
    %v11067 = vld [vmem:[#allocation7 + $0x210] sm:$0xff]
    %v11068 = vld [vmem:[#allocation7 + $0x218] sm:$0xff]
    %v11069 = vld [vmem:[#allocation7 + $0x220] sm:$0xff]
    %v11070 = vld [vmem:[#allocation7 + $0x228] sm:$0xff]
    %v11071 = vld [vmem:[#allocation7 + $0x230] sm:$0xff]
    %v11072 = vld [vmem:[#allocation7 + $0x238] sm:$0xff]
    %v11073 = vld [vmem:[#allocation7 + $0x240] sm:$0xff]
    %v11074 = vld [vmem:[#allocation7 + $0x248] sm:$0xff]
    %v11075 = vld [vmem:[#allocation7 + $0x250] sm:$0xff]
    %v11076 = vld [vmem:[#allocation7 + $0x258] sm:$0xff]
    %v11077 = vld [vmem:[#allocation7 + $0x260] sm:$0xff]
    %v11078 = vld [vmem:[#allocation7 + $0x268] sm:$0xff]
    %v11079 = vld [vmem:[#allocation7 + $0x270] sm:$0xff]
    %v11080 = vld [vmem:[#allocation7 + $0x278] sm:$0xff]
    %v11081 = vld [vmem:[#allocation7 + $0x280] sm:$0xff]
    %v11082 = vld [vmem:[#allocation7 + $0x288] sm:$0xff]
    %v11083 = vld [vmem:[#allocation7 + $0x290] sm:$0xff]
    %v11084 = vld [vmem:[#allocation7 + $0x298] sm:$0xff]
    %v11085 = vld [vmem:[#allocation7 + $0x2a0] sm:$0xff]
    %v11086 = vld [vmem:[#allocation7 + $0x2a8] sm:$0xff]
    %v11087 = vld [vmem:[#allocation7 + $0x2b0] sm:$0xff]
    %v11088 = vld [vmem:[#allocation7 + $0x2b8] sm:$0xff]
    %v11089 = vld [vmem:[#allocation7 + $0x2c0] sm:$0xff]
    %v11090 = vld [vmem:[#allocation7 + $0x2c8] sm:$0xff]
    %v11091 = vld [vmem:[#allocation7 + $0x2d0] sm:$0xff]
    %v11092 = vld [vmem:[#allocation7 + $0x2d8] sm:$0xff]
    %v11093 = vld [vmem:[#allocation7 + $0x2e0] sm:$0xff]
    %v11094 = vld [vmem:[#allocation7 + $0x2e8] sm:$0xff]
    %v11095 = vld [vmem:[#allocation7 + $0x2f0] sm:$0xff]
    %v11096 = vld [vmem:[#allocation7 + $0x2f8] sm:$0xff]
    %v11097 = vld [vmem:[#allocation7 + $0x300] sm:$0xff]
    %v11098 = vld [vmem:[#allocation7 + $0x308] sm:$0xff]
    %v11099 = vld [vmem:[#allocation7 + $0x310] sm:$0xff]
    %v11100 = vld [vmem:[#allocation7 + $0x318] sm:$0xff]
    %v11101 = vld [vmem:[#allocation7 + $0x320] sm:$0xff]
    %v11102 = vld [vmem:[#allocation7 + $0x328] sm:$0xff]
    %v11103 = vld [vmem:[#allocation7 + $0x330] sm:$0xff]
    %v11104 = vld [vmem:[#allocation7 + $0x338] sm:$0xff]
    %v11105 = vld [vmem:[#allocation7 + $0x340] sm:$0xff]
    %v11106 = vld [vmem:[#allocation7 + $0x348] sm:$0xff]
    %v11107 = vld [vmem:[#allocation7 + $0x350] sm:$0xff]
    %v11108 = vld [vmem:[#allocation7 + $0x358] sm:$0xff]
    %v11109 = vld [vmem:[#allocation7 + $0x360] sm:$0xff]
    %v11110 = vld [vmem:[#allocation7 + $0x368] sm:$0xff]
    %v11111 = vld [vmem:[#allocation7 + $0x370] sm:$0xff]
    %v11112 = vld [vmem:[#allocation7 + $0x378] sm:$0xff]
    %v11113 = vld [vmem:[#allocation7 + $0x380] sm:$0xff]
    %v11114 = vld [vmem:[#allocation7 + $0x388] sm:$0xff]
    %v11115 = vld [vmem:[#allocation7 + $0x390] sm:$0xff]
    %v11116 = vld [vmem:[#allocation7 + $0x398] sm:$0xff]
    %v11117 = vld [vmem:[#allocation7 + $0x3a0] sm:$0xff]
    %v11118 = vld [vmem:[#allocation7 + $0x3a8] sm:$0xff]
    %v11119 = vld [vmem:[#allocation7 + $0x3b0] sm:$0xff]
    %v11120 = vld [vmem:[#allocation7 + $0x3b8] sm:$0xff]
    %v11121 = vld [vmem:[#allocation7 + $0x3c0] sm:$0xff]
    %v11122 = vld [vmem:[#allocation7 + $0x3c8] sm:$0xff]
    %v11123 = vld [vmem:[#allocation7 + $0x3d0] sm:$0xff]
    %v11124 = vld [vmem:[#allocation7 + $0x3d8] sm:$0xff]
    %v11125 = vld [vmem:[#allocation7 + $0x3e0] sm:$0xff]
    %v11126 = vld [vmem:[#allocation7 + $0x3e8] sm:$0xff]
    %v11127 = vld [vmem:[#allocation7 + $0x3f0] sm:$0xff]
    %v11128 = vld [vmem:[#allocation7 + $0x3f8] sm:$0xff]
    %v11257 = vunpack.c.l.b16 %v11001
    %v11258 = vunpack.c.h.b16 %v11001
    %v11259 = vunpack.c.l.b16 %v11002
    %v11260 = vunpack.c.h.b16 %v11002
    %v11261 = vunpack.c.l.b16 %v11003
    %v11262 = vunpack.c.h.b16 %v11003
    %v11263 = vunpack.c.l.b16 %v11004
    %v11264 = vunpack.c.h.b16 %v11004
    %v11265 = vunpack.c.l.b16 %v11005
    %v11266 = vunpack.c.h.b16 %v11005
    %v11267 = vunpack.c.l.b16 %v11006
    %v11268 = vunpack.c.h.b16 %v11006
    %v11269 = vunpack.c.l.b16 %v11007
    %v11270 = vunpack.c.h.b16 %v11007
    %v11271 = vunpack.c.l.b16 %v11008
    %v11272 = vunpack.c.h.b16 %v11008
    %v11273 = vunpack.c.l.b16 %v11009
    %v11274 = vunpack.c.h.b16 %v11009
    %v11275 = vunpack.c.l.b16 %v11010
    %v11276 = vunpack.c.h.b16 %v11010
    %v11277 = vunpack.c.l.b16 %v11011
    %v11278 = vunpack.c.h.b16 %v11011
    %v11279 = vunpack.c.l.b16 %v11012
    %v11280 = vunpack.c.h.b16 %v11012
    %v11281 = vunpack.c.l.b16 %v11013
    %v11282 = vunpack.c.h.b16 %v11013
    %v11283 = vunpack.c.l.b16 %v11014
    %v11284 = vunpack.c.h.b16 %v11014
    %v11285 = vunpack.c.l.b16 %v11015
    %v11286 = vunpack.c.h.b16 %v11015
    %v11287 = vunpack.c.l.b16 %v11016
    %v11288 = vunpack.c.h.b16 %v11016
    %v11289 = vunpack.c.l.b16 %v11017
    %v11290 = vunpack.c.h.b16 %v11017
    %v11291 = vunpack.c.l.b16 %v11018
    %v11292 = vunpack.c.h.b16 %v11018
    %v11293 = vunpack.c.l.b16 %v11019
    %v11294 = vunpack.c.h.b16 %v11019
    %v11295 = vunpack.c.l.b16 %v11020
    %v11296 = vunpack.c.h.b16 %v11020
    %v11297 = vunpack.c.l.b16 %v11021
    %v11298 = vunpack.c.h.b16 %v11021
    %v11299 = vunpack.c.l.b16 %v11022
    %v11300 = vunpack.c.h.b16 %v11022
    %v11301 = vunpack.c.l.b16 %v11023
    %v11302 = vunpack.c.h.b16 %v11023
    %v11303 = vunpack.c.l.b16 %v11024
    %v11304 = vunpack.c.h.b16 %v11024
    %v11305 = vunpack.c.l.b16 %v11025
    %v11306 = vunpack.c.h.b16 %v11025
    %v11307 = vunpack.c.l.b16 %v11026
    %v11308 = vunpack.c.h.b16 %v11026
    %v11309 = vunpack.c.l.b16 %v11027
    %v11310 = vunpack.c.h.b16 %v11027
    %v11311 = vunpack.c.l.b16 %v11028
    %v11312 = vunpack.c.h.b16 %v11028
    %v11313 = vunpack.c.l.b16 %v11029
    %v11314 = vunpack.c.h.b16 %v11029
    %v11315 = vunpack.c.l.b16 %v11030
    %v11316 = vunpack.c.h.b16 %v11030
    %v11317 = vunpack.c.l.b16 %v11031
    %v11318 = vunpack.c.h.b16 %v11031
    %v11319 = vunpack.c.l.b16 %v11032
    %v11320 = vunpack.c.h.b16 %v11032
    %v11321 = vunpack.c.l.b16 %v11033
    %v11322 = vunpack.c.h.b16 %v11033
    %v11323 = vunpack.c.l.b16 %v11034
    %v11324 = vunpack.c.h.b16 %v11034
    %v11325 = vunpack.c.l.b16 %v11035
    %v11326 = vunpack.c.h.b16 %v11035
    %v11327 = vunpack.c.l.b16 %v11036
    %v11328 = vunpack.c.h.b16 %v11036
    %v11329 = vunpack.c.l.b16 %v11037
    %v11330 = vunpack.c.h.b16 %v11037
    %v11331 = vunpack.c.l.b16 %v11038
    %v11332 = vunpack.c.h.b16 %v11038
    %v11333 = vunpack.c.l.b16 %v11039
    %v11334 = vunpack.c.h.b16 %v11039
    %v11335 = vunpack.c.l.b16 %v11040
    %v11336 = vunpack.c.h.b16 %v11040
    %v11337 = vunpack.c.l.b16 %v11041
    %v11338 = vunpack.c.h.b16 %v11041
    %v11339 = vunpack.c.l.b16 %v11042
    %v11340 = vunpack.c.h.b16 %v11042
    %v11341 = vunpack.c.l.b16 %v11043
    %v11342 = vunpack.c.h.b16 %v11043
    %v11343 = vunpack.c.l.b16 %v11044
    %v11344 = vunpack.c.h.b16 %v11044
    %v11345 = vunpack.c.l.b16 %v11045
    %v11346 = vunpack.c.h.b16 %v11045
    %v11347 = vunpack.c.l.b16 %v11046
    %v11348 = vunpack.c.h.b16 %v11046
    %v11349 = vunpack.c.l.b16 %v11047
    %v11350 = vunpack.c.h.b16 %v11047
    %v11351 = vunpack.c.l.b16 %v11048
    %v11352 = vunpack.c.h.b16 %v11048
    %v11353 = vunpack.c.l.b16 %v11049
    %v11354 = vunpack.c.h.b16 %v11049
    %v11355 = vunpack.c.l.b16 %v11050
    %v11356 = vunpack.c.h.b16 %v11050
    %v11357 = vunpack.c.l.b16 %v11051
    %v11358 = vunpack.c.h.b16 %v11051
    %v11359 = vunpack.c.l.b16 %v11052
    %v11360 = vunpack.c.h.b16 %v11052
    %v11361 = vunpack.c.l.b16 %v11053
    %v11362 = vunpack.c.h.b16 %v11053
    %v11363 = vunpack.c.l.b16 %v11054
    %v11364 = vunpack.c.h.b16 %v11054
    %v11365 = vunpack.c.l.b16 %v11055
    %v11366 = vunpack.c.h.b16 %v11055
    %v11367 = vunpack.c.l.b16 %v11056
    %v11368 = vunpack.c.h.b16 %v11056
    %v11369 = vunpack.c.l.b16 %v11057
    %v11370 = vunpack.c.h.b16 %v11057
    %v11371 = vunpack.c.l.b16 %v11058
    %v11372 = vunpack.c.h.b16 %v11058
    %v11373 = vunpack.c.l.b16 %v11059
    %v11374 = vunpack.c.h.b16 %v11059
    %v11375 = vunpack.c.l.b16 %v11060
    %v11376 = vunpack.c.h.b16 %v11060
    %v11377 = vunpack.c.l.b16 %v11061
    %v11378 = vunpack.c.h.b16 %v11061
    %v11379 = vunpack.c.l.b16 %v11062
    %v11380 = vunpack.c.h.b16 %v11062
    %v11381 = vunpack.c.l.b16 %v11063
    %v11382 = vunpack.c.h.b16 %v11063
    %v11383 = vunpack.c.l.b16 %v11064
    %v11384 = vunpack.c.h.b16 %v11064
    %v11385 = vunpack.c.l.b16 %v11065
    %v11386 = vunpack.c.h.b16 %v11065
    %v11387 = vunpack.c.l.b16 %v11066
    %v11388 = vunpack.c.h.b16 %v11066
    %v11389 = vunpack.c.l.b16 %v11067
    %v11390 = vunpack.c.h.b16 %v11067
    %v11391 = vunpack.c.l.b16 %v11068
    %v11392 = vunpack.c.h.b16 %v11068
    %v11393 = vunpack.c.l.b16 %v11069
    %v11394 = vunpack.c.h.b16 %v11069
    %v11395 = vunpack.c.l.b16 %v11070
    %v11396 = vunpack.c.h.b16 %v11070
    %v11397 = vunpack.c.l.b16 %v11071
    %v11398 = vunpack.c.h.b16 %v11071
    %v11399 = vunpack.c.l.b16 %v11072
    %v11400 = vunpack.c.h.b16 %v11072
    %v11401 = vunpack.c.l.b16 %v11073
    %v11402 = vunpack.c.h.b16 %v11073
    %v11403 = vunpack.c.l.b16 %v11074
    %v11404 = vunpack.c.h.b16 %v11074
    %v11405 = vunpack.c.l.b16 %v11075
    %v11406 = vunpack.c.h.b16 %v11075
    %v11407 = vunpack.c.l.b16 %v11076
    %v11408 = vunpack.c.h.b16 %v11076
    %v11409 = vunpack.c.l.b16 %v11077
    %v11410 = vunpack.c.h.b16 %v11077
    %v11411 = vunpack.c.l.b16 %v11078
    %v11412 = vunpack.c.h.b16 %v11078
    %v11413 = vunpack.c.l.b16 %v11079
    %v11414 = vunpack.c.h.b16 %v11079
    %v11415 = vunpack.c.l.b16 %v11080
    %v11416 = vunpack.c.h.b16 %v11080
    %v11417 = vunpack.c.l.b16 %v11081
    %v11418 = vunpack.c.h.b16 %v11081
    %v11419 = vunpack.c.l.b16 %v11082
    %v11420 = vunpack.c.h.b16 %v11082
    %v11421 = vunpack.c.l.b16 %v11083
    %v11422 = vunpack.c.h.b16 %v11083
    %v11423 = vunpack.c.l.b16 %v11084
    %v11424 = vunpack.c.h.b16 %v11084
    %v11425 = vunpack.c.l.b16 %v11085
    %v11426 = vunpack.c.h.b16 %v11085
    %v11427 = vunpack.c.l.b16 %v11086
    %v11428 = vunpack.c.h.b16 %v11086
    %v11429 = vunpack.c.l.b16 %v11087
    %v11430 = vunpack.c.h.b16 %v11087
    %v11431 = vunpack.c.l.b16 %v11088
    %v11432 = vunpack.c.h.b16 %v11088
    %v11433 = vunpack.c.l.b16 %v11089
    %v11434 = vunpack.c.h.b16 %v11089
    %v11435 = vunpack.c.l.b16 %v11090
    %v11436 = vunpack.c.h.b16 %v11090
    %v11437 = vunpack.c.l.b16 %v11091
    %v11438 = vunpack.c.h.b16 %v11091
    %v11439 = vunpack.c.l.b16 %v11092
    %v11440 = vunpack.c.h.b16 %v11092
    %v11441 = vunpack.c.l.b16 %v11093
    %v11442 = vunpack.c.h.b16 %v11093
    %v11443 = vunpack.c.l.b16 %v11094
    %v11444 = vunpack.c.h.b16 %v11094
    %v11445 = vunpack.c.l.b16 %v11095
    %v11446 = vunpack.c.h.b16 %v11095
    %v11447 = vunpack.c.l.b16 %v11096
    %v11448 = vunpack.c.h.b16 %v11096
    %v11449 = vunpack.c.l.b16 %v11097
    %v11450 = vunpack.c.h.b16 %v11097
    %v11451 = vunpack.c.l.b16 %v11098
    %v11452 = vunpack.c.h.b16 %v11098
    %v11453 = vunpack.c.l.b16 %v11099
    %v11454 = vunpack.c.h.b16 %v11099
    %v11455 = vunpack.c.l.b16 %v11100
    %v11456 = vunpack.c.h.b16 %v11100
    %v11457 = vunpack.c.l.b16 %v11101
    %v11458 = vunpack.c.h.b16 %v11101
    %v11459 = vunpack.c.l.b16 %v11102
    %v11460 = vunpack.c.h.b16 %v11102
    %v11461 = vunpack.c.l.b16 %v11103
    %v11462 = vunpack.c.h.b16 %v11103
    %v11463 = vunpack.c.l.b16 %v11104
    %v11464 = vunpack.c.h.b16 %v11104
    %v11465 = vunpack.c.l.b16 %v11105
    %v11466 = vunpack.c.h.b16 %v11105
    %v11467 = vunpack.c.l.b16 %v11106
    %v11468 = vunpack.c.h.b16 %v11106
    %v11469 = vunpack.c.l.b16 %v11107
    %v11470 = vunpack.c.h.b16 %v11107
    %v11471 = vunpack.c.l.b16 %v11108
    %v11472 = vunpack.c.h.b16 %v11108
    %v11473 = vunpack.c.l.b16 %v11109
    %v11474 = vunpack.c.h.b16 %v11109
    %v11475 = vunpack.c.l.b16 %v11110
    %v11476 = vunpack.c.h.b16 %v11110
    %v11477 = vunpack.c.l.b16 %v11111
    %v11478 = vunpack.c.h.b16 %v11111
    %v11479 = vunpack.c.l.b16 %v11112
    %v11480 = vunpack.c.h.b16 %v11112
    %v11481 = vunpack.c.l.b16 %v11113
    %v11482 = vunpack.c.h.b16 %v11113
    %v11483 = vunpack.c.l.b16 %v11114
    %v11484 = vunpack.c.h.b16 %v11114
    %v11485 = vunpack.c.l.b16 %v11115
    %v11486 = vunpack.c.h.b16 %v11115
    %v11487 = vunpack.c.l.b16 %v11116
    %v11488 = vunpack.c.h.b16 %v11116
    %v11489 = vunpack.c.l.b16 %v11117
    %v11490 = vunpack.c.h.b16 %v11117
    %v11491 = vunpack.c.l.b16 %v11118
    %v11492 = vunpack.c.h.b16 %v11118
    %v11493 = vunpack.c.l.b16 %v11119
    %v11494 = vunpack.c.h.b16 %v11119
    %v11495 = vunpack.c.l.b16 %v11120
    %v11496 = vunpack.c.h.b16 %v11120
    %v11497 = vunpack.c.l.b16 %v11121
    %v11498 = vunpack.c.h.b16 %v11121
    %v11499 = vunpack.c.l.b16 %v11122
    %v11500 = vunpack.c.h.b16 %v11122
    %v11501 = vunpack.c.l.b16 %v11123
    %v11502 = vunpack.c.h.b16 %v11123
    %v11503 = vunpack.c.l.b16 %v11124
    %v11504 = vunpack.c.h.b16 %v11124
    %v11505 = vunpack.c.l.b16 %v11125
    %v11506 = vunpack.c.h.b16 %v11125
    %v11507 = vunpack.c.l.b16 %v11126
    %v11508 = vunpack.c.h.b16 %v11126
    %v11509 = vunpack.c.l.b16 %v11127
    %v11510 = vunpack.c.h.b16 %v11127
    %v11511 = vunpack.c.l.b16 %v11128
    %v11512 = vunpack.c.h.b16 %v11128
    %v11513 = vpack.c.b16 %v11265, %v11257
    %v11514 = vpack.c.b16 %v11266, %v11258
    %v11515 = vpack.c.b16 %v11267, %v11259
    %v11516 = vpack.c.b16 %v11268, %v11260
    %v11517 = vpack.c.b16 %v11269, %v11261
    %v11518 = vpack.c.b16 %v11270, %v11262
    %v11519 = vpack.c.b16 %v11271, %v11263
    %v11520 = vpack.c.b16 %v11272, %v11264
    %v11521 = vpack.c.b16 %v11281, %v11273
    %v11522 = vpack.c.b16 %v11282, %v11274
    %v11523 = vpack.c.b16 %v11283, %v11275
    %v11524 = vpack.c.b16 %v11284, %v11276
    %v11525 = vpack.c.b16 %v11285, %v11277
    %v11526 = vpack.c.b16 %v11286, %v11278
    %v11527 = vpack.c.b16 %v11287, %v11279
    %v11528 = vpack.c.b16 %v11288, %v11280
    %v11529 = vpack.c.b16 %v11297, %v11289
    %v11530 = vpack.c.b16 %v11298, %v11290
    %v11531 = vpack.c.b16 %v11299, %v11291
    %v11532 = vpack.c.b16 %v11300, %v11292
    %v11533 = vpack.c.b16 %v11301, %v11293
    %v11534 = vpack.c.b16 %v11302, %v11294
    %v11535 = vpack.c.b16 %v11303, %v11295
    %v11536 = vpack.c.b16 %v11304, %v11296
    %v11537 = vpack.c.b16 %v11313, %v11305
    %v11538 = vpack.c.b16 %v11314, %v11306
    %v11539 = vpack.c.b16 %v11315, %v11307
    %v11540 = vpack.c.b16 %v11316, %v11308
    %v11541 = vpack.c.b16 %v11317, %v11309
    %v11542 = vpack.c.b16 %v11318, %v11310
    %v11543 = vpack.c.b16 %v11319, %v11311
    %v11544 = vpack.c.b16 %v11320, %v11312
    %v11545 = vpack.c.b16 %v11329, %v11321
    %v11546 = vpack.c.b16 %v11330, %v11322
    %v11547 = vpack.c.b16 %v11331, %v11323
    %v11548 = vpack.c.b16 %v11332, %v11324
    %v11549 = vpack.c.b16 %v11333, %v11325
    %v11550 = vpack.c.b16 %v11334, %v11326
    %v11551 = vpack.c.b16 %v11335, %v11327
    %v11552 = vpack.c.b16 %v11336, %v11328
    %v11553 = vpack.c.b16 %v11345, %v11337
    %v11554 = vpack.c.b16 %v11346, %v11338
    %v11555 = vpack.c.b16 %v11347, %v11339
    %v11556 = vpack.c.b16 %v11348, %v11340
    %v11557 = vpack.c.b16 %v11349, %v11341
    %v11558 = vpack.c.b16 %v11350, %v11342
    %v11559 = vpack.c.b16 %v11351, %v11343
    %v11560 = vpack.c.b16 %v11352, %v11344
    %v11561 = vpack.c.b16 %v11361, %v11353
    %v11562 = vpack.c.b16 %v11362, %v11354
    %v11563 = vpack.c.b16 %v11363, %v11355
    %v11564 = vpack.c.b16 %v11364, %v11356
    %v11565 = vpack.c.b16 %v11365, %v11357
    %v11566 = vpack.c.b16 %v11366, %v11358
    %v11567 = vpack.c.b16 %v11367, %v11359
    %v11568 = vpack.c.b16 %v11368, %v11360
    %v11569 = vpack.c.b16 %v11377, %v11369
    %v11570 = vpack.c.b16 %v11378, %v11370
    %v11571 = vpack.c.b16 %v11379, %v11371
    %v11572 = vpack.c.b16 %v11380, %v11372
    %v11573 = vpack.c.b16 %v11381, %v11373
    %v11574 = vpack.c.b16 %v11382, %v11374
    %v11575 = vpack.c.b16 %v11383, %v11375
    %v11576 = vpack.c.b16 %v11384, %v11376
    %v11577 = vpack.c.b16 %v11393, %v11385
    %v11578 = vpack.c.b16 %v11394, %v11386
    %v11579 = vpack.c.b16 %v11395, %v11387
    %v11580 = vpack.c.b16 %v11396, %v11388
    %v11581 = vpack.c.b16 %v11397, %v11389
    %v11582 = vpack.c.b16 %v11398, %v11390
    %v11583 = vpack.c.b16 %v11399, %v11391
    %v11584 = vpack.c.b16 %v11400, %v11392
    %v11585 = vpack.c.b16 %v11409, %v11401
    %v11586 = vpack.c.b16 %v11410, %v11402
    %v11587 = vpack.c.b16 %v11411, %v11403
    %v11588 = vpack.c.b16 %v11412, %v11404
    %v11589 = vpack.c.b16 %v11413, %v11405
    %v11590 = vpack.c.b16 %v11414, %v11406
    %v11591 = vpack.c.b16 %v11415, %v11407
    %v11592 = vpack.c.b16 %v11416, %v11408
    %v11593 = vpack.c.b16 %v11425, %v11417
    %v11594 = vpack.c.b16 %v11426, %v11418
    %v11595 = vpack.c.b16 %v11427, %v11419
    %v11596 = vpack.c.b16 %v11428, %v11420
    %v11597 = vpack.c.b16 %v11429, %v11421
    %v11598 = vpack.c.b16 %v11430, %v11422
    %v11599 = vpack.c.b16 %v11431, %v11423
    %v11600 = vpack.c.b16 %v11432, %v11424
    %v11601 = vpack.c.b16 %v11441, %v11433
    %v11602 = vpack.c.b16 %v11442, %v11434
    %v11603 = vpack.c.b16 %v11443, %v11435
    %v11604 = vpack.c.b16 %v11444, %v11436
    %v11605 = vpack.c.b16 %v11445, %v11437
    %v11606 = vpack.c.b16 %v11446, %v11438
    %v11607 = vpack.c.b16 %v11447, %v11439
    %v11608 = vpack.c.b16 %v11448, %v11440
    %v11609 = vpack.c.b16 %v11457, %v11449
    %v11610 = vpack.c.b16 %v11458, %v11450
    %v11611 = vpack.c.b16 %v11459, %v11451
    %v11612 = vpack.c.b16 %v11460, %v11452
    %v11613 = vpack.c.b16 %v11461, %v11453
    %v11614 = vpack.c.b16 %v11462, %v11454
    %v11615 = vpack.c.b16 %v11463, %v11455
    %v11616 = vpack.c.b16 %v11464, %v11456
    %v11617 = vpack.c.b16 %v11473, %v11465
    %v11618 = vpack.c.b16 %v11474, %v11466
    %v11619 = vpack.c.b16 %v11475, %v11467
    %v11620 = vpack.c.b16 %v11476, %v11468
    %v11621 = vpack.c.b16 %v11477, %v11469
    %v11622 = vpack.c.b16 %v11478, %v11470
    %v11623 = vpack.c.b16 %v11479, %v11471
    %v11624 = vpack.c.b16 %v11480, %v11472
    %v11625 = vpack.c.b16 %v11489, %v11481
    %v11626 = vpack.c.b16 %v11490, %v11482
    %v11627 = vpack.c.b16 %v11491, %v11483
    %v11628 = vpack.c.b16 %v11492, %v11484
    %v11629 = vpack.c.b16 %v11493, %v11485
    %v11630 = vpack.c.b16 %v11494, %v11486
    %v11631 = vpack.c.b16 %v11495, %v11487
    %v11632 = vpack.c.b16 %v11496, %v11488
    %v11633 = vpack.c.b16 %v11505, %v11497
    %v11634 = vpack.c.b16 %v11506, %v11498
    %v11635 = vpack.c.b16 %v11507, %v11499
    %v11636 = vpack.c.b16 %v11508, %v11500
    %v11637 = vpack.c.b16 %v11509, %v11501
    %v11638 = vpack.c.b16 %v11510, %v11502
    %v11639 = vpack.c.b16 %v11511, %v11503
    %v11640 = vpack.c.b16 %v11512, %v11504
    %11769 = vmatprep.subr.bf16.mxu0 %v11514
    %11770 = vmatpush1.bf16.msra.mxu0 %v11513
    %11771 = vmatprep.subr.bf16.mxu0 %v11522
    %11772 = vmatpush1.bf16.msra.mxu0 %v11521
    %11773 = vmatprep.subr.bf16.mxu0 %v11530
    %11774 = vmatpush1.bf16.msra.mxu0 %v11529
    %11775 = vmatprep.subr.bf16.mxu0 %v11538
    %11776 = vmatpush1.bf16.msra.mxu0 %v11537
    %11777 = vmatprep.subr.bf16.mxu0 %v11546
    %11778 = vmatpush1.bf16.msra.mxu0 %v11545
    %11779 = vmatprep.subr.bf16.mxu0 %v11554
    %11780 = vmatpush1.bf16.msra.mxu0 %v11553
    %11781 = vmatprep.subr.bf16.mxu0 %v11562
    %11782 = vmatpush1.bf16.msra.mxu0 %v11561
    %11783 = vmatprep.subr.bf16.mxu0 %v11570
    %11784 = vmatpush1.bf16.msra.mxu0 %v11569
    %11785 = vmatprep.subr.bf16.mxu0 %v11578
    %11786 = vmatpush1.bf16.msra.mxu0 %v11577
    %11787 = vmatprep.subr.bf16.mxu0 %v11586
    %11788 = vmatpush1.bf16.msra.mxu0 %v11585
    %11789 = vmatprep.subr.bf16.mxu0 %v11594
    %11790 = vmatpush1.bf16.msra.mxu0 %v11593
    %11791 = vmatprep.subr.bf16.mxu0 %v11602
    %11792 = vmatpush1.bf16.msra.mxu0 %v11601
    %11793 = vmatprep.subr.bf16.mxu0 %v11610
    %11794 = vmatpush1.bf16.msra.mxu0 %v11609
    %11795 = vmatprep.subr.bf16.mxu0 %v11618
    %11796 = vmatpush1.bf16.msra.mxu0 %v11617
    %11797 = vmatprep.subr.bf16.mxu0 %v11626
    %11798 = vmatpush1.bf16.msra.mxu0 %v11625
    %11799 = vmatprep.subr.bf16.mxu0 %v11634
    %11800 = vmatpush1.bf16.msra.mxu0 %v11633
    %11801 = vmatprep.mubr.bf16.mxu0 %v11000
    %11802 = vmatmul.mubr.bf16.gmra.mrb[0].mxu0 %v10999
    %v11803 = vpop.f32.mrb[0].mxu0
    %v11804 = vadd.f32 0.0, %v11803
    %v11805 = vpop.f32.mrb[0].mxu0
    %v11806 = vadd.f32 0.0, %v11805
    %v11807 = vpop.f32.mrb[0].mxu0
    %v11808 = vpop.f32.mrb[0].mxu0
    %11809 = vdwg.mxu0
    %11810 = vmatprep.subr.bf16.mxu0 %v11516
    %11811 = vmatpush1.bf16.msra.mxu0 %v11515
    %11812 = vmatprep.subr.bf16.mxu0 %v11524
    %11813 = vmatpush1.bf16.msra.mxu0 %v11523
    %11814 = vmatprep.subr.bf16.mxu0 %v11532
    %11815 = vmatpush1.bf16.msra.mxu0 %v11531
    %11816 = vmatprep.subr.bf16.mxu0 %v11540
    %11817 = vmatpush1.bf16.msra.mxu0 %v11539
    %11818 = vmatprep.subr.bf16.mxu0 %v11548
    %11819 = vmatpush1.bf16.msra.mxu0 %v11547
    %11820 = vmatprep.subr.bf16.mxu0 %v11556
    %11821 = vmatpush1.bf16.msra.mxu0 %v11555
    %11822 = vmatprep.subr.bf16.mxu0 %v11564
    %11823 = vmatpush1.bf16.msra.mxu0 %v11563
    %11824 = vmatprep.subr.bf16.mxu0 %v11572
    %11825 = vmatpush1.bf16.msra.mxu0 %v11571
    %11826 = vmatprep.subr.bf16.mxu0 %v11580
    %11827 = vmatpush1.bf16.msra.mxu0 %v11579
    %11828 = vmatprep.subr.bf16.mxu0 %v11588
    %11829 = vmatpush1.bf16.msra.mxu0 %v11587
    %11830 = vmatprep.subr.bf16.mxu0 %v11596
    %11831 = vmatpush1.bf16.msra.mxu0 %v11595
    %11832 = vmatprep.subr.bf16.mxu0 %v11604
    %11833 = vmatpush1.bf16.msra.mxu0 %v11603
    %11834 = vmatprep.subr.bf16.mxu0 %v11612
    %11835 = vmatpush1.bf16.msra.mxu0 %v11611
    %11836 = vmatprep.subr.bf16.mxu0 %v11620
    %11837 = vmatpush1.bf16.msra.mxu0 %v11619
    %11838 = vmatprep.subr.bf16.mxu0 %v11628
    %11839 = vmatpush1.bf16.msra.mxu0 %v11627
    %11840 = vmatprep.subr.bf16.mxu0 %v11636
    %11841 = vmatpush1.bf16.msra.mxu0 %v11635
    %11842 = vmatprep.mubr.bf16.mxu0 %v11000
    %11843 = vmatmul.mubr.bf16.gmra.mrb[0].mxu0 %v10999
    %v11844 = vpop.f32.mrb[0].mxu0
    %v11845 = vadd.f32 0.0, %v11844
    %v11846 = vpop.f32.mrb[0].mxu0
    %v11847 = vadd.f32 0.0, %v11846
    %v11848 = vpop.f32.mrb[0].mxu0
    %v11849 = vpop.f32.mrb[0].mxu0
    %11850 = vdwg.mxu0
    %11851 = vmatprep.subr.bf16.mxu0 %v11518
    %11852 = vmatpush1.bf16.msra.mxu0 %v11517
    %11853 = vmatprep.subr.bf16.mxu0 %v11526
    %11854 = vmatpush1.bf16.msra.mxu0 %v11525
    %11855 = vmatprep.subr.bf16.mxu0 %v11534
    %11856 = vmatpush1.bf16.msra.mxu0 %v11533
    %11857 = vmatprep.subr.bf16.mxu0 %v11542
    %11858 = vmatpush1.bf16.msra.mxu0 %v11541
    %11859 = vmatprep.subr.bf16.mxu0 %v11550
    %11860 = vmatpush1.bf16.msra.mxu0 %v11549
    %11861 = vmatprep.subr.bf16.mxu0 %v11558
    %11862 = vmatpush1.bf16.msra.mxu0 %v11557
    %11863 = vmatprep.subr.bf16.mxu0 %v11566
    %11864 = vmatpush1.bf16.msra.mxu0 %v11565
    %11865 = vmatprep.subr.bf16.mxu0 %v11574
    %11866 = vmatpush1.bf16.msra.mxu0 %v11573
    %11867 = vmatprep.subr.bf16.mxu0 %v11582
    %11868 = vmatpush1.bf16.msra.mxu0 %v11581
    %11869 = vmatprep.subr.bf16.mxu0 %v11590
    %11870 = vmatpush1.bf16.msra.mxu0 %v11589
    %11871 = vmatprep.subr.bf16.mxu0 %v11598
    %11872 = vmatpush1.bf16.msra.mxu0 %v11597
    %11873 = vmatprep.subr.bf16.mxu0 %v11606
    %11874 = vmatpush1.bf16.msra.mxu0 %v11605
    %11875 = vmatprep.subr.bf16.mxu0 %v11614
    %11876 = vmatpush1.bf16.msra.mxu0 %v11613
    %11877 = vmatprep.subr.bf16.mxu0 %v11622
    %11878 = vmatpush1.bf16.msra.mxu0 %v11621
    %11879 = vmatprep.subr.bf16.mxu0 %v11630
    %11880 = vmatpush1.bf16.msra.mxu0 %v11629
    %11881 = vmatprep.subr.bf16.mxu0 %v11638
    %11882 = vmatpush1.bf16.msra.mxu0 %v11637
    %11883 = vmatprep.mubr.bf16.mxu0 %v11000
    %11884 = vmatmul.mubr.bf16.gmra.mrb[0].mxu0 %v10999
    %v11885 = vpop.f32.mrb[0].mxu0
    %v11886 = vadd.f32 0.0, %v11885
    %v11887 = vpop.f32.mrb[0].mxu0
    %v11888 = vadd.f32 0.0, %v11887
    %v11889 = vpop.f32.mrb[0].mxu0
    %v11890 = vpop.f32.mrb[0].mxu0
    %11891 = vdwg.mxu0
    %11892 = vmatprep.subr.bf16.mxu0 %v11520
    %11893 = vmatpush1.bf16.msra.mxu0 %v11519
    %11894 = vmatprep.subr.bf16.mxu0 %v11528
    %11895 = vmatpush1.bf16.msra.mxu0 %v11527
    %11896 = vmatprep.subr.bf16.mxu0 %v11536
    %11897 = vmatpush1.bf16.msra.mxu0 %v11535
    %11898 = vmatprep.subr.bf16.mxu0 %v11544
    %11899 = vmatpush1.bf16.msra.mxu0 %v11543
    %11900 = vmatprep.subr.bf16.mxu0 %v11552
    %11901 = vmatpush1.bf16.msra.mxu0 %v11551
    %11902 = vmatprep.subr.bf16.mxu0 %v11560
    %11903 = vmatpush1.bf16.msra.mxu0 %v11559
    %11904 = vmatprep.subr.bf16.mxu0 %v11568
    %11905 = vmatpush1.bf16.msra.mxu0 %v11567
    %11906 = vmatprep.subr.bf16.mxu0 %v11576
    %11907 = vmatpush1.bf16.msra.mxu0 %v11575
    %11908 = vmatprep.subr.bf16.mxu0 %v11584
    %11909 = vmatpush1.bf16.msra.mxu0 %v11583
    %11910 = vmatprep.subr.bf16.mxu0 %v11592
    %11911 = vmatpush1.bf16.msra.mxu0 %v11591
    %11912 = vmatprep.subr.bf16.mxu0 %v11600
    %11913 = vmatpush1.bf16.msra.mxu0 %v11599
    %11914 = vmatprep.subr.bf16.mxu0 %v11608
    %11915 = vmatpush1.bf16.msra.mxu0 %v11607
    %11916 = vmatprep.subr.bf16.mxu0 %v11616
    %11917 = vmatpush1.bf16.msra.mxu0 %v11615
    %11918 = vmatprep.subr.bf16.mxu0 %v11624
    %11919 = vmatpush1.bf16.msra.mxu0 %v11623
    %11920 = vmatprep.subr.bf16.mxu0 %v11632
    %11921 = vmatpush1.bf16.msra.mxu0 %v11631
    %11922 = vmatprep.subr.bf16.mxu0 %v11640
    %11923 = vmatpush1.bf16.msra.mxu0 %v11639
    %11924 = vmatprep.mubr.bf16.mxu0 %v11000
    %11925 = vmatmul.mubr.bf16.gmra.mrb[0].mxu0 %v10999
    %v11926 = vpop.f32.mrb[0].mxu0
    %v11927 = vadd.f32 0.0, %v11926
    %v11928 = vpop.f32.mrb[0].mxu0
    %v11929 = vadd.f32 0.0, %v11928
    %v11930 = vpop.f32.mrb[0].mxu0
    %v11931 = vpop.f32.mrb[0].mxu0
    %11932 = vdwg.mxu0
    %v11933 = vadd.f32 %v3603, %v11804
    %v11934 = vadd.f32 %v3605, %v11806
    %v11935 = vadd.f32 %v3749, %v11845
    %v11936 = vadd.f32 %v3751, %v11847
    %v11937 = vadd.f32 %v3895, %v11886
    %v11938 = vadd.f32 %v3897, %v11888
    %v11939 = vadd.f32 %v4041, %v11927
    %v11940 = vadd.f32 %v4043, %v11929
    %v11941 = vxor.u32 %v11933, 2147483648
    %v11942 = vxor.u32 %v11934, 2147483648
    %v11943 = vmul.f32 %v11941, 1.442695
    %v11944 = vpow.pop %v11943
    %v11945 = vmul.f32 %v11942, 1.442695
    %v11946 = vpow.pop %v11945
    %v11947 = vadd.f32 %v11944, 1.0
    %v11948 = vadd.f32 %v11946, 1.0
    %v11949 = vrcp.pop %v11947
    %v11950 = vmul.f32 1.0, %v11949
    %v11951 = vrcp.pop %v11948
    %v11952 = vmul.f32 1.0, %v11951
    %v11953 = vxor.u32 %v11935, 2147483648
    %v11954 = vxor.u32 %v11936, 2147483648
    %v11955 = vmul.f32 %v11953, 1.442695
    %v11956 = vpow.pop %v11955
    %v11957 = vmul.f32 %v11954, 1.442695
    %v11958 = vpow.pop %v11957
    %v11959 = vadd.f32 %v11956, 1.0
    %v11960 = vadd.f32 %v11958, 1.0
    %v11961 = vrcp.pop %v11959
    %v11962 = vmul.f32 1.0, %v11961
    %v11963 = vrcp.pop %v11960
    %v11964 = vmul.f32 1.0, %v11963
    %v11965 = vtanh.pop %v11937
    %v11966 = vtanh.pop %v11938
    %v11967 = vxor.u32 %v11939, 2147483648
    %v11968 = vxor.u32 %v11940, 2147483648
    %v11969 = vmul.f32 %v11967, 1.442695
    %v11970 = vpow.pop %v11969
    %v11971 = vmul.f32 %v11968, 1.442695
    %v11972 = vpow.pop %v11971
    %v11973 = vadd.f32 %v11970, 1.0
    %v11974 = vadd.f32 %v11972, 1.0
    %v11975 = vrcp.pop %v11973
    %v11976 = vmul.f32 1.0, %v11975
    %v11977 = vrcp.pop %v11974
    %v11978 = vmul.f32 1.0, %v11977
    %v11979 = vmul.f32 %v11962, %v10990
    %v11980 = vmul.f32 %v11964, %v10991
    %v11981 = vmul.f32 %v11950, %v11965
    %v11982 = vmul.f32 %v11952, %v11966
    %v11983 = vadd.f32 %v11979, %v11981
    %v11984 = vadd.f32 %v11980, %v11982
    %v11985 = vtanh.pop %v11983
    %v11986 = vtanh.pop %v11984
    %v11987 = vmul.f32 %v11976, %v11985
    %v11988 = vmul.f32 %v11978, %v11986
    %s11989 = scalar_lea.vmem [#allocation4], 112
    %11990 = vst [vmem:[%s11989] sm:$0xff] %v11987
    %11991 = vst [vmem:[%s11989 + $0x8] sm:$0xff] %v11988
    %11992 = vst [vmem:[#allocation2] sm:$0xff] %v11987
    %11993 = vst [vmem:[#allocation2 + $0x8] sm:$0xff] %v11988
    %11994 = vst [vmem:[#allocation3] sm:$0xff] %v11983
    %11995 = vst [vmem:[#allocation3 + $0x8] sm:$0xff] %v11984
    %11996 = vst [vmem:[%s11] sm:$0xff] %v11987
    %11997 = vst [vmem:[%s11 + $0x8] sm:$0xff] %v11988
    %11998 = vst [vmem:[%s12] sm:$0xff] %v11983
    %11999 = vst [vmem:[%s12 + $0x8] sm:$0xff] %v11984
    %v12000 = vld [vmem:[#allocation4] sm:$0xff]
    %v12001 = vld [vmem:[#allocation4 + $0x8] sm:$0xff]
    %v12002 = vld [vmem:[#allocation4 + $0x10] sm:$0xff]
    %v12003 = vld [vmem:[#allocation4 + $0x18] sm:$0xff]
    %v12004 = vld [vmem:[#allocation4 + $0x20] sm:$0xff]
    %v12005 = vld [vmem:[#allocation4 + $0x28] sm:$0xff]
    %v12006 = vld [vmem:[#allocation4 + $0x30] sm:$0xff]
    %v12007 = vld [vmem:[#allocation4 + $0x38] sm:$0xff]
    %v12008 = vld [vmem:[#allocation4 + $0x40] sm:$0xff]
    %v12009 = vld [vmem:[#allocation4 + $0x48] sm:$0xff]
    %v12010 = vld [vmem:[#allocation4 + $0x50] sm:$0xff]
    %v12011 = vld [vmem:[#allocation4 + $0x58] sm:$0xff]
    %v12012 = vld [vmem:[#allocation4 + $0x60] sm:$0xff]
    %v12013 = vld [vmem:[#allocation4 + $0x68] sm:$0xff]
    %v12014 = vld [vmem:[#allocation4 + $0x70] sm:$0xff]
    %v12015 = vld [vmem:[#allocation4 + $0x78] sm:$0xff]
    %v12016 = vpack.c.bf16 %v12002, %v12000
    %v12017 = vpack.c.bf16 %v12003, %v12001
    %v12018 = vpack.c.bf16 %v12006, %v12004
    %v12019 = vpack.c.bf16 %v12007, %v12005
    %v12020 = vpack.c.bf16 %v12010, %v12008
    %v12021 = vpack.c.bf16 %v12011, %v12009
    %v12022 = vpack.c.bf16 %v12014, %v12012
    %v12023 = vpack.c.bf16 %v12015, %v12013
    %v12024 = vld [vmem:[%s6] sm:$0xf]
    %v12025 = vld [vmem:[%s6 + $0x4] sm:$0xf]
    %v12026 = vld [vmem:[%s6 + $0x8] sm:$0xf]
    %v12027 = vld [vmem:[%s6 + $0xc] sm:$0xf]
    %v12028 = vld [vmem:[%s6 + $0x10] sm:$0xf]
    %v12029 = vld [vmem:[%s6 + $0x14] sm:$0xf]
    %v12030 = vld [vmem:[%s6 + $0x18] sm:$0xf]
    %v12031 = vld [vmem:[%s6 + $0x1c] sm:$0xf]
    %v12032 = vld [vmem:[%s6 + $0x20] sm:$0xf]
    %v12033 = vld [vmem:[%s6 + $0x24] sm:$0xf]
    %v12034 = vld [vmem:[%s6 + $0x28] sm:$0xf]
    %v12035 = vld [vmem:[%s6 + $0x2c] sm:$0xf]
    %v12036 = vld [vmem:[%s6 + $0x30] sm:$0xf]
    %v12037 = vld [vmem:[%s6 + $0x34] sm:$0xf]
    %v12038 = vld [vmem:[%s6 + $0x38] sm:$0xf]
    %v12039 = vld [vmem:[%s6 + $0x3c] sm:$0xf]
    %v12040 = vld [vmem:[%s6 + $0x40] sm:$0xf]
    %v12041 = vld [vmem:[%s6 + $0x44] sm:$0xf]
    %v12042 = vld [vmem:[%s6 + $0x48] sm:$0xf]
    %v12043 = vld [vmem:[%s6 + $0x4c] sm:$0xf]
    %v12044 = vld [vmem:[%s6 + $0x50] sm:$0xf]
    %v12045 = vld [vmem:[%s6 + $0x54] sm:$0xf]
    %v12046 = vld [vmem:[%s6 + $0x58] sm:$0xf]
    %v12047 = vld [vmem:[%s6 + $0x5c] sm:$0xf]
    %v12048 = vld [vmem:[%s6 + $0x60] sm:$0xf]
    %v12049 = vld [vmem:[%s6 + $0x64] sm:$0xf]
    %v12050 = vld [vmem:[%s6 + $0x68] sm:$0xf]
    %v12051 = vld [vmem:[%s6 + $0x6c] sm:$0xf]
    %v12052 = vld [vmem:[%s6 + $0x70] sm:$0xf]
    %v12053 = vld [vmem:[%s6 + $0x74] sm:$0xf]
    %v12054 = vld [vmem:[%s6 + $0x78] sm:$0xf]
    %v12055 = vld [vmem:[%s6 + $0x7c] sm:$0xf]
    %v12056 = vld [vmem:[%s7] sm:$0x1]
    %v12058 = vlaneseq
    %v12059 = vshrl.u32 %v12058, 7
    %v12060 = vsub.s32 0, %v12059
    %v12061 = vrot.slane %v12056, %v12060
    %v12095 = vunpack.c.l.b16 %v12024
    %v12096 = vunpack.c.l.b16 %v12025
    %v12097 = vunpack.c.l.b16 %v12026
    %v12098 = vunpack.c.l.b16 %v12027
    %v12099 = vunpack.c.l.b16 %v12028
    %v12100 = vunpack.c.l.b16 %v12029
    %v12101 = vunpack.c.l.b16 %v12030
    %v12102 = vunpack.c.l.b16 %v12031
    %v12103 = vunpack.c.l.b16 %v12032
    %v12104 = vunpack.c.l.b16 %v12033
    %v12105 = vunpack.c.l.b16 %v12034
    %v12106 = vunpack.c.l.b16 %v12035
    %v12107 = vunpack.c.l.b16 %v12036
    %v12108 = vunpack.c.l.b16 %v12037
    %v12109 = vunpack.c.l.b16 %v12038
    %v12110 = vunpack.c.l.b16 %v12039
    %v12111 = vunpack.c.l.b16 %v12040
    %v12112 = vunpack.c.l.b16 %v12041
    %v12113 = vunpack.c.l.b16 %v12042
    %v12114 = vunpack.c.l.b16 %v12043
    %v12115 = vunpack.c.l.b16 %v12044
    %v12116 = vunpack.c.l.b16 %v12045
    %v12117 = vunpack.c.l.b16 %v12046
    %v12118 = vunpack.c.l.b16 %v12047
    %v12119 = vunpack.c.l.b16 %v12048
    %v12120 = vunpack.c.l.b16 %v12049
    %v12121 = vunpack.c.l.b16 %v12050
    %v12122 = vunpack.c.l.b16 %v12051
    %v12123 = vunpack.c.l.b16 %v12052
    %v12124 = vunpack.c.l.b16 %v12053
    %v12125 = vunpack.c.l.b16 %v12054
    %v12126 = vunpack.c.l.b16 %v12055
    %v12127 = vpack.c.b16 %v12096, %v12095
    %v12128 = vpack.c.b16 %v12098, %v12097
    %v12129 = vpack.c.b16 %v12100, %v12099
    %v12130 = vpack.c.b16 %v12102, %v12101
    %v12131 = vpack.c.b16 %v12104, %v12103
    %v12132 = vpack.c.b16 %v12106, %v12105
    %v12133 = vpack.c.b16 %v12108, %v12107
    %v12134 = vpack.c.b16 %v12110, %v12109
    %v12135 = vpack.c.b16 %v12112, %v12111
    %v12136 = vpack.c.b16 %v12114, %v12113
    %v12137 = vpack.c.b16 %v12116, %v12115
    %v12138 = vpack.c.b16 %v12118, %v12117
    %v12139 = vpack.c.b16 %v12120, %v12119
    %v12140 = vpack.c.b16 %v12122, %v12121
    %v12141 = vpack.c.b16 %v12124, %v12123
    %v12142 = vpack.c.b16 %v12126, %v12125
    %12159 = vmatprep.subr.bf16.mxu0 0
    %12160 = vmatpush1.bf16.msra.mxu0 %v12127
    %12161 = vmatprep.subr.bf16.mxu0 0
    %12162 = vmatpush1.bf16.msra.mxu0 %v12128
    %12163 = vmatprep.subr.bf16.mxu0 0
    %12164 = vmatpush1.bf16.msra.mxu0 %v12129
    %12165 = vmatprep.subr.bf16.mxu0 0
    %12166 = vmatpush1.bf16.msra.mxu0 %v12130
    %12167 = vmatprep.subr.bf16.mxu0 0
    %12168 = vmatpush1.bf16.msra.mxu0 %v12131
    %12169 = vmatprep.subr.bf16.mxu0 0
    %12170 = vmatpush1.bf16.msra.mxu0 %v12132
    %12171 = vmatprep.subr.bf16.mxu0 0
    %12172 = vmatpush1.bf16.msra.mxu0 %v12133
    %12173 = vmatprep.subr.bf16.mxu0 0
    %12174 = vmatpush1.bf16.msra.mxu0 %v12134
    %12175 = vmatprep.subr.bf16.mxu0 0
    %12176 = vmatpush1.bf16.msra.mxu0 %v12135
    %12177 = vmatprep.subr.bf16.mxu0 0
    %12178 = vmatpush1.bf16.msra.mxu0 %v12136
    %12179 = vmatprep.subr.bf16.mxu0 0
    %12180 = vmatpush1.bf16.msra.mxu0 %v12137
    %12181 = vmatprep.subr.bf16.mxu0 0
    %12182 = vmatpush1.bf16.msra.mxu0 %v12138
    %12183 = vmatprep.subr.bf16.mxu0 0
    %12184 = vmatpush1.bf16.msra.mxu0 %v12139
    %12185 = vmatprep.subr.bf16.mxu0 0
    %12186 = vmatpush1.bf16.msra.mxu0 %v12140
    %12187 = vmatprep.subr.bf16.mxu0 0
    %12188 = vmatpush1.bf16.msra.mxu0 %v12141
    %12189 = vmatprep.subr.bf16.mxu0 0
    %12190 = vmatpush1.bf16.msra.mxu0 %v12142
    %12191 = vmatprep.mubr.bf16.mxu0 %v12017
    %12192 = vmatmul.mubr.bf16.gmra.mrb[0].mxu0 %v12016
    %v12193 = vpop.f32.mrb[0].mxu0
    %v12194 = vadd.f32 %v12061, %v12193
    %v12195 = vpop.f32.mrb[0].mxu0
    %v12196 = vpop.f32.mrb[0].mxu0
    %v12197 = vadd.f32 %v12061, %v12196
    %v12198 = vpop.f32.mrb[0].mxu0
    %12199 = vmatprep.mubr.bf16.mxu0 %v12019
    %12200 = vmatmul.mubr.bf16.gmra.mrb[0].mxu0 %v12018
    %v12201 = vpop.f32.mrb[0].mxu0
    %v12202 = vadd.f32 %v12061, %v12201
    %v12203 = vpop.f32.mrb[0].mxu0
    %v12204 = vpop.f32.mrb[0].mxu0
    %v12205 = vadd.f32 %v12061, %v12204
    %v12206 = vpop.f32.mrb[0].mxu0
    %12207 = vmatprep.mubr.bf16.mxu0 %v12021
    %12208 = vmatmul.mubr.bf16.gmra.mrb[0].mxu0 %v12020
    %v12209 = vpop.f32.mrb[0].mxu0
    %v12210 = vadd.f32 %v12061, %v12209
    %v12211 = vpop.f32.mrb[0].mxu0
    %v12212 = vpop.f32.mrb[0].mxu0
    %v12213 = vadd.f32 %v12061, %v12212
    %v12214 = vpop.f32.mrb[0].mxu0
    %12215 = vmatprep.mubr.bf16.mxu0 %v12023
    %12216 = vmatmul.mubr.bf16.gmra.mrb[0].mxu0 %v12022
    %v12217 = vpop.f32.mrb[0].mxu0
    %v12218 = vadd.f32 %v12061, %v12217
    %v12219 = vpop.f32.mrb[0].mxu0
    %v12220 = vpop.f32.mrb[0].mxu0
    %v12221 = vadd.f32 %v12061, %v12220
    %v12222 = vpop.f32.mrb[0].mxu0
    %12223 = vdwg.mxu0
    %12224 = vst [vmem:[%s10] sm:$0xff] %v12194
    %12225 = vst [vmem:[%s10 + $0x8] sm:$0xff] %v12197
    %12226 = vst [vmem:[%s10 + $0x10] sm:$0xff] %v12202
    %12227 = vst [vmem:[%s10 + $0x18] sm:$0xff] %v12205
    %12228 = vst [vmem:[%s10 + $0x20] sm:$0xff] %v12210
    %12229 = vst [vmem:[%s10 + $0x28] sm:$0xff] %v12213
    %12230 = vst [vmem:[%s10 + $0x30] sm:$0xff] %v12218
    %12231 = vst [vmem:[%s10 + $0x38] sm:$0xff] %v12221
    // Predicated region
    $region54: #{lstm_robot_actor_forward.1} parent=1 // pred_check
      _
    $region55: #{lstm_robot_actor_forward.1} parent=1 // pred_check_branch
      %12233 = sbr.rel (0) target = $region57
    $region56: #{lstm_robot_actor_forward.1} parent=1 // pred_region
      _
    $region57: #{lstm_robot_actor_forward.1} parent=1 // pred_fallthru
      _
    // Predicated region
    $region58: #{lstm_robot_actor_forward.1} parent=1 // pred_check
      _
    $region59: #{lstm_robot_actor_forward.1} parent=1 // pred_check_branch
      %12235 = sbr.rel (0) target = $region61
    $region60: #{lstm_robot_actor_forward.1} parent=1 // pred_region
      _
    $region61: #{lstm_robot_actor_forward.1} parent=1 // pred_fallthru
      _
    // Predicated region
    $region62: #{lstm_robot_actor_forward.1} parent=1 // pred_check
      _
    $region63: #{lstm_robot_actor_forward.1} parent=1 // pred_check_branch
      %12237 = sbr.rel (0) target = $region65
    $region64: #{lstm_robot_actor_forward.1} parent=1 // pred_region
      _
    $region65: #{lstm_robot_actor_forward.1} parent=1 // pred_fallthru
      _
    // Predicated region
    $region66: #{lstm_robot_actor_forward.1} parent=1 // pred_check
      _
    $region67: #{lstm_robot_actor_forward.1} parent=1 // pred_check_branch
      %12239 = sbr.rel (0) target = $region69
    $region68: #{lstm_robot_actor_forward.1} parent=1 // pred_region
      _
    $region69: #{lstm_robot_actor_forward.1} parent=1 // pred_fallthru
      _
    // Predicated region
    $region70: #{lstm_robot_actor_forward.1} parent=1 // pred_check
      _
    $region71: #{lstm_robot_actor_forward.1} parent=1 // pred_check_branch
      %12241 = sbr.rel (0) target = $region73
    $region72: #{lstm_robot_actor_forward.1} parent=1 // pred_region
      _
    $region73: #{lstm_robot_actor_forward.1} parent=1 // pred_fallthru
      _
    // Predicated region
    $region74: #{lstm_robot_actor_forward.1} parent=1 // pred_check
      _
    $region75: #{lstm_robot_actor_forward.1} parent=1 // pred_check_branch
      %12243 = sbr.rel (0) target = $region77
    $region76: #{lstm_robot_actor_forward.1} parent=1 // pred_region
      _
    $region77: #{lstm_robot_actor_forward.1} parent=1 // pred_fallthru
      _
    %12244 = vsyncpa [#allocation6], 1
    %12245 = vsyncpa [#allocation8], 1

</llo_original>
